<compile_context>
chip_gen: v7x
topology: tpu7x:2x2x1
jax: 0.10.0
libtpu: 0.0.40
codegen_flags: <defaults>
</compile_context>

<pallas_src>
import functools

import jax
import jax.numpy as jnp
from jax.experimental import pallas as pl
from jax.experimental.pallas import tpu as pltpu


# ----------------------------------------------------------------------------- #
# Fused Inception kernel (one invocation = one batch element)
# ----------------------------------------------------------------------------- #
def _inception_kernel(x_ref,              # (1, H*W, Cin)
                      w_b1, b_b1,         # branch1x1          (Cin, 32), (1, 32)
                      w_b2, b_b2,         # branch1x1_2        (Cin, 32), (1, 32)
                      w_r1, b_r1,         # branch3x3_reduce   (Cin, 24), (1, 24)
                      w_c1, b_c1,         # branch3x3          (9*24, 32), (1, 32)
                      w_r2, b_r2,         # branch3x3_reduce_2 (Cin, 24), (1, 24)
                      w_c2, b_c2,         # branch3x3_2        (9*24, 32), (1, 32)
                      w_c3, b_c3,         # branch3x3_3        (9*32, 32), (1, 32)
                      o_ref,              # (1, H*W, 128)
                      *, H, W):
    M = H * W
    x2d = x_ref[0]                                   # (M, Cin) f32

    def cbr(inp, w_ref, b_ref):
        # conv-as-matmul + folded-BN bias + ReLU (f32 accumulation on the MXU).
        y = jnp.dot(inp, w_ref[...], preferred_element_type=jnp.float32)
        return jnp.maximum(y + b_ref[...], 0.0)

    def taps3x3(y2d):
        # 9 shifted copies of y (zero padding = 1) as (H, W, C) arrays,
        # tap order (kh, kw) row-major.
        C = y2d.shape[-1]
        y3d = y2d.reshape(H, W, C)
        zc = jnp.zeros((H, 1, C), jnp.float32)
        yw = jnp.concatenate([zc, y3d, zc], axis=1)          # (H, W+2, C)
        zr = jnp.zeros((1, W + 2, C), jnp.float32)
        yp = jnp.concatenate([zr, yw, zr], axis=0)           # (H+2, W+2, C)
        return [yp[kh:kh + H, kw:kw + W, :] for kh in range(3) for kw in range(3)]

    def patches3x3(y2d):
        # im2col patch matrix (M, 9*C); column order (kh, kw, cin) matches the
        # (3, 3, Cin, Cout) -> (9*Cin, Cout) reshaped weights.
        C = y2d.shape[-1]
        return jnp.concatenate(taps3x3(y2d), axis=-1).reshape(M, 9 * C)

    # branch 1: 1x1 conv
    br1 = cbr(x2d, w_b1, b_b1)                                          # (M, 32)

    # branch 2: 3x3 avg-pool (stride 1, pad 1, count_include_pad=True) -> 1x1
    tx = taps3x3(x2d)
    pooled = tx[0]
    for t in tx[1:]:
        pooled = pooled + t
    pooled = (pooled * (1.0 / 9.0)).reshape(M, x2d.shape[-1])
    br2 = cbr(pooled, w_b2, b_b2)                                       # (M, 32)

    # branch 3: 1x1 reduce -> 3x3 conv (single dot, K = 9*24)
    r1 = cbr(x2d, w_r1, b_r1)                                           # (M, 24)
    br3 = cbr(patches3x3(r1), w_c1, b_c1)                               # (M, 32)

    # branch 4: 1x1 reduce -> 3x3 -> 3x3
    r2 = cbr(x2d, w_r2, b_r2)                                           # (M, 24)
    c2 = cbr(patches3x3(r2), w_c2, b_c2)                                # (M, 32)
    br4 = cbr(patches3x3(c2), w_c3, b_c3)                               # (M, 32)

    # Lane-dense concatenated output: channels [br1 | br2 | br3 | br4] = 128.
    o_ref[0] = jnp.concatenate([br1, br2, br3, br4], axis=-1)


# ----------------------------------------------------------------------------- #
# Wrapper (pallas_call plumbing)
# ----------------------------------------------------------------------------- #
_BRANCH_ORDER = ("branch1x1", "branch1x1_2", "branch3x3_reduce", "branch3x3",
                 "branch3x3_reduce_2", "branch3x3_2", "branch3x3_3")


def inception_forward(x_nchw, params):
    n, cin, h, w = x_nchw.shape
    m = h * w
    x = jnp.transpose(x_nchw, (0, 2, 3, 1)).reshape(n, m, cin)   # NCHW -> (N, H*W, C)

    flat_args = []
    in_specs = [pl.BlockSpec((1, m, cin), lambda b: (b, 0, 0))]
    for name in _BRANCH_ORDER:
        wmat, bias = params[name]
        if wmat.ndim == 4:                         # (3, 3, Cin, Cout) -> (9*Cin, Cout)
            wmat = wmat.reshape(-1, wmat.shape[-1])
        bias2d = bias.reshape(1, -1)
        flat_args += [wmat, bias2d]
        in_specs += [pl.BlockSpec(wmat.shape, lambda b: (0, 0)),
                     pl.BlockSpec(bias2d.shape, lambda b: (0, 0))]

    cout_total = 128                               # 32 + 32 + 32 + 32 (fixed by module)
    kernel = functools.partial(_inception_kernel, H=h, W=w)
    out = pl.pallas_call(
        kernel,
        grid=(n,),
        in_specs=in_specs,
        out_specs=pl.BlockSpec((1, m, cout_total), lambda b: (b, 0, 0)),
        out_shape=jax.ShapeDtypeStruct((n, m, cout_total), jnp.float32),
        compiler_params=pltpu.CompilerParams(dimension_semantics=("parallel",)),
    )(x, *flat_args)

    return jnp.transpose(out.reshape(n, h, w, cout_total), (0, 3, 1, 2))   # -> NCHW


# ----------------------------------------------------------------------------- #
# Deterministic synthetic parameters (ConvBNReLU with BN folded into w, bias)
# ----------------------------------------------------------------------------- #
def _make_convbnrelu_params(key, cin, cout, ksize):
    """Weight layouts: 1x1 -> (Cin, Cout)      (PyTorch (Cout,Cin,1,1): w[:,:,0,0].T)
                       3x3 -> (3, 3, Cin, Cout)(PyTorch (Cout,Cin,3,3): permute(2,3,1,0))
    BN (eval mode) folded:  y = conv(x, w*scale) + (beta - mean*scale);  ReLU."""
    k1, k2, k3, k4, k5 = jax.random.split(key, 5)
    if ksize == 1:
        w = 0.1 * jax.random.normal(k1, (cin, cout), jnp.float32)
    else:
        w = 0.1 * jax.random.normal(k1, (3, 3, cin, cout), jnp.float32)
    gamma = 1.0 + 0.1 * jax.random.normal(k2, (cout,), jnp.float32)
    beta = 0.1 * jax.random.normal(k3, (cout,), jnp.float32)
    mean = 0.1 * jax.random.normal(k4, (cout,), jnp.float32)
    var = 1.0 + jnp.abs(jax.random.normal(k5, (cout,), jnp.float32))
    scale = gamma / jnp.sqrt(var + 1e-5)
    return w * scale, beta - mean * scale


def make_inception_params(key, in_channels):
    ks = jax.random.split(key, 7)
    return {
        "branch1x1":          _make_convbnrelu_params(ks[0], in_channels, 32, 1),
        "branch1x1_2":        _make_convbnrelu_params(ks[1], in_channels, 32, 1),
        "branch3x3_reduce":   _make_convbnrelu_params(ks[2], in_channels, 24, 1),
        "branch3x3":          _make_convbnrelu_params(ks[3], 24, 32, 3),
        "branch3x3_reduce_2": _make_convbnrelu_params(ks[4], in_channels, 24, 1),
        "branch3x3_2":        _make_convbnrelu_params(ks[5], 24, 32, 3),
        "branch3x3_3":        _make_convbnrelu_params(ks[6], 32, 32, 3),
    }


# ----------------------------------------------------------------------------- #
# Pure-JAX reference (same folded params) for correctness check
# ----------------------------------------------------------------------------- #
def _reference_forward(x_nchw, params):
    x = jnp.transpose(x_nchw, (0, 2, 3, 1))
    hi = jax.lax.Precision.HIGHEST

    def cbr(t, w, b):
        if w.ndim == 2:
            y = jnp.einsum("nhwc,cd->nhwd", t, w, precision=hi)
        else:
            y = jax.lax.conv_general_dilated(
                t, w, (1, 1), "SAME",
                dimension_numbers=("NHWC", "HWIO", "NHWC"), precision=hi)
        return jnp.maximum(y + b, 0.0)

    def avg_pool3x3(t):
        s = jax.lax.reduce_window(t, 0.0, jax.lax.add, (1, 3, 3, 1), (1, 1, 1, 1),
                                  [(0, 0), (1, 1), (1, 1), (0, 0)])
        return s / 9.0                                  # count_include_pad=True

    b1 = cbr(x, *params["branch1x1"])
    b2 = cbr(avg_pool3x3(x), *params["branch1x1_2"])
    b3 = cbr(cbr(x, *params["branch3x3_reduce"]), *params["branch3x3"])
    t4 = cbr(cbr(x, *params["branch3x3_reduce_2"]), *params["branch3x3_2"])
    b4 = cbr(t4, *params["branch3x3_3"])
    out = jnp.concatenate([b1, b2, b3, b4], axis=-1)
    return jnp.transpose(out, (0, 3, 1, 2))


# ----------------------------------------------------------------------------- #
if __name__ == "__main__":
    key = jax.random.PRNGKey(0)
    kx, kp = jax.random.split(key)

    in_channels, n, hw = 4, 2, 16
    x = jax.random.normal(kx, (n, in_channels, hw, hw), jnp.float32)   # NCHW
    params = make_inception_params(kp, in_channels)

    out = jax.block_until_ready(jax.jit(inception_forward)(x, params))

    assert out.shape == (n, 128, hw, hw), out.shape
    assert out.dtype == jnp.float32
    assert bool(jnp.all(jnp.isfinite(out)))
    assert bool(jnp.all(out >= 0.0))                    # ReLU output

    ref = jax.block_until_ready(jax.jit(_reference_forward)(x, params))
    max_err = float(jnp.max(jnp.abs(out - ref)))
    assert max_err < 5e-2, f"mismatch vs reference: max abs err {max_err}"

    print("KERNEL_OK")
</pallas_src>

<mosaic_0001>
module attributes {stable_mosaic.version = 11 : i64} {
  func.func @_inception_kernel(%arg0: i32, %arg1: memref<1x256x4xf32, #tpu.memory_space<vmem>>, %arg2: memref<4x32xf32, #tpu.memory_space<vmem>>, %arg3: memref<1x32xf32, #tpu.memory_space<vmem>>, %arg4: memref<4x32xf32, #tpu.memory_space<vmem>>, %arg5: memref<1x32xf32, #tpu.memory_space<vmem>>, %arg6: memref<4x24xf32, #tpu.memory_space<vmem>>, %arg7: memref<1x24xf32, #tpu.memory_space<vmem>>, %arg8: memref<216x32xf32, #tpu.memory_space<vmem>>, %arg9: memref<1x32xf32, #tpu.memory_space<vmem>>, %arg10: memref<4x24xf32, #tpu.memory_space<vmem>>, %arg11: memref<1x24xf32, #tpu.memory_space<vmem>>, %arg12: memref<216x32xf32, #tpu.memory_space<vmem>>, %arg13: memref<1x32xf32, #tpu.memory_space<vmem>>, %arg14: memref<288x32xf32, #tpu.memory_space<vmem>>, %arg15: memref<1x32xf32, #tpu.memory_space<vmem>>, %arg16: memref<1x256x128xf32, #tpu.memory_space<vmem>>) attributes {dimension_semantics = [#tpu.dimension_semantics<parallel>], iteration_bounds = array<i64: 2>, scalar_prefetch = 0 : i64, scratch_operands = 0 : i64, tpu.core_type = #tpu.core_type<tc>, window_params = [{transform_indices = @transform_0, window_bounds = array<i64: 1, 256, 4>}, {pipeline_mode = #tpu.pipeline_mode<synchronous>, transform_indices = @transform_1, window_bounds = array<i64: 4, 32>}, {pipeline_mode = #tpu.pipeline_mode<synchronous>, transform_indices = @transform_2, window_bounds = array<i64: 1, 32>}, {pipeline_mode = #tpu.pipeline_mode<synchronous>, transform_indices = @transform_3, window_bounds = array<i64: 4, 32>}, {pipeline_mode = #tpu.pipeline_mode<synchronous>, transform_indices = @transform_4, window_bounds = array<i64: 1, 32>}, {pipeline_mode = #tpu.pipeline_mode<synchronous>, transform_indices = @transform_5, window_bounds = array<i64: 4, 24>}, {pipeline_mode = #tpu.pipeline_mode<synchronous>, transform_indices = @transform_6, window_bounds = array<i64: 1, 24>}, {pipeline_mode = #tpu.pipeline_mode<synchronous>, transform_indices = @transform_7, window_bounds = array<i64: 216, 32>}, {pipeline_mode = #tpu.pipeline_mode<synchronous>, transform_indices = @transform_8, window_bounds = array<i64: 1, 32>}, {pipeline_mode = #tpu.pipeline_mode<synchronous>, transform_indices = @transform_9, window_bounds = array<i64: 4, 24>}, {pipeline_mode = #tpu.pipeline_mode<synchronous>, transform_indices = @transform_10, window_bounds = array<i64: 1, 24>}, {pipeline_mode = #tpu.pipeline_mode<synchronous>, transform_indices = @transform_11, window_bounds = array<i64: 216, 32>}, {pipeline_mode = #tpu.pipeline_mode<synchronous>, transform_indices = @transform_12, window_bounds = array<i64: 1, 32>}, {pipeline_mode = #tpu.pipeline_mode<synchronous>, transform_indices = @transform_13, window_bounds = array<i64: 288, 32>}, {pipeline_mode = #tpu.pipeline_mode<synchronous>, transform_indices = @transform_14, window_bounds = array<i64: 1, 32>}, {transform_indices = @transform_15, window_bounds = array<i64: 1, 256, 128>}]} {
    %c0 = arith.constant 0 : index
    %c0_0 = arith.constant 0 : index
    %c0_1 = arith.constant 0 : index
    %0 = vector.load %arg1[%c0, %c0_0, %c0_1] : memref<1x256x4xf32, #tpu.memory_space<vmem>>, vector<1x256x4xf32>
    %1 = vector.shape_cast %0 : vector<1x256x4xf32> to vector<256x4xf32>
    %c0_2 = arith.constant 0 : index
    %c0_3 = arith.constant 0 : index
    %2 = vector.load %arg2[%c0_2, %c0_3] : memref<4x32xf32, #tpu.memory_space<vmem>>, vector<4x32xf32>
    %cst = arith.constant dense<0.000000e+00> : vector<256x32xf32>
    %3 = tpu.matmul %1, %2, %cst {dimension_numbers = #tpu.dot_dimension_numbers<[1], [0], [0], [1], [0, 0, 1, 1], [], []>} : vector<256x4xf32>, vector<4x32xf32>, vector<256x32xf32> -> vector<256x32xf32>
    %c0_4 = arith.constant 0 : index
    %c0_5 = arith.constant 0 : index
    %4 = vector.load %arg3[%c0_4, %c0_5] : memref<1x32xf32, #tpu.memory_space<vmem>>, vector<1x32xf32>
    %5 = vector.broadcast %4 : vector<1x32xf32> to vector<256x32xf32>
    %6 = arith.addf %3, %5 : vector<256x32xf32>
    %cst_6 = arith.constant 0.000000e+00 : f32
    %7 = vector.broadcast %cst_6 : f32 to vector<256x32xf32>
    %8 = arith.maximumf %6, %7 : vector<256x32xf32>
    %9 = vector.shape_cast %1 : vector<256x4xf32> to vector<16x16x4xf32>
    %cst_7 = arith.constant 0.000000e+00 : f32
    %10 = vector.broadcast %cst_7 : f32 to vector<16x1x4xf32>
    %11 = tpu.concatenate %10, %9, %10 in 1 : vector<16x1x4xf32>, vector<16x16x4xf32>, vector<16x1x4xf32> -> vector<16x18x4xf32>
    %cst_8 = arith.constant 0.000000e+00 : f32
    %12 = vector.broadcast %cst_8 : f32 to vector<1x18x4xf32>
    %13 = tpu.concatenate %12, %11, %12 in 0 : vector<1x18x4xf32>, vector<16x18x4xf32>, vector<1x18x4xf32> -> vector<18x18x4xf32>
    %14 = vector.extract_strided_slice %13 {offsets = [0, 0, 0], sizes = [16, 16, 4], strides = [1, 1, 1]} : vector<18x18x4xf32> to vector<16x16x4xf32>
    %15 = vector.extract_strided_slice %13 {offsets = [0, 1, 0], sizes = [16, 16, 4], strides = [1, 1, 1]} : vector<18x18x4xf32> to vector<16x16x4xf32>
    %16 = vector.extract_strided_slice %13 {offsets = [0, 2, 0], sizes = [16, 16, 4], strides = [1, 1, 1]} : vector<18x18x4xf32> to vector<16x16x4xf32>
    %17 = vector.extract_strided_slice %13 {offsets = [1, 0, 0], sizes = [16, 16, 4], strides = [1, 1, 1]} : vector<18x18x4xf32> to vector<16x16x4xf32>
    %18 = vector.extract_strided_slice %13 {offsets = [1, 1, 0], sizes = [16, 16, 4], strides = [1, 1, 1]} : vector<18x18x4xf32> to vector<16x16x4xf32>
    %19 = vector.extract_strided_slice %13 {offsets = [1, 2, 0], sizes = [16, 16, 4], strides = [1, 1, 1]} : vector<18x18x4xf32> to vector<16x16x4xf32>
    %20 = vector.extract_strided_slice %13 {offsets = [2, 0, 0], sizes = [16, 16, 4], strides = [1, 1, 1]} : vector<18x18x4xf32> to vector<16x16x4xf32>
    %21 = vector.extract_strided_slice %13 {offsets = [2, 1, 0], sizes = [16, 16, 4], strides = [1, 1, 1]} : vector<18x18x4xf32> to vector<16x16x4xf32>
    %22 = vector.extract_strided_slice %13 {offsets = [2, 2, 0], sizes = [16, 16, 4], strides = [1, 1, 1]} : vector<18x18x4xf32> to vector<16x16x4xf32>
    %23 = arith.addf %14, %15 : vector<16x16x4xf32>
    %24 = arith.addf %23, %16 : vector<16x16x4xf32>
    %25 = arith.addf %24, %17 : vector<16x16x4xf32>
    %26 = arith.addf %25, %18 : vector<16x16x4xf32>
    %27 = arith.addf %26, %19 : vector<16x16x4xf32>
    %28 = arith.addf %27, %20 : vector<16x16x4xf32>
    %29 = arith.addf %28, %21 : vector<16x16x4xf32>
    %30 = arith.addf %29, %22 : vector<16x16x4xf32>
    %cst_9 = arith.constant 0.111111112 : f32
    %31 = vector.broadcast %cst_9 : f32 to vector<16x16x4xf32>
    %32 = arith.mulf %30, %31 : vector<16x16x4xf32>
    %33 = vector.shape_cast %32 : vector<16x16x4xf32> to vector<256x4xf32>
    %c0_10 = arith.constant 0 : index
    %c0_11 = arith.constant 0 : index
    %34 = vector.load %arg4[%c0_10, %c0_11] : memref<4x32xf32, #tpu.memory_space<vmem>>, vector<4x32xf32>
    %cst_12 = arith.constant dense<0.000000e+00> : vector<256x32xf32>
    %35 = tpu.matmul %33, %34, %cst_12 {dimension_numbers = #tpu.dot_dimension_numbers<[1], [0], [0], [1], [0, 0, 1, 1], [], []>} : vector<256x4xf32>, vector<4x32xf32>, vector<256x32xf32> -> vector<256x32xf32>
    %c0_13 = arith.constant 0 : index
    %c0_14 = arith.constant 0 : index
    %36 = vector.load %arg5[%c0_13, %c0_14] : memref<1x32xf32, #tpu.memory_space<vmem>>, vector<1x32xf32>
    %37 = vector.broadcast %36 : vector<1x32xf32> to vector<256x32xf32>
    %38 = arith.addf %35, %37 : vector<256x32xf32>
    %cst_15 = arith.constant 0.000000e+00 : f32
    %39 = vector.broadcast %cst_15 : f32 to vector<256x32xf32>
    %40 = arith.maximumf %38, %39 : vector<256x32xf32>
    %c0_16 = arith.constant 0 : index
    %c0_17 = arith.constant 0 : index
    %41 = vector.load %arg6[%c0_16, %c0_17] : memref<4x24xf32, #tpu.memory_space<vmem>>, vector<4x24xf32>
    %cst_18 = arith.constant dense<0.000000e+00> : vector<256x24xf32>
    %42 = tpu.matmul %1, %41, %cst_18 {dimension_numbers = #tpu.dot_dimension_numbers<[1], [0], [0], [1], [0, 0, 1, 1], [], []>} : vector<256x4xf32>, vector<4x24xf32>, vector<256x24xf32> -> vector<256x24xf32>
    %c0_19 = arith.constant 0 : index
    %c0_20 = arith.constant 0 : index
    %43 = vector.load %arg7[%c0_19, %c0_20] : memref<1x24xf32, #tpu.memory_space<vmem>>, vector<1x24xf32>
    %44 = vector.broadcast %43 : vector<1x24xf32> to vector<256x24xf32>
    %45 = arith.addf %42, %44 : vector<256x24xf32>
    %cst_21 = arith.constant 0.000000e+00 : f32
    %46 = vector.broadcast %cst_21 : f32 to vector<256x24xf32>
    %47 = arith.maximumf %45, %46 : vector<256x24xf32>
    %48 = vector.shape_cast %47 : vector<256x24xf32> to vector<16x16x24xf32>
    %cst_22 = arith.constant 0.000000e+00 : f32
    %49 = vector.broadcast %cst_22 : f32 to vector<16x1x24xf32>
    %50 = tpu.concatenate %49, %48, %49 in 1 : vector<16x1x24xf32>, vector<16x16x24xf32>, vector<16x1x24xf32> -> vector<16x18x24xf32>
    %cst_23 = arith.constant 0.000000e+00 : f32
    %51 = vector.broadcast %cst_23 : f32 to vector<1x18x24xf32>
    %52 = tpu.concatenate %51, %50, %51 in 0 : vector<1x18x24xf32>, vector<16x18x24xf32>, vector<1x18x24xf32> -> vector<18x18x24xf32>
    %53 = vector.extract_strided_slice %52 {offsets = [0, 0, 0], sizes = [16, 16, 24], strides = [1, 1, 1]} : vector<18x18x24xf32> to vector<16x16x24xf32>
    %54 = vector.extract_strided_slice %52 {offsets = [0, 1, 0], sizes = [16, 16, 24], strides = [1, 1, 1]} : vector<18x18x24xf32> to vector<16x16x24xf32>
    %55 = vector.extract_strided_slice %52 {offsets = [0, 2, 0], sizes = [16, 16, 24], strides = [1, 1, 1]} : vector<18x18x24xf32> to vector<16x16x24xf32>
    %56 = vector.extract_strided_slice %52 {offsets = [1, 0, 0], sizes = [16, 16, 24], strides = [1, 1, 1]} : vector<18x18x24xf32> to vector<16x16x24xf32>
    %57 = vector.extract_strided_slice %52 {offsets = [1, 1, 0], sizes = [16, 16, 24], strides = [1, 1, 1]} : vector<18x18x24xf32> to vector<16x16x24xf32>
    %58 = vector.extract_strided_slice %52 {offsets = [1, 2, 0], sizes = [16, 16, 24], strides = [1, 1, 1]} : vector<18x18x24xf32> to vector<16x16x24xf32>
    %59 = vector.extract_strided_slice %52 {offsets = [2, 0, 0], sizes = [16, 16, 24], strides = [1, 1, 1]} : vector<18x18x24xf32> to vector<16x16x24xf32>
    %60 = vector.extract_strided_slice %52 {offsets = [2, 1, 0], sizes = [16, 16, 24], strides = [1, 1, 1]} : vector<18x18x24xf32> to vector<16x16x24xf32>
    %61 = vector.extract_strided_slice %52 {offsets = [2, 2, 0], sizes = [16, 16, 24], strides = [1, 1, 1]} : vector<18x18x24xf32> to vector<16x16x24xf32>
    %62 = tpu.concatenate %53, %54, %55, %56, %57, %58, %59, %60, %61 in 2 : vector<16x16x24xf32>, vector<16x16x24xf32>, vector<16x16x24xf32>, vector<16x16x24xf32>, vector<16x16x24xf32>, vector<16x16x24xf32>, vector<16x16x24xf32>, vector<16x16x24xf32>, vector<16x16x24xf32> -> vector<16x16x216xf32>
    %63 = vector.shape_cast %62 : vector<16x16x216xf32> to vector<256x216xf32>
    %c0_24 = arith.constant 0 : index
    %c0_25 = arith.constant 0 : index
    %64 = vector.load %arg8[%c0_24, %c0_25] : memref<216x32xf32, #tpu.memory_space<vmem>>, vector<216x32xf32>
    %cst_26 = arith.constant dense<0.000000e+00> : vector<256x32xf32>
    %65 = tpu.matmul %63, %64, %cst_26 {dimension_numbers = #tpu.dot_dimension_numbers<[1], [0], [0], [1], [0, 0, 1, 1], [], []>} : vector<256x216xf32>, vector<216x32xf32>, vector<256x32xf32> -> vector<256x32xf32>
    %c0_27 = arith.constant 0 : index
    %c0_28 = arith.constant 0 : index
    %66 = vector.load %arg9[%c0_27, %c0_28] : memref<1x32xf32, #tpu.memory_space<vmem>>, vector<1x32xf32>
    %67 = vector.broadcast %66 : vector<1x32xf32> to vector<256x32xf32>
    %68 = arith.addf %65, %67 : vector<256x32xf32>
    %cst_29 = arith.constant 0.000000e+00 : f32
    %69 = vector.broadcast %cst_29 : f32 to vector<256x32xf32>
    %70 = arith.maximumf %68, %69 : vector<256x32xf32>
    %c0_30 = arith.constant 0 : index
    %c0_31 = arith.constant 0 : index
    %71 = vector.load %arg10[%c0_30, %c0_31] : memref<4x24xf32, #tpu.memory_space<vmem>>, vector<4x24xf32>
    %cst_32 = arith.constant dense<0.000000e+00> : vector<256x24xf32>
    %72 = tpu.matmul %1, %71, %cst_32 {dimension_numbers = #tpu.dot_dimension_numbers<[1], [0], [0], [1], [0, 0, 1, 1], [], []>} : vector<256x4xf32>, vector<4x24xf32>, vector<256x24xf32> -> vector<256x24xf32>
    %c0_33 = arith.constant 0 : index
    %c0_34 = arith.constant 0 : index
    %73 = vector.load %arg11[%c0_33, %c0_34] : memref<1x24xf32, #tpu.memory_space<vmem>>, vector<1x24xf32>
    %74 = vector.broadcast %73 : vector<1x24xf32> to vector<256x24xf32>
    %75 = arith.addf %72, %74 : vector<256x24xf32>
    %cst_35 = arith.constant 0.000000e+00 : f32
    %76 = vector.broadcast %cst_35 : f32 to vector<256x24xf32>
    %77 = arith.maximumf %75, %76 : vector<256x24xf32>
    %78 = vector.shape_cast %77 : vector<256x24xf32> to vector<16x16x24xf32>
    %cst_36 = arith.constant 0.000000e+00 : f32
    %79 = vector.broadcast %cst_36 : f32 to vector<16x1x24xf32>
    %80 = tpu.concatenate %79, %78, %79 in 1 : vector<16x1x24xf32>, vector<16x16x24xf32>, vector<16x1x24xf32> -> vector<16x18x24xf32>
    %cst_37 = arith.constant 0.000000e+00 : f32
    %81 = vector.broadcast %cst_37 : f32 to vector<1x18x24xf32>
    %82 = tpu.concatenate %81, %80, %81 in 0 : vector<1x18x24xf32>, vector<16x18x24xf32>, vector<1x18x24xf32> -> vector<18x18x24xf32>
    %83 = vector.extract_strided_slice %82 {offsets = [0, 0, 0], sizes = [16, 16, 24], strides = [1, 1, 1]} : vector<18x18x24xf32> to vector<16x16x24xf32>
    %84 = vector.extract_strided_slice %82 {offsets = [0, 1, 0], sizes = [16, 16, 24], strides = [1, 1, 1]} : vector<18x18x24xf32> to vector<16x16x24xf32>
    %85 = vector.extract_strided_slice %82 {offsets = [0, 2, 0], sizes = [16, 16, 24], strides = [1, 1, 1]} : vector<18x18x24xf32> to vector<16x16x24xf32>
    %86 = vector.extract_strided_slice %82 {offsets = [1, 0, 0], sizes = [16, 16, 24], strides = [1, 1, 1]} : vector<18x18x24xf32> to vector<16x16x24xf32>
    %87 = vector.extract_strided_slice %82 {offsets = [1, 1, 0], sizes = [16, 16, 24], strides = [1, 1, 1]} : vector<18x18x24xf32> to vector<16x16x24xf32>
    %88 = vector.extract_strided_slice %82 {offsets = [1, 2, 0], sizes = [16, 16, 24], strides = [1, 1, 1]} : vector<18x18x24xf32> to vector<16x16x24xf32>
    %89 = vector.extract_strided_slice %82 {offsets = [2, 0, 0], sizes = [16, 16, 24], strides = [1, 1, 1]} : vector<18x18x24xf32> to vector<16x16x24xf32>
    %90 = vector.extract_strided_slice %82 {offsets = [2, 1, 0], sizes = [16, 16, 24], strides = [1, 1, 1]} : vector<18x18x24xf32> to vector<16x16x24xf32>
    %91 = vector.extract_strided_slice %82 {offsets = [2, 2, 0], sizes = [16, 16, 24], strides = [1, 1, 1]} : vector<18x18x24xf32> to vector<16x16x24xf32>
    %92 = tpu.concatenate %83, %84, %85, %86, %87, %88, %89, %90, %91 in 2 : vector<16x16x24xf32>, vector<16x16x24xf32>, vector<16x16x24xf32>, vector<16x16x24xf32>, vector<16x16x24xf32>, vector<16x16x24xf32>, vector<16x16x24xf32>, vector<16x16x24xf32>, vector<16x16x24xf32> -> vector<16x16x216xf32>
    %93 = vector.shape_cast %92 : vector<16x16x216xf32> to vector<256x216xf32>
    %c0_38 = arith.constant 0 : index
    %c0_39 = arith.constant 0 : index
    %94 = vector.load %arg12[%c0_38, %c0_39] : memref<216x32xf32, #tpu.memory_space<vmem>>, vector<216x32xf32>
    %cst_40 = arith.constant dense<0.000000e+00> : vector<256x32xf32>
    %95 = tpu.matmul %93, %94, %cst_40 {dimension_numbers = #tpu.dot_dimension_numbers<[1], [0], [0], [1], [0, 0, 1, 1], [], []>} : vector<256x216xf32>, vector<216x32xf32>, vector<256x32xf32> -> vector<256x32xf32>
    %c0_41 = arith.constant 0 : index
    %c0_42 = arith.constant 0 : index
    %96 = vector.load %arg13[%c0_41, %c0_42] : memref<1x32xf32, #tpu.memory_space<vmem>>, vector<1x32xf32>
    %97 = vector.broadcast %96 : vector<1x32xf32> to vector<256x32xf32>
    %98 = arith.addf %95, %97 : vector<256x32xf32>
    %cst_43 = arith.constant 0.000000e+00 : f32
    %99 = vector.broadcast %cst_43 : f32 to vector<256x32xf32>
    %100 = arith.maximumf %98, %99 : vector<256x32xf32>
    %101 = vector.shape_cast %100 : vector<256x32xf32> to vector<16x16x32xf32>
    %cst_44 = arith.constant 0.000000e+00 : f32
    %102 = vector.broadcast %cst_44 : f32 to vector<16x1x32xf32>
    %103 = tpu.concatenate %102, %101, %102 in 1 : vector<16x1x32xf32>, vector<16x16x32xf32>, vector<16x1x32xf32> -> vector<16x18x32xf32>
    %cst_45 = arith.constant 0.000000e+00 : f32
    %104 = vector.broadcast %cst_45 : f32 to vector<1x18x32xf32>
    %105 = tpu.concatenate %104, %103, %104 in 0 : vector<1x18x32xf32>, vector<16x18x32xf32>, vector<1x18x32xf32> -> vector<18x18x32xf32>
    %106 = vector.extract_strided_slice %105 {offsets = [0, 0, 0], sizes = [16, 16, 32], strides = [1, 1, 1]} : vector<18x18x32xf32> to vector<16x16x32xf32>
    %107 = vector.extract_strided_slice %105 {offsets = [0, 1, 0], sizes = [16, 16, 32], strides = [1, 1, 1]} : vector<18x18x32xf32> to vector<16x16x32xf32>
    %108 = vector.extract_strided_slice %105 {offsets = [0, 2, 0], sizes = [16, 16, 32], strides = [1, 1, 1]} : vector<18x18x32xf32> to vector<16x16x32xf32>
    %109 = vector.extract_strided_slice %105 {offsets = [1, 0, 0], sizes = [16, 16, 32], strides = [1, 1, 1]} : vector<18x18x32xf32> to vector<16x16x32xf32>
    %110 = vector.extract_strided_slice %105 {offsets = [1, 1, 0], sizes = [16, 16, 32], strides = [1, 1, 1]} : vector<18x18x32xf32> to vector<16x16x32xf32>
    %111 = vector.extract_strided_slice %105 {offsets = [1, 2, 0], sizes = [16, 16, 32], strides = [1, 1, 1]} : vector<18x18x32xf32> to vector<16x16x32xf32>
    %112 = vector.extract_strided_slice %105 {offsets = [2, 0, 0], sizes = [16, 16, 32], strides = [1, 1, 1]} : vector<18x18x32xf32> to vector<16x16x32xf32>
    %113 = vector.extract_strided_slice %105 {offsets = [2, 1, 0], sizes = [16, 16, 32], strides = [1, 1, 1]} : vector<18x18x32xf32> to vector<16x16x32xf32>
    %114 = vector.extract_strided_slice %105 {offsets = [2, 2, 0], sizes = [16, 16, 32], strides = [1, 1, 1]} : vector<18x18x32xf32> to vector<16x16x32xf32>
    %115 = tpu.concatenate %106, %107, %108, %109, %110, %111, %112, %113, %114 in 2 : vector<16x16x32xf32>, vector<16x16x32xf32>, vector<16x16x32xf32>, vector<16x16x32xf32>, vector<16x16x32xf32>, vector<16x16x32xf32>, vector<16x16x32xf32>, vector<16x16x32xf32>, vector<16x16x32xf32> -> vector<16x16x288xf32>
    %116 = vector.shape_cast %115 : vector<16x16x288xf32> to vector<256x288xf32>
    %c0_46 = arith.constant 0 : index
    %c0_47 = arith.constant 0 : index
    %117 = vector.load %arg14[%c0_46, %c0_47] : memref<288x32xf32, #tpu.memory_space<vmem>>, vector<288x32xf32>
    %cst_48 = arith.constant dense<0.000000e+00> : vector<256x32xf32>
    %118 = tpu.matmul %116, %117, %cst_48 {dimension_numbers = #tpu.dot_dimension_numbers<[1], [0], [0], [1], [0, 0, 1, 1], [], []>} : vector<256x288xf32>, vector<288x32xf32>, vector<256x32xf32> -> vector<256x32xf32>
    %c0_49 = arith.constant 0 : index
    %c0_50 = arith.constant 0 : index
    %119 = vector.load %arg15[%c0_49, %c0_50] : memref<1x32xf32, #tpu.memory_space<vmem>>, vector<1x32xf32>
    %120 = vector.broadcast %119 : vector<1x32xf32> to vector<256x32xf32>
    %121 = arith.addf %118, %120 : vector<256x32xf32>
    %cst_51 = arith.constant 0.000000e+00 : f32
    %122 = vector.broadcast %cst_51 : f32 to vector<256x32xf32>
    %123 = arith.maximumf %121, %122 : vector<256x32xf32>
    %124 = tpu.concatenate %8, %40, %70, %123 in 1 : vector<256x32xf32>, vector<256x32xf32>, vector<256x32xf32>, vector<256x32xf32> -> vector<256x128xf32>
    %c0_52 = arith.constant 0 : index
    %c0_53 = arith.constant 0 : index
    %c0_54 = arith.constant 0 : index
    %125 = vector.load %arg16[%c0_52, %c0_53, %c0_54] : memref<1x256x128xf32, #tpu.memory_space<vmem>>, vector<1x256x128xf32>
    %126 = vector.shape_cast %125 : vector<1x256x128xf32> to vector<256x128xf32>
    %127 = vector.shape_cast %124 : vector<256x128xf32> to vector<1x256x128xf32>
    tpu.vector_store %arg16[%c0_52, %c0_53, %c0_54], %127 {strides = array<i32>} : memref<1x256x128xf32, #tpu.memory_space<vmem>>, vector<1x256x128xf32>,
    return
  }
  func.func @transform_0(%arg0: i32) -> (i32, i32, i32) {
    %c0_i32 = arith.constant 0 : i32
    %c0_i32_0 = arith.constant 0 : i32
    %c0_i32_1 = arith.constant 0 : i32
    return %arg0, %c0_i32, %c0_i32_0 : i32, i32, i32
  }
  func.func @transform_1(%arg0: i32) -> (i32, i32) {
    %c0_i32 = arith.constant 0 : i32
    %c0_i32_0 = arith.constant 0 : i32
    %c0_i32_1 = arith.constant 0 : i32
    return %c0_i32, %c0_i32_0 : i32, i32
  }
  func.func @transform_2(%arg0: i32) -> (i32, i32) {
    %c0_i32 = arith.constant 0 : i32
    %c0_i32_0 = arith.constant 0 : i32
    %c0_i32_1 = arith.constant 0 : i32
    return %c0_i32, %c0_i32_0 : i32, i32
  }
  func.func @transform_3(%arg0: i32) -> (i32, i32) {
    %c0_i32 = arith.constant 0 : i32
    %c0_i32_0 = arith.constant 0 : i32
    %c0_i32_1 = arith.constant 0 : i32
    return %c0_i32, %c0_i32_0 : i32, i32
  }
  func.func @transform_4(%arg0: i32) -> (i32, i32) {
    %c0_i32 = arith.constant 0 : i32
    %c0_i32_0 = arith.constant 0 : i32
    %c0_i32_1 = arith.constant 0 : i32
    return %c0_i32, %c0_i32_0 : i32, i32
  }
  func.func @transform_5(%arg0: i32) -> (i32, i32) {
    %c0_i32 = arith.constant 0 : i32
    %c0_i32_0 = arith.constant 0 : i32
    %c0_i32_1 = arith.constant 0 : i32
    return %c0_i32, %c0_i32_0 : i32, i32
  }
  func.func @transform_6(%arg0: i32) -> (i32, i32) {
    %c0_i32 = arith.constant 0 : i32
    %c0_i32_0 = arith.constant 0 : i32
    %c0_i32_1 = arith.constant 0 : i32
    return %c0_i32, %c0_i32_0 : i32, i32
  }
  func.func @transform_7(%arg0: i32) -> (i32, i32) {
    %c0_i32 = arith.constant 0 : i32
    %c0_i32_0 = arith.constant 0 : i32
    %c0_i32_1 = arith.constant 0 : i32
    return %c0_i32, %c0_i32_0 : i32, i32
  }
  func.func @transform_8(%arg0: i32) -> (i32, i32) {
    %c0_i32 = arith.constant 0 : i32
    %c0_i32_0 = arith.constant 0 : i32
    %c0_i32_1 = arith.constant 0 : i32
    return %c0_i32, %c0_i32_0 : i32, i32
  }
  func.func @transform_9(%arg0: i32) -> (i32, i32) {
    %c0_i32 = arith.constant 0 : i32
    %c0_i32_0 = arith.constant 0 : i32
    %c0_i32_1 = arith.constant 0 : i32
    return %c0_i32, %c0_i32_0 : i32, i32
  }
  func.func @transform_10(%arg0: i32) -> (i32, i32) {
    %c0_i32 = arith.constant 0 : i32
    %c0_i32_0 = arith.constant 0 : i32
    %c0_i32_1 = arith.constant 0 : i32
    return %c0_i32, %c0_i32_0 : i32, i32
  }
  func.func @transform_11(%arg0: i32) -> (i32, i32) {
    %c0_i32 = arith.constant 0 : i32
    %c0_i32_0 = arith.constant 0 : i32
    %c0_i32_1 = arith.constant 0 : i32
    return %c0_i32, %c0_i32_0 : i32, i32
  }
  func.func @transform_12(%arg0: i32) -> (i32, i32) {
    %c0_i32 = arith.constant 0 : i32
    %c0_i32_0 = arith.constant 0 : i32
    %c0_i32_1 = arith.constant 0 : i32
    return %c0_i32, %c0_i32_0 : i32, i32
  }
  func.func @transform_13(%arg0: i32) -> (i32, i32) {
    %c0_i32 = arith.constant 0 : i32
    %c0_i32_0 = arith.constant 0 : i32
    %c0_i32_1 = arith.constant 0 : i32
    return %c0_i32, %c0_i32_0 : i32, i32
  }
  func.func @transform_14(%arg0: i32) -> (i32, i32) {
    %c0_i32 = arith.constant 0 : i32
    %c0_i32_0 = arith.constant 0 : i32
    %c0_i32_1 = arith.constant 0 : i32
    return %c0_i32, %c0_i32_0 : i32, i32
  }
  func.func @transform_15(%arg0: i32) -> (i32, i32, i32) {
    %c0_i32 = arith.constant 0 : i32
    %c0_i32_0 = arith.constant 0 : i32
    %c0_i32_1 = arith.constant 0 : i32
    return %arg0, %c0_i32, %c0_i32_0 : i32, i32, i32
  }
}

</mosaic_0001>

<llo_original>
// kernel: inception_forward.1
$region0: #{inception_forward.1}
  #allocation0 [shape = 'u32[]', space=smem, size = 0x4, offset = 0x4, fixed_abs, tag = 'smem constant byte address 0x4 - core index']
  #allocation1 [shape = 'u32[144,128]{1,0:T(1,128)}', space=vmem, size = 0x12000, scoped, tag = 'internal scratch']
  %s0 = inlined_call_operand.vmem [shape: f32[2,256,4], index: 0, kind: input, shape index: {}]
  %s1 = inlined_call_operand.vmem [shape: f32[4,32], index: 1, kind: input, shape index: {}]
  %s2 = inlined_call_operand.vmem [shape: f32[1,32], index: 2, kind: input, shape index: {}]
  %s3 = inlined_call_operand.vmem [shape: f32[4,32], index: 3, kind: input, shape index: {}]
  %s4 = inlined_call_operand.vmem [shape: f32[1,32], index: 4, kind: input, shape index: {}]
  %s5 = inlined_call_operand.vmem [shape: f32[4,24], index: 5, kind: input, shape index: {}]
  %s6 = inlined_call_operand.vmem [shape: f32[1,24], index: 6, kind: input, shape index: {}]
  %s7 = inlined_call_operand.vmem [shape: f32[216,32], index: 7, kind: input, shape index: {}]
  %s8 = inlined_call_operand.vmem [shape: f32[1,32], index: 8, kind: input, shape index: {}]
  %s9 = inlined_call_operand.vmem [shape: f32[4,24], index: 9, kind: input, shape index: {}]
  %s10 = inlined_call_operand.vmem [shape: f32[1,24], index: 10, kind: input, shape index: {}]
  %s11 = inlined_call_operand.hbm [shape: f32[216,32], index: 11, kind: input, shape index: {}]
  %s12 = inlined_call_operand.vmem [shape: f32[1,32], index: 12, kind: input, shape index: {}]
  %s13 = inlined_call_operand.vmem [shape: f32[288,32], index: 13, kind: input, shape index: {}]
  %s14 = inlined_call_operand.vmem [shape: f32[1,32], index: 14, kind: input, shape index: {}]
  %s15 = inlined_call_operand.hbm [shape: f32[2,256,128], index: 15, kind: output, shape index: {}]
  %s16 = sld [smem:[#allocation0]]
  $region97: #{inception_forward.1} parent=0
    _
  %s18 = ssub.s32 1, %s16
  %s19 = scalar_select 0, %s18, %s16
  $region1: #{inception_forward.1} parent=0
    #allocation2 [shape = 'u8[110592]{0}', space=vmem, size = 0x1b000, scoped, tag = 'input window, operand 11, single buffered']
    #allocation3 [shape = 's32[2]{0}', space=sflag, size = 0x8, scoped, tag = 'scoped memory for inception_forward.1']
    #allocation4 [shape = 's32[2]{0}', space=sflag, size = 0x8, scoped, tag = 'scoped memory for inception_forward.1']
    #allocation5 [shape = 'u8[262144]{0}', space=vmem, size = 0x40000, scoped, tag = 'output window, operand 0']
    %20 = vsyncpa [#allocation3], 0
    %21 = vsyncpa [#allocation4], 0
    %s22 = scalar_lea.sflag [#allocation4], 1
    %23 = vsyncpa %s22, 0
    loop: start=0, step=1, limit=4
    $region2: #{inception_forward.1} parent=1 // loop_pre_header
      _
    $region3: #{inception_forward.1} parent=1 // loop_header
      %s25 = sphi 0, %s29
      %p26 = scmp.ge.s32.totalorder %s25, 4
      %s35 = sphi 0, %s37
      %s38 = sphi 0, %s35
      %s39 = sphi 0, %s38
      %s55 = sphi 0, %s39
      %s59 = sphi 0, %s59
      %s61 = sphi 0, %s59
      %s62 = sphi 0, %s61
      %s76 = sphi 0, %s62
      %s80 = sphi 0, %s80
      %s82 = sphi 0, %s80
      %s83 = sphi 0, %s82
      %s97 = sphi 0, %s83
      %s101 = sphi 0, %s101
      %s103 = sphi 0, %s101
      %s104 = sphi 0, %s103
      %s118 = sphi 0, %s104
      %s122 = sphi 0, %s122
      %s124 = sphi 0, %s122
      %s125 = sphi 0, %s124
      %s139 = sphi 0, %s125
      %s143 = sphi 0, %s143
      %s145 = sphi 0, %s143
      %s146 = sphi 0, %s145
      %s160 = sphi 0, %s146
      %s164 = sphi 0, %s164
      %s166 = sphi 0, %s164
      %s167 = sphi 0, %s166
      %s181 = sphi 0, %s167
      %s185 = sphi 0, %s185
      %s187 = sphi 0, %s185
      %s188 = sphi 0, %s187
      %s202 = sphi 0, %s188
      %s206 = sphi 0, %s206
      %s208 = sphi 0, %s206
      %s209 = sphi 0, %s208
      %s223 = sphi 0, %s209
      %s227 = sphi 0, %s227
      %s229 = sphi 0, %s227
      %s230 = sphi 0, %s229
      %s244 = sphi 0, %s230
      %s248 = sphi 0, %s248
      %s250 = sphi 0, %s248
      %s251 = sphi 0, %s250
      %s265 = sphi 0, %s251
      %s269 = sphi 0, %s269
      %s271 = sphi 0, %s269
      %s272 = sphi 0, %s271
      %s286 = sphi 0, %s272
      %s290 = sphi 0, %s290
      %s292 = sphi 0, %s290
      %s293 = sphi 0, %s292
      %s307 = sphi 0, %s293
      %s311 = sphi 0, %s311
      %s313 = sphi 0, %s311
      %s314 = sphi 0, %s313
      %s328 = sphi 0, %s314
      %s332 = sphi 0, %s332
      %s334 = sphi 0, %s332
      %s335 = sphi 0, %s334
      %s349 = sphi 0, %s335
      %s355 = sphi 0, %s357
      %s358 = sphi 0, %s355
      %s359 = sphi 0, %s358
      %s375 = sphi 0, %s359
    $region4: #{inception_forward.1} parent=1 // loop_header_branch
      %28 = sbr.rel (%p26) target = $region8
    $region5: #{inception_forward.1} parent=1 // loop_body
      %s30 = ssub.s32 %s25, 1
      %s31 = ssub.s32 %s25, 2
      %s32 = sadd.s32 %s25, 1
      %s33 = ssub.s32 %s25, %s32
      %p34 = scmp.eq.s32.totalorder %s33, 0
      %s36 = sadd.s32 %s35, 1
      %s37 = scalar_select %p34, %s35, %s36
      %p40 = pneg %p34
      %p41 = scmp.eq.s32.totalorder %s25, 1
      %p42 = por %p40, %p41
      %p43 = scmp.ne.s32.totalorder %s35, %s38
      %p44 = scmp.eq.s32.totalorder %s25, 0
      %p45 = por %p43, %p44
      %p46 = scmp.ne.s32.totalorder %s35, %s38
      %p47 = scmp.eq.s32.totalorder %s30, 1
      %p48 = por %p46, %p47
      %p49 = scmp.ne.s32.totalorder %s38, %s39
      %p50 = scmp.eq.s32.totalorder %s30, 0
      %p51 = por %p49, %p50
      %p52 = scmp.ne.s32.totalorder %s38, %s39
      %p53 = scmp.eq.s32.totalorder %s31, 1
      %p54 = por %p52, %p53
      %p56 = scmp.ne.s32.totalorder %s39, %s55
      %p57 = scmp.eq.s32.totalorder %s31, 0
      %p58 = por %p56, %p57
      %s60 = sadd.s32 %s59, 1
      %p63 = scmp.eq.s32.totalorder %s25, 1
      %p64 = scmp.ne.s32.totalorder %s59, %s61
      %p65 = scmp.eq.s32.totalorder %s25, 0
      %p66 = por %p64, %p65
      %p67 = scmp.ne.s32.totalorder %s59, %s61
      %p68 = scmp.eq.s32.totalorder %s30, 1
      %p69 = por %p67, %p68
      %p70 = scmp.ne.s32.totalorder %s61, %s62
      %p71 = scmp.eq.s32.totalorder %s30, 0
      %p72 = por %p70, %p71
      %p73 = scmp.ne.s32.totalorder %s61, %s62
      %p74 = scmp.eq.s32.totalorder %s31, 1
      %p75 = por %p73, %p74
      %p77 = scmp.ne.s32.totalorder %s62, %s76
      %p78 = scmp.eq.s32.totalorder %s31, 0
      %p79 = por %p77, %p78
      %s81 = sadd.s32 %s80, 1
      %p84 = scmp.eq.s32.totalorder %s25, 1
      %p85 = scmp.ne.s32.totalorder %s80, %s82
      %p86 = scmp.eq.s32.totalorder %s25, 0
      %p87 = por %p85, %p86
      %p88 = scmp.ne.s32.totalorder %s80, %s82
      %p89 = scmp.eq.s32.totalorder %s30, 1
      %p90 = por %p88, %p89
      %p91 = scmp.ne.s32.totalorder %s82, %s83
      %p92 = scmp.eq.s32.totalorder %s30, 0
      %p93 = por %p91, %p92
      %p94 = scmp.ne.s32.totalorder %s82, %s83
      %p95 = scmp.eq.s32.totalorder %s31, 1
      %p96 = por %p94, %p95
      %p98 = scmp.ne.s32.totalorder %s83, %s97
      %p99 = scmp.eq.s32.totalorder %s31, 0
      %p100 = por %p98, %p99
      %s102 = sadd.s32 %s101, 1
      %p105 = scmp.eq.s32.totalorder %s25, 1
      %p106 = scmp.ne.s32.totalorder %s101, %s103
      %p107 = scmp.eq.s32.totalorder %s25, 0
      %p108 = por %p106, %p107
      %p109 = scmp.ne.s32.totalorder %s101, %s103
      %p110 = scmp.eq.s32.totalorder %s30, 1
      %p111 = por %p109, %p110
      %p112 = scmp.ne.s32.totalorder %s103, %s104
      %p113 = scmp.eq.s32.totalorder %s30, 0
      %p114 = por %p112, %p113
      %p115 = scmp.ne.s32.totalorder %s103, %s104
      %p116 = scmp.eq.s32.totalorder %s31, 1
      %p117 = por %p115, %p116
      %p119 = scmp.ne.s32.totalorder %s104, %s118
      %p120 = scmp.eq.s32.totalorder %s31, 0
      %p121 = por %p119, %p120
      %s123 = sadd.s32 %s122, 1
      %p126 = scmp.eq.s32.totalorder %s25, 1
      %p127 = scmp.ne.s32.totalorder %s122, %s124
      %p128 = scmp.eq.s32.totalorder %s25, 0
      %p129 = por %p127, %p128
      %p130 = scmp.ne.s32.totalorder %s122, %s124
      %p131 = scmp.eq.s32.totalorder %s30, 1
      %p132 = por %p130, %p131
      %p133 = scmp.ne.s32.totalorder %s124, %s125
      %p134 = scmp.eq.s32.totalorder %s30, 0
      %p135 = por %p133, %p134
      %p136 = scmp.ne.s32.totalorder %s124, %s125
      %p137 = scmp.eq.s32.totalorder %s31, 1
      %p138 = por %p136, %p137
      %p140 = scmp.ne.s32.totalorder %s125, %s139
      %p141 = scmp.eq.s32.totalorder %s31, 0
      %p142 = por %p140, %p141
      %s144 = sadd.s32 %s143, 1
      %p147 = scmp.eq.s32.totalorder %s25, 1
      %p148 = scmp.ne.s32.totalorder %s143, %s145
      %p149 = scmp.eq.s32.totalorder %s25, 0
      %p150 = por %p148, %p149
      %p151 = scmp.ne.s32.totalorder %s143, %s145
      %p152 = scmp.eq.s32.totalorder %s30, 1
      %p153 = por %p151, %p152
      %p154 = scmp.ne.s32.totalorder %s145, %s146
      %p155 = scmp.eq.s32.totalorder %s30, 0
      %p156 = por %p154, %p155
      %p157 = scmp.ne.s32.totalorder %s145, %s146
      %p158 = scmp.eq.s32.totalorder %s31, 1
      %p159 = por %p157, %p158
      %p161 = scmp.ne.s32.totalorder %s146, %s160
      %p162 = scmp.eq.s32.totalorder %s31, 0
      %p163 = por %p161, %p162
      %s165 = sadd.s32 %s164, 1
      %p168 = scmp.eq.s32.totalorder %s25, 1
      %p169 = scmp.ne.s32.totalorder %s164, %s166
      %p170 = scmp.eq.s32.totalorder %s25, 0
      %p171 = por %p169, %p170
      %p172 = scmp.ne.s32.totalorder %s164, %s166
      %p173 = scmp.eq.s32.totalorder %s30, 1
      %p174 = por %p172, %p173
      %p175 = scmp.ne.s32.totalorder %s166, %s167
      %p176 = scmp.eq.s32.totalorder %s30, 0
      %p177 = por %p175, %p176
      %p178 = scmp.ne.s32.totalorder %s166, %s167
      %p179 = scmp.eq.s32.totalorder %s31, 1
      %p180 = por %p178, %p179
      %p182 = scmp.ne.s32.totalorder %s167, %s181
      %p183 = scmp.eq.s32.totalorder %s31, 0
      %p184 = por %p182, %p183
      %s186 = sadd.s32 %s185, 1
      %p189 = scmp.eq.s32.totalorder %s25, 1
      %p190 = scmp.ne.s32.totalorder %s185, %s187
      %p191 = scmp.eq.s32.totalorder %s25, 0
      %p192 = por %p190, %p191
      %p193 = scmp.ne.s32.totalorder %s185, %s187
      %p194 = scmp.eq.s32.totalorder %s30, 1
      %p195 = por %p193, %p194
      %p196 = scmp.ne.s32.totalorder %s187, %s188
      %p197 = scmp.eq.s32.totalorder %s30, 0
      %p198 = por %p196, %p197
      %p199 = scmp.ne.s32.totalorder %s187, %s188
      %p200 = scmp.eq.s32.totalorder %s31, 1
      %p201 = por %p199, %p200
      %p203 = scmp.ne.s32.totalorder %s188, %s202
      %p204 = scmp.eq.s32.totalorder %s31, 0
      %p205 = por %p203, %p204
      %s207 = sadd.s32 %s206, 1
      %p210 = scmp.eq.s32.totalorder %s25, 1
      %p211 = scmp.ne.s32.totalorder %s206, %s208
      %p212 = scmp.eq.s32.totalorder %s25, 0
      %p213 = por %p211, %p212
      %p214 = scmp.ne.s32.totalorder %s206, %s208
      %p215 = scmp.eq.s32.totalorder %s30, 1
      %p216 = por %p214, %p215
      %p217 = scmp.ne.s32.totalorder %s208, %s209
      %p218 = scmp.eq.s32.totalorder %s30, 0
      %p219 = por %p217, %p218
      %p220 = scmp.ne.s32.totalorder %s208, %s209
      %p221 = scmp.eq.s32.totalorder %s31, 1
      %p222 = por %p220, %p221
      %p224 = scmp.ne.s32.totalorder %s209, %s223
      %p225 = scmp.eq.s32.totalorder %s31, 0
      %p226 = por %p224, %p225
      %s228 = sadd.s32 %s227, 1
      %p231 = scmp.eq.s32.totalorder %s25, 1
      %p232 = scmp.ne.s32.totalorder %s227, %s229
      %p233 = scmp.eq.s32.totalorder %s25, 0
      %p234 = por %p232, %p233
      %p235 = scmp.ne.s32.totalorder %s227, %s229
      %p236 = scmp.eq.s32.totalorder %s30, 1
      %p237 = por %p235, %p236
      %p238 = scmp.ne.s32.totalorder %s229, %s230
      %p239 = scmp.eq.s32.totalorder %s30, 0
      %p240 = por %p238, %p239
      %p241 = scmp.ne.s32.totalorder %s229, %s230
      %p242 = scmp.eq.s32.totalorder %s31, 1
      %p243 = por %p241, %p242
      %p245 = scmp.ne.s32.totalorder %s230, %s244
      %p246 = scmp.eq.s32.totalorder %s31, 0
      %p247 = por %p245, %p246
      %s249 = sadd.s32 %s248, 1
      %p252 = scmp.eq.s32.totalorder %s25, 1
      %p253 = scmp.ne.s32.totalorder %s248, %s250
      %p254 = scmp.eq.s32.totalorder %s25, 0
      %p255 = por %p253, %p254
      %p256 = scmp.ne.s32.totalorder %s248, %s250
      %p257 = scmp.eq.s32.totalorder %s30, 1
      %p258 = por %p256, %p257
      %p259 = scmp.ne.s32.totalorder %s250, %s251
      %p260 = scmp.eq.s32.totalorder %s30, 0
      %p261 = por %p259, %p260
      %p262 = scmp.ne.s32.totalorder %s250, %s251
      %p263 = scmp.eq.s32.totalorder %s31, 1
      %p264 = por %p262, %p263
      %p266 = scmp.ne.s32.totalorder %s251, %s265
      %p267 = scmp.eq.s32.totalorder %s31, 0
      %p268 = por %p266, %p267
      %s270 = sadd.s32 %s269, 1
      %p273 = scmp.eq.s32.totalorder %s25, 1
      %p274 = scmp.ne.s32.totalorder %s269, %s271
      %p275 = scmp.eq.s32.totalorder %s25, 0
      %p276 = por %p274, %p275
      %p277 = scmp.ne.s32.totalorder %s269, %s271
      %p278 = scmp.eq.s32.totalorder %s30, 1
      %p279 = por %p277, %p278
      %p280 = scmp.ne.s32.totalorder %s271, %s272
      %p281 = scmp.eq.s32.totalorder %s30, 0
      %p282 = por %p280, %p281
      %p283 = scmp.ne.s32.totalorder %s271, %s272
      %p284 = scmp.eq.s32.totalorder %s31, 1
      %p285 = por %p283, %p284
      %p287 = scmp.ne.s32.totalorder %s272, %s286
      %p288 = scmp.eq.s32.totalorder %s31, 0
      %p289 = por %p287, %p288
      %s291 = sadd.s32 %s290, 1
      %p294 = scmp.eq.s32.totalorder %s25, 1
      %p295 = scmp.ne.s32.totalorder %s290, %s292
      %p296 = scmp.eq.s32.totalorder %s25, 0
      %p297 = por %p295, %p296
      %p298 = scmp.ne.s32.totalorder %s290, %s292
      %p299 = scmp.eq.s32.totalorder %s30, 1
      %p300 = por %p298, %p299
      %p301 = scmp.ne.s32.totalorder %s292, %s293
      %p302 = scmp.eq.s32.totalorder %s30, 0
      %p303 = por %p301, %p302
      %p304 = scmp.ne.s32.totalorder %s292, %s293
      %p305 = scmp.eq.s32.totalorder %s31, 1
      %p306 = por %p304, %p305
      %p308 = scmp.ne.s32.totalorder %s293, %s307
      %p309 = scmp.eq.s32.totalorder %s31, 0
      %p310 = por %p308, %p309
      %s312 = sadd.s32 %s311, 1
      %p315 = scmp.eq.s32.totalorder %s25, 1
      %p316 = scmp.ne.s32.totalorder %s311, %s313
      %p317 = scmp.eq.s32.totalorder %s25, 0
      %p318 = por %p316, %p317
      %p319 = scmp.ne.s32.totalorder %s311, %s313
      %p320 = scmp.eq.s32.totalorder %s30, 1
      %p321 = por %p319, %p320
      %p322 = scmp.ne.s32.totalorder %s313, %s314
      %p323 = scmp.eq.s32.totalorder %s30, 0
      %p324 = por %p322, %p323
      %p325 = scmp.ne.s32.totalorder %s313, %s314
      %p326 = scmp.eq.s32.totalorder %s31, 1
      %p327 = por %p325, %p326
      %p329 = scmp.ne.s32.totalorder %s314, %s328
      %p330 = scmp.eq.s32.totalorder %s31, 0
      %p331 = por %p329, %p330
      %s333 = sadd.s32 %s332, 1
      %p336 = scmp.eq.s32.totalorder %s25, 1
      %p337 = scmp.ne.s32.totalorder %s332, %s334
      %p338 = scmp.eq.s32.totalorder %s25, 0
      %p339 = por %p337, %p338
      %p340 = scmp.ne.s32.totalorder %s332, %s334
      %p341 = scmp.eq.s32.totalorder %s30, 1
      %p342 = por %p340, %p341
      %p343 = scmp.ne.s32.totalorder %s334, %s335
      %p344 = scmp.eq.s32.totalorder %s30, 0
      %p345 = por %p343, %p344
      %p346 = scmp.ne.s32.totalorder %s334, %s335
      %p347 = scmp.eq.s32.totalorder %s31, 1
      %p348 = por %p346, %p347
      %p350 = scmp.ne.s32.totalorder %s335, %s349
      %p351 = scmp.eq.s32.totalorder %s31, 0
      %p352 = por %p350, %p351
      %s353 = ssub.s32 %s25, %s32
      %p354 = scmp.eq.s32.totalorder %s353, 0
      %s356 = sadd.s32 %s355, 1
      %s357 = scalar_select %p354, %s355, %s356
      %p360 = pneg %p354
      %p361 = scmp.eq.s32.totalorder %s25, 1
      %p362 = por %p360, %p361
      %p363 = scmp.ne.s32.totalorder %s355, %s358
      %p364 = scmp.eq.s32.totalorder %s25, 0
      %p365 = por %p363, %p364
      %p366 = scmp.ne.s32.totalorder %s355, %s358
      %p367 = scmp.eq.s32.totalorder %s30, 1
      %p368 = por %p366, %p367
      %p369 = scmp.ne.s32.totalorder %s358, %s359
      %p370 = scmp.eq.s32.totalorder %s30, 0
      %p371 = por %p369, %p370
      %p372 = scmp.ne.s32.totalorder %s358, %s359
      %p373 = scmp.eq.s32.totalorder %s31, 1
      %p374 = por %p372, %p373
      %p376 = scmp.ne.s32.totalorder %s359, %s375
      %p377 = scmp.eq.s32.totalorder %s31, 0
      %p378 = por %p376, %p377
      %p379 = scmp.le.s32.totalorder 1, %s25
      %p380 = scmp.lt.s32.totalorder %s25, 3
      %p381 = pnand %p379, %p380
      %p382 = pneg %p381
      // Predicated region
      $region9: #{inception_forward.1} parent=5 // pred_check
        _
      $region10: #{inception_forward.1} parent=5 // pred_check_branch
        %384 = sbr.rel (%p381) target = $region12
      $region11: #{inception_forward.1} parent=5 // pred_region
        %s385 = ssub.s32 %s25, 1
        // Predicated region
        $region13: #{inception_forward.1} parent=11 // pred_check
          %p386 = pneg %p72
        $region14: #{inception_forward.1} parent=11 // pred_check_branch
          %388 = sbr.rel (%p386) target = $region16
        $region15: #{inception_forward.1} parent=11 // pred_region
          _
        $region16: #{inception_forward.1} parent=11 // pred_fallthru
          _
        // Predicated region
        $region17: #{inception_forward.1} parent=11 // pred_check
          %p389 = pneg %p93
        $region18: #{inception_forward.1} parent=11 // pred_check_branch
          %391 = sbr.rel (%p389) target = $region20
        $region19: #{inception_forward.1} parent=11 // pred_region
          _
        $region20: #{inception_forward.1} parent=11 // pred_fallthru
          _
        // Predicated region
        $region21: #{inception_forward.1} parent=11 // pred_check
          %p392 = pneg %p114
        $region22: #{inception_forward.1} parent=11 // pred_check_branch
          %394 = sbr.rel (%p392) target = $region24
        $region23: #{inception_forward.1} parent=11 // pred_region
          _
        $region24: #{inception_forward.1} parent=11 // pred_fallthru
          _
        // Predicated region
        $region25: #{inception_forward.1} parent=11 // pred_check
          %p395 = pneg %p135
        $region26: #{inception_forward.1} parent=11 // pred_check_branch
          %397 = sbr.rel (%p395) target = $region28
        $region27: #{inception_forward.1} parent=11 // pred_region
          _
        $region28: #{inception_forward.1} parent=11 // pred_fallthru
          _
        // Predicated region
        $region29: #{inception_forward.1} parent=11 // pred_check
          %p398 = pneg %p156
        $region30: #{inception_forward.1} parent=11 // pred_check_branch
          %400 = sbr.rel (%p398) target = $region32
        $region31: #{inception_forward.1} parent=11 // pred_region
          _
        $region32: #{inception_forward.1} parent=11 // pred_fallthru
          _
        // Predicated region
        $region33: #{inception_forward.1} parent=11 // pred_check
          %p401 = pneg %p177
        $region34: #{inception_forward.1} parent=11 // pred_check_branch
          %403 = sbr.rel (%p401) target = $region36
        $region35: #{inception_forward.1} parent=11 // pred_region
          _
        $region36: #{inception_forward.1} parent=11 // pred_fallthru
          _
        // Predicated region
        $region37: #{inception_forward.1} parent=11 // pred_check
          %p404 = pneg %p198
        $region38: #{inception_forward.1} parent=11 // pred_check_branch
          %406 = sbr.rel (%p404) target = $region40
        $region39: #{inception_forward.1} parent=11 // pred_region
          _
        $region40: #{inception_forward.1} parent=11 // pred_fallthru
          _
        // Predicated region
        $region41: #{inception_forward.1} parent=11 // pred_check
          %p407 = pneg %p219
        $region42: #{inception_forward.1} parent=11 // pred_check_branch
          %409 = sbr.rel (%p407) target = $region44
        $region43: #{inception_forward.1} parent=11 // pred_region
          _
        $region44: #{inception_forward.1} parent=11 // pred_fallthru
          _
        // Predicated region
        $region45: #{inception_forward.1} parent=11 // pred_check
          %p410 = pneg %p240
        $region46: #{inception_forward.1} parent=11 // pred_check_branch
          %412 = sbr.rel (%p410) target = $region48
        $region47: #{inception_forward.1} parent=11 // pred_region
          _
        $region48: #{inception_forward.1} parent=11 // pred_fallthru
          _
        // Predicated region
        $region49: #{inception_forward.1} parent=11 // pred_check
          %p413 = pneg %p261
        $region50: #{inception_forward.1} parent=11 // pred_check_branch
          %415 = sbr.rel (%p413) target = $region52
        $region51: #{inception_forward.1} parent=11 // pred_region
          _
        $region52: #{inception_forward.1} parent=11 // pred_fallthru
          _
        // Predicated region
        $region53: #{inception_forward.1} parent=11 // pred_check
          %p416 = pneg %p282
        $region54: #{inception_forward.1} parent=11 // pred_check_branch
          %418 = sbr.rel (%p416) target = $region56
        $region55: #{inception_forward.1} parent=11 // pred_region
          %s420 = ssub.s32 3456, 3456
          %421 = vsyncadd [#allocation3], %s420
          %s422 = sshll.u32 [#allocation2], 4
          %s423 = int_to_ptr.vmem [resolvable:$true] %s422
          %428 = dma.hbm_to_vmem [thread:$0]  %s11, 3456, %s423, [#allocation3], 128, 128, 8
        $region56: #{inception_forward.1} parent=11 // pred_fallthru
          _
        // Predicated region
        $region57: #{inception_forward.1} parent=11 // pred_check
          %p429 = pneg %p303
        $region58: #{inception_forward.1} parent=11 // pred_check_branch
          %431 = sbr.rel (%p429) target = $region60
        $region59: #{inception_forward.1} parent=11 // pred_region
          _
        $region60: #{inception_forward.1} parent=11 // pred_fallthru
          _
        // Predicated region
        $region61: #{inception_forward.1} parent=11 // pred_check
          %p432 = pneg %p324
        $region62: #{inception_forward.1} parent=11 // pred_check_branch
          %434 = sbr.rel (%p432) target = $region64
        $region63: #{inception_forward.1} parent=11 // pred_region
          _
        $region64: #{inception_forward.1} parent=11 // pred_fallthru
          _
        // Predicated region
        $region65: #{inception_forward.1} parent=11 // pred_check
          %p435 = pneg %p345
        $region66: #{inception_forward.1} parent=11 // pred_check_branch
          %437 = sbr.rel (%p435) target = $region68
        $region67: #{inception_forward.1} parent=11 // pred_region
          _
        $region68: #{inception_forward.1} parent=11 // pred_fallthru
          _
      $region12: #{inception_forward.1} parent=5 // pred_fallthru
        _
      %p438 = scmp.lt.s32.totalorder %s25, 2
      // Predicated region
      $region69: #{inception_forward.1} parent=5 // pred_check
        %p439 = pneg %p438
      $region70: #{inception_forward.1} parent=5 // pred_check_branch
        %441 = sbr.rel (%p439) target = $region72
      $region71: #{inception_forward.1} parent=5 // pred_region
        // Predicated region
        $region73: #{inception_forward.1} parent=71 // pred_check
          %p442 = pneg %p45
        $region74: #{inception_forward.1} parent=71 // pred_check_branch
          %444 = sbr.rel (%p442) target = $region76
        $region75: #{inception_forward.1} parent=71 // pred_region
          %p445 = scmp.lt.s32.totalorder %s25, 1
          %s446 = scalar_select %p445, %s25, 1
          %s447 = smul.addr %s446, 32
          %s448 = smul.addr %s447, 8
          %s449 = scalar_lea.vmem %s0, %s448
        $region76: #{inception_forward.1} parent=71 // pred_fallthru
          _
      $region72: #{inception_forward.1} parent=5 // pred_fallthru
        _
      %p450 = scmp.le.s32.totalorder 1, %s25
      %p451 = scmp.lt.s32.totalorder %s25, 3
      %p452 = pnand %p450, %p451
      %p453 = pneg %p452
      // Predicated region
      $region77: #{inception_forward.1} parent=5 // pred_check
        _
      $region78: #{inception_forward.1} parent=5 // pred_check_branch
        %455 = sbr.rel (%p452) target = $region80
      $region79: #{inception_forward.1} parent=5 // pred_region
        %s456 = ssub.s32 %s25, 1
        // Predicated region
        $region81: #{inception_forward.1} parent=79 // pred_check
          %p457 = pneg %p282
        $region82: #{inception_forward.1} parent=79 // pred_check_branch
          %459 = sbr.rel (%p457) target = $region84
        $region83: #{inception_forward.1} parent=79 // pred_region
          %460 = dma.done [#allocation3], 3456
        $region84: #{inception_forward.1} parent=79 // pred_fallthru
          _
        %p461 = scmp.lt.s32.totalorder %s30, 1
        %s462 = scalar_select %p461, %s30, 1
        %s463 = smul.addr %s462, 32
        %s464 = smul.addr %s463, 8
        %s465 = scalar_lea.vmem %s0, %s464
        %p466 = pneg %p51
        %p467 = pneg %p48
        %p468 = pneg %p72
        %p469 = pneg %p69
        %p470 = pneg %p93
        %p471 = pneg %p90
        %p472 = pneg %p114
        %p473 = pneg %p111
        %p474 = pneg %p135
        %p475 = pneg %p132
        %p476 = pneg %p156
        %p477 = pneg %p153
        %p478 = pneg %p177
        %p479 = pneg %p174
        %p480 = pneg %p198
        %p481 = pneg %p195
        %p482 = pneg %p219
        %p483 = pneg %p216
        %p484 = pneg %p240
        %p485 = pneg %p237
        %p486 = pneg %p261
        %p487 = pneg %p258
        %p488 = pneg %p282
        %p489 = pneg %p279
        %p490 = pneg %p303
        %p491 = pneg %p300
        %p492 = pneg %p324
        %p493 = pneg %p321
        %p494 = pneg %p345
        %p495 = pneg %p342
        %p496 = pneg %p371
        %p497 = pneg %p368
        %s498 = sand.u32 %s358, 1
        %s499 = scalar_lea.sflag [#allocation4], %s498
        %s500 = sand.u32 %s358, 1
        %s501 = smul.addr %s500, 256
        %s502 = scalar_lea.vmem [#allocation5], %s501
        %p503 = scmp.lt.s32.totalorder %s30, 1
        %s504 = scalar_select %p503, %s30, 1
        %s505 = smul.addr %s504, 32
        %s506 = smul.addr %s505, 8
        %s507 = scalar_lea.vmem %s0, %s506
        %v508 = vld [vmem:[%s507] sm:$0xff]
        %v509 = vld [vmem:[%s507 + $0x8] sm:$0xff]
        %v510 = vld [vmem:[%s507 + $0x10] sm:$0xff]
        %v511 = vld [vmem:[%s507 + $0x18] sm:$0xff]
        %v512 = vld [vmem:[%s507 + $0x20] sm:$0xff]
        %v513 = vld [vmem:[%s507 + $0x28] sm:$0xff]
        %v514 = vld [vmem:[%s507 + $0x30] sm:$0xff]
        %v515 = vld [vmem:[%s507 + $0x38] sm:$0xff]
        %v516 = vld [vmem:[%s507 + $0x40] sm:$0xff]
        %v517 = vld [vmem:[%s507 + $0x48] sm:$0xff]
        %v518 = vld [vmem:[%s507 + $0x50] sm:$0xff]
        %v519 = vld [vmem:[%s507 + $0x58] sm:$0xff]
        %v520 = vld [vmem:[%s507 + $0x60] sm:$0xff]
        %v521 = vld [vmem:[%s507 + $0x68] sm:$0xff]
        %v522 = vld [vmem:[%s507 + $0x70] sm:$0xff]
        %v523 = vld [vmem:[%s507 + $0x78] sm:$0xff]
        %v524 = vld [vmem:[%s507 + $0x80] sm:$0xff]
        %v525 = vld [vmem:[%s507 + $0x88] sm:$0xff]
        %v526 = vld [vmem:[%s507 + $0x90] sm:$0xff]
        %v527 = vld [vmem:[%s507 + $0x98] sm:$0xff]
        %v528 = vld [vmem:[%s507 + $0xa0] sm:$0xff]
        %v529 = vld [vmem:[%s507 + $0xa8] sm:$0xff]
        %v530 = vld [vmem:[%s507 + $0xb0] sm:$0xff]
        %v531 = vld [vmem:[%s507 + $0xb8] sm:$0xff]
        %v532 = vld [vmem:[%s507 + $0xc0] sm:$0xff]
        %v533 = vld [vmem:[%s507 + $0xc8] sm:$0xff]
        %v534 = vld [vmem:[%s507 + $0xd0] sm:$0xff]
        %v535 = vld [vmem:[%s507 + $0xd8] sm:$0xff]
        %v536 = vld [vmem:[%s507 + $0xe0] sm:$0xff]
        %v537 = vld [vmem:[%s507 + $0xe8] sm:$0xff]
        %v538 = vld [vmem:[%s507 + $0xf0] sm:$0xff]
        %v539 = vld [vmem:[%s507 + $0xf8] sm:$0xff]
        %v540 = vld [vmem:[%s1] sm:$0xf]
        %v541 = vld [vmem:[%s2] sm:$0x1]
        %v543 = vlaneseq
        %v544 = vshrl.u32 %v543, 7
        %v545 = vsub.s32 0, %v544
        %v546 = vrot.slane %v541, %v545
        %vm548 = vcmask 31744
        %v550 = vsel %vm548, %v508, 0
        %v553 = vsel %vm548, %v509, 0
        %v556 = vsel %vm548, %v510, 0
        %v559 = vsel %vm548, %v511, 0
        %v562 = vsel %vm548, %v512, 0
        %v565 = vsel %vm548, %v513, 0
        %v568 = vsel %vm548, %v514, 0
        %v571 = vsel %vm548, %v515, 0
        %v574 = vsel %vm548, %v516, 0
        %v577 = vsel %vm548, %v517, 0
        %v580 = vsel %vm548, %v518, 0
        %v583 = vsel %vm548, %v519, 0
        %v586 = vsel %vm548, %v520, 0
        %v589 = vsel %vm548, %v521, 0
        %v592 = vsel %vm548, %v522, 0
        %v595 = vsel %vm548, %v523, 0
        %v598 = vsel %vm548, %v524, 0
        %v601 = vsel %vm548, %v525, 0
        %v604 = vsel %vm548, %v526, 0
        %v607 = vsel %vm548, %v527, 0
        %v610 = vsel %vm548, %v528, 0
        %v613 = vsel %vm548, %v529, 0
        %v616 = vsel %vm548, %v530, 0
        %v619 = vsel %vm548, %v531, 0
        %v622 = vsel %vm548, %v532, 0
        %v625 = vsel %vm548, %v533, 0
        %v628 = vsel %vm548, %v534, 0
        %v631 = vsel %vm548, %v535, 0
        %v634 = vsel %vm548, %v536, 0
        %v637 = vsel %vm548, %v537, 0
        %v640 = vsel %vm548, %v538, 0
        %v643 = vsel %vm548, %v539, 0
        %vm645 = vcmask 1043456
        %v647 = vsel %vm645, %v540, 0
        %649 = vmatprep.subr.mxu0 0.0
        %650 = vmatpush1.msra.mxu0 %v647
        %651 = vmatprep.subr.mxu0 0.0
        %652 = vmatpush1.msra.mxu0 0.0
        %653 = vmatprep.subr.mxu0 0.0
        %654 = vmatpush1.msra.mxu0 0.0
        %655 = vmatprep.subr.mxu0 0.0
        %656 = vmatpush1.msra.mxu0 0.0
        %657 = vmatprep.subr.mxu0 0.0
        %658 = vmatpush1.msra.mxu0 0.0
        %659 = vmatprep.subr.mxu0 0.0
        %660 = vmatpush1.msra.mxu0 0.0
        %661 = vmatprep.subr.mxu0 0.0
        %662 = vmatpush1.msra.mxu0 0.0
        %663 = vmatprep.subr.mxu0 0.0
        %664 = vmatpush1.msra.mxu0 0.0
        %665 = vmatprep.subr.mxu0 0.0
        %666 = vmatpush1.msra.mxu0 0.0
        %667 = vmatprep.subr.mxu0 0.0
        %668 = vmatpush1.msra.mxu0 0.0
        %669 = vmatprep.subr.mxu0 0.0
        %670 = vmatpush1.msra.mxu0 0.0
        %671 = vmatprep.subr.mxu0 0.0
        %672 = vmatpush1.msra.mxu0 0.0
        %673 = vmatprep.subr.mxu0 0.0
        %674 = vmatpush1.msra.mxu0 0.0
        %675 = vmatprep.subr.mxu0 0.0
        %676 = vmatpush1.msra.mxu0 0.0
        %677 = vmatprep.subr.mxu0 0.0
        %678 = vmatpush1.msra.mxu0 0.0
        %679 = vmatprep.subr.mxu0 0.0
        %680 = vmatpush1.msra.mxu0 0.0
        %681 = vmatprep.subr.mxu0 0.0
        %682 = vmatpush1.msra.mxu0 0.0
        %683 = vmatprep.subr.mxu0 0.0
        %684 = vmatpush1.msra.mxu0 0.0
        %685 = vmatprep.subr.mxu0 0.0
        %686 = vmatpush1.msra.mxu0 0.0
        %687 = vmatprep.subr.mxu0 0.0
        %688 = vmatpush1.msra.mxu0 0.0
        %689 = vmatprep.subr.mxu0 0.0
        %690 = vmatpush1.msra.mxu0 0.0
        %691 = vmatprep.subr.mxu0 0.0
        %692 = vmatpush1.msra.mxu0 0.0
        %693 = vmatprep.subr.mxu0 0.0
        %694 = vmatpush1.msra.mxu0 0.0
        %695 = vmatprep.subr.mxu0 0.0
        %696 = vmatpush1.msra.mxu0 0.0
        %697 = vmatprep.subr.mxu0 0.0
        %698 = vmatpush1.msra.mxu0 0.0
        %699 = vmatprep.subr.mxu0 0.0
        %700 = vmatpush1.msra.mxu0 0.0
        %701 = vmatprep.subr.mxu0 0.0
        %702 = vmatpush1.msra.mxu0 0.0
        %703 = vmatprep.subr.mxu0 0.0
        %704 = vmatpush1.msra.mxu0 0.0
        %705 = vmatprep.subr.mxu0 0.0
        %706 = vmatpush1.msra.mxu0 0.0
        %707 = vmatprep.subr.mxu0 0.0
        %708 = vmatpush1.msra.mxu0 0.0
        %709 = vmatprep.subr.mxu0 0.0
        %710 = vmatpush1.msra.mxu0 0.0
        %711 = vmatprep.subr.mxu0 0.0
        %712 = vmatpush1.msra.mxu0 0.0
        %713 = vmatprep.mubr.f32.mxu0 0.0
        %714 = vmatmul.mubr.f32.gmra.mrb[0].mxu0 %v550
        %v715 = vpop.f32.mrb[0].mxu0
        %v716 = vadd.f32 %v546, %v715
        %v717 = vpop.f32.mrb[0].mxu0
        %718 = vmatprep.mubr.f32.mxu0 0.0
        %719 = vmatmul.mubr.f32.gmra.mrb[0].mxu0 %v553
        %v720 = vpop.f32.mrb[0].mxu0
        %v721 = vadd.f32 %v546, %v720
        %v722 = vpop.f32.mrb[0].mxu0
        %723 = vmatprep.mubr.f32.mxu0 0.0
        %724 = vmatmul.mubr.f32.gmra.mrb[0].mxu0 %v556
        %v725 = vpop.f32.mrb[0].mxu0
        %v726 = vadd.f32 %v546, %v725
        %v727 = vpop.f32.mrb[0].mxu0
        %728 = vmatprep.mubr.f32.mxu0 0.0
        %729 = vmatmul.mubr.f32.gmra.mrb[0].mxu0 %v559
        %v730 = vpop.f32.mrb[0].mxu0
        %v731 = vadd.f32 %v546, %v730
        %v732 = vpop.f32.mrb[0].mxu0
        %733 = vmatprep.mubr.f32.mxu0 0.0
        %734 = vmatmul.mubr.f32.gmra.mrb[0].mxu0 %v562
        %v735 = vpop.f32.mrb[0].mxu0
        %v736 = vadd.f32 %v546, %v735
        %v737 = vpop.f32.mrb[0].mxu0
        %738 = vmatprep.mubr.f32.mxu0 0.0
        %739 = vmatmul.mubr.f32.gmra.mrb[0].mxu0 %v565
        %v740 = vpop.f32.mrb[0].mxu0
        %v741 = vadd.f32 %v546, %v740
        %v742 = vpop.f32.mrb[0].mxu0
        %743 = vmatprep.mubr.f32.mxu0 0.0
        %744 = vmatmul.mubr.f32.gmra.mrb[0].mxu0 %v568
        %v745 = vpop.f32.mrb[0].mxu0
        %v746 = vadd.f32 %v546, %v745
        %v747 = vpop.f32.mrb[0].mxu0
        %748 = vmatprep.mubr.f32.mxu0 0.0
        %749 = vmatmul.mubr.f32.gmra.mrb[0].mxu0 %v571
        %v750 = vpop.f32.mrb[0].mxu0
        %v751 = vadd.f32 %v546, %v750
        %v752 = vpop.f32.mrb[0].mxu0
        %753 = vmatprep.mubr.f32.mxu0 0.0
        %754 = vmatmul.mubr.f32.gmra.mrb[0].mxu0 %v574
        %v755 = vpop.f32.mrb[0].mxu0
        %v756 = vadd.f32 %v546, %v755
        %v757 = vpop.f32.mrb[0].mxu0
        %758 = vmatprep.mubr.f32.mxu0 0.0
        %759 = vmatmul.mubr.f32.gmra.mrb[0].mxu0 %v577
        %v760 = vpop.f32.mrb[0].mxu0
        %v761 = vadd.f32 %v546, %v760
        %v762 = vpop.f32.mrb[0].mxu0
        %763 = vmatprep.mubr.f32.mxu0 0.0
        %764 = vmatmul.mubr.f32.gmra.mrb[0].mxu0 %v580
        %v765 = vpop.f32.mrb[0].mxu0
        %v766 = vadd.f32 %v546, %v765
        %v767 = vpop.f32.mrb[0].mxu0
        %768 = vmatprep.mubr.f32.mxu0 0.0
        %769 = vmatmul.mubr.f32.gmra.mrb[0].mxu0 %v583
        %v770 = vpop.f32.mrb[0].mxu0
        %v771 = vadd.f32 %v546, %v770
        %v772 = vpop.f32.mrb[0].mxu0
        %773 = vmatprep.mubr.f32.mxu0 0.0
        %774 = vmatmul.mubr.f32.gmra.mrb[0].mxu0 %v586
        %v775 = vpop.f32.mrb[0].mxu0
        %v776 = vadd.f32 %v546, %v775
        %v777 = vpop.f32.mrb[0].mxu0
        %778 = vmatprep.mubr.f32.mxu0 0.0
        %779 = vmatmul.mubr.f32.gmra.mrb[0].mxu0 %v589
        %v780 = vpop.f32.mrb[0].mxu0
        %v781 = vadd.f32 %v546, %v780
        %v782 = vpop.f32.mrb[0].mxu0
        %783 = vmatprep.mubr.f32.mxu0 0.0
        %784 = vmatmul.mubr.f32.gmra.mrb[0].mxu0 %v592
        %v785 = vpop.f32.mrb[0].mxu0
        %v786 = vadd.f32 %v546, %v785
        %v787 = vpop.f32.mrb[0].mxu0
        %788 = vmatprep.mubr.f32.mxu0 0.0
        %789 = vmatmul.mubr.f32.gmra.mrb[0].mxu0 %v595
        %v790 = vpop.f32.mrb[0].mxu0
        %v791 = vadd.f32 %v546, %v790
        %v792 = vpop.f32.mrb[0].mxu0
        %793 = vmatprep.mubr.f32.mxu0 0.0
        %794 = vmatmul.mubr.f32.gmra.mrb[0].mxu0 %v598
        %v795 = vpop.f32.mrb[0].mxu0
        %v796 = vadd.f32 %v546, %v795
        %v797 = vpop.f32.mrb[0].mxu0
        %798 = vmatprep.mubr.f32.mxu0 0.0
        %799 = vmatmul.mubr.f32.gmra.mrb[0].mxu0 %v601
        %v800 = vpop.f32.mrb[0].mxu0
        %v801 = vadd.f32 %v546, %v800
        %v802 = vpop.f32.mrb[0].mxu0
        %803 = vmatprep.mubr.f32.mxu0 0.0
        %804 = vmatmul.mubr.f32.gmra.mrb[0].mxu0 %v604
        %v805 = vpop.f32.mrb[0].mxu0
        %v806 = vadd.f32 %v546, %v805
        %v807 = vpop.f32.mrb[0].mxu0
        %808 = vmatprep.mubr.f32.mxu0 0.0
        %809 = vmatmul.mubr.f32.gmra.mrb[0].mxu0 %v607
        %v810 = vpop.f32.mrb[0].mxu0
        %v811 = vadd.f32 %v546, %v810
        %v812 = vpop.f32.mrb[0].mxu0
        %813 = vmatprep.mubr.f32.mxu0 0.0
        %814 = vmatmul.mubr.f32.gmra.mrb[0].mxu0 %v610
        %v815 = vpop.f32.mrb[0].mxu0
        %v816 = vadd.f32 %v546, %v815
        %v817 = vpop.f32.mrb[0].mxu0
        %818 = vmatprep.mubr.f32.mxu0 0.0
        %819 = vmatmul.mubr.f32.gmra.mrb[0].mxu0 %v613
        %v820 = vpop.f32.mrb[0].mxu0
        %v821 = vadd.f32 %v546, %v820
        %v822 = vpop.f32.mrb[0].mxu0
        %823 = vmatprep.mubr.f32.mxu0 0.0
        %824 = vmatmul.mubr.f32.gmra.mrb[0].mxu0 %v616
        %v825 = vpop.f32.mrb[0].mxu0
        %v826 = vadd.f32 %v546, %v825
        %v827 = vpop.f32.mrb[0].mxu0
        %828 = vmatprep.mubr.f32.mxu0 0.0
        %829 = vmatmul.mubr.f32.gmra.mrb[0].mxu0 %v619
        %v830 = vpop.f32.mrb[0].mxu0
        %v831 = vadd.f32 %v546, %v830
        %v832 = vpop.f32.mrb[0].mxu0
        %833 = vmatprep.mubr.f32.mxu0 0.0
        %834 = vmatmul.mubr.f32.gmra.mrb[0].mxu0 %v622
        %v835 = vpop.f32.mrb[0].mxu0
        %v836 = vadd.f32 %v546, %v835
        %v837 = vpop.f32.mrb[0].mxu0
        %838 = vmatprep.mubr.f32.mxu0 0.0
        %839 = vmatmul.mubr.f32.gmra.mrb[0].mxu0 %v625
        %v840 = vpop.f32.mrb[0].mxu0
        %v841 = vadd.f32 %v546, %v840
        %v842 = vpop.f32.mrb[0].mxu0
        %843 = vmatprep.mubr.f32.mxu0 0.0
        %844 = vmatmul.mubr.f32.gmra.mrb[0].mxu0 %v628
        %v845 = vpop.f32.mrb[0].mxu0
        %v846 = vadd.f32 %v546, %v845
        %v847 = vpop.f32.mrb[0].mxu0
        %848 = vmatprep.mubr.f32.mxu0 0.0
        %849 = vmatmul.mubr.f32.gmra.mrb[0].mxu0 %v631
        %v850 = vpop.f32.mrb[0].mxu0
        %v851 = vadd.f32 %v546, %v850
        %v852 = vpop.f32.mrb[0].mxu0
        %853 = vmatprep.mubr.f32.mxu0 0.0
        %854 = vmatmul.mubr.f32.gmra.mrb[0].mxu0 %v634
        %v855 = vpop.f32.mrb[0].mxu0
        %v856 = vadd.f32 %v546, %v855
        %v857 = vpop.f32.mrb[0].mxu0
        %858 = vmatprep.mubr.f32.mxu0 0.0
        %859 = vmatmul.mubr.f32.gmra.mrb[0].mxu0 %v637
        %v860 = vpop.f32.mrb[0].mxu0
        %v861 = vadd.f32 %v546, %v860
        %v862 = vpop.f32.mrb[0].mxu0
        %863 = vmatprep.mubr.f32.mxu0 0.0
        %864 = vmatmul.mubr.f32.gmra.mrb[0].mxu0 %v640
        %v865 = vpop.f32.mrb[0].mxu0
        %v866 = vadd.f32 %v546, %v865
        %v867 = vpop.f32.mrb[0].mxu0
        %868 = vmatprep.mubr.f32.mxu0 0.0
        %869 = vmatmul.mubr.f32.gmra.mrb[0].mxu0 %v643
        %v870 = vpop.f32.mrb[0].mxu0
        %v871 = vadd.f32 %v546, %v870
        %v872 = vpop.f32.mrb[0].mxu0
        %873 = vdwg.mxu0
        %v874 = vmax.f32 %v716, 0.0
        %v875 = vmax.f32 %v721, 0.0
        %v876 = vmax.f32 %v726, 0.0
        %v877 = vmax.f32 %v731, 0.0
        %v878 = vmax.f32 %v736, 0.0
        %v879 = vmax.f32 %v741, 0.0
        %v880 = vmax.f32 %v746, 0.0
        %v881 = vmax.f32 %v751, 0.0
        %v882 = vmax.f32 %v756, 0.0
        %v883 = vmax.f32 %v761, 0.0
        %v884 = vmax.f32 %v766, 0.0
        %v885 = vmax.f32 %v771, 0.0
        %v886 = vmax.f32 %v776, 0.0
        %v887 = vmax.f32 %v781, 0.0
        %v888 = vmax.f32 %v786, 0.0
        %v889 = vmax.f32 %v791, 0.0
        %v890 = vmax.f32 %v796, 0.0
        %v891 = vmax.f32 %v801, 0.0
        %v892 = vmax.f32 %v806, 0.0
        %v893 = vmax.f32 %v811, 0.0
        %v894 = vmax.f32 %v816, 0.0
        %v895 = vmax.f32 %v821, 0.0
        %v896 = vmax.f32 %v826, 0.0
        %v897 = vmax.f32 %v831, 0.0
        %v898 = vmax.f32 %v836, 0.0
        %v899 = vmax.f32 %v841, 0.0
        %v900 = vmax.f32 %v846, 0.0
        %v901 = vmax.f32 %v851, 0.0
        %v902 = vmax.f32 %v856, 0.0
        %v903 = vmax.f32 %v861, 0.0
        %v904 = vmax.f32 %v866, 0.0
        %v905 = vmax.f32 %v871, 0.0
        %vm906 = vcmask 1040384
        %v907 = vrot.slane %v508, 7
        %v908 = vrot.slane %v509, 7
        %v909 = vsel %vm906, %v907, %v908
        %v910 = vrot.slane %v510, 7
        %v911 = vrot.slane %v511, 7
        %v912 = vsel %vm906, %v910, %v911
        %v913 = vrot.slane %v512, 7
        %v914 = vrot.slane %v513, 7
        %v915 = vsel %vm906, %v913, %v914
        %v916 = vrot.slane %v514, 7
        %v917 = vrot.slane %v515, 7
        %v918 = vsel %vm906, %v916, %v917
        %v919 = vrot.slane %v516, 7
        %v920 = vrot.slane %v517, 7
        %v921 = vsel %vm906, %v919, %v920
        %v922 = vrot.slane %v518, 7
        %v923 = vrot.slane %v519, 7
        %v924 = vsel %vm906, %v922, %v923
        %v925 = vrot.slane %v520, 7
        %v926 = vrot.slane %v521, 7
        %v927 = vsel %vm906, %v925, %v926
        %v928 = vrot.slane %v522, 7
        %v929 = vrot.slane %v523, 7
        %v930 = vsel %vm906, %v928, %v929
        %v931 = vrot.slane %v524, 7
        %v932 = vrot.slane %v525, 7
        %v933 = vsel %vm906, %v931, %v932
        %v934 = vrot.slane %v526, 7
        %v935 = vrot.slane %v527, 7
        %v936 = vsel %vm906, %v934, %v935
        %v937 = vrot.slane %v528, 7
        %v938 = vrot.slane %v529, 7
        %v939 = vsel %vm906, %v937, %v938
        %v940 = vrot.slane %v530, 7
        %v941 = vrot.slane %v531, 7
        %v942 = vsel %vm906, %v940, %v941
        %v943 = vrot.slane %v532, 7
        %v944 = vrot.slane %v533, 7
        %v945 = vsel %vm906, %v943, %v944
        %v946 = vrot.slane %v534, 7
        %v947 = vrot.slane %v535, 7
        %v948 = vsel %vm906, %v946, %v947
        %v949 = vrot.slane %v536, 7
        %v950 = vrot.slane %v537, 7
        %v951 = vsel %vm906, %v949, %v950
        %v952 = vrot.slane %v538, 7
        %v953 = vrot.slane %v539, 7
        %v954 = vsel %vm906, %v952, %v953
        %v1003 = vsel %vm906, 0.0, %v907
        %v1004 = vsel %vm906, 0.0, %v910
        %v1005 = vsel %vm906, 0.0, %v913
        %v1006 = vsel %vm906, 0.0, %v916
        %v1007 = vsel %vm906, 0.0, %v919
        %v1008 = vsel %vm906, 0.0, %v922
        %v1009 = vsel %vm906, 0.0, %v925
        %v1010 = vsel %vm906, 0.0, %v928
        %v1011 = vsel %vm906, 0.0, %v931
        %v1012 = vsel %vm906, 0.0, %v934
        %v1013 = vsel %vm906, 0.0, %v937
        %v1014 = vsel %vm906, 0.0, %v940
        %v1015 = vsel %vm906, 0.0, %v943
        %v1016 = vsel %vm906, 0.0, %v946
        %v1017 = vsel %vm906, 0.0, %v949
        %v1018 = vsel %vm906, 0.0, %v952
        %v1019 = vsel %vm906, %v908, 0.0
        %v1020 = vsel %vm906, %v911, 0.0
        %v1021 = vsel %vm906, %v914, 0.0
        %v1022 = vsel %vm906, %v917, 0.0
        %v1023 = vsel %vm906, %v920, 0.0
        %v1024 = vsel %vm906, %v923, 0.0
        %v1025 = vsel %vm906, %v926, 0.0
        %v1026 = vsel %vm906, %v929, 0.0
        %v1027 = vsel %vm906, %v932, 0.0
        %v1028 = vsel %vm906, %v935, 0.0
        %v1029 = vsel %vm906, %v938, 0.0
        %v1030 = vsel %vm906, %v941, 0.0
        %v1031 = vsel %vm906, %v944, 0.0
        %v1032 = vsel %vm906, %v947, 0.0
        %v1033 = vsel %vm906, %v950, 0.0
        %v1034 = vsel %vm906, %v953, 0.0
        %vm1066 = vcmask 1046528
        %v1067 = vrot.slane 0.0, 1
        %v1068 = vsel %vm1066, %v1067, %v1067
        %v1069 = vrot.slane %v1003, 1
        %v1070 = vrot.slane %v909, 1
        %v1071 = vsel %vm1066, %v1069, %v1070
        %v1072 = vrot.slane %v1019, 1
        %v1073 = vsel %vm1066, %v1070, %v1072
        %v1074 = vrot.slane %v1004, 1
        %v1075 = vrot.slane %v912, 1
        %v1076 = vsel %vm1066, %v1074, %v1075
        %v1077 = vrot.slane %v1020, 1
        %v1078 = vsel %vm1066, %v1075, %v1077
        %v1079 = vrot.slane %v1005, 1
        %v1080 = vrot.slane %v915, 1
        %v1081 = vsel %vm1066, %v1079, %v1080
        %v1082 = vrot.slane %v1021, 1
        %v1083 = vsel %vm1066, %v1080, %v1082
        %v1084 = vrot.slane %v1006, 1
        %v1085 = vrot.slane %v918, 1
        %v1086 = vsel %vm1066, %v1084, %v1085
        %v1087 = vrot.slane %v1022, 1
        %v1088 = vsel %vm1066, %v1085, %v1087
        %v1089 = vrot.slane %v1007, 1
        %v1090 = vrot.slane %v921, 1
        %v1091 = vsel %vm1066, %v1089, %v1090
        %v1092 = vrot.slane %v1023, 1
        %v1093 = vsel %vm1066, %v1090, %v1092
        %v1094 = vrot.slane %v1008, 1
        %v1095 = vrot.slane %v924, 1
        %v1096 = vsel %vm1066, %v1094, %v1095
        %v1097 = vrot.slane %v1024, 1
        %v1098 = vsel %vm1066, %v1095, %v1097
        %v1099 = vrot.slane %v1009, 1
        %v1100 = vrot.slane %v927, 1
        %v1101 = vsel %vm1066, %v1099, %v1100
        %v1102 = vrot.slane %v1025, 1
        %v1103 = vsel %vm1066, %v1100, %v1102
        %v1104 = vrot.slane %v1010, 1
        %v1105 = vrot.slane %v930, 1
        %v1106 = vsel %vm1066, %v1104, %v1105
        %v1107 = vrot.slane %v1026, 1
        %v1108 = vsel %vm1066, %v1105, %v1107
        %v1109 = vrot.slane %v1011, 1
        %v1110 = vrot.slane %v933, 1
        %v1111 = vsel %vm1066, %v1109, %v1110
        %v1112 = vrot.slane %v1027, 1
        %v1113 = vsel %vm1066, %v1110, %v1112
        %v1114 = vrot.slane %v1012, 1
        %v1115 = vrot.slane %v936, 1
        %v1116 = vsel %vm1066, %v1114, %v1115
        %v1117 = vrot.slane %v1028, 1
        %v1118 = vsel %vm1066, %v1115, %v1117
        %v1119 = vrot.slane %v1013, 1
        %v1120 = vrot.slane %v939, 1
        %v1121 = vsel %vm1066, %v1119, %v1120
        %v1122 = vrot.slane %v1029, 1
        %v1123 = vsel %vm1066, %v1120, %v1122
        %v1124 = vrot.slane %v1014, 1
        %v1125 = vrot.slane %v942, 1
        %v1126 = vsel %vm1066, %v1124, %v1125
        %v1127 = vrot.slane %v1030, 1
        %v1128 = vsel %vm1066, %v1125, %v1127
        %v1129 = vrot.slane %v1015, 1
        %v1130 = vrot.slane %v945, 1
        %v1131 = vsel %vm1066, %v1129, %v1130
        %v1132 = vrot.slane %v1031, 1
        %v1133 = vsel %vm1066, %v1130, %v1132
        %v1134 = vrot.slane %v1016, 1
        %v1135 = vrot.slane %v948, 1
        %v1136 = vsel %vm1066, %v1134, %v1135
        %v1137 = vrot.slane %v1032, 1
        %v1138 = vsel %vm1066, %v1135, %v1137
        %v1139 = vrot.slane %v1017, 1
        %v1140 = vrot.slane %v951, 1
        %v1141 = vsel %vm1066, %v1139, %v1140
        %v1142 = vrot.slane %v1033, 1
        %v1143 = vsel %vm1066, %v1140, %v1142
        %v1175 = vadd.f32 %v1068, 0.0
        %v1176 = vadd.f32 %v1003, %v1071
        %v1177 = vadd.f32 %v909, %v1073
        %v1178 = vadd.f32 %v1004, %v1076
        %v1179 = vadd.f32 %v912, %v1078
        %v1180 = vadd.f32 %v1005, %v1081
        %v1181 = vadd.f32 %v915, %v1083
        %v1182 = vadd.f32 %v1006, %v1086
        %v1183 = vadd.f32 %v918, %v1088
        %v1184 = vadd.f32 %v1007, %v1091
        %v1185 = vadd.f32 %v921, %v1093
        %v1186 = vadd.f32 %v1008, %v1096
        %v1187 = vadd.f32 %v924, %v1098
        %v1188 = vadd.f32 %v1009, %v1101
        %v1189 = vadd.f32 %v927, %v1103
        %v1190 = vadd.f32 %v1010, %v1106
        %v1191 = vadd.f32 %v930, %v1108
        %v1192 = vadd.f32 %v1011, %v1111
        %v1193 = vadd.f32 %v933, %v1113
        %v1194 = vadd.f32 %v1012, %v1116
        %v1195 = vadd.f32 %v936, %v1118
        %v1196 = vadd.f32 %v1013, %v1121
        %v1197 = vadd.f32 %v939, %v1123
        %v1198 = vadd.f32 %v1014, %v1126
        %v1199 = vadd.f32 %v942, %v1128
        %v1200 = vadd.f32 %v1015, %v1131
        %v1201 = vadd.f32 %v945, %v1133
        %v1202 = vadd.f32 %v1016, %v1136
        %v1203 = vadd.f32 %v948, %v1138
        %v1204 = vadd.f32 %v1017, %v1141
        %v1205 = vadd.f32 %v951, %v1143
        %vm1206 = vcmask 1045504
        %v1207 = vrot.slane 0.0, 2
        %v1208 = vsel %vm1206, %v1207, %v1207
        %v1209 = vrot.slane %v1003, 2
        %v1210 = vrot.slane %v909, 2
        %v1211 = vsel %vm1206, %v1209, %v1210
        %v1212 = vrot.slane %v1019, 2
        %v1213 = vsel %vm1206, %v1210, %v1212
        %v1214 = vrot.slane %v1004, 2
        %v1215 = vrot.slane %v912, 2
        %v1216 = vsel %vm1206, %v1214, %v1215
        %v1217 = vrot.slane %v1020, 2
        %v1218 = vsel %vm1206, %v1215, %v1217
        %v1219 = vrot.slane %v1005, 2
        %v1220 = vrot.slane %v915, 2
        %v1221 = vsel %vm1206, %v1219, %v1220
        %v1222 = vrot.slane %v1021, 2
        %v1223 = vsel %vm1206, %v1220, %v1222
        %v1224 = vrot.slane %v1006, 2
        %v1225 = vrot.slane %v918, 2
        %v1226 = vsel %vm1206, %v1224, %v1225
        %v1227 = vrot.slane %v1022, 2
        %v1228 = vsel %vm1206, %v1225, %v1227
        %v1229 = vrot.slane %v1007, 2
        %v1230 = vrot.slane %v921, 2
        %v1231 = vsel %vm1206, %v1229, %v1230
        %v1232 = vrot.slane %v1023, 2
        %v1233 = vsel %vm1206, %v1230, %v1232
        %v1234 = vrot.slane %v1008, 2
        %v1235 = vrot.slane %v924, 2
        %v1236 = vsel %vm1206, %v1234, %v1235
        %v1237 = vrot.slane %v1024, 2
        %v1238 = vsel %vm1206, %v1235, %v1237
        %v1239 = vrot.slane %v1009, 2
        %v1240 = vrot.slane %v927, 2
        %v1241 = vsel %vm1206, %v1239, %v1240
        %v1242 = vrot.slane %v1025, 2
        %v1243 = vsel %vm1206, %v1240, %v1242
        %v1244 = vrot.slane %v1010, 2
        %v1245 = vrot.slane %v930, 2
        %v1246 = vsel %vm1206, %v1244, %v1245
        %v1247 = vrot.slane %v1026, 2
        %v1248 = vsel %vm1206, %v1245, %v1247
        %v1249 = vrot.slane %v1011, 2
        %v1250 = vrot.slane %v933, 2
        %v1251 = vsel %vm1206, %v1249, %v1250
        %v1252 = vrot.slane %v1027, 2
        %v1253 = vsel %vm1206, %v1250, %v1252
        %v1254 = vrot.slane %v1012, 2
        %v1255 = vrot.slane %v936, 2
        %v1256 = vsel %vm1206, %v1254, %v1255
        %v1257 = vrot.slane %v1028, 2
        %v1258 = vsel %vm1206, %v1255, %v1257
        %v1259 = vrot.slane %v1013, 2
        %v1260 = vrot.slane %v939, 2
        %v1261 = vsel %vm1206, %v1259, %v1260
        %v1262 = vrot.slane %v1029, 2
        %v1263 = vsel %vm1206, %v1260, %v1262
        %v1264 = vrot.slane %v1014, 2
        %v1265 = vrot.slane %v942, 2
        %v1266 = vsel %vm1206, %v1264, %v1265
        %v1267 = vrot.slane %v1030, 2
        %v1268 = vsel %vm1206, %v1265, %v1267
        %v1269 = vrot.slane %v1015, 2
        %v1270 = vrot.slane %v945, 2
        %v1271 = vsel %vm1206, %v1269, %v1270
        %v1272 = vrot.slane %v1031, 2
        %v1273 = vsel %vm1206, %v1270, %v1272
        %v1274 = vrot.slane %v1016, 2
        %v1275 = vrot.slane %v948, 2
        %v1276 = vsel %vm1206, %v1274, %v1275
        %v1277 = vrot.slane %v1032, 2
        %v1278 = vsel %vm1206, %v1275, %v1277
        %v1279 = vrot.slane %v1017, 2
        %v1280 = vrot.slane %v951, 2
        %v1281 = vsel %vm1206, %v1279, %v1280
        %v1282 = vrot.slane %v1033, 2
        %v1283 = vsel %vm1206, %v1280, %v1282
        %v1315 = vadd.f32 %v1175, %v1208
        %v1316 = vadd.f32 %v1176, %v1211
        %v1317 = vadd.f32 %v1177, %v1213
        %v1318 = vadd.f32 %v1178, %v1216
        %v1319 = vadd.f32 %v1179, %v1218
        %v1320 = vadd.f32 %v1180, %v1221
        %v1321 = vadd.f32 %v1181, %v1223
        %v1322 = vadd.f32 %v1182, %v1226
        %v1323 = vadd.f32 %v1183, %v1228
        %v1324 = vadd.f32 %v1184, %v1231
        %v1325 = vadd.f32 %v1185, %v1233
        %v1326 = vadd.f32 %v1186, %v1236
        %v1327 = vadd.f32 %v1187, %v1238
        %v1328 = vadd.f32 %v1188, %v1241
        %v1329 = vadd.f32 %v1189, %v1243
        %v1330 = vadd.f32 %v1190, %v1246
        %v1331 = vadd.f32 %v1191, %v1248
        %v1332 = vadd.f32 %v1192, %v1251
        %v1333 = vadd.f32 %v1193, %v1253
        %v1334 = vadd.f32 %v1194, %v1256
        %v1335 = vadd.f32 %v1195, %v1258
        %v1336 = vadd.f32 %v1196, %v1261
        %v1337 = vadd.f32 %v1197, %v1263
        %v1338 = vadd.f32 %v1198, %v1266
        %v1339 = vadd.f32 %v1199, %v1268
        %v1340 = vadd.f32 %v1200, %v1271
        %v1341 = vadd.f32 %v1201, %v1273
        %v1342 = vadd.f32 %v1202, %v1276
        %v1343 = vadd.f32 %v1203, %v1278
        %v1344 = vadd.f32 %v1204, %v1281
        %v1345 = vadd.f32 %v1205, %v1283
        %v1346 = vadd.f32 %v1315, %v1003
        %v1347 = vadd.f32 %v1315, %v909
        %v1348 = vadd.f32 %v1316, %v1004
        %v1349 = vadd.f32 %v1317, %v912
        %v1350 = vadd.f32 %v1318, %v1005
        %v1351 = vadd.f32 %v1319, %v915
        %v1352 = vadd.f32 %v1320, %v1006
        %v1353 = vadd.f32 %v1321, %v918
        %v1354 = vadd.f32 %v1322, %v1007
        %v1355 = vadd.f32 %v1323, %v921
        %v1356 = vadd.f32 %v1324, %v1008
        %v1357 = vadd.f32 %v1325, %v924
        %v1358 = vadd.f32 %v1326, %v1009
        %v1359 = vadd.f32 %v1327, %v927
        %v1360 = vadd.f32 %v1328, %v1010
        %v1361 = vadd.f32 %v1329, %v930
        %v1362 = vadd.f32 %v1330, %v1011
        %v1363 = vadd.f32 %v1331, %v933
        %v1364 = vadd.f32 %v1332, %v1012
        %v1365 = vadd.f32 %v1333, %v936
        %v1366 = vadd.f32 %v1334, %v1013
        %v1367 = vadd.f32 %v1335, %v939
        %v1368 = vadd.f32 %v1336, %v1014
        %v1369 = vadd.f32 %v1337, %v942
        %v1370 = vadd.f32 %v1338, %v1015
        %v1371 = vadd.f32 %v1339, %v945
        %v1372 = vadd.f32 %v1340, %v1016
        %v1373 = vadd.f32 %v1341, %v948
        %v1374 = vadd.f32 %v1342, %v1017
        %v1375 = vadd.f32 %v1343, %v951
        %v1376 = vadd.f32 %v1344, %v1018
        %v1377 = vadd.f32 %v1345, %v954
        %v1380 = vrot.slane %v1018, 1
        %v1381 = vrot.slane %v954, 1
        %v1382 = vsel %vm1066, %v1380, %v1381
        %v1383 = vrot.slane %v1034, 1
        %v1384 = vsel %vm1066, %v1381, %v1383
        %v1387 = vadd.f32 %v1346, %v1071
        %v1388 = vadd.f32 %v1347, %v1073
        %v1389 = vadd.f32 %v1348, %v1076
        %v1390 = vadd.f32 %v1349, %v1078
        %v1391 = vadd.f32 %v1350, %v1081
        %v1392 = vadd.f32 %v1351, %v1083
        %v1393 = vadd.f32 %v1352, %v1086
        %v1394 = vadd.f32 %v1353, %v1088
        %v1395 = vadd.f32 %v1354, %v1091
        %v1396 = vadd.f32 %v1355, %v1093
        %v1397 = vadd.f32 %v1356, %v1096
        %v1398 = vadd.f32 %v1357, %v1098
        %v1399 = vadd.f32 %v1358, %v1101
        %v1400 = vadd.f32 %v1359, %v1103
        %v1401 = vadd.f32 %v1360, %v1106
        %v1402 = vadd.f32 %v1361, %v1108
        %v1403 = vadd.f32 %v1362, %v1111
        %v1404 = vadd.f32 %v1363, %v1113
        %v1405 = vadd.f32 %v1364, %v1116
        %v1406 = vadd.f32 %v1365, %v1118
        %v1407 = vadd.f32 %v1366, %v1121
        %v1408 = vadd.f32 %v1367, %v1123
        %v1409 = vadd.f32 %v1368, %v1126
        %v1410 = vadd.f32 %v1369, %v1128
        %v1411 = vadd.f32 %v1370, %v1131
        %v1412 = vadd.f32 %v1371, %v1133
        %v1413 = vadd.f32 %v1372, %v1136
        %v1414 = vadd.f32 %v1373, %v1138
        %v1415 = vadd.f32 %v1374, %v1141
        %v1416 = vadd.f32 %v1375, %v1143
        %v1417 = vadd.f32 %v1376, %v1382
        %v1418 = vadd.f32 %v1377, %v1384
        %v1419 = vrot.slane %v1018, 2
        %v1420 = vrot.slane %v954, 2
        %v1421 = vsel %vm1206, %v1419, %v1420
        %v1422 = vrot.slane %v1034, 2
        %v1423 = vsel %vm1206, %v1420, %v1422
        %v1426 = vadd.f32 %v1387, %v1211
        %v1427 = vadd.f32 %v1388, %v1213
        %v1428 = vadd.f32 %v1389, %v1216
        %v1429 = vadd.f32 %v1390, %v1218
        %v1430 = vadd.f32 %v1391, %v1221
        %v1431 = vadd.f32 %v1392, %v1223
        %v1432 = vadd.f32 %v1393, %v1226
        %v1433 = vadd.f32 %v1394, %v1228
        %v1434 = vadd.f32 %v1395, %v1231
        %v1435 = vadd.f32 %v1396, %v1233
        %v1436 = vadd.f32 %v1397, %v1236
        %v1437 = vadd.f32 %v1398, %v1238
        %v1438 = vadd.f32 %v1399, %v1241
        %v1439 = vadd.f32 %v1400, %v1243
        %v1440 = vadd.f32 %v1401, %v1246
        %v1441 = vadd.f32 %v1402, %v1248
        %v1442 = vadd.f32 %v1403, %v1251
        %v1443 = vadd.f32 %v1404, %v1253
        %v1444 = vadd.f32 %v1405, %v1256
        %v1445 = vadd.f32 %v1406, %v1258
        %v1446 = vadd.f32 %v1407, %v1261
        %v1447 = vadd.f32 %v1408, %v1263
        %v1448 = vadd.f32 %v1409, %v1266
        %v1449 = vadd.f32 %v1410, %v1268
        %v1450 = vadd.f32 %v1411, %v1271
        %v1451 = vadd.f32 %v1412, %v1273
        %v1452 = vadd.f32 %v1413, %v1276
        %v1453 = vadd.f32 %v1414, %v1278
        %v1454 = vadd.f32 %v1415, %v1281
        %v1455 = vadd.f32 %v1416, %v1283
        %v1456 = vadd.f32 %v1417, %v1421
        %v1457 = vadd.f32 %v1418, %v1423
        %v1458 = vadd.f32 %v1426, %v1004
        %v1459 = vadd.f32 %v1427, %v912
        %v1460 = vadd.f32 %v1428, %v1005
        %v1461 = vadd.f32 %v1429, %v915
        %v1462 = vadd.f32 %v1430, %v1006
        %v1463 = vadd.f32 %v1431, %v918
        %v1464 = vadd.f32 %v1432, %v1007
        %v1465 = vadd.f32 %v1433, %v921
        %v1466 = vadd.f32 %v1434, %v1008
        %v1467 = vadd.f32 %v1435, %v924
        %v1468 = vadd.f32 %v1436, %v1009
        %v1469 = vadd.f32 %v1437, %v927
        %v1470 = vadd.f32 %v1438, %v1010
        %v1471 = vadd.f32 %v1439, %v930
        %v1472 = vadd.f32 %v1440, %v1011
        %v1473 = vadd.f32 %v1441, %v933
        %v1474 = vadd.f32 %v1442, %v1012
        %v1475 = vadd.f32 %v1443, %v936
        %v1476 = vadd.f32 %v1444, %v1013
        %v1477 = vadd.f32 %v1445, %v939
        %v1478 = vadd.f32 %v1446, %v1014
        %v1479 = vadd.f32 %v1447, %v942
        %v1480 = vadd.f32 %v1448, %v1015
        %v1481 = vadd.f32 %v1449, %v945
        %v1482 = vadd.f32 %v1450, %v1016
        %v1483 = vadd.f32 %v1451, %v948
        %v1484 = vadd.f32 %v1452, %v1017
        %v1485 = vadd.f32 %v1453, %v951
        %v1486 = vadd.f32 %v1454, %v1018
        %v1487 = vadd.f32 %v1455, %v954
        %v1488 = vadd.f32 %v1456, 0.0
        %v1489 = vadd.f32 %v1457, 0.0
        %v1490 = vadd.f32 %v1458, %v1076
        %v1491 = vadd.f32 %v1459, %v1078
        %v1492 = vadd.f32 %v1460, %v1081
        %v1493 = vadd.f32 %v1461, %v1083
        %v1494 = vadd.f32 %v1462, %v1086
        %v1495 = vadd.f32 %v1463, %v1088
        %v1496 = vadd.f32 %v1464, %v1091
        %v1497 = vadd.f32 %v1465, %v1093
        %v1498 = vadd.f32 %v1466, %v1096
        %v1499 = vadd.f32 %v1467, %v1098
        %v1500 = vadd.f32 %v1468, %v1101
        %v1501 = vadd.f32 %v1469, %v1103
        %v1502 = vadd.f32 %v1470, %v1106
        %v1503 = vadd.f32 %v1471, %v1108
        %v1504 = vadd.f32 %v1472, %v1111
        %v1505 = vadd.f32 %v1473, %v1113
        %v1506 = vadd.f32 %v1474, %v1116
        %v1507 = vadd.f32 %v1475, %v1118
        %v1508 = vadd.f32 %v1476, %v1121
        %v1509 = vadd.f32 %v1477, %v1123
        %v1510 = vadd.f32 %v1478, %v1126
        %v1511 = vadd.f32 %v1479, %v1128
        %v1512 = vadd.f32 %v1480, %v1131
        %v1513 = vadd.f32 %v1481, %v1133
        %v1514 = vadd.f32 %v1482, %v1136
        %v1515 = vadd.f32 %v1483, %v1138
        %v1516 = vadd.f32 %v1484, %v1141
        %v1517 = vadd.f32 %v1485, %v1143
        %v1518 = vadd.f32 %v1486, %v1382
        %v1519 = vadd.f32 %v1487, %v1384
        %v1520 = vadd.f32 %v1488, %v1068
        %v1521 = vadd.f32 %v1489, %v1068
        %v1522 = vadd.f32 %v1490, %v1216
        %v1523 = vadd.f32 %v1491, %v1218
        %v1524 = vadd.f32 %v1492, %v1221
        %v1525 = vadd.f32 %v1493, %v1223
        %v1526 = vadd.f32 %v1494, %v1226
        %v1527 = vadd.f32 %v1495, %v1228
        %v1528 = vadd.f32 %v1496, %v1231
        %v1529 = vadd.f32 %v1497, %v1233
        %v1530 = vadd.f32 %v1498, %v1236
        %v1531 = vadd.f32 %v1499, %v1238
        %v1532 = vadd.f32 %v1500, %v1241
        %v1533 = vadd.f32 %v1501, %v1243
        %v1534 = vadd.f32 %v1502, %v1246
        %v1535 = vadd.f32 %v1503, %v1248
        %v1536 = vadd.f32 %v1504, %v1251
        %v1537 = vadd.f32 %v1505, %v1253
        %v1538 = vadd.f32 %v1506, %v1256
        %v1539 = vadd.f32 %v1507, %v1258
        %v1540 = vadd.f32 %v1508, %v1261
        %v1541 = vadd.f32 %v1509, %v1263
        %v1542 = vadd.f32 %v1510, %v1266
        %v1543 = vadd.f32 %v1511, %v1268
        %v1544 = vadd.f32 %v1512, %v1271
        %v1545 = vadd.f32 %v1513, %v1273
        %v1546 = vadd.f32 %v1514, %v1276
        %v1547 = vadd.f32 %v1515, %v1278
        %v1548 = vadd.f32 %v1516, %v1281
        %v1549 = vadd.f32 %v1517, %v1283
        %v1550 = vadd.f32 %v1518, %v1421
        %v1551 = vadd.f32 %v1519, %v1423
        %v1552 = vadd.f32 %v1520, %v1208
        %v1553 = vadd.f32 %v1521, %v1208
        %v1554 = vmul.f32 %v1522, 0.11111111
        %v1555 = vmul.f32 %v1523, 0.11111111
        %v1556 = vmul.f32 %v1524, 0.11111111
        %v1557 = vmul.f32 %v1525, 0.11111111
        %v1558 = vmul.f32 %v1526, 0.11111111
        %v1559 = vmul.f32 %v1527, 0.11111111
        %v1560 = vmul.f32 %v1528, 0.11111111
        %v1561 = vmul.f32 %v1529, 0.11111111
        %v1562 = vmul.f32 %v1530, 0.11111111
        %v1563 = vmul.f32 %v1531, 0.11111111
        %v1564 = vmul.f32 %v1532, 0.11111111
        %v1565 = vmul.f32 %v1533, 0.11111111
        %v1566 = vmul.f32 %v1534, 0.11111111
        %v1567 = vmul.f32 %v1535, 0.11111111
        %v1568 = vmul.f32 %v1536, 0.11111111
        %v1569 = vmul.f32 %v1537, 0.11111111
        %v1570 = vmul.f32 %v1538, 0.11111111
        %v1571 = vmul.f32 %v1539, 0.11111111
        %v1572 = vmul.f32 %v1540, 0.11111111
        %v1573 = vmul.f32 %v1541, 0.11111111
        %v1574 = vmul.f32 %v1542, 0.11111111
        %v1575 = vmul.f32 %v1543, 0.11111111
        %v1576 = vmul.f32 %v1544, 0.11111111
        %v1577 = vmul.f32 %v1545, 0.11111111
        %v1578 = vmul.f32 %v1546, 0.11111111
        %v1579 = vmul.f32 %v1547, 0.11111111
        %v1580 = vmul.f32 %v1548, 0.11111111
        %v1581 = vmul.f32 %v1549, 0.11111111
        %v1582 = vmul.f32 %v1550, 0.11111111
        %v1583 = vmul.f32 %v1551, 0.11111111
        %v1584 = vmul.f32 %v1552, 0.11111111
        %v1585 = vmul.f32 %v1553, 0.11111111
        %v1586 = vld [vmem:[%s3] sm:$0xf]
        %v1587 = vld [vmem:[%s4] sm:$0x1]
        %v1589 = vlaneseq
        %v1590 = vshrl.u32 %v1589, 7
        %v1591 = vsub.s32 0, %v1590
        %v1592 = vrot.slane %v1587, %v1591
        %v1595 = vsel %vm548, %v1554, 0
        %v1598 = vsel %vm548, %v1555, 0
        %v1601 = vsel %vm548, %v1556, 0
        %v1604 = vsel %vm548, %v1557, 0
        %v1607 = vsel %vm548, %v1558, 0
        %v1610 = vsel %vm548, %v1559, 0
        %v1613 = vsel %vm548, %v1560, 0
        %v1616 = vsel %vm548, %v1561, 0
        %v1619 = vsel %vm548, %v1562, 0
        %v1622 = vsel %vm548, %v1563, 0
        %v1625 = vsel %vm548, %v1564, 0
        %v1628 = vsel %vm548, %v1565, 0
        %v1631 = vsel %vm548, %v1566, 0
        %v1634 = vsel %vm548, %v1567, 0
        %v1637 = vsel %vm548, %v1568, 0
        %v1640 = vsel %vm548, %v1569, 0
        %v1643 = vsel %vm548, %v1570, 0
        %v1646 = vsel %vm548, %v1571, 0
        %v1649 = vsel %vm548, %v1572, 0
        %v1652 = vsel %vm548, %v1573, 0
        %v1655 = vsel %vm548, %v1574, 0
        %v1658 = vsel %vm548, %v1575, 0
        %v1661 = vsel %vm548, %v1576, 0
        %v1664 = vsel %vm548, %v1577, 0
        %v1667 = vsel %vm548, %v1578, 0
        %v1670 = vsel %vm548, %v1579, 0
        %v1673 = vsel %vm548, %v1580, 0
        %v1676 = vsel %vm548, %v1581, 0
        %v1679 = vsel %vm548, %v1582, 0
        %v1682 = vsel %vm548, %v1583, 0
        %v1685 = vsel %vm548, %v1584, 0
        %v1688 = vsel %vm548, %v1585, 0
        %v1691 = vsel %vm645, %v1586, 0
        %1693 = vmatprep.subr.mxu0 0.0
        %1694 = vmatpush1.msra.mxu0 %v1691
        %1695 = vmatprep.subr.mxu0 0.0
        %1696 = vmatpush1.msra.mxu0 0.0
        %1697 = vmatprep.subr.mxu0 0.0
        %1698 = vmatpush1.msra.mxu0 0.0
        %1699 = vmatprep.subr.mxu0 0.0
        %1700 = vmatpush1.msra.mxu0 0.0
        %1701 = vmatprep.subr.mxu0 0.0
        %1702 = vmatpush1.msra.mxu0 0.0
        %1703 = vmatprep.subr.mxu0 0.0
        %1704 = vmatpush1.msra.mxu0 0.0
        %1705 = vmatprep.subr.mxu0 0.0
        %1706 = vmatpush1.msra.mxu0 0.0
        %1707 = vmatprep.subr.mxu0 0.0
        %1708 = vmatpush1.msra.mxu0 0.0
        %1709 = vmatprep.subr.mxu0 0.0
        %1710 = vmatpush1.msra.mxu0 0.0
        %1711 = vmatprep.subr.mxu0 0.0
        %1712 = vmatpush1.msra.mxu0 0.0
        %1713 = vmatprep.subr.mxu0 0.0
        %1714 = vmatpush1.msra.mxu0 0.0
        %1715 = vmatprep.subr.mxu0 0.0
        %1716 = vmatpush1.msra.mxu0 0.0
        %1717 = vmatprep.subr.mxu0 0.0
        %1718 = vmatpush1.msra.mxu0 0.0
        %1719 = vmatprep.subr.mxu0 0.0
        %1720 = vmatpush1.msra.mxu0 0.0
        %1721 = vmatprep.subr.mxu0 0.0
        %1722 = vmatpush1.msra.mxu0 0.0
        %1723 = vmatprep.subr.mxu0 0.0
        %1724 = vmatpush1.msra.mxu0 0.0
        %1725 = vmatprep.subr.mxu0 0.0
        %1726 = vmatpush1.msra.mxu0 0.0
        %1727 = vmatprep.subr.mxu0 0.0
        %1728 = vmatpush1.msra.mxu0 0.0
        %1729 = vmatprep.subr.mxu0 0.0
        %1730 = vmatpush1.msra.mxu0 0.0
        %1731 = vmatprep.subr.mxu0 0.0
        %1732 = vmatpush1.msra.mxu0 0.0
        %1733 = vmatprep.subr.mxu0 0.0
        %1734 = vmatpush1.msra.mxu0 0.0
        %1735 = vmatprep.subr.mxu0 0.0
        %1736 = vmatpush1.msra.mxu0 0.0
        %1737 = vmatprep.subr.mxu0 0.0
        %1738 = vmatpush1.msra.mxu0 0.0
        %1739 = vmatprep.subr.mxu0 0.0
        %1740 = vmatpush1.msra.mxu0 0.0
        %1741 = vmatprep.subr.mxu0 0.0
        %1742 = vmatpush1.msra.mxu0 0.0
        %1743 = vmatprep.subr.mxu0 0.0
        %1744 = vmatpush1.msra.mxu0 0.0
        %1745 = vmatprep.subr.mxu0 0.0
        %1746 = vmatpush1.msra.mxu0 0.0
        %1747 = vmatprep.subr.mxu0 0.0
        %1748 = vmatpush1.msra.mxu0 0.0
        %1749 = vmatprep.subr.mxu0 0.0
        %1750 = vmatpush1.msra.mxu0 0.0
        %1751 = vmatprep.subr.mxu0 0.0
        %1752 = vmatpush1.msra.mxu0 0.0
        %1753 = vmatprep.subr.mxu0 0.0
        %1754 = vmatpush1.msra.mxu0 0.0
        %1755 = vmatprep.subr.mxu0 0.0
        %1756 = vmatpush1.msra.mxu0 0.0
        %1757 = vmatprep.mubr.f32.mxu0 0.0
        %1758 = vmatmul.mubr.f32.gmra.mrb[0].mxu0 %v1595
        %v1759 = vpop.f32.mrb[0].mxu0
        %v1760 = vadd.f32 %v1592, %v1759
        %v1761 = vpop.f32.mrb[0].mxu0
        %1762 = vmatprep.mubr.f32.mxu0 0.0
        %1763 = vmatmul.mubr.f32.gmra.mrb[0].mxu0 %v1598
        %v1764 = vpop.f32.mrb[0].mxu0
        %v1765 = vadd.f32 %v1592, %v1764
        %v1766 = vpop.f32.mrb[0].mxu0
        %1767 = vmatprep.mubr.f32.mxu0 0.0
        %1768 = vmatmul.mubr.f32.gmra.mrb[0].mxu0 %v1601
        %v1769 = vpop.f32.mrb[0].mxu0
        %v1770 = vadd.f32 %v1592, %v1769
        %v1771 = vpop.f32.mrb[0].mxu0
        %1772 = vmatprep.mubr.f32.mxu0 0.0
        %1773 = vmatmul.mubr.f32.gmra.mrb[0].mxu0 %v1604
        %v1774 = vpop.f32.mrb[0].mxu0
        %v1775 = vadd.f32 %v1592, %v1774
        %v1776 = vpop.f32.mrb[0].mxu0
        %1777 = vmatprep.mubr.f32.mxu0 0.0
        %1778 = vmatmul.mubr.f32.gmra.mrb[0].mxu0 %v1607
        %v1779 = vpop.f32.mrb[0].mxu0
        %v1780 = vadd.f32 %v1592, %v1779
        %v1781 = vpop.f32.mrb[0].mxu0
        %1782 = vmatprep.mubr.f32.mxu0 0.0
        %1783 = vmatmul.mubr.f32.gmra.mrb[0].mxu0 %v1610
        %v1784 = vpop.f32.mrb[0].mxu0
        %v1785 = vadd.f32 %v1592, %v1784
        %v1786 = vpop.f32.mrb[0].mxu0
        %1787 = vmatprep.mubr.f32.mxu0 0.0
        %1788 = vmatmul.mubr.f32.gmra.mrb[0].mxu0 %v1613
        %v1789 = vpop.f32.mrb[0].mxu0
        %v1790 = vadd.f32 %v1592, %v1789
        %v1791 = vpop.f32.mrb[0].mxu0
        %1792 = vmatprep.mubr.f32.mxu0 0.0
        %1793 = vmatmul.mubr.f32.gmra.mrb[0].mxu0 %v1616
        %v1794 = vpop.f32.mrb[0].mxu0
        %v1795 = vadd.f32 %v1592, %v1794
        %v1796 = vpop.f32.mrb[0].mxu0
        %1797 = vmatprep.mubr.f32.mxu0 0.0
        %1798 = vmatmul.mubr.f32.gmra.mrb[0].mxu0 %v1619
        %v1799 = vpop.f32.mrb[0].mxu0
        %v1800 = vadd.f32 %v1592, %v1799
        %v1801 = vpop.f32.mrb[0].mxu0
        %1802 = vmatprep.mubr.f32.mxu0 0.0
        %1803 = vmatmul.mubr.f32.gmra.mrb[0].mxu0 %v1622
        %v1804 = vpop.f32.mrb[0].mxu0
        %v1805 = vadd.f32 %v1592, %v1804
        %v1806 = vpop.f32.mrb[0].mxu0
        %1807 = vmatprep.mubr.f32.mxu0 0.0
        %1808 = vmatmul.mubr.f32.gmra.mrb[0].mxu0 %v1625
        %v1809 = vpop.f32.mrb[0].mxu0
        %v1810 = vadd.f32 %v1592, %v1809
        %v1811 = vpop.f32.mrb[0].mxu0
        %1812 = vmatprep.mubr.f32.mxu0 0.0
        %1813 = vmatmul.mubr.f32.gmra.mrb[0].mxu0 %v1628
        %v1814 = vpop.f32.mrb[0].mxu0
        %v1815 = vadd.f32 %v1592, %v1814
        %v1816 = vpop.f32.mrb[0].mxu0
        %1817 = vmatprep.mubr.f32.mxu0 0.0
        %1818 = vmatmul.mubr.f32.gmra.mrb[0].mxu0 %v1631
        %v1819 = vpop.f32.mrb[0].mxu0
        %v1820 = vadd.f32 %v1592, %v1819
        %v1821 = vpop.f32.mrb[0].mxu0
        %1822 = vmatprep.mubr.f32.mxu0 0.0
        %1823 = vmatmul.mubr.f32.gmra.mrb[0].mxu0 %v1634
        %v1824 = vpop.f32.mrb[0].mxu0
        %v1825 = vadd.f32 %v1592, %v1824
        %v1826 = vpop.f32.mrb[0].mxu0
        %1827 = vmatprep.mubr.f32.mxu0 0.0
        %1828 = vmatmul.mubr.f32.gmra.mrb[0].mxu0 %v1637
        %v1829 = vpop.f32.mrb[0].mxu0
        %v1830 = vadd.f32 %v1592, %v1829
        %v1831 = vpop.f32.mrb[0].mxu0
        %1832 = vmatprep.mubr.f32.mxu0 0.0
        %1833 = vmatmul.mubr.f32.gmra.mrb[0].mxu0 %v1640
        %v1834 = vpop.f32.mrb[0].mxu0
        %v1835 = vadd.f32 %v1592, %v1834
        %v1836 = vpop.f32.mrb[0].mxu0
        %1837 = vmatprep.mubr.f32.mxu0 0.0
        %1838 = vmatmul.mubr.f32.gmra.mrb[0].mxu0 %v1643
        %v1839 = vpop.f32.mrb[0].mxu0
        %v1840 = vadd.f32 %v1592, %v1839
        %v1841 = vpop.f32.mrb[0].mxu0
        %1842 = vmatprep.mubr.f32.mxu0 0.0
        %1843 = vmatmul.mubr.f32.gmra.mrb[0].mxu0 %v1646
        %v1844 = vpop.f32.mrb[0].mxu0
        %v1845 = vadd.f32 %v1592, %v1844
        %v1846 = vpop.f32.mrb[0].mxu0
        %1847 = vmatprep.mubr.f32.mxu0 0.0
        %1848 = vmatmul.mubr.f32.gmra.mrb[0].mxu0 %v1649
        %v1849 = vpop.f32.mrb[0].mxu0
        %v1850 = vadd.f32 %v1592, %v1849
        %v1851 = vpop.f32.mrb[0].mxu0
        %1852 = vmatprep.mubr.f32.mxu0 0.0
        %1853 = vmatmul.mubr.f32.gmra.mrb[0].mxu0 %v1652
        %v1854 = vpop.f32.mrb[0].mxu0
        %v1855 = vadd.f32 %v1592, %v1854
        %v1856 = vpop.f32.mrb[0].mxu0
        %1857 = vmatprep.mubr.f32.mxu0 0.0
        %1858 = vmatmul.mubr.f32.gmra.mrb[0].mxu0 %v1655
        %v1859 = vpop.f32.mrb[0].mxu0
        %v1860 = vadd.f32 %v1592, %v1859
        %v1861 = vpop.f32.mrb[0].mxu0
        %1862 = vmatprep.mubr.f32.mxu0 0.0
        %1863 = vmatmul.mubr.f32.gmra.mrb[0].mxu0 %v1658
        %v1864 = vpop.f32.mrb[0].mxu0
        %v1865 = vadd.f32 %v1592, %v1864
        %v1866 = vpop.f32.mrb[0].mxu0
        %1867 = vmatprep.mubr.f32.mxu0 0.0
        %1868 = vmatmul.mubr.f32.gmra.mrb[0].mxu0 %v1661
        %v1869 = vpop.f32.mrb[0].mxu0
        %v1870 = vadd.f32 %v1592, %v1869
        %v1871 = vpop.f32.mrb[0].mxu0
        %1872 = vmatprep.mubr.f32.mxu0 0.0
        %1873 = vmatmul.mubr.f32.gmra.mrb[0].mxu0 %v1664
        %v1874 = vpop.f32.mrb[0].mxu0
        %v1875 = vadd.f32 %v1592, %v1874
        %v1876 = vpop.f32.mrb[0].mxu0
        %1877 = vmatprep.mubr.f32.mxu0 0.0
        %1878 = vmatmul.mubr.f32.gmra.mrb[0].mxu0 %v1667
        %v1879 = vpop.f32.mrb[0].mxu0
        %v1880 = vadd.f32 %v1592, %v1879
        %v1881 = vpop.f32.mrb[0].mxu0
        %1882 = vmatprep.mubr.f32.mxu0 0.0
        %1883 = vmatmul.mubr.f32.gmra.mrb[0].mxu0 %v1670
        %v1884 = vpop.f32.mrb[0].mxu0
        %v1885 = vadd.f32 %v1592, %v1884
        %v1886 = vpop.f32.mrb[0].mxu0
        %1887 = vmatprep.mubr.f32.mxu0 0.0
        %1888 = vmatmul.mubr.f32.gmra.mrb[0].mxu0 %v1673
        %v1889 = vpop.f32.mrb[0].mxu0
        %v1890 = vadd.f32 %v1592, %v1889
        %v1891 = vpop.f32.mrb[0].mxu0
        %1892 = vmatprep.mubr.f32.mxu0 0.0
        %1893 = vmatmul.mubr.f32.gmra.mrb[0].mxu0 %v1676
        %v1894 = vpop.f32.mrb[0].mxu0
        %v1895 = vadd.f32 %v1592, %v1894
        %v1896 = vpop.f32.mrb[0].mxu0
        %1897 = vmatprep.mubr.f32.mxu0 0.0
        %1898 = vmatmul.mubr.f32.gmra.mrb[0].mxu0 %v1679
        %v1899 = vpop.f32.mrb[0].mxu0
        %v1900 = vadd.f32 %v1592, %v1899
        %v1901 = vpop.f32.mrb[0].mxu0
        %1902 = vmatprep.mubr.f32.mxu0 0.0
        %1903 = vmatmul.mubr.f32.gmra.mrb[0].mxu0 %v1682
        %v1904 = vpop.f32.mrb[0].mxu0
        %v1905 = vadd.f32 %v1592, %v1904
        %v1906 = vpop.f32.mrb[0].mxu0
        %1907 = vmatprep.mubr.f32.mxu0 0.0
        %1908 = vmatmul.mubr.f32.gmra.mrb[0].mxu0 %v1685
        %v1909 = vpop.f32.mrb[0].mxu0
        %v1910 = vadd.f32 %v1592, %v1909
        %v1911 = vpop.f32.mrb[0].mxu0
        %1912 = vmatprep.mubr.f32.mxu0 0.0
        %1913 = vmatmul.mubr.f32.gmra.mrb[0].mxu0 %v1688
        %v1914 = vpop.f32.mrb[0].mxu0
        %v1915 = vadd.f32 %v1592, %v1914
        %v1916 = vpop.f32.mrb[0].mxu0
        %1917 = vdwg.mxu0
        %v1918 = vmax.f32 %v1760, 0.0
        %v1919 = vmax.f32 %v1765, 0.0
        %v1920 = vmax.f32 %v1770, 0.0
        %v1921 = vmax.f32 %v1775, 0.0
        %v1922 = vmax.f32 %v1780, 0.0
        %v1923 = vmax.f32 %v1785, 0.0
        %v1924 = vmax.f32 %v1790, 0.0
        %v1925 = vmax.f32 %v1795, 0.0
        %v1926 = vmax.f32 %v1800, 0.0
        %v1927 = vmax.f32 %v1805, 0.0
        %v1928 = vmax.f32 %v1810, 0.0
        %v1929 = vmax.f32 %v1815, 0.0
        %v1930 = vmax.f32 %v1820, 0.0
        %v1931 = vmax.f32 %v1825, 0.0
        %v1932 = vmax.f32 %v1830, 0.0
        %v1933 = vmax.f32 %v1835, 0.0
        %v1934 = vmax.f32 %v1840, 0.0
        %v1935 = vmax.f32 %v1845, 0.0
        %v1936 = vmax.f32 %v1850, 0.0
        %v1937 = vmax.f32 %v1855, 0.0
        %v1938 = vmax.f32 %v1860, 0.0
        %v1939 = vmax.f32 %v1865, 0.0
        %v1940 = vmax.f32 %v1870, 0.0
        %v1941 = vmax.f32 %v1875, 0.0
        %v1942 = vmax.f32 %v1880, 0.0
        %v1943 = vmax.f32 %v1885, 0.0
        %v1944 = vmax.f32 %v1890, 0.0
        %v1945 = vmax.f32 %v1895, 0.0
        %v1946 = vmax.f32 %v1900, 0.0
        %v1947 = vmax.f32 %v1905, 0.0
        %v1948 = vmax.f32 %v1910, 0.0
        %v1949 = vmax.f32 %v1915, 0.0
        %v1950 = vld [vmem:[%s5] sm:$0xf]
        %v1951 = vld [vmem:[%s6] sm:$0x1]
        %v1953 = vlaneseq
        %v1954 = vshrl.u32 %v1953, 7
        %v1955 = vsub.s32 0, %v1954
        %v1956 = vrot.slane %v1951, %v1955
        %v1959 = vsel %vm645, %v1950, 0
        %1961 = vmatprep.subr.mxu0 0.0
        %1962 = vmatpush1.msra.mxu0 %v1959
        %1963 = vmatprep.subr.mxu0 0.0
        %1964 = vmatpush1.msra.mxu0 0.0
        %1965 = vmatprep.subr.mxu0 0.0
        %1966 = vmatpush1.msra.mxu0 0.0
        %1967 = vmatprep.subr.mxu0 0.0
        %1968 = vmatpush1.msra.mxu0 0.0
        %1969 = vmatprep.subr.mxu0 0.0
        %1970 = vmatpush1.msra.mxu0 0.0
        %1971 = vmatprep.subr.mxu0 0.0
        %1972 = vmatpush1.msra.mxu0 0.0
        %1973 = vmatprep.subr.mxu0 0.0
        %1974 = vmatpush1.msra.mxu0 0.0
        %1975 = vmatprep.subr.mxu0 0.0
        %1976 = vmatpush1.msra.mxu0 0.0
        %1977 = vmatprep.subr.mxu0 0.0
        %1978 = vmatpush1.msra.mxu0 0.0
        %1979 = vmatprep.subr.mxu0 0.0
        %1980 = vmatpush1.msra.mxu0 0.0
        %1981 = vmatprep.subr.mxu0 0.0
        %1982 = vmatpush1.msra.mxu0 0.0
        %1983 = vmatprep.subr.mxu0 0.0
        %1984 = vmatpush1.msra.mxu0 0.0
        %1985 = vmatprep.subr.mxu0 0.0
        %1986 = vmatpush1.msra.mxu0 0.0
        %1987 = vmatprep.subr.mxu0 0.0
        %1988 = vmatpush1.msra.mxu0 0.0
        %1989 = vmatprep.subr.mxu0 0.0
        %1990 = vmatpush1.msra.mxu0 0.0
        %1991 = vmatprep.subr.mxu0 0.0
        %1992 = vmatpush1.msra.mxu0 0.0
        %1993 = vmatprep.subr.mxu0 0.0
        %1994 = vmatpush1.msra.mxu0 0.0
        %1995 = vmatprep.subr.mxu0 0.0
        %1996 = vmatpush1.msra.mxu0 0.0
        %1997 = vmatprep.subr.mxu0 0.0
        %1998 = vmatpush1.msra.mxu0 0.0
        %1999 = vmatprep.subr.mxu0 0.0
        %2000 = vmatpush1.msra.mxu0 0.0
        %2001 = vmatprep.subr.mxu0 0.0
        %2002 = vmatpush1.msra.mxu0 0.0
        %2003 = vmatprep.subr.mxu0 0.0
        %2004 = vmatpush1.msra.mxu0 0.0
        %2005 = vmatprep.subr.mxu0 0.0
        %2006 = vmatpush1.msra.mxu0 0.0
        %2007 = vmatprep.subr.mxu0 0.0
        %2008 = vmatpush1.msra.mxu0 0.0
        %2009 = vmatprep.subr.mxu0 0.0
        %2010 = vmatpush1.msra.mxu0 0.0
        %2011 = vmatprep.subr.mxu0 0.0
        %2012 = vmatpush1.msra.mxu0 0.0
        %2013 = vmatprep.subr.mxu0 0.0
        %2014 = vmatpush1.msra.mxu0 0.0
        %2015 = vmatprep.subr.mxu0 0.0
        %2016 = vmatpush1.msra.mxu0 0.0
        %2017 = vmatprep.subr.mxu0 0.0
        %2018 = vmatpush1.msra.mxu0 0.0
        %2019 = vmatprep.subr.mxu0 0.0
        %2020 = vmatpush1.msra.mxu0 0.0
        %2021 = vmatprep.subr.mxu0 0.0
        %2022 = vmatpush1.msra.mxu0 0.0
        %2023 = vmatprep.subr.mxu0 0.0
        %2024 = vmatpush1.msra.mxu0 0.0
        %2025 = vmatprep.mubr.f32.mxu0 0.0
        %2026 = vmatmul.mubr.f32.gmra.mrb[0].mxu0 %v550
        %v2027 = vpop.f32.mrb[0].mxu0
        %v2028 = vadd.f32 %v1956, %v2027
        %v2029 = vpop.f32.mrb[0].mxu0
        %2030 = vmatprep.mubr.f32.mxu0 0.0
        %2031 = vmatmul.mubr.f32.gmra.mrb[0].mxu0 %v553
        %v2032 = vpop.f32.mrb[0].mxu0
        %v2033 = vadd.f32 %v1956, %v2032
        %v2034 = vpop.f32.mrb[0].mxu0
        %2035 = vmatprep.mubr.f32.mxu0 0.0
        %2036 = vmatmul.mubr.f32.gmra.mrb[0].mxu0 %v556
        %v2037 = vpop.f32.mrb[0].mxu0
        %v2038 = vadd.f32 %v1956, %v2037
        %v2039 = vpop.f32.mrb[0].mxu0
        %2040 = vmatprep.mubr.f32.mxu0 0.0
        %2041 = vmatmul.mubr.f32.gmra.mrb[0].mxu0 %v559
        %v2042 = vpop.f32.mrb[0].mxu0
        %v2043 = vadd.f32 %v1956, %v2042
        %v2044 = vpop.f32.mrb[0].mxu0
        %2045 = vmatprep.mubr.f32.mxu0 0.0
        %2046 = vmatmul.mubr.f32.gmra.mrb[0].mxu0 %v562
        %v2047 = vpop.f32.mrb[0].mxu0
        %v2048 = vadd.f32 %v1956, %v2047
        %v2049 = vpop.f32.mrb[0].mxu0
        %2050 = vmatprep.mubr.f32.mxu0 0.0
        %2051 = vmatmul.mubr.f32.gmra.mrb[0].mxu0 %v565
        %v2052 = vpop.f32.mrb[0].mxu0
        %v2053 = vadd.f32 %v1956, %v2052
        %v2054 = vpop.f32.mrb[0].mxu0
        %2055 = vmatprep.mubr.f32.mxu0 0.0
        %2056 = vmatmul.mubr.f32.gmra.mrb[0].mxu0 %v568
        %v2057 = vpop.f32.mrb[0].mxu0
        %v2058 = vadd.f32 %v1956, %v2057
        %v2059 = vpop.f32.mrb[0].mxu0
        %2060 = vmatprep.mubr.f32.mxu0 0.0
        %2061 = vmatmul.mubr.f32.gmra.mrb[0].mxu0 %v571
        %v2062 = vpop.f32.mrb[0].mxu0
        %v2063 = vadd.f32 %v1956, %v2062
        %v2064 = vpop.f32.mrb[0].mxu0
        %2065 = vmatprep.mubr.f32.mxu0 0.0
        %2066 = vmatmul.mubr.f32.gmra.mrb[0].mxu0 %v574
        %v2067 = vpop.f32.mrb[0].mxu0
        %v2068 = vadd.f32 %v1956, %v2067
        %v2069 = vpop.f32.mrb[0].mxu0
        %2070 = vmatprep.mubr.f32.mxu0 0.0
        %2071 = vmatmul.mubr.f32.gmra.mrb[0].mxu0 %v577
        %v2072 = vpop.f32.mrb[0].mxu0
        %v2073 = vadd.f32 %v1956, %v2072
        %v2074 = vpop.f32.mrb[0].mxu0
        %2075 = vmatprep.mubr.f32.mxu0 0.0
        %2076 = vmatmul.mubr.f32.gmra.mrb[0].mxu0 %v580
        %v2077 = vpop.f32.mrb[0].mxu0
        %v2078 = vadd.f32 %v1956, %v2077
        %v2079 = vpop.f32.mrb[0].mxu0
        %2080 = vmatprep.mubr.f32.mxu0 0.0
        %2081 = vmatmul.mubr.f32.gmra.mrb[0].mxu0 %v583
        %v2082 = vpop.f32.mrb[0].mxu0
        %v2083 = vadd.f32 %v1956, %v2082
        %v2084 = vpop.f32.mrb[0].mxu0
        %2085 = vmatprep.mubr.f32.mxu0 0.0
        %2086 = vmatmul.mubr.f32.gmra.mrb[0].mxu0 %v586
        %v2087 = vpop.f32.mrb[0].mxu0
        %v2088 = vadd.f32 %v1956, %v2087
        %v2089 = vpop.f32.mrb[0].mxu0
        %2090 = vmatprep.mubr.f32.mxu0 0.0
        %2091 = vmatmul.mubr.f32.gmra.mrb[0].mxu0 %v589
        %v2092 = vpop.f32.mrb[0].mxu0
        %v2093 = vadd.f32 %v1956, %v2092
        %v2094 = vpop.f32.mrb[0].mxu0
        %2095 = vmatprep.mubr.f32.mxu0 0.0
        %2096 = vmatmul.mubr.f32.gmra.mrb[0].mxu0 %v592
        %v2097 = vpop.f32.mrb[0].mxu0
        %v2098 = vadd.f32 %v1956, %v2097
        %v2099 = vpop.f32.mrb[0].mxu0
        %2100 = vmatprep.mubr.f32.mxu0 0.0
        %2101 = vmatmul.mubr.f32.gmra.mrb[0].mxu0 %v595
        %v2102 = vpop.f32.mrb[0].mxu0
        %v2103 = vadd.f32 %v1956, %v2102
        %v2104 = vpop.f32.mrb[0].mxu0
        %2105 = vmatprep.mubr.f32.mxu0 0.0
        %2106 = vmatmul.mubr.f32.gmra.mrb[0].mxu0 %v598
        %v2107 = vpop.f32.mrb[0].mxu0
        %v2108 = vadd.f32 %v1956, %v2107
        %v2109 = vpop.f32.mrb[0].mxu0
        %2110 = vmatprep.mubr.f32.mxu0 0.0
        %2111 = vmatmul.mubr.f32.gmra.mrb[0].mxu0 %v601
        %v2112 = vpop.f32.mrb[0].mxu0
        %v2113 = vadd.f32 %v1956, %v2112
        %v2114 = vpop.f32.mrb[0].mxu0
        %2115 = vmatprep.mubr.f32.mxu0 0.0
        %2116 = vmatmul.mubr.f32.gmra.mrb[0].mxu0 %v604
        %v2117 = vpop.f32.mrb[0].mxu0
        %v2118 = vadd.f32 %v1956, %v2117
        %v2119 = vpop.f32.mrb[0].mxu0
        %2120 = vmatprep.mubr.f32.mxu0 0.0
        %2121 = vmatmul.mubr.f32.gmra.mrb[0].mxu0 %v607
        %v2122 = vpop.f32.mrb[0].mxu0
        %v2123 = vadd.f32 %v1956, %v2122
        %v2124 = vpop.f32.mrb[0].mxu0
        %2125 = vmatprep.mubr.f32.mxu0 0.0
        %2126 = vmatmul.mubr.f32.gmra.mrb[0].mxu0 %v610
        %v2127 = vpop.f32.mrb[0].mxu0
        %v2128 = vadd.f32 %v1956, %v2127
        %v2129 = vpop.f32.mrb[0].mxu0
        %2130 = vmatprep.mubr.f32.mxu0 0.0
        %2131 = vmatmul.mubr.f32.gmra.mrb[0].mxu0 %v613
        %v2132 = vpop.f32.mrb[0].mxu0
        %v2133 = vadd.f32 %v1956, %v2132
        %v2134 = vpop.f32.mrb[0].mxu0
        %2135 = vmatprep.mubr.f32.mxu0 0.0
        %2136 = vmatmul.mubr.f32.gmra.mrb[0].mxu0 %v616
        %v2137 = vpop.f32.mrb[0].mxu0
        %v2138 = vadd.f32 %v1956, %v2137
        %v2139 = vpop.f32.mrb[0].mxu0
        %2140 = vmatprep.mubr.f32.mxu0 0.0
        %2141 = vmatmul.mubr.f32.gmra.mrb[0].mxu0 %v619
        %v2142 = vpop.f32.mrb[0].mxu0
        %v2143 = vadd.f32 %v1956, %v2142
        %v2144 = vpop.f32.mrb[0].mxu0
        %2145 = vmatprep.mubr.f32.mxu0 0.0
        %2146 = vmatmul.mubr.f32.gmra.mrb[0].mxu0 %v622
        %v2147 = vpop.f32.mrb[0].mxu0
        %v2148 = vadd.f32 %v1956, %v2147
        %v2149 = vpop.f32.mrb[0].mxu0
        %2150 = vmatprep.mubr.f32.mxu0 0.0
        %2151 = vmatmul.mubr.f32.gmra.mrb[0].mxu0 %v625
        %v2152 = vpop.f32.mrb[0].mxu0
        %v2153 = vadd.f32 %v1956, %v2152
        %v2154 = vpop.f32.mrb[0].mxu0
        %2155 = vmatprep.mubr.f32.mxu0 0.0
        %2156 = vmatmul.mubr.f32.gmra.mrb[0].mxu0 %v628
        %v2157 = vpop.f32.mrb[0].mxu0
        %v2158 = vadd.f32 %v1956, %v2157
        %v2159 = vpop.f32.mrb[0].mxu0
        %2160 = vmatprep.mubr.f32.mxu0 0.0
        %2161 = vmatmul.mubr.f32.gmra.mrb[0].mxu0 %v631
        %v2162 = vpop.f32.mrb[0].mxu0
        %v2163 = vadd.f32 %v1956, %v2162
        %v2164 = vpop.f32.mrb[0].mxu0
        %2165 = vmatprep.mubr.f32.mxu0 0.0
        %2166 = vmatmul.mubr.f32.gmra.mrb[0].mxu0 %v634
        %v2167 = vpop.f32.mrb[0].mxu0
        %v2168 = vadd.f32 %v1956, %v2167
        %v2169 = vpop.f32.mrb[0].mxu0
        %2170 = vmatprep.mubr.f32.mxu0 0.0
        %2171 = vmatmul.mubr.f32.gmra.mrb[0].mxu0 %v637
        %v2172 = vpop.f32.mrb[0].mxu0
        %v2173 = vadd.f32 %v1956, %v2172
        %v2174 = vpop.f32.mrb[0].mxu0
        %2175 = vmatprep.mubr.f32.mxu0 0.0
        %2176 = vmatmul.mubr.f32.gmra.mrb[0].mxu0 %v640
        %v2177 = vpop.f32.mrb[0].mxu0
        %v2178 = vadd.f32 %v1956, %v2177
        %v2179 = vpop.f32.mrb[0].mxu0
        %2180 = vmatprep.mubr.f32.mxu0 0.0
        %2181 = vmatmul.mubr.f32.gmra.mrb[0].mxu0 %v643
        %v2182 = vpop.f32.mrb[0].mxu0
        %v2183 = vadd.f32 %v1956, %v2182
        %v2184 = vpop.f32.mrb[0].mxu0
        %2185 = vdwg.mxu0
        %v2186 = vmax.f32 %v2028, 0.0
        %v2187 = vmax.f32 %v2033, 0.0
        %v2188 = vmax.f32 %v2038, 0.0
        %v2189 = vmax.f32 %v2043, 0.0
        %v2190 = vmax.f32 %v2048, 0.0
        %v2191 = vmax.f32 %v2053, 0.0
        %v2192 = vmax.f32 %v2058, 0.0
        %v2193 = vmax.f32 %v2063, 0.0
        %v2194 = vmax.f32 %v2068, 0.0
        %v2195 = vmax.f32 %v2073, 0.0
        %v2196 = vmax.f32 %v2078, 0.0
        %v2197 = vmax.f32 %v2083, 0.0
        %v2198 = vmax.f32 %v2088, 0.0
        %v2199 = vmax.f32 %v2093, 0.0
        %v2200 = vmax.f32 %v2098, 0.0
        %v2201 = vmax.f32 %v2103, 0.0
        %v2202 = vmax.f32 %v2108, 0.0
        %v2203 = vmax.f32 %v2113, 0.0
        %v2204 = vmax.f32 %v2118, 0.0
        %v2205 = vmax.f32 %v2123, 0.0
        %v2206 = vmax.f32 %v2128, 0.0
        %v2207 = vmax.f32 %v2133, 0.0
        %v2208 = vmax.f32 %v2138, 0.0
        %v2209 = vmax.f32 %v2143, 0.0
        %v2210 = vmax.f32 %v2148, 0.0
        %v2211 = vmax.f32 %v2153, 0.0
        %v2212 = vmax.f32 %v2158, 0.0
        %v2213 = vmax.f32 %v2163, 0.0
        %v2214 = vmax.f32 %v2168, 0.0
        %v2215 = vmax.f32 %v2173, 0.0
        %v2216 = vmax.f32 %v2178, 0.0
        %v2217 = vmax.f32 %v2183, 0.0
        %v2250 = vrot.slane %v2186, 7
        %v2251 = vrot.slane %v2187, 7
        %v2252 = vsel %vm906, %v2250, %v2251
        %v2253 = vrot.slane %v2188, 7
        %v2254 = vrot.slane %v2189, 7
        %v2255 = vsel %vm906, %v2253, %v2254
        %v2256 = vrot.slane %v2190, 7
        %v2257 = vrot.slane %v2191, 7
        %v2258 = vsel %vm906, %v2256, %v2257
        %v2259 = vrot.slane %v2192, 7
        %v2260 = vrot.slane %v2193, 7
        %v2261 = vsel %vm906, %v2259, %v2260
        %v2262 = vrot.slane %v2194, 7
        %v2263 = vrot.slane %v2195, 7
        %v2264 = vsel %vm906, %v2262, %v2263
        %v2265 = vrot.slane %v2196, 7
        %v2266 = vrot.slane %v2197, 7
        %v2267 = vsel %vm906, %v2265, %v2266
        %v2268 = vrot.slane %v2198, 7
        %v2269 = vrot.slane %v2199, 7
        %v2270 = vsel %vm906, %v2268, %v2269
        %v2271 = vrot.slane %v2200, 7
        %v2272 = vrot.slane %v2201, 7
        %v2273 = vsel %vm906, %v2271, %v2272
        %v2274 = vrot.slane %v2202, 7
        %v2275 = vrot.slane %v2203, 7
        %v2276 = vsel %vm906, %v2274, %v2275
        %v2277 = vrot.slane %v2204, 7
        %v2278 = vrot.slane %v2205, 7
        %v2279 = vsel %vm906, %v2277, %v2278
        %v2280 = vrot.slane %v2206, 7
        %v2281 = vrot.slane %v2207, 7
        %v2282 = vsel %vm906, %v2280, %v2281
        %v2283 = vrot.slane %v2208, 7
        %v2284 = vrot.slane %v2209, 7
        %v2285 = vsel %vm906, %v2283, %v2284
        %v2286 = vrot.slane %v2210, 7
        %v2287 = vrot.slane %v2211, 7
        %v2288 = vsel %vm906, %v2286, %v2287
        %v2289 = vrot.slane %v2212, 7
        %v2290 = vrot.slane %v2213, 7
        %v2291 = vsel %vm906, %v2289, %v2290
        %v2292 = vrot.slane %v2214, 7
        %v2293 = vrot.slane %v2215, 7
        %v2294 = vsel %vm906, %v2292, %v2293
        %v2295 = vrot.slane %v2216, 7
        %v2296 = vrot.slane %v2217, 7
        %v2297 = vsel %vm906, %v2295, %v2296
        %v2345 = vsel %vm906, 0.0, %v2250
        %v2346 = vsel %vm906, 0.0, %v2253
        %v2347 = vsel %vm906, 0.0, %v2256
        %v2348 = vsel %vm906, 0.0, %v2259
        %v2349 = vsel %vm906, 0.0, %v2262
        %v2350 = vsel %vm906, 0.0, %v2265
        %v2351 = vsel %vm906, 0.0, %v2268
        %v2352 = vsel %vm906, 0.0, %v2271
        %v2353 = vsel %vm906, 0.0, %v2274
        %v2354 = vsel %vm906, 0.0, %v2277
        %v2355 = vsel %vm906, 0.0, %v2280
        %v2356 = vsel %vm906, 0.0, %v2283
        %v2357 = vsel %vm906, 0.0, %v2286
        %v2358 = vsel %vm906, 0.0, %v2289
        %v2359 = vsel %vm906, 0.0, %v2292
        %v2360 = vsel %vm906, 0.0, %v2295
        %v2361 = vsel %vm906, %v2251, 0.0
        %v2362 = vsel %vm906, %v2254, 0.0
        %v2363 = vsel %vm906, %v2257, 0.0
        %v2364 = vsel %vm906, %v2260, 0.0
        %v2365 = vsel %vm906, %v2263, 0.0
        %v2366 = vsel %vm906, %v2266, 0.0
        %v2367 = vsel %vm906, %v2269, 0.0
        %v2368 = vsel %vm906, %v2272, 0.0
        %v2369 = vsel %vm906, %v2275, 0.0
        %v2370 = vsel %vm906, %v2278, 0.0
        %v2371 = vsel %vm906, %v2281, 0.0
        %v2372 = vsel %vm906, %v2284, 0.0
        %v2373 = vsel %vm906, %v2287, 0.0
        %v2374 = vsel %vm906, %v2290, 0.0
        %v2375 = vsel %vm906, %v2293, 0.0
        %v2376 = vsel %vm906, %v2296, 0.0
        %v2407 = vrot.slane %v2345, 1
        %v2408 = vrot.slane %v2252, 1
        %v2409 = vsel %vm1066, %v2407, %v2408
        %v2410 = vrot.slane %v2361, 1
        %v2411 = vsel %vm1066, %v2408, %v2410
        %v2412 = vrot.slane %v2346, 1
        %v2413 = vrot.slane %v2255, 1
        %v2414 = vsel %vm1066, %v2412, %v2413
        %v2415 = vrot.slane %v2362, 1
        %v2416 = vsel %vm1066, %v2413, %v2415
        %v2417 = vrot.slane %v2347, 1
        %v2418 = vrot.slane %v2258, 1
        %v2419 = vsel %vm1066, %v2417, %v2418
        %v2420 = vrot.slane %v2363, 1
        %v2421 = vsel %vm1066, %v2418, %v2420
        %v2422 = vrot.slane %v2348, 1
        %v2423 = vrot.slane %v2261, 1
        %v2424 = vsel %vm1066, %v2422, %v2423
        %v2425 = vrot.slane %v2364, 1
        %v2426 = vsel %vm1066, %v2423, %v2425
        %v2427 = vrot.slane %v2349, 1
        %v2428 = vrot.slane %v2264, 1
        %v2429 = vsel %vm1066, %v2427, %v2428
        %v2430 = vrot.slane %v2365, 1
        %v2431 = vsel %vm1066, %v2428, %v2430
        %v2432 = vrot.slane %v2350, 1
        %v2433 = vrot.slane %v2267, 1
        %v2434 = vsel %vm1066, %v2432, %v2433
        %v2435 = vrot.slane %v2366, 1
        %v2436 = vsel %vm1066, %v2433, %v2435
        %v2437 = vrot.slane %v2351, 1
        %v2438 = vrot.slane %v2270, 1
        %v2439 = vsel %vm1066, %v2437, %v2438
        %v2440 = vrot.slane %v2367, 1
        %v2441 = vsel %vm1066, %v2438, %v2440
        %v2442 = vrot.slane %v2352, 1
        %v2443 = vrot.slane %v2273, 1
        %v2444 = vsel %vm1066, %v2442, %v2443
        %v2445 = vrot.slane %v2368, 1
        %v2446 = vsel %vm1066, %v2443, %v2445
        %v2447 = vrot.slane %v2353, 1
        %v2448 = vrot.slane %v2276, 1
        %v2449 = vsel %vm1066, %v2447, %v2448
        %v2450 = vrot.slane %v2369, 1
        %v2451 = vsel %vm1066, %v2448, %v2450
        %v2452 = vrot.slane %v2354, 1
        %v2453 = vrot.slane %v2279, 1
        %v2454 = vsel %vm1066, %v2452, %v2453
        %v2455 = vrot.slane %v2370, 1
        %v2456 = vsel %vm1066, %v2453, %v2455
        %v2457 = vrot.slane %v2355, 1
        %v2458 = vrot.slane %v2282, 1
        %v2459 = vsel %vm1066, %v2457, %v2458
        %v2460 = vrot.slane %v2371, 1
        %v2461 = vsel %vm1066, %v2458, %v2460
        %v2462 = vrot.slane %v2356, 1
        %v2463 = vrot.slane %v2285, 1
        %v2464 = vsel %vm1066, %v2462, %v2463
        %v2465 = vrot.slane %v2372, 1
        %v2466 = vsel %vm1066, %v2463, %v2465
        %v2467 = vrot.slane %v2357, 1
        %v2468 = vrot.slane %v2288, 1
        %v2469 = vsel %vm1066, %v2467, %v2468
        %v2470 = vrot.slane %v2373, 1
        %v2471 = vsel %vm1066, %v2468, %v2470
        %v2472 = vrot.slane %v2358, 1
        %v2473 = vrot.slane %v2291, 1
        %v2474 = vsel %vm1066, %v2472, %v2473
        %v2475 = vrot.slane %v2374, 1
        %v2476 = vsel %vm1066, %v2473, %v2475
        %v2477 = vrot.slane %v2359, 1
        %v2478 = vrot.slane %v2294, 1
        %v2479 = vsel %vm1066, %v2477, %v2478
        %v2480 = vrot.slane %v2375, 1
        %v2481 = vsel %vm1066, %v2478, %v2480
        %2482 = vrot.lane.b32.xlu0 %v1068, 24
        %v2483 = vpop.permute.xlu0 %2482
        %2484 = vrot.lane.b32.xlu0 %v2409, 24
        %v2485 = vpop.permute.xlu0 %2484
        %2486 = vrot.lane.b32.xlu0 %v2411, 24
        %v2487 = vpop.permute.xlu0 %2486
        %2488 = vrot.lane.b32.xlu0 %v2414, 24
        %v2489 = vpop.permute.xlu0 %2488
        %2490 = vrot.lane.b32.xlu0 %v2416, 24
        %v2491 = vpop.permute.xlu0 %2490
        %2492 = vrot.lane.b32.xlu0 %v2419, 24
        %v2493 = vpop.permute.xlu0 %2492
        %2494 = vrot.lane.b32.xlu0 %v2421, 24
        %v2495 = vpop.permute.xlu0 %2494
        %2496 = vrot.lane.b32.xlu0 %v2424, 24
        %v2497 = vpop.permute.xlu0 %2496
        %2498 = vrot.lane.b32.xlu0 %v2426, 24
        %v2499 = vpop.permute.xlu0 %2498
        %2500 = vrot.lane.b32.xlu0 %v2429, 24
        %v2501 = vpop.permute.xlu0 %2500
        %2502 = vrot.lane.b32.xlu0 %v2431, 24
        %v2503 = vpop.permute.xlu0 %2502
        %2504 = vrot.lane.b32.xlu0 %v2434, 24
        %v2505 = vpop.permute.xlu0 %2504
        %2506 = vrot.lane.b32.xlu0 %v2436, 24
        %v2507 = vpop.permute.xlu0 %2506
        %2508 = vrot.lane.b32.xlu0 %v2439, 24
        %v2509 = vpop.permute.xlu0 %2508
        %2510 = vrot.lane.b32.xlu0 %v2441, 24
        %v2511 = vpop.permute.xlu0 %2510
        %2512 = vrot.lane.b32.xlu0 %v2444, 24
        %v2513 = vpop.permute.xlu0 %2512
        %2514 = vrot.lane.b32.xlu0 %v2446, 24
        %v2515 = vpop.permute.xlu0 %2514
        %2516 = vrot.lane.b32.xlu0 %v2449, 24
        %v2517 = vpop.permute.xlu0 %2516
        %2518 = vrot.lane.b32.xlu0 %v2451, 24
        %v2519 = vpop.permute.xlu0 %2518
        %2520 = vrot.lane.b32.xlu0 %v2454, 24
        %v2521 = vpop.permute.xlu0 %2520
        %2522 = vrot.lane.b32.xlu0 %v2456, 24
        %v2523 = vpop.permute.xlu0 %2522
        %2524 = vrot.lane.b32.xlu0 %v2459, 24
        %v2525 = vpop.permute.xlu0 %2524
        %2526 = vrot.lane.b32.xlu0 %v2461, 24
        %v2527 = vpop.permute.xlu0 %2526
        %2528 = vrot.lane.b32.xlu0 %v2464, 24
        %v2529 = vpop.permute.xlu0 %2528
        %2530 = vrot.lane.b32.xlu0 %v2466, 24
        %v2531 = vpop.permute.xlu0 %2530
        %2532 = vrot.lane.b32.xlu0 %v2469, 24
        %v2533 = vpop.permute.xlu0 %2532
        %2534 = vrot.lane.b32.xlu0 %v2471, 24
        %v2535 = vpop.permute.xlu0 %2534
        %2536 = vrot.lane.b32.xlu0 %v2474, 24
        %v2537 = vpop.permute.xlu0 %2536
        %2538 = vrot.lane.b32.xlu0 %v2476, 24
        %v2539 = vpop.permute.xlu0 %2538
        %2540 = vrot.lane.b32.xlu0 %v2479, 24
        %v2541 = vpop.permute.xlu0 %2540
        %2542 = vrot.lane.b32.xlu0 %v2481, 24
        %v2543 = vpop.permute.xlu0 %2542
        %v2575 = vrot.slane %v2345, 2
        %v2576 = vrot.slane %v2252, 2
        %v2577 = vsel %vm1206, %v2575, %v2576
        %v2578 = vrot.slane %v2361, 2
        %v2579 = vsel %vm1206, %v2576, %v2578
        %v2580 = vrot.slane %v2346, 2
        %v2581 = vrot.slane %v2255, 2
        %v2582 = vsel %vm1206, %v2580, %v2581
        %v2583 = vrot.slane %v2362, 2
        %v2584 = vsel %vm1206, %v2581, %v2583
        %v2585 = vrot.slane %v2347, 2
        %v2586 = vrot.slane %v2258, 2
        %v2587 = vsel %vm1206, %v2585, %v2586
        %v2588 = vrot.slane %v2363, 2
        %v2589 = vsel %vm1206, %v2586, %v2588
        %v2590 = vrot.slane %v2348, 2
        %v2591 = vrot.slane %v2261, 2
        %v2592 = vsel %vm1206, %v2590, %v2591
        %v2593 = vrot.slane %v2364, 2
        %v2594 = vsel %vm1206, %v2591, %v2593
        %v2595 = vrot.slane %v2349, 2
        %v2596 = vrot.slane %v2264, 2
        %v2597 = vsel %vm1206, %v2595, %v2596
        %v2598 = vrot.slane %v2365, 2
        %v2599 = vsel %vm1206, %v2596, %v2598
        %v2600 = vrot.slane %v2350, 2
        %v2601 = vrot.slane %v2267, 2
        %v2602 = vsel %vm1206, %v2600, %v2601
        %v2603 = vrot.slane %v2366, 2
        %v2604 = vsel %vm1206, %v2601, %v2603
        %v2605 = vrot.slane %v2351, 2
        %v2606 = vrot.slane %v2270, 2
        %v2607 = vsel %vm1206, %v2605, %v2606
        %v2608 = vrot.slane %v2367, 2
        %v2609 = vsel %vm1206, %v2606, %v2608
        %v2610 = vrot.slane %v2352, 2
        %v2611 = vrot.slane %v2273, 2
        %v2612 = vsel %vm1206, %v2610, %v2611
        %v2613 = vrot.slane %v2368, 2
        %v2614 = vsel %vm1206, %v2611, %v2613
        %v2615 = vrot.slane %v2353, 2
        %v2616 = vrot.slane %v2276, 2
        %v2617 = vsel %vm1206, %v2615, %v2616
        %v2618 = vrot.slane %v2369, 2
        %v2619 = vsel %vm1206, %v2616, %v2618
        %v2620 = vrot.slane %v2354, 2
        %v2621 = vrot.slane %v2279, 2
        %v2622 = vsel %vm1206, %v2620, %v2621
        %v2623 = vrot.slane %v2370, 2
        %v2624 = vsel %vm1206, %v2621, %v2623
        %v2625 = vrot.slane %v2355, 2
        %v2626 = vrot.slane %v2282, 2
        %v2627 = vsel %vm1206, %v2625, %v2626
        %v2628 = vrot.slane %v2371, 2
        %v2629 = vsel %vm1206, %v2626, %v2628
        %v2630 = vrot.slane %v2356, 2
        %v2631 = vrot.slane %v2285, 2
        %v2632 = vsel %vm1206, %v2630, %v2631
        %v2633 = vrot.slane %v2372, 2
        %v2634 = vsel %vm1206, %v2631, %v2633
        %v2635 = vrot.slane %v2357, 2
        %v2636 = vrot.slane %v2288, 2
        %v2637 = vsel %vm1206, %v2635, %v2636
        %v2638 = vrot.slane %v2373, 2
        %v2639 = vsel %vm1206, %v2636, %v2638
        %v2640 = vrot.slane %v2358, 2
        %v2641 = vrot.slane %v2291, 2
        %v2642 = vsel %vm1206, %v2640, %v2641
        %v2643 = vrot.slane %v2374, 2
        %v2644 = vsel %vm1206, %v2641, %v2643
        %v2645 = vrot.slane %v2359, 2
        %v2646 = vrot.slane %v2294, 2
        %v2647 = vsel %vm1206, %v2645, %v2646
        %v2648 = vrot.slane %v2375, 2
        %v2649 = vsel %vm1206, %v2646, %v2648
        %2650 = vrot.lane.b32.xlu0 %v1208, 48
        %v2651 = vpop.permute.xlu0 %2650
        %2652 = vrot.lane.b32.xlu0 %v2577, 48
        %v2653 = vpop.permute.xlu0 %2652
        %2654 = vrot.lane.b32.xlu0 %v2579, 48
        %v2655 = vpop.permute.xlu0 %2654
        %2656 = vrot.lane.b32.xlu0 %v2582, 48
        %v2657 = vpop.permute.xlu0 %2656
        %2658 = vrot.lane.b32.xlu0 %v2584, 48
        %v2659 = vpop.permute.xlu0 %2658
        %2660 = vrot.lane.b32.xlu0 %v2587, 48
        %v2661 = vpop.permute.xlu0 %2660
        %2662 = vrot.lane.b32.xlu0 %v2589, 48
        %v2663 = vpop.permute.xlu0 %2662
        %2664 = vrot.lane.b32.xlu0 %v2592, 48
        %v2665 = vpop.permute.xlu0 %2664
        %2666 = vrot.lane.b32.xlu0 %v2594, 48
        %v2667 = vpop.permute.xlu0 %2666
        %2668 = vrot.lane.b32.xlu0 %v2597, 48
        %v2669 = vpop.permute.xlu0 %2668
        %2670 = vrot.lane.b32.xlu0 %v2599, 48
        %v2671 = vpop.permute.xlu0 %2670
        %2672 = vrot.lane.b32.xlu0 %v2602, 48
        %v2673 = vpop.permute.xlu0 %2672
        %2674 = vrot.lane.b32.xlu0 %v2604, 48
        %v2675 = vpop.permute.xlu0 %2674
        %2676 = vrot.lane.b32.xlu0 %v2607, 48
        %v2677 = vpop.permute.xlu0 %2676
        %2678 = vrot.lane.b32.xlu0 %v2609, 48
        %v2679 = vpop.permute.xlu0 %2678
        %2680 = vrot.lane.b32.xlu0 %v2612, 48
        %v2681 = vpop.permute.xlu0 %2680
        %2682 = vrot.lane.b32.xlu0 %v2614, 48
        %v2683 = vpop.permute.xlu0 %2682
        %2684 = vrot.lane.b32.xlu0 %v2617, 48
        %v2685 = vpop.permute.xlu0 %2684
        %2686 = vrot.lane.b32.xlu0 %v2619, 48
        %v2687 = vpop.permute.xlu0 %2686
        %2688 = vrot.lane.b32.xlu0 %v2622, 48
        %v2689 = vpop.permute.xlu0 %2688
        %2690 = vrot.lane.b32.xlu0 %v2624, 48
        %v2691 = vpop.permute.xlu0 %2690
        %2692 = vrot.lane.b32.xlu0 %v2627, 48
        %v2693 = vpop.permute.xlu0 %2692
        %2694 = vrot.lane.b32.xlu0 %v2629, 48
        %v2695 = vpop.permute.xlu0 %2694
        %2696 = vrot.lane.b32.xlu0 %v2632, 48
        %v2697 = vpop.permute.xlu0 %2696
        %2698 = vrot.lane.b32.xlu0 %v2634, 48
        %v2699 = vpop.permute.xlu0 %2698
        %2700 = vrot.lane.b32.xlu0 %v2637, 48
        %v2701 = vpop.permute.xlu0 %2700
        %2702 = vrot.lane.b32.xlu0 %v2639, 48
        %v2703 = vpop.permute.xlu0 %2702
        %2704 = vrot.lane.b32.xlu0 %v2642, 48
        %v2705 = vpop.permute.xlu0 %2704
        %2706 = vrot.lane.b32.xlu0 %v2644, 48
        %v2707 = vpop.permute.xlu0 %2706
        %2708 = vrot.lane.b32.xlu0 %v2647, 48
        %v2709 = vpop.permute.xlu0 %2708
        %2710 = vrot.lane.b32.xlu0 %v2649, 48
        %v2711 = vpop.permute.xlu0 %2710
        %2744 = vrot.lane.b32.xlu0 %v2345, 72
        %v2745 = vpop.permute.xlu0 %2744
        %2746 = vrot.lane.b32.xlu0 %v2252, 72
        %v2747 = vpop.permute.xlu0 %2746
        %2748 = vrot.lane.b32.xlu0 %v2346, 72
        %v2749 = vpop.permute.xlu0 %2748
        %2750 = vrot.lane.b32.xlu0 %v2255, 72
        %v2751 = vpop.permute.xlu0 %2750
        %2752 = vrot.lane.b32.xlu0 %v2347, 72
        %v2753 = vpop.permute.xlu0 %2752
        %2754 = vrot.lane.b32.xlu0 %v2258, 72
        %v2755 = vpop.permute.xlu0 %2754
        %2756 = vrot.lane.b32.xlu0 %v2348, 72
        %v2757 = vpop.permute.xlu0 %2756
        %2758 = vrot.lane.b32.xlu0 %v2261, 72
        %v2759 = vpop.permute.xlu0 %2758
        %2760 = vrot.lane.b32.xlu0 %v2349, 72
        %v2761 = vpop.permute.xlu0 %2760
        %2762 = vrot.lane.b32.xlu0 %v2264, 72
        %v2763 = vpop.permute.xlu0 %2762
        %2764 = vrot.lane.b32.xlu0 %v2350, 72
        %v2765 = vpop.permute.xlu0 %2764
        %2766 = vrot.lane.b32.xlu0 %v2267, 72
        %v2767 = vpop.permute.xlu0 %2766
        %2768 = vrot.lane.b32.xlu0 %v2351, 72
        %v2769 = vpop.permute.xlu0 %2768
        %2770 = vrot.lane.b32.xlu0 %v2270, 72
        %v2771 = vpop.permute.xlu0 %2770
        %2772 = vrot.lane.b32.xlu0 %v2352, 72
        %v2773 = vpop.permute.xlu0 %2772
        %2774 = vrot.lane.b32.xlu0 %v2273, 72
        %v2775 = vpop.permute.xlu0 %2774
        %2776 = vrot.lane.b32.xlu0 %v2353, 72
        %v2777 = vpop.permute.xlu0 %2776
        %2778 = vrot.lane.b32.xlu0 %v2276, 72
        %v2779 = vpop.permute.xlu0 %2778
        %2780 = vrot.lane.b32.xlu0 %v2354, 72
        %v2781 = vpop.permute.xlu0 %2780
        %2782 = vrot.lane.b32.xlu0 %v2279, 72
        %v2783 = vpop.permute.xlu0 %2782
        %2784 = vrot.lane.b32.xlu0 %v2355, 72
        %v2785 = vpop.permute.xlu0 %2784
        %2786 = vrot.lane.b32.xlu0 %v2282, 72
        %v2787 = vpop.permute.xlu0 %2786
        %2788 = vrot.lane.b32.xlu0 %v2356, 72
        %v2789 = vpop.permute.xlu0 %2788
        %2790 = vrot.lane.b32.xlu0 %v2285, 72
        %v2791 = vpop.permute.xlu0 %2790
        %2792 = vrot.lane.b32.xlu0 %v2357, 72
        %v2793 = vpop.permute.xlu0 %2792
        %2794 = vrot.lane.b32.xlu0 %v2288, 72
        %v2795 = vpop.permute.xlu0 %2794
        %2796 = vrot.lane.b32.xlu0 %v2358, 72
        %v2797 = vpop.permute.xlu0 %2796
        %2798 = vrot.lane.b32.xlu0 %v2291, 72
        %v2799 = vpop.permute.xlu0 %2798
        %2800 = vrot.lane.b32.xlu0 %v2359, 72
        %v2801 = vpop.permute.xlu0 %2800
        %2802 = vrot.lane.b32.xlu0 %v2294, 72
        %v2803 = vpop.permute.xlu0 %2802
        %2804 = vrot.lane.b32.xlu0 %v2360, 72
        %v2805 = vpop.permute.xlu0 %2804
        %2806 = vrot.lane.b32.xlu0 %v2297, 72
        %v2807 = vpop.permute.xlu0 %2806
        %v2841 = vrot.slane %v2360, 1
        %v2842 = vrot.slane %v2297, 1
        %v2843 = vsel %vm1066, %v2841, %v2842
        %v2844 = vrot.slane %v2376, 1
        %v2845 = vsel %vm1066, %v2842, %v2844
        %2846 = vrot.lane.b32.xlu0 %v2409, 96
        %v2847 = vpop.permute.xlu0 %2846
        %2848 = vrot.lane.b32.xlu0 %v2411, 96
        %v2849 = vpop.permute.xlu0 %2848
        %2850 = vrot.lane.b32.xlu0 %v2414, 96
        %v2851 = vpop.permute.xlu0 %2850
        %2852 = vrot.lane.b32.xlu0 %v2416, 96
        %v2853 = vpop.permute.xlu0 %2852
        %2854 = vrot.lane.b32.xlu0 %v2419, 96
        %v2855 = vpop.permute.xlu0 %2854
        %2856 = vrot.lane.b32.xlu0 %v2421, 96
        %v2857 = vpop.permute.xlu0 %2856
        %2858 = vrot.lane.b32.xlu0 %v2424, 96
        %v2859 = vpop.permute.xlu0 %2858
        %2860 = vrot.lane.b32.xlu0 %v2426, 96
        %v2861 = vpop.permute.xlu0 %2860
        %2862 = vrot.lane.b32.xlu0 %v2429, 96
        %v2863 = vpop.permute.xlu0 %2862
        %2864 = vrot.lane.b32.xlu0 %v2431, 96
        %v2865 = vpop.permute.xlu0 %2864
        %2866 = vrot.lane.b32.xlu0 %v2434, 96
        %v2867 = vpop.permute.xlu0 %2866
        %2868 = vrot.lane.b32.xlu0 %v2436, 96
        %v2869 = vpop.permute.xlu0 %2868
        %2870 = vrot.lane.b32.xlu0 %v2439, 96
        %v2871 = vpop.permute.xlu0 %2870
        %2872 = vrot.lane.b32.xlu0 %v2441, 96
        %v2873 = vpop.permute.xlu0 %2872
        %2874 = vrot.lane.b32.xlu0 %v2444, 96
        %v2875 = vpop.permute.xlu0 %2874
        %2876 = vrot.lane.b32.xlu0 %v2446, 96
        %v2877 = vpop.permute.xlu0 %2876
        %2878 = vrot.lane.b32.xlu0 %v2449, 96
        %v2879 = vpop.permute.xlu0 %2878
        %2880 = vrot.lane.b32.xlu0 %v2451, 96
        %v2881 = vpop.permute.xlu0 %2880
        %2882 = vrot.lane.b32.xlu0 %v2454, 96
        %v2883 = vpop.permute.xlu0 %2882
        %2884 = vrot.lane.b32.xlu0 %v2456, 96
        %v2885 = vpop.permute.xlu0 %2884
        %2886 = vrot.lane.b32.xlu0 %v2459, 96
        %v2887 = vpop.permute.xlu0 %2886
        %2888 = vrot.lane.b32.xlu0 %v2461, 96
        %v2889 = vpop.permute.xlu0 %2888
        %2890 = vrot.lane.b32.xlu0 %v2464, 96
        %v2891 = vpop.permute.xlu0 %2890
        %2892 = vrot.lane.b32.xlu0 %v2466, 96
        %v2893 = vpop.permute.xlu0 %2892
        %2894 = vrot.lane.b32.xlu0 %v2469, 96
        %v2895 = vpop.permute.xlu0 %2894
        %2896 = vrot.lane.b32.xlu0 %v2471, 96
        %v2897 = vpop.permute.xlu0 %2896
        %2898 = vrot.lane.b32.xlu0 %v2474, 96
        %v2899 = vpop.permute.xlu0 %2898
        %2900 = vrot.lane.b32.xlu0 %v2476, 96
        %v2901 = vpop.permute.xlu0 %2900
        %2902 = vrot.lane.b32.xlu0 %v2479, 96
        %v2903 = vpop.permute.xlu0 %2902
        %2904 = vrot.lane.b32.xlu0 %v2481, 96
        %v2905 = vpop.permute.xlu0 %2904
        %2906 = vrot.lane.b32.xlu0 %v2843, 96
        %v2907 = vpop.permute.xlu0 %2906
        %2908 = vrot.lane.b32.xlu0 %v2845, 96
        %v2909 = vpop.permute.xlu0 %2908
        %v2942 = vrot.slane %v2360, 2
        %v2943 = vrot.slane %v2297, 2
        %v2944 = vsel %vm1206, %v2942, %v2943
        %v2945 = vrot.slane %v2376, 2
        %v2946 = vsel %vm1206, %v2943, %v2945
        %2947 = vrot.lane.b32.xlu0 %v2577, 120
        %v2948 = vpop.permute.xlu0 %2947
        %2949 = vrot.lane.b32.xlu0 %v2579, 120
        %v2950 = vpop.permute.xlu0 %2949
        %2951 = vrot.lane.b32.xlu0 %v2582, 120
        %v2952 = vpop.permute.xlu0 %2951
        %2953 = vrot.lane.b32.xlu0 %v2584, 120
        %v2954 = vpop.permute.xlu0 %2953
        %2955 = vrot.lane.b32.xlu0 %v2587, 120
        %v2956 = vpop.permute.xlu0 %2955
        %2957 = vrot.lane.b32.xlu0 %v2589, 120
        %v2958 = vpop.permute.xlu0 %2957
        %2959 = vrot.lane.b32.xlu0 %v2592, 120
        %v2960 = vpop.permute.xlu0 %2959
        %2961 = vrot.lane.b32.xlu0 %v2594, 120
        %v2962 = vpop.permute.xlu0 %2961
        %2963 = vrot.lane.b32.xlu0 %v2597, 120
        %v2964 = vpop.permute.xlu0 %2963
        %2965 = vrot.lane.b32.xlu0 %v2599, 120
        %v2966 = vpop.permute.xlu0 %2965
        %2967 = vrot.lane.b32.xlu0 %v2602, 120
        %v2968 = vpop.permute.xlu0 %2967
        %2969 = vrot.lane.b32.xlu0 %v2604, 120
        %v2970 = vpop.permute.xlu0 %2969
        %2971 = vrot.lane.b32.xlu0 %v2607, 120
        %v2972 = vpop.permute.xlu0 %2971
        %2973 = vrot.lane.b32.xlu0 %v2609, 120
        %v2974 = vpop.permute.xlu0 %2973
        %2975 = vrot.lane.b32.xlu0 %v2612, 120
        %v2976 = vpop.permute.xlu0 %2975
        %2977 = vrot.lane.b32.xlu0 %v2614, 120
        %v2978 = vpop.permute.xlu0 %2977
        %2979 = vrot.lane.b32.xlu0 %v2617, 120
        %v2980 = vpop.permute.xlu0 %2979
        %2981 = vrot.lane.b32.xlu0 %v2619, 120
        %v2982 = vpop.permute.xlu0 %2981
        %2983 = vrot.lane.b32.xlu0 %v2622, 120
        %v2984 = vpop.permute.xlu0 %2983
        %2985 = vrot.lane.b32.xlu0 %v2624, 120
        %v2986 = vpop.permute.xlu0 %2985
        %2987 = vrot.lane.b32.xlu0 %v2627, 120
        %v2988 = vpop.permute.xlu0 %2987
        %2989 = vrot.lane.b32.xlu0 %v2629, 120
        %v2990 = vpop.permute.xlu0 %2989
        %2991 = vrot.lane.b32.xlu0 %v2632, 120
        %v2992 = vpop.permute.xlu0 %2991
        %2993 = vrot.lane.b32.xlu0 %v2634, 120
        %v2994 = vpop.permute.xlu0 %2993
        %2995 = vrot.lane.b32.xlu0 %v2637, 120
        %v2996 = vpop.permute.xlu0 %2995
        %2997 = vrot.lane.b32.xlu0 %v2639, 120
        %v2998 = vpop.permute.xlu0 %2997
        %2999 = vrot.lane.b32.xlu0 %v2642, 120
        %v3000 = vpop.permute.xlu0 %2999
        %3001 = vrot.lane.b32.xlu0 %v2644, 120
        %v3002 = vpop.permute.xlu0 %3001
        %3003 = vrot.lane.b32.xlu0 %v2647, 120
        %v3004 = vpop.permute.xlu0 %3003
        %3005 = vrot.lane.b32.xlu0 %v2649, 120
        %v3006 = vpop.permute.xlu0 %3005
        %3007 = vrot.lane.b32.xlu0 %v2944, 120
        %v3008 = vpop.permute.xlu0 %3007
        %3009 = vrot.lane.b32.xlu0 %v2946, 120
        %v3010 = vpop.permute.xlu0 %3009
        %3043 = vrot.lane.b32.xlu0 %v2346, 16
        %v3044 = vpop.permute.xlu0 %3043
        %3045 = vrot.lane.b32.xlu0 %v2255, 16
        %v3046 = vpop.permute.xlu0 %3045
        %3047 = vrot.lane.b32.xlu0 %v2347, 16
        %v3048 = vpop.permute.xlu0 %3047
        %3049 = vrot.lane.b32.xlu0 %v2258, 16
        %v3050 = vpop.permute.xlu0 %3049
        %3051 = vrot.lane.b32.xlu0 %v2348, 16
        %v3052 = vpop.permute.xlu0 %3051
        %3053 = vrot.lane.b32.xlu0 %v2261, 16
        %v3054 = vpop.permute.xlu0 %3053
        %3055 = vrot.lane.b32.xlu0 %v2349, 16
        %v3056 = vpop.permute.xlu0 %3055
        %3057 = vrot.lane.b32.xlu0 %v2264, 16
        %v3058 = vpop.permute.xlu0 %3057
        %3059 = vrot.lane.b32.xlu0 %v2350, 16
        %v3060 = vpop.permute.xlu0 %3059
        %3061 = vrot.lane.b32.xlu0 %v2267, 16
        %v3062 = vpop.permute.xlu0 %3061
        %3063 = vrot.lane.b32.xlu0 %v2351, 16
        %v3064 = vpop.permute.xlu0 %3063
        %3065 = vrot.lane.b32.xlu0 %v2270, 16
        %v3066 = vpop.permute.xlu0 %3065
        %3067 = vrot.lane.b32.xlu0 %v2352, 16
        %v3068 = vpop.permute.xlu0 %3067
        %3069 = vrot.lane.b32.xlu0 %v2273, 16
        %v3070 = vpop.permute.xlu0 %3069
        %3071 = vrot.lane.b32.xlu0 %v2353, 16
        %v3072 = vpop.permute.xlu0 %3071
        %3073 = vrot.lane.b32.xlu0 %v2276, 16
        %v3074 = vpop.permute.xlu0 %3073
        %3075 = vrot.lane.b32.xlu0 %v2354, 16
        %v3076 = vpop.permute.xlu0 %3075
        %3077 = vrot.lane.b32.xlu0 %v2279, 16
        %v3078 = vpop.permute.xlu0 %3077
        %3079 = vrot.lane.b32.xlu0 %v2355, 16
        %v3080 = vpop.permute.xlu0 %3079
        %3081 = vrot.lane.b32.xlu0 %v2282, 16
        %v3082 = vpop.permute.xlu0 %3081
        %3083 = vrot.lane.b32.xlu0 %v2356, 16
        %v3084 = vpop.permute.xlu0 %3083
        %3085 = vrot.lane.b32.xlu0 %v2285, 16
        %v3086 = vpop.permute.xlu0 %3085
        %3087 = vrot.lane.b32.xlu0 %v2357, 16
        %v3088 = vpop.permute.xlu0 %3087
        %3089 = vrot.lane.b32.xlu0 %v2288, 16
        %v3090 = vpop.permute.xlu0 %3089
        %3091 = vrot.lane.b32.xlu0 %v2358, 16
        %v3092 = vpop.permute.xlu0 %3091
        %3093 = vrot.lane.b32.xlu0 %v2291, 16
        %v3094 = vpop.permute.xlu0 %3093
        %3095 = vrot.lane.b32.xlu0 %v2359, 16
        %v3096 = vpop.permute.xlu0 %3095
        %3097 = vrot.lane.b32.xlu0 %v2294, 16
        %v3098 = vpop.permute.xlu0 %3097
        %3099 = vrot.lane.b32.xlu0 %v2360, 16
        %v3100 = vpop.permute.xlu0 %3099
        %3101 = vrot.lane.b32.xlu0 %v2297, 16
        %v3102 = vpop.permute.xlu0 %3101
        %3103 = vrot.lane.b32.xlu0 0.0, 16
        %v3104 = vpop.permute.xlu0 %3103
        %3136 = vrot.lane.b32.xlu0 %v2414, 40
        %v3137 = vpop.permute.xlu0 %3136
        %3138 = vrot.lane.b32.xlu0 %v2416, 40
        %v3139 = vpop.permute.xlu0 %3138
        %3140 = vrot.lane.b32.xlu0 %v2419, 40
        %v3141 = vpop.permute.xlu0 %3140
        %3142 = vrot.lane.b32.xlu0 %v2421, 40
        %v3143 = vpop.permute.xlu0 %3142
        %3144 = vrot.lane.b32.xlu0 %v2424, 40
        %v3145 = vpop.permute.xlu0 %3144
        %3146 = vrot.lane.b32.xlu0 %v2426, 40
        %v3147 = vpop.permute.xlu0 %3146
        %3148 = vrot.lane.b32.xlu0 %v2429, 40
        %v3149 = vpop.permute.xlu0 %3148
        %3150 = vrot.lane.b32.xlu0 %v2431, 40
        %v3151 = vpop.permute.xlu0 %3150
        %3152 = vrot.lane.b32.xlu0 %v2434, 40
        %v3153 = vpop.permute.xlu0 %3152
        %3154 = vrot.lane.b32.xlu0 %v2436, 40
        %v3155 = vpop.permute.xlu0 %3154
        %3156 = vrot.lane.b32.xlu0 %v2439, 40
        %v3157 = vpop.permute.xlu0 %3156
        %3158 = vrot.lane.b32.xlu0 %v2441, 40
        %v3159 = vpop.permute.xlu0 %3158
        %3160 = vrot.lane.b32.xlu0 %v2444, 40
        %v3161 = vpop.permute.xlu0 %3160
        %3162 = vrot.lane.b32.xlu0 %v2446, 40
        %v3163 = vpop.permute.xlu0 %3162
        %3164 = vrot.lane.b32.xlu0 %v2449, 40
        %v3165 = vpop.permute.xlu0 %3164
        %3166 = vrot.lane.b32.xlu0 %v2451, 40
        %v3167 = vpop.permute.xlu0 %3166
        %3168 = vrot.lane.b32.xlu0 %v2454, 40
        %v3169 = vpop.permute.xlu0 %3168
        %3170 = vrot.lane.b32.xlu0 %v2456, 40
        %v3171 = vpop.permute.xlu0 %3170
        %3172 = vrot.lane.b32.xlu0 %v2459, 40
        %v3173 = vpop.permute.xlu0 %3172
        %3174 = vrot.lane.b32.xlu0 %v2461, 40
        %v3175 = vpop.permute.xlu0 %3174
        %3176 = vrot.lane.b32.xlu0 %v2464, 40
        %v3177 = vpop.permute.xlu0 %3176
        %3178 = vrot.lane.b32.xlu0 %v2466, 40
        %v3179 = vpop.permute.xlu0 %3178
        %3180 = vrot.lane.b32.xlu0 %v2469, 40
        %v3181 = vpop.permute.xlu0 %3180
        %3182 = vrot.lane.b32.xlu0 %v2471, 40
        %v3183 = vpop.permute.xlu0 %3182
        %3184 = vrot.lane.b32.xlu0 %v2474, 40
        %v3185 = vpop.permute.xlu0 %3184
        %3186 = vrot.lane.b32.xlu0 %v2476, 40
        %v3187 = vpop.permute.xlu0 %3186
        %3188 = vrot.lane.b32.xlu0 %v2479, 40
        %v3189 = vpop.permute.xlu0 %3188
        %3190 = vrot.lane.b32.xlu0 %v2481, 40
        %v3191 = vpop.permute.xlu0 %3190
        %3192 = vrot.lane.b32.xlu0 %v2843, 40
        %v3193 = vpop.permute.xlu0 %3192
        %3194 = vrot.lane.b32.xlu0 %v2845, 40
        %v3195 = vpop.permute.xlu0 %3194
        %3196 = vrot.lane.b32.xlu0 %v1068, 40
        %v3197 = vpop.permute.xlu0 %3196
        %3229 = vrot.lane.b32.xlu0 %v2582, 64
        %v3230 = vpop.permute.xlu0 %3229
        %3231 = vrot.lane.b32.xlu0 %v2584, 64
        %v3232 = vpop.permute.xlu0 %3231
        %3233 = vrot.lane.b32.xlu0 %v2587, 64
        %v3234 = vpop.permute.xlu0 %3233
        %3235 = vrot.lane.b32.xlu0 %v2589, 64
        %v3236 = vpop.permute.xlu0 %3235
        %3237 = vrot.lane.b32.xlu0 %v2592, 64
        %v3238 = vpop.permute.xlu0 %3237
        %3239 = vrot.lane.b32.xlu0 %v2594, 64
        %v3240 = vpop.permute.xlu0 %3239
        %3241 = vrot.lane.b32.xlu0 %v2597, 64
        %v3242 = vpop.permute.xlu0 %3241
        %3243 = vrot.lane.b32.xlu0 %v2599, 64
        %v3244 = vpop.permute.xlu0 %3243
        %3245 = vrot.lane.b32.xlu0 %v2602, 64
        %v3246 = vpop.permute.xlu0 %3245
        %3247 = vrot.lane.b32.xlu0 %v2604, 64
        %v3248 = vpop.permute.xlu0 %3247
        %3249 = vrot.lane.b32.xlu0 %v2607, 64
        %v3250 = vpop.permute.xlu0 %3249
        %3251 = vrot.lane.b32.xlu0 %v2609, 64
        %v3252 = vpop.permute.xlu0 %3251
        %3253 = vrot.lane.b32.xlu0 %v2612, 64
        %v3254 = vpop.permute.xlu0 %3253
        %3255 = vrot.lane.b32.xlu0 %v2614, 64
        %v3256 = vpop.permute.xlu0 %3255
        %3257 = vrot.lane.b32.xlu0 %v2617, 64
        %v3258 = vpop.permute.xlu0 %3257
        %3259 = vrot.lane.b32.xlu0 %v2619, 64
        %v3260 = vpop.permute.xlu0 %3259
        %3261 = vrot.lane.b32.xlu0 %v2622, 64
        %v3262 = vpop.permute.xlu0 %3261
        %3263 = vrot.lane.b32.xlu0 %v2624, 64
        %v3264 = vpop.permute.xlu0 %3263
        %3265 = vrot.lane.b32.xlu0 %v2627, 64
        %v3266 = vpop.permute.xlu0 %3265
        %3267 = vrot.lane.b32.xlu0 %v2629, 64
        %v3268 = vpop.permute.xlu0 %3267
        %3269 = vrot.lane.b32.xlu0 %v2632, 64
        %v3270 = vpop.permute.xlu0 %3269
        %3271 = vrot.lane.b32.xlu0 %v2634, 64
        %v3272 = vpop.permute.xlu0 %3271
        %3273 = vrot.lane.b32.xlu0 %v2637, 64
        %v3274 = vpop.permute.xlu0 %3273
        %3275 = vrot.lane.b32.xlu0 %v2639, 64
        %v3276 = vpop.permute.xlu0 %3275
        %3277 = vrot.lane.b32.xlu0 %v2642, 64
        %v3278 = vpop.permute.xlu0 %3277
        %3279 = vrot.lane.b32.xlu0 %v2644, 64
        %v3280 = vpop.permute.xlu0 %3279
        %3281 = vrot.lane.b32.xlu0 %v2647, 64
        %v3282 = vpop.permute.xlu0 %3281
        %3283 = vrot.lane.b32.xlu0 %v2649, 64
        %v3284 = vpop.permute.xlu0 %3283
        %3285 = vrot.lane.b32.xlu0 %v2944, 64
        %v3286 = vpop.permute.xlu0 %3285
        %3287 = vrot.lane.b32.xlu0 %v2946, 64
        %v3288 = vpop.permute.xlu0 %3287
        %3289 = vrot.lane.b32.xlu0 %v1208, 64
        %v3290 = vpop.permute.xlu0 %3289
        %vm3322 = vcmask 195584
        %v3323 = vsel %vm3322, 0.0, %v2483
        %v3324 = vsel %vm3322, %v2345, %v2485
        %v3325 = vsel %vm3322, %v2252, %v2487
        %v3326 = vsel %vm3322, %v2346, %v2489
        %v3327 = vsel %vm3322, %v2255, %v2491
        %v3328 = vsel %vm3322, %v2347, %v2493
        %v3329 = vsel %vm3322, %v2258, %v2495
        %v3330 = vsel %vm3322, %v2348, %v2497
        %v3331 = vsel %vm3322, %v2261, %v2499
        %v3332 = vsel %vm3322, %v2349, %v2501
        %v3333 = vsel %vm3322, %v2264, %v2503
        %v3334 = vsel %vm3322, %v2350, %v2505
        %v3335 = vsel %vm3322, %v2267, %v2507
        %v3336 = vsel %vm3322, %v2351, %v2509
        %v3337 = vsel %vm3322, %v2270, %v2511
        %v3338 = vsel %vm3322, %v2352, %v2513
        %v3339 = vsel %vm3322, %v2273, %v2515
        %v3340 = vsel %vm3322, %v2353, %v2517
        %v3341 = vsel %vm3322, %v2276, %v2519
        %v3342 = vsel %vm3322, %v2354, %v2521
        %v3343 = vsel %vm3322, %v2279, %v2523
        %v3344 = vsel %vm3322, %v2355, %v2525
        %v3345 = vsel %vm3322, %v2282, %v2527
        %v3346 = vsel %vm3322, %v2356, %v2529
        %v3347 = vsel %vm3322, %v2285, %v2531
        %v3348 = vsel %vm3322, %v2357, %v2533
        %v3349 = vsel %vm3322, %v2288, %v2535
        %v3350 = vsel %vm3322, %v2358, %v2537
        %v3351 = vsel %vm3322, %v2291, %v2539
        %v3352 = vsel %vm3322, %v2359, %v2541
        %v3353 = vsel %vm3322, %v2294, %v2543
        %vm3354 = vcmask 392192
        %v3355 = vsel %vm3354, %v3323, %v2651
        %v3356 = vsel %vm3354, %v3324, %v2653
        %v3357 = vsel %vm3354, %v3325, %v2655
        %v3358 = vsel %vm3354, %v3326, %v2657
        %v3359 = vsel %vm3354, %v3327, %v2659
        %v3360 = vsel %vm3354, %v3328, %v2661
        %v3361 = vsel %vm3354, %v3329, %v2663
        %v3362 = vsel %vm3354, %v3330, %v2665
        %v3363 = vsel %vm3354, %v3331, %v2667
        %v3364 = vsel %vm3354, %v3332, %v2669
        %v3365 = vsel %vm3354, %v3333, %v2671
        %v3366 = vsel %vm3354, %v3334, %v2673
        %v3367 = vsel %vm3354, %v3335, %v2675
        %v3368 = vsel %vm3354, %v3336, %v2677
        %v3369 = vsel %vm3354, %v3337, %v2679
        %v3370 = vsel %vm3354, %v3338, %v2681
        %v3371 = vsel %vm3354, %v3339, %v2683
        %v3372 = vsel %vm3354, %v3340, %v2685
        %v3373 = vsel %vm3354, %v3341, %v2687
        %v3374 = vsel %vm3354, %v3342, %v2689
        %v3375 = vsel %vm3354, %v3343, %v2691
        %v3376 = vsel %vm3354, %v3344, %v2693
        %v3377 = vsel %vm3354, %v3345, %v2695
        %v3378 = vsel %vm3354, %v3346, %v2697
        %v3379 = vsel %vm3354, %v3347, %v2699
        %v3380 = vsel %vm3354, %v3348, %v2701
        %v3381 = vsel %vm3354, %v3349, %v2703
        %v3382 = vsel %vm3354, %v3350, %v2705
        %v3383 = vsel %vm3354, %v3351, %v2707
        %v3384 = vsel %vm3354, %v3352, %v2709
        %v3385 = vsel %vm3354, %v3353, %v2711
        %vm3386 = vcmask 588800
        %v3387 = vsel %vm3386, %v3355, %v2745
        %v3388 = vsel %vm3386, %v3355, %v2747
        %v3389 = vsel %vm3386, %v3356, %v2749
        %v3390 = vsel %vm3386, %v3357, %v2751
        %v3391 = vsel %vm3386, %v3358, %v2753
        %v3392 = vsel %vm3386, %v3359, %v2755
        %v3393 = vsel %vm3386, %v3360, %v2757
        %v3394 = vsel %vm3386, %v3361, %v2759
        %v3395 = vsel %vm3386, %v3362, %v2761
        %v3396 = vsel %vm3386, %v3363, %v2763
        %v3397 = vsel %vm3386, %v3364, %v2765
        %v3398 = vsel %vm3386, %v3365, %v2767
        %v3399 = vsel %vm3386, %v3366, %v2769
        %v3400 = vsel %vm3386, %v3367, %v2771
        %v3401 = vsel %vm3386, %v3368, %v2773
        %v3402 = vsel %vm3386, %v3369, %v2775
        %v3403 = vsel %vm3386, %v3370, %v2777
        %v3404 = vsel %vm3386, %v3371, %v2779
        %v3405 = vsel %vm3386, %v3372, %v2781
        %v3406 = vsel %vm3386, %v3373, %v2783
        %v3407 = vsel %vm3386, %v3374, %v2785
        %v3408 = vsel %vm3386, %v3375, %v2787
        %v3409 = vsel %vm3386, %v3376, %v2789
        %v3410 = vsel %vm3386, %v3377, %v2791
        %v3411 = vsel %vm3386, %v3378, %v2793
        %v3412 = vsel %vm3386, %v3379, %v2795
        %v3413 = vsel %vm3386, %v3380, %v2797
        %v3414 = vsel %vm3386, %v3381, %v2799
        %v3415 = vsel %vm3386, %v3382, %v2801
        %v3416 = vsel %vm3386, %v3383, %v2803
        %v3417 = vsel %vm3386, %v3384, %v2805
        %v3418 = vsel %vm3386, %v3385, %v2807
        %vm3419 = vcmask 785408
        %v3420 = vsel %vm3419, %v3387, %v2847
        %v3421 = vsel %vm3419, %v3388, %v2849
        %v3422 = vsel %vm3419, %v3389, %v2851
        %v3423 = vsel %vm3419, %v3390, %v2853
        %v3424 = vsel %vm3419, %v3391, %v2855
        %v3425 = vsel %vm3419, %v3392, %v2857
        %v3426 = vsel %vm3419, %v3393, %v2859
        %v3427 = vsel %vm3419, %v3394, %v2861
        %v3428 = vsel %vm3419, %v3395, %v2863
        %v3429 = vsel %vm3419, %v3396, %v2865
        %v3430 = vsel %vm3419, %v3397, %v2867
        %v3431 = vsel %vm3419, %v3398, %v2869
        %v3432 = vsel %vm3419, %v3399, %v2871
        %v3433 = vsel %vm3419, %v3400, %v2873
        %v3434 = vsel %vm3419, %v3401, %v2875
        %v3435 = vsel %vm3419, %v3402, %v2877
        %v3436 = vsel %vm3419, %v3403, %v2879
        %v3437 = vsel %vm3419, %v3404, %v2881
        %v3438 = vsel %vm3419, %v3405, %v2883
        %v3439 = vsel %vm3419, %v3406, %v2885
        %v3440 = vsel %vm3419, %v3407, %v2887
        %v3441 = vsel %vm3419, %v3408, %v2889
        %v3442 = vsel %vm3419, %v3409, %v2891
        %v3443 = vsel %vm3419, %v3410, %v2893
        %v3444 = vsel %vm3419, %v3411, %v2895
        %v3445 = vsel %vm3419, %v3412, %v2897
        %v3446 = vsel %vm3419, %v3413, %v2899
        %v3447 = vsel %vm3419, %v3414, %v2901
        %v3448 = vsel %vm3419, %v3415, %v2903
        %v3449 = vsel %vm3419, %v3416, %v2905
        %v3450 = vsel %vm3419, %v3417, %v2907
        %v3451 = vsel %vm3419, %v3418, %v2909
        %vm3452 = vcmask 982016
        %v3453 = vsel %vm3452, %v3420, %v2948
        %v3454 = vsel %vm3452, %v3421, %v2950
        %v3455 = vsel %vm3452, %v3422, %v2952
        %v3456 = vsel %vm3452, %v3423, %v2954
        %v3457 = vsel %vm3452, %v3424, %v2956
        %v3458 = vsel %vm3452, %v3425, %v2958
        %v3459 = vsel %vm3452, %v3426, %v2960
        %v3460 = vsel %vm3452, %v3427, %v2962
        %v3461 = vsel %vm3452, %v3428, %v2964
        %v3462 = vsel %vm3452, %v3429, %v2966
        %v3463 = vsel %vm3452, %v3430, %v2968
        %v3464 = vsel %vm3452, %v3431, %v2970
        %v3465 = vsel %vm3452, %v3432, %v2972
        %v3466 = vsel %vm3452, %v3433, %v2974
        %v3467 = vsel %vm3452, %v3434, %v2976
        %v3468 = vsel %vm3452, %v3435, %v2978
        %v3469 = vsel %vm3452, %v3436, %v2980
        %v3470 = vsel %vm3452, %v3437, %v2982
        %v3471 = vsel %vm3452, %v3438, %v2984
        %v3472 = vsel %vm3452, %v3439, %v2986
        %v3473 = vsel %vm3452, %v3440, %v2988
        %v3474 = vsel %vm3452, %v3441, %v2990
        %v3475 = vsel %vm3452, %v3442, %v2992
        %v3476 = vsel %vm3452, %v3443, %v2994
        %v3477 = vsel %vm3452, %v3444, %v2996
        %v3478 = vsel %vm3452, %v3445, %v2998
        %v3479 = vsel %vm3452, %v3446, %v3000
        %v3480 = vsel %vm3452, %v3447, %v3002
        %v3481 = vsel %vm3452, %v3448, %v3004
        %v3482 = vsel %vm3452, %v3449, %v3006
        %v3483 = vsel %vm3452, %v3450, %v3008
        %v3484 = vsel %vm3452, %v3451, %v3010
        %vm3485 = vcmask 130048
        %v3486 = vsel %vm3485, %v2948, %v3044
        %v3487 = vsel %vm3485, %v2950, %v3046
        %v3488 = vsel %vm3485, %v2952, %v3048
        %v3489 = vsel %vm3485, %v2954, %v3050
        %v3490 = vsel %vm3485, %v2956, %v3052
        %v3491 = vsel %vm3485, %v2958, %v3054
        %v3492 = vsel %vm3485, %v2960, %v3056
        %v3493 = vsel %vm3485, %v2962, %v3058
        %v3494 = vsel %vm3485, %v2964, %v3060
        %v3495 = vsel %vm3485, %v2966, %v3062
        %v3496 = vsel %vm3485, %v2968, %v3064
        %v3497 = vsel %vm3485, %v2970, %v3066
        %v3498 = vsel %vm3485, %v2972, %v3068
        %v3499 = vsel %vm3485, %v2974, %v3070
        %v3500 = vsel %vm3485, %v2976, %v3072
        %v3501 = vsel %vm3485, %v2978, %v3074
        %v3502 = vsel %vm3485, %v2980, %v3076
        %v3503 = vsel %vm3485, %v2982, %v3078
        %v3504 = vsel %vm3485, %v2984, %v3080
        %v3505 = vsel %vm3485, %v2986, %v3082
        %v3506 = vsel %vm3485, %v2988, %v3084
        %v3507 = vsel %vm3485, %v2990, %v3086
        %v3508 = vsel %vm3485, %v2992, %v3088
        %v3509 = vsel %vm3485, %v2994, %v3090
        %v3510 = vsel %vm3485, %v2996, %v3092
        %v3511 = vsel %vm3485, %v2998, %v3094
        %v3512 = vsel %vm3485, %v3000, %v3096
        %v3513 = vsel %vm3485, %v3002, %v3098
        %v3514 = vsel %vm3485, %v3004, %v3100
        %v3515 = vsel %vm3485, %v3006, %v3102
        %v3516 = vsel %vm3485, %v3008, %v3104
        %v3517 = vsel %vm3485, %v3010, %v3104
        %vm3518 = vcmask 326656
        %v3519 = vsel %vm3518, %v3486, %v3137
        %v3520 = vsel %vm3518, %v3487, %v3139
        %v3521 = vsel %vm3518, %v3488, %v3141
        %v3522 = vsel %vm3518, %v3489, %v3143
        %v3523 = vsel %vm3518, %v3490, %v3145
        %v3524 = vsel %vm3518, %v3491, %v3147
        %v3525 = vsel %vm3518, %v3492, %v3149
        %v3526 = vsel %vm3518, %v3493, %v3151
        %v3527 = vsel %vm3518, %v3494, %v3153
        %v3528 = vsel %vm3518, %v3495, %v3155
        %v3529 = vsel %vm3518, %v3496, %v3157
        %v3530 = vsel %vm3518, %v3497, %v3159
        %v3531 = vsel %vm3518, %v3498, %v3161
        %v3532 = vsel %vm3518, %v3499, %v3163
        %v3533 = vsel %vm3518, %v3500, %v3165
        %v3534 = vsel %vm3518, %v3501, %v3167
        %v3535 = vsel %vm3518, %v3502, %v3169
        %v3536 = vsel %vm3518, %v3503, %v3171
        %v3537 = vsel %vm3518, %v3504, %v3173
        %v3538 = vsel %vm3518, %v3505, %v3175
        %v3539 = vsel %vm3518, %v3506, %v3177
        %v3540 = vsel %vm3518, %v3507, %v3179
        %v3541 = vsel %vm3518, %v3508, %v3181
        %v3542 = vsel %vm3518, %v3509, %v3183
        %v3543 = vsel %vm3518, %v3510, %v3185
        %v3544 = vsel %vm3518, %v3511, %v3187
        %v3545 = vsel %vm3518, %v3512, %v3189
        %v3546 = vsel %vm3518, %v3513, %v3191
        %v3547 = vsel %vm3518, %v3514, %v3193
        %v3548 = vsel %vm3518, %v3515, %v3195
        %v3549 = vsel %vm3518, %v3516, %v3197
        %v3550 = vsel %vm3518, %v3517, %v3197
        %vm3551 = vcmask 523264
        %v3552 = vsel %vm3551, %v3519, %v3230
        %v3553 = vsel %vm3551, %v3520, %v3232
        %v3554 = vsel %vm3551, %v3521, %v3234
        %v3555 = vsel %vm3551, %v3522, %v3236
        %v3556 = vsel %vm3551, %v3523, %v3238
        %v3557 = vsel %vm3551, %v3524, %v3240
        %v3558 = vsel %vm3551, %v3525, %v3242
        %v3559 = vsel %vm3551, %v3526, %v3244
        %v3560 = vsel %vm3551, %v3527, %v3246
        %v3561 = vsel %vm3551, %v3528, %v3248
        %v3562 = vsel %vm3551, %v3529, %v3250
        %v3563 = vsel %vm3551, %v3530, %v3252
        %v3564 = vsel %vm3551, %v3531, %v3254
        %v3565 = vsel %vm3551, %v3532, %v3256
        %v3566 = vsel %vm3551, %v3533, %v3258
        %v3567 = vsel %vm3551, %v3534, %v3260
        %v3568 = vsel %vm3551, %v3535, %v3262
        %v3569 = vsel %vm3551, %v3536, %v3264
        %v3570 = vsel %vm3551, %v3537, %v3266
        %v3571 = vsel %vm3551, %v3538, %v3268
        %v3572 = vsel %vm3551, %v3539, %v3270
        %v3573 = vsel %vm3551, %v3540, %v3272
        %v3574 = vsel %vm3551, %v3541, %v3274
        %v3575 = vsel %vm3551, %v3542, %v3276
        %v3576 = vsel %vm3551, %v3543, %v3278
        %v3577 = vsel %vm3551, %v3544, %v3280
        %v3578 = vsel %vm3551, %v3545, %v3282
        %v3579 = vsel %vm3551, %v3546, %v3284
        %v3580 = vsel %vm3551, %v3547, %v3286
        %v3581 = vsel %vm3551, %v3548, %v3288
        %v3582 = vsel %vm3551, %v3549, %v3290
        %v3583 = vsel %vm3551, %v3550, %v3290
        %v3584 = vld [vmem:[%s7] sm:$0xff]
        %v3585 = vld [vmem:[%s7 + $0x8] sm:$0xff]
        %v3586 = vld [vmem:[%s7 + $0x10] sm:$0xff]
        %v3587 = vld [vmem:[%s7 + $0x18] sm:$0xff]
        %v3588 = vld [vmem:[%s7 + $0x20] sm:$0xff]
        %v3589 = vld [vmem:[%s7 + $0x28] sm:$0xff]
        %v3590 = vld [vmem:[%s7 + $0x30] sm:$0xff]
        %v3591 = vld [vmem:[%s7 + $0x38] sm:$0xff]
        %v3592 = vld [vmem:[%s7 + $0x40] sm:$0xff]
        %v3593 = vld [vmem:[%s7 + $0x48] sm:$0xff]
        %v3594 = vld [vmem:[%s7 + $0x50] sm:$0xff]
        %v3595 = vld [vmem:[%s7 + $0x58] sm:$0xff]
        %v3596 = vld [vmem:[%s7 + $0x60] sm:$0xff]
        %v3597 = vld [vmem:[%s7 + $0x68] sm:$0xff]
        %v3598 = vld [vmem:[%s7 + $0x70] sm:$0xff]
        %v3599 = vld [vmem:[%s7 + $0x78] sm:$0xff]
        %v3600 = vld [vmem:[%s7 + $0x80] sm:$0xff]
        %v3601 = vld [vmem:[%s7 + $0x88] sm:$0xff]
        %v3602 = vld [vmem:[%s7 + $0x90] sm:$0xff]
        %v3603 = vld [vmem:[%s7 + $0x98] sm:$0xff]
        %v3604 = vld [vmem:[%s7 + $0xa0] sm:$0xff]
        %v3605 = vld [vmem:[%s7 + $0xa8] sm:$0xff]
        %v3606 = vld [vmem:[%s7 + $0xb0] sm:$0xff]
        %v3607 = vld [vmem:[%s7 + $0xb8] sm:$0xff]
        %v3608 = vld [vmem:[%s7 + $0xc0] sm:$0xff]
        %v3609 = vld [vmem:[%s7 + $0xc8] sm:$0xff]
        %v3610 = vld [vmem:[%s7 + $0xd0] sm:$0xff]
        %v3611 = vld [vmem:[%s8] sm:$0x1]
        %v3613 = vlaneseq
        %v3614 = vshrl.u32 %v3613, 7
        %v3615 = vsub.s32 0, %v3614
        %v3616 = vrot.slane %v3611, %v3615
        %vm3618 = vcmask 719872
        %v3620 = vsel %vm3618, %v3552, 0
        %v3623 = vsel %vm3618, %v3553, 0
        %v3626 = vsel %vm3618, %v3554, 0
        %v3629 = vsel %vm3618, %v3555, 0
        %v3632 = vsel %vm3618, %v3556, 0
        %v3635 = vsel %vm3618, %v3557, 0
        %v3638 = vsel %vm3618, %v3558, 0
        %v3641 = vsel %vm3618, %v3559, 0
        %v3644 = vsel %vm3618, %v3560, 0
        %v3647 = vsel %vm3618, %v3561, 0
        %v3650 = vsel %vm3618, %v3562, 0
        %v3653 = vsel %vm3618, %v3563, 0
        %v3656 = vsel %vm3618, %v3564, 0
        %v3659 = vsel %vm3618, %v3565, 0
        %v3662 = vsel %vm3618, %v3566, 0
        %v3665 = vsel %vm3618, %v3567, 0
        %v3668 = vsel %vm3618, %v3568, 0
        %v3671 = vsel %vm3618, %v3569, 0
        %v3674 = vsel %vm3618, %v3570, 0
        %v3677 = vsel %vm3618, %v3571, 0
        %v3680 = vsel %vm3618, %v3572, 0
        %v3683 = vsel %vm3618, %v3573, 0
        %v3686 = vsel %vm3618, %v3574, 0
        %v3689 = vsel %vm3618, %v3575, 0
        %v3692 = vsel %vm3618, %v3576, 0
        %v3695 = vsel %vm3618, %v3577, 0
        %v3698 = vsel %vm3618, %v3578, 0
        %v3701 = vsel %vm3618, %v3579, 0
        %v3704 = vsel %vm3618, %v3580, 0
        %v3707 = vsel %vm3618, %v3581, 0
        %v3710 = vsel %vm3618, %v3582, 0
        %v3713 = vsel %vm3618, %v3583, 0
        %3715 = vmatprep.subr.mxu0 0.0
        %3716 = vmatpush1.msra.mxu0 %v3584
        %3717 = vmatprep.subr.mxu0 0.0
        %3718 = vmatpush1.msra.mxu0 %v3585
        %3719 = vmatprep.subr.mxu0 0.0
        %3720 = vmatpush1.msra.mxu0 %v3586
        %3721 = vmatprep.subr.mxu0 0.0
        %3722 = vmatpush1.msra.mxu0 %v3587
        %3723 = vmatprep.subr.mxu0 0.0
        %3724 = vmatpush1.msra.mxu0 %v3588
        %3725 = vmatprep.subr.mxu0 0.0
        %3726 = vmatpush1.msra.mxu0 %v3589
        %3727 = vmatprep.subr.mxu0 0.0
        %3728 = vmatpush1.msra.mxu0 %v3590
        %3729 = vmatprep.subr.mxu0 0.0
        %3730 = vmatpush1.msra.mxu0 %v3591
        %3731 = vmatprep.subr.mxu0 0.0
        %3732 = vmatpush1.msra.mxu0 %v3592
        %3733 = vmatprep.subr.mxu0 0.0
        %3734 = vmatpush1.msra.mxu0 %v3593
        %3735 = vmatprep.subr.mxu0 0.0
        %3736 = vmatpush1.msra.mxu0 %v3594
        %3737 = vmatprep.subr.mxu0 0.0
        %3738 = vmatpush1.msra.mxu0 %v3595
        %3739 = vmatprep.subr.mxu0 0.0
        %3740 = vmatpush1.msra.mxu0 %v3596
        %3741 = vmatprep.subr.mxu0 0.0
        %3742 = vmatpush1.msra.mxu0 %v3597
        %3743 = vmatprep.subr.mxu0 0.0
        %3744 = vmatpush1.msra.mxu0 %v3598
        %3745 = vmatprep.subr.mxu0 0.0
        %3746 = vmatpush1.msra.mxu0 %v3599
        %3747 = vmatprep.subr.mxu0 0.0
        %3748 = vmatpush1.msra.mxu0 %v3600
        %3749 = vmatprep.subr.mxu0 0.0
        %3750 = vmatpush1.msra.mxu0 %v3601
        %3751 = vmatprep.subr.mxu0 0.0
        %3752 = vmatpush1.msra.mxu0 %v3602
        %3753 = vmatprep.subr.mxu0 0.0
        %3754 = vmatpush1.msra.mxu0 %v3603
        %3755 = vmatprep.subr.mxu0 0.0
        %3756 = vmatpush1.msra.mxu0 %v3604
        %3757 = vmatprep.subr.mxu0 0.0
        %3758 = vmatpush1.msra.mxu0 %v3605
        %3759 = vmatprep.subr.mxu0 0.0
        %3760 = vmatpush1.msra.mxu0 %v3606
        %3761 = vmatprep.subr.mxu0 0.0
        %3762 = vmatpush1.msra.mxu0 %v3607
        %3763 = vmatprep.subr.mxu0 0.0
        %3764 = vmatpush1.msra.mxu0 %v3608
        %3765 = vmatprep.subr.mxu0 0.0
        %3766 = vmatpush1.msra.mxu0 %v3609
        %3767 = vmatprep.subr.mxu0 0.0
        %3768 = vmatpush1.msra.mxu0 %v3610
        %3769 = vmatprep.subr.mxu0 0.0
        %3770 = vmatpush1.msra.mxu0 0.0
        %3771 = vmatprep.subr.mxu0 0.0
        %3772 = vmatpush1.msra.mxu0 0.0
        %3773 = vmatprep.subr.mxu0 0.0
        %3774 = vmatpush1.msra.mxu0 0.0
        %3775 = vmatprep.subr.mxu0 0.0
        %3776 = vmatpush1.msra.mxu0 0.0
        %3777 = vmatprep.subr.mxu0 0.0
        %3778 = vmatpush1.msra.mxu0 0.0
        %3779 = vmatprep.mubr.f32.mxu0 %v3620
        %3780 = vmatmul.mubr.f32.gmra.mrb[0].mxu0 %v3453
        %v3781 = vpop.f32.mrb[0].mxu0
        %v3782 = vadd.f32 %v3616, %v3781
        %v3783 = vpop.f32.mrb[0].mxu0
        %3784 = vmatprep.mubr.f32.mxu0 %v3623
        %3785 = vmatmul.mubr.f32.gmra.mrb[0].mxu0 %v3454
        %v3786 = vpop.f32.mrb[0].mxu0
        %v3787 = vadd.f32 %v3616, %v3786
        %v3788 = vpop.f32.mrb[0].mxu0
        %3789 = vmatprep.mubr.f32.mxu0 %v3626
        %3790 = vmatmul.mubr.f32.gmra.mrb[0].mxu0 %v3455
        %v3791 = vpop.f32.mrb[0].mxu0
        %v3792 = vadd.f32 %v3616, %v3791
        %v3793 = vpop.f32.mrb[0].mxu0
        %3794 = vmatprep.mubr.f32.mxu0 %v3629
        %3795 = vmatmul.mubr.f32.gmra.mrb[0].mxu0 %v3456
        %v3796 = vpop.f32.mrb[0].mxu0
        %v3797 = vadd.f32 %v3616, %v3796
        %v3798 = vpop.f32.mrb[0].mxu0
        %3799 = vmatprep.mubr.f32.mxu0 %v3632
        %3800 = vmatmul.mubr.f32.gmra.mrb[0].mxu0 %v3457
        %v3801 = vpop.f32.mrb[0].mxu0
        %v3802 = vadd.f32 %v3616, %v3801
        %v3803 = vpop.f32.mrb[0].mxu0
        %3804 = vmatprep.mubr.f32.mxu0 %v3635
        %3805 = vmatmul.mubr.f32.gmra.mrb[0].mxu0 %v3458
        %v3806 = vpop.f32.mrb[0].mxu0
        %v3807 = vadd.f32 %v3616, %v3806
        %v3808 = vpop.f32.mrb[0].mxu0
        %3809 = vmatprep.mubr.f32.mxu0 %v3638
        %3810 = vmatmul.mubr.f32.gmra.mrb[0].mxu0 %v3459
        %v3811 = vpop.f32.mrb[0].mxu0
        %v3812 = vadd.f32 %v3616, %v3811
        %v3813 = vpop.f32.mrb[0].mxu0
        %3814 = vmatprep.mubr.f32.mxu0 %v3641
        %3815 = vmatmul.mubr.f32.gmra.mrb[0].mxu0 %v3460
        %v3816 = vpop.f32.mrb[0].mxu0
        %v3817 = vadd.f32 %v3616, %v3816
        %v3818 = vpop.f32.mrb[0].mxu0
        %3819 = vmatprep.mubr.f32.mxu0 %v3644
        %3820 = vmatmul.mubr.f32.gmra.mrb[0].mxu0 %v3461
        %v3821 = vpop.f32.mrb[0].mxu0
        %v3822 = vadd.f32 %v3616, %v3821
        %v3823 = vpop.f32.mrb[0].mxu0
        %3824 = vmatprep.mubr.f32.mxu0 %v3647
        %3825 = vmatmul.mubr.f32.gmra.mrb[0].mxu0 %v3462
        %v3826 = vpop.f32.mrb[0].mxu0
        %v3827 = vadd.f32 %v3616, %v3826
        %v3828 = vpop.f32.mrb[0].mxu0
        %3829 = vmatprep.mubr.f32.mxu0 %v3650
        %3830 = vmatmul.mubr.f32.gmra.mrb[0].mxu0 %v3463
        %v3831 = vpop.f32.mrb[0].mxu0
        %v3832 = vadd.f32 %v3616, %v3831
        %v3833 = vpop.f32.mrb[0].mxu0
        %3834 = vmatprep.mubr.f32.mxu0 %v3653
        %3835 = vmatmul.mubr.f32.gmra.mrb[0].mxu0 %v3464
        %v3836 = vpop.f32.mrb[0].mxu0
        %v3837 = vadd.f32 %v3616, %v3836
        %v3838 = vpop.f32.mrb[0].mxu0
        %3839 = vmatprep.mubr.f32.mxu0 %v3656
        %3840 = vmatmul.mubr.f32.gmra.mrb[0].mxu0 %v3465
        %v3841 = vpop.f32.mrb[0].mxu0
        %v3842 = vadd.f32 %v3616, %v3841
        %v3843 = vpop.f32.mrb[0].mxu0
        %3844 = vmatprep.mubr.f32.mxu0 %v3659
        %3845 = vmatmul.mubr.f32.gmra.mrb[0].mxu0 %v3466
        %v3846 = vpop.f32.mrb[0].mxu0
        %v3847 = vadd.f32 %v3616, %v3846
        %v3848 = vpop.f32.mrb[0].mxu0
        %3849 = vmatprep.mubr.f32.mxu0 %v3662
        %3850 = vmatmul.mubr.f32.gmra.mrb[0].mxu0 %v3467
        %v3851 = vpop.f32.mrb[0].mxu0
        %v3852 = vadd.f32 %v3616, %v3851
        %v3853 = vpop.f32.mrb[0].mxu0
        %3854 = vmatprep.mubr.f32.mxu0 %v3665
        %3855 = vmatmul.mubr.f32.gmra.mrb[0].mxu0 %v3468
        %v3856 = vpop.f32.mrb[0].mxu0
        %v3857 = vadd.f32 %v3616, %v3856
        %v3858 = vpop.f32.mrb[0].mxu0
        %3859 = vmatprep.mubr.f32.mxu0 %v3668
        %3860 = vmatmul.mubr.f32.gmra.mrb[0].mxu0 %v3469
        %v3861 = vpop.f32.mrb[0].mxu0
        %v3862 = vadd.f32 %v3616, %v3861
        %v3863 = vpop.f32.mrb[0].mxu0
        %3864 = vmatprep.mubr.f32.mxu0 %v3671
        %3865 = vmatmul.mubr.f32.gmra.mrb[0].mxu0 %v3470
        %v3866 = vpop.f32.mrb[0].mxu0
        %v3867 = vadd.f32 %v3616, %v3866
        %v3868 = vpop.f32.mrb[0].mxu0
        %3869 = vmatprep.mubr.f32.mxu0 %v3674
        %3870 = vmatmul.mubr.f32.gmra.mrb[0].mxu0 %v3471
        %v3871 = vpop.f32.mrb[0].mxu0
        %v3872 = vadd.f32 %v3616, %v3871
        %v3873 = vpop.f32.mrb[0].mxu0
        %3874 = vmatprep.mubr.f32.mxu0 %v3677
        %3875 = vmatmul.mubr.f32.gmra.mrb[0].mxu0 %v3472
        %v3876 = vpop.f32.mrb[0].mxu0
        %v3877 = vadd.f32 %v3616, %v3876
        %v3878 = vpop.f32.mrb[0].mxu0
        %3879 = vmatprep.mubr.f32.mxu0 %v3680
        %3880 = vmatmul.mubr.f32.gmra.mrb[0].mxu0 %v3473
        %v3881 = vpop.f32.mrb[0].mxu0
        %v3882 = vadd.f32 %v3616, %v3881
        %v3883 = vpop.f32.mrb[0].mxu0
        %3884 = vmatprep.mubr.f32.mxu0 %v3683
        %3885 = vmatmul.mubr.f32.gmra.mrb[0].mxu0 %v3474
        %v3886 = vpop.f32.mrb[0].mxu0
        %v3887 = vadd.f32 %v3616, %v3886
        %v3888 = vpop.f32.mrb[0].mxu0
        %3889 = vmatprep.mubr.f32.mxu0 %v3686
        %3890 = vmatmul.mubr.f32.gmra.mrb[0].mxu0 %v3475
        %v3891 = vpop.f32.mrb[0].mxu0
        %v3892 = vadd.f32 %v3616, %v3891
        %v3893 = vpop.f32.mrb[0].mxu0
        %3894 = vmatprep.mubr.f32.mxu0 %v3689
        %3895 = vmatmul.mubr.f32.gmra.mrb[0].mxu0 %v3476
        %v3896 = vpop.f32.mrb[0].mxu0
        %v3897 = vadd.f32 %v3616, %v3896
        %v3898 = vpop.f32.mrb[0].mxu0
        %3899 = vmatprep.mubr.f32.mxu0 %v3692
        %3900 = vmatmul.mubr.f32.gmra.mrb[0].mxu0 %v3477
        %v3901 = vpop.f32.mrb[0].mxu0
        %v3902 = vadd.f32 %v3616, %v3901
        %v3903 = vpop.f32.mrb[0].mxu0
        %3904 = vmatprep.mubr.f32.mxu0 %v3695
        %3905 = vmatmul.mubr.f32.gmra.mrb[0].mxu0 %v3478
        %v3906 = vpop.f32.mrb[0].mxu0
        %v3907 = vadd.f32 %v3616, %v3906
        %v3908 = vpop.f32.mrb[0].mxu0
        %3909 = vmatprep.mubr.f32.mxu0 %v3698
        %3910 = vmatmul.mubr.f32.gmra.mrb[0].mxu0 %v3479
        %v3911 = vpop.f32.mrb[0].mxu0
        %v3912 = vadd.f32 %v3616, %v3911
        %v3913 = vpop.f32.mrb[0].mxu0
        %3914 = vmatprep.mubr.f32.mxu0 %v3701
        %3915 = vmatmul.mubr.f32.gmra.mrb[0].mxu0 %v3480
        %v3916 = vpop.f32.mrb[0].mxu0
        %v3917 = vadd.f32 %v3616, %v3916
        %v3918 = vpop.f32.mrb[0].mxu0
        %3919 = vmatprep.mubr.f32.mxu0 %v3704
        %3920 = vmatmul.mubr.f32.gmra.mrb[0].mxu0 %v3481
        %v3921 = vpop.f32.mrb[0].mxu0
        %v3922 = vadd.f32 %v3616, %v3921
        %v3923 = vpop.f32.mrb[0].mxu0
        %3924 = vmatprep.mubr.f32.mxu0 %v3707
        %3925 = vmatmul.mubr.f32.gmra.mrb[0].mxu0 %v3482
        %v3926 = vpop.f32.mrb[0].mxu0
        %v3927 = vadd.f32 %v3616, %v3926
        %v3928 = vpop.f32.mrb[0].mxu0
        %3929 = vmatprep.mubr.f32.mxu0 %v3710
        %3930 = vmatmul.mubr.f32.gmra.mrb[0].mxu0 %v3483
        %v3931 = vpop.f32.mrb[0].mxu0
        %v3932 = vadd.f32 %v3616, %v3931
        %v3933 = vpop.f32.mrb[0].mxu0
        %3934 = vmatprep.mubr.f32.mxu0 %v3713
        %3935 = vmatmul.mubr.f32.gmra.mrb[0].mxu0 %v3484
        %v3936 = vpop.f32.mrb[0].mxu0
        %v3937 = vadd.f32 %v3616, %v3936
        %v3938 = vpop.f32.mrb[0].mxu0
        %3939 = vdwg.mxu0
        %v3940 = vmax.f32 %v3782, 0.0
        %v3941 = vmax.f32 %v3787, 0.0
        %v3942 = vmax.f32 %v3792, 0.0
        %v3943 = vmax.f32 %v3797, 0.0
        %v3944 = vmax.f32 %v3802, 0.0
        %v3945 = vmax.f32 %v3807, 0.0
        %v3946 = vmax.f32 %v3812, 0.0
        %v3947 = vmax.f32 %v3817, 0.0
        %v3948 = vmax.f32 %v3822, 0.0
        %v3949 = vmax.f32 %v3827, 0.0
        %v3950 = vmax.f32 %v3832, 0.0
        %v3951 = vmax.f32 %v3837, 0.0
        %v3952 = vmax.f32 %v3842, 0.0
        %v3953 = vmax.f32 %v3847, 0.0
        %v3954 = vmax.f32 %v3852, 0.0
        %v3955 = vmax.f32 %v3857, 0.0
        %v3956 = vmax.f32 %v3862, 0.0
        %v3957 = vmax.f32 %v3867, 0.0
        %v3958 = vmax.f32 %v3872, 0.0
        %v3959 = vmax.f32 %v3877, 0.0
        %v3960 = vmax.f32 %v3882, 0.0
        %v3961 = vmax.f32 %v3887, 0.0
        %v3962 = vmax.f32 %v3892, 0.0
        %v3963 = vmax.f32 %v3897, 0.0
        %v3964 = vmax.f32 %v3902, 0.0
        %v3965 = vmax.f32 %v3907, 0.0
        %v3966 = vmax.f32 %v3912, 0.0
        %v3967 = vmax.f32 %v3917, 0.0
        %v3968 = vmax.f32 %v3922, 0.0
        %v3969 = vmax.f32 %v3927, 0.0
        %v3970 = vmax.f32 %v3932, 0.0
        %v3971 = vmax.f32 %v3937, 0.0
        %v3972 = vld [vmem:[%s9] sm:$0xf]
        %v3973 = vld [vmem:[%s10] sm:$0x1]
        %v3975 = vlaneseq
        %v3976 = vshrl.u32 %v3975, 7
        %v3977 = vsub.s32 0, %v3976
        %v3978 = vrot.slane %v3973, %v3977
        %v3981 = vsel %vm645, %v3972, 0
        %3983 = vmatprep.subr.mxu0 0.0
        %3984 = vmatpush1.msra.mxu0 %v3981
        %3985 = vmatprep.subr.mxu0 0.0
        %3986 = vmatpush1.msra.mxu0 0.0
        %3987 = vmatprep.subr.mxu0 0.0
        %3988 = vmatpush1.msra.mxu0 0.0
        %3989 = vmatprep.subr.mxu0 0.0
        %3990 = vmatpush1.msra.mxu0 0.0
        %3991 = vmatprep.subr.mxu0 0.0
        %3992 = vmatpush1.msra.mxu0 0.0
        %3993 = vmatprep.subr.mxu0 0.0
        %3994 = vmatpush1.msra.mxu0 0.0
        %3995 = vmatprep.subr.mxu0 0.0
        %3996 = vmatpush1.msra.mxu0 0.0
        %3997 = vmatprep.subr.mxu0 0.0
        %3998 = vmatpush1.msra.mxu0 0.0
        %3999 = vmatprep.subr.mxu0 0.0
        %4000 = vmatpush1.msra.mxu0 0.0
        %4001 = vmatprep.subr.mxu0 0.0
        %4002 = vmatpush1.msra.mxu0 0.0
        %4003 = vmatprep.subr.mxu0 0.0
        %4004 = vmatpush1.msra.mxu0 0.0
        %4005 = vmatprep.subr.mxu0 0.0
        %4006 = vmatpush1.msra.mxu0 0.0
        %4007 = vmatprep.subr.mxu0 0.0
        %4008 = vmatpush1.msra.mxu0 0.0
        %4009 = vmatprep.subr.mxu0 0.0
        %4010 = vmatpush1.msra.mxu0 0.0
        %4011 = vmatprep.subr.mxu0 0.0
        %4012 = vmatpush1.msra.mxu0 0.0
        %4013 = vmatprep.subr.mxu0 0.0
        %4014 = vmatpush1.msra.mxu0 0.0
        %4015 = vmatprep.subr.mxu0 0.0
        %4016 = vmatpush1.msra.mxu0 0.0
        %4017 = vmatprep.subr.mxu0 0.0
        %4018 = vmatpush1.msra.mxu0 0.0
        %4019 = vmatprep.subr.mxu0 0.0
        %4020 = vmatpush1.msra.mxu0 0.0
        %4021 = vmatprep.subr.mxu0 0.0
        %4022 = vmatpush1.msra.mxu0 0.0
        %4023 = vmatprep.subr.mxu0 0.0
        %4024 = vmatpush1.msra.mxu0 0.0
        %4025 = vmatprep.subr.mxu0 0.0
        %4026 = vmatpush1.msra.mxu0 0.0
        %4027 = vmatprep.subr.mxu0 0.0
        %4028 = vmatpush1.msra.mxu0 0.0
        %4029 = vmatprep.subr.mxu0 0.0
        %4030 = vmatpush1.msra.mxu0 0.0
        %4031 = vmatprep.subr.mxu0 0.0
        %4032 = vmatpush1.msra.mxu0 0.0
        %4033 = vmatprep.subr.mxu0 0.0
        %4034 = vmatpush1.msra.mxu0 0.0
        %4035 = vmatprep.subr.mxu0 0.0
        %4036 = vmatpush1.msra.mxu0 0.0
        %4037 = vmatprep.subr.mxu0 0.0
        %4038 = vmatpush1.msra.mxu0 0.0
        %4039 = vmatprep.subr.mxu0 0.0
        %4040 = vmatpush1.msra.mxu0 0.0
        %4041 = vmatprep.subr.mxu0 0.0
        %4042 = vmatpush1.msra.mxu0 0.0
        %4043 = vmatprep.subr.mxu0 0.0
        %4044 = vmatpush1.msra.mxu0 0.0
        %4045 = vmatprep.subr.mxu0 0.0
        %4046 = vmatpush1.msra.mxu0 0.0
        %4047 = vmatprep.mubr.f32.mxu0 0.0
        %4048 = vmatmul.mubr.f32.gmra.mrb[0].mxu0 %v550
        %v4049 = vpop.f32.mrb[0].mxu0
        %v4050 = vadd.f32 %v3978, %v4049
        %v4051 = vpop.f32.mrb[0].mxu0
        %4052 = vmatprep.mubr.f32.mxu0 0.0
        %4053 = vmatmul.mubr.f32.gmra.mrb[0].mxu0 %v553
        %v4054 = vpop.f32.mrb[0].mxu0
        %v4055 = vadd.f32 %v3978, %v4054
        %v4056 = vpop.f32.mrb[0].mxu0
        %4057 = vmatprep.mubr.f32.mxu0 0.0
        %4058 = vmatmul.mubr.f32.gmra.mrb[0].mxu0 %v556
        %v4059 = vpop.f32.mrb[0].mxu0
        %v4060 = vadd.f32 %v3978, %v4059
        %v4061 = vpop.f32.mrb[0].mxu0
        %4062 = vmatprep.mubr.f32.mxu0 0.0
        %4063 = vmatmul.mubr.f32.gmra.mrb[0].mxu0 %v559
        %v4064 = vpop.f32.mrb[0].mxu0
        %v4065 = vadd.f32 %v3978, %v4064
        %v4066 = vpop.f32.mrb[0].mxu0
        %4067 = vmatprep.mubr.f32.mxu0 0.0
        %4068 = vmatmul.mubr.f32.gmra.mrb[0].mxu0 %v562
        %v4069 = vpop.f32.mrb[0].mxu0
        %v4070 = vadd.f32 %v3978, %v4069
        %v4071 = vpop.f32.mrb[0].mxu0
        %4072 = vmatprep.mubr.f32.mxu0 0.0
        %4073 = vmatmul.mubr.f32.gmra.mrb[0].mxu0 %v565
        %v4074 = vpop.f32.mrb[0].mxu0
        %v4075 = vadd.f32 %v3978, %v4074
        %v4076 = vpop.f32.mrb[0].mxu0
        %4077 = vmatprep.mubr.f32.mxu0 0.0
        %4078 = vmatmul.mubr.f32.gmra.mrb[0].mxu0 %v568
        %v4079 = vpop.f32.mrb[0].mxu0
        %v4080 = vadd.f32 %v3978, %v4079
        %v4081 = vpop.f32.mrb[0].mxu0
        %4082 = vmatprep.mubr.f32.mxu0 0.0
        %4083 = vmatmul.mubr.f32.gmra.mrb[0].mxu0 %v571
        %v4084 = vpop.f32.mrb[0].mxu0
        %v4085 = vadd.f32 %v3978, %v4084
        %v4086 = vpop.f32.mrb[0].mxu0
        %4087 = vmatprep.mubr.f32.mxu0 0.0
        %4088 = vmatmul.mubr.f32.gmra.mrb[0].mxu0 %v574
        %v4089 = vpop.f32.mrb[0].mxu0
        %v4090 = vadd.f32 %v3978, %v4089
        %v4091 = vpop.f32.mrb[0].mxu0
        %4092 = vmatprep.mubr.f32.mxu0 0.0
        %4093 = vmatmul.mubr.f32.gmra.mrb[0].mxu0 %v577
        %v4094 = vpop.f32.mrb[0].mxu0
        %v4095 = vadd.f32 %v3978, %v4094
        %v4096 = vpop.f32.mrb[0].mxu0
        %4097 = vmatprep.mubr.f32.mxu0 0.0
        %4098 = vmatmul.mubr.f32.gmra.mrb[0].mxu0 %v580
        %v4099 = vpop.f32.mrb[0].mxu0
        %v4100 = vadd.f32 %v3978, %v4099
        %v4101 = vpop.f32.mrb[0].mxu0
        %4102 = vmatprep.mubr.f32.mxu0 0.0
        %4103 = vmatmul.mubr.f32.gmra.mrb[0].mxu0 %v583
        %v4104 = vpop.f32.mrb[0].mxu0
        %v4105 = vadd.f32 %v3978, %v4104
        %v4106 = vpop.f32.mrb[0].mxu0
        %4107 = vmatprep.mubr.f32.mxu0 0.0
        %4108 = vmatmul.mubr.f32.gmra.mrb[0].mxu0 %v586
        %v4109 = vpop.f32.mrb[0].mxu0
        %v4110 = vadd.f32 %v3978, %v4109
        %v4111 = vpop.f32.mrb[0].mxu0
        %4112 = vmatprep.mubr.f32.mxu0 0.0
        %4113 = vmatmul.mubr.f32.gmra.mrb[0].mxu0 %v589
        %v4114 = vpop.f32.mrb[0].mxu0
        %v4115 = vadd.f32 %v3978, %v4114
        %v4116 = vpop.f32.mrb[0].mxu0
        %4117 = vmatprep.mubr.f32.mxu0 0.0
        %4118 = vmatmul.mubr.f32.gmra.mrb[0].mxu0 %v592
        %v4119 = vpop.f32.mrb[0].mxu0
        %v4120 = vadd.f32 %v3978, %v4119
        %v4121 = vpop.f32.mrb[0].mxu0
        %4122 = vmatprep.mubr.f32.mxu0 0.0
        %4123 = vmatmul.mubr.f32.gmra.mrb[0].mxu0 %v595
        %v4124 = vpop.f32.mrb[0].mxu0
        %v4125 = vadd.f32 %v3978, %v4124
        %v4126 = vpop.f32.mrb[0].mxu0
        %4127 = vmatprep.mubr.f32.mxu0 0.0
        %4128 = vmatmul.mubr.f32.gmra.mrb[0].mxu0 %v598
        %v4129 = vpop.f32.mrb[0].mxu0
        %v4130 = vadd.f32 %v3978, %v4129
        %v4131 = vpop.f32.mrb[0].mxu0
        %4132 = vmatprep.mubr.f32.mxu0 0.0
        %4133 = vmatmul.mubr.f32.gmra.mrb[0].mxu0 %v601
        %v4134 = vpop.f32.mrb[0].mxu0
        %v4135 = vadd.f32 %v3978, %v4134
        %v4136 = vpop.f32.mrb[0].mxu0
        %4137 = vmatprep.mubr.f32.mxu0 0.0
        %4138 = vmatmul.mubr.f32.gmra.mrb[0].mxu0 %v604
        %v4139 = vpop.f32.mrb[0].mxu0
        %v4140 = vadd.f32 %v3978, %v4139
        %v4141 = vpop.f32.mrb[0].mxu0
        %4142 = vmatprep.mubr.f32.mxu0 0.0
        %4143 = vmatmul.mubr.f32.gmra.mrb[0].mxu0 %v607
        %v4144 = vpop.f32.mrb[0].mxu0
        %v4145 = vadd.f32 %v3978, %v4144
        %v4146 = vpop.f32.mrb[0].mxu0
        %4147 = vmatprep.mubr.f32.mxu0 0.0
        %4148 = vmatmul.mubr.f32.gmra.mrb[0].mxu0 %v610
        %v4149 = vpop.f32.mrb[0].mxu0
        %v4150 = vadd.f32 %v3978, %v4149
        %v4151 = vpop.f32.mrb[0].mxu0
        %4152 = vmatprep.mubr.f32.mxu0 0.0
        %4153 = vmatmul.mubr.f32.gmra.mrb[0].mxu0 %v613
        %v4154 = vpop.f32.mrb[0].mxu0
        %v4155 = vadd.f32 %v3978, %v4154
        %v4156 = vpop.f32.mrb[0].mxu0
        %4157 = vmatprep.mubr.f32.mxu0 0.0
        %4158 = vmatmul.mubr.f32.gmra.mrb[0].mxu0 %v616
        %v4159 = vpop.f32.mrb[0].mxu0
        %v4160 = vadd.f32 %v3978, %v4159
        %v4161 = vpop.f32.mrb[0].mxu0
        %4162 = vmatprep.mubr.f32.mxu0 0.0
        %4163 = vmatmul.mubr.f32.gmra.mrb[0].mxu0 %v619
        %v4164 = vpop.f32.mrb[0].mxu0
        %v4165 = vadd.f32 %v3978, %v4164
        %v4166 = vpop.f32.mrb[0].mxu0
        %4167 = vmatprep.mubr.f32.mxu0 0.0
        %4168 = vmatmul.mubr.f32.gmra.mrb[0].mxu0 %v622
        %v4169 = vpop.f32.mrb[0].mxu0
        %v4170 = vadd.f32 %v3978, %v4169
        %v4171 = vpop.f32.mrb[0].mxu0
        %4172 = vmatprep.mubr.f32.mxu0 0.0
        %4173 = vmatmul.mubr.f32.gmra.mrb[0].mxu0 %v625
        %v4174 = vpop.f32.mrb[0].mxu0
        %v4175 = vadd.f32 %v3978, %v4174
        %v4176 = vpop.f32.mrb[0].mxu0
        %4177 = vmatprep.mubr.f32.mxu0 0.0
        %4178 = vmatmul.mubr.f32.gmra.mrb[0].mxu0 %v628
        %v4179 = vpop.f32.mrb[0].mxu0
        %v4180 = vadd.f32 %v3978, %v4179
        %v4181 = vpop.f32.mrb[0].mxu0
        %4182 = vmatprep.mubr.f32.mxu0 0.0
        %4183 = vmatmul.mubr.f32.gmra.mrb[0].mxu0 %v631
        %v4184 = vpop.f32.mrb[0].mxu0
        %v4185 = vadd.f32 %v3978, %v4184
        %v4186 = vpop.f32.mrb[0].mxu0
        %4187 = vmatprep.mubr.f32.mxu0 0.0
        %4188 = vmatmul.mubr.f32.gmra.mrb[0].mxu0 %v634
        %v4189 = vpop.f32.mrb[0].mxu0
        %v4190 = vadd.f32 %v3978, %v4189
        %v4191 = vpop.f32.mrb[0].mxu0
        %4192 = vmatprep.mubr.f32.mxu0 0.0
        %4193 = vmatmul.mubr.f32.gmra.mrb[0].mxu0 %v637
        %v4194 = vpop.f32.mrb[0].mxu0
        %v4195 = vadd.f32 %v3978, %v4194
        %v4196 = vpop.f32.mrb[0].mxu0
        %4197 = vmatprep.mubr.f32.mxu0 0.0
        %4198 = vmatmul.mubr.f32.gmra.mrb[0].mxu0 %v640
        %v4199 = vpop.f32.mrb[0].mxu0
        %v4200 = vadd.f32 %v3978, %v4199
        %v4201 = vpop.f32.mrb[0].mxu0
        %4202 = vmatprep.mubr.f32.mxu0 0.0
        %4203 = vmatmul.mubr.f32.gmra.mrb[0].mxu0 %v643
        %v4204 = vpop.f32.mrb[0].mxu0
        %v4205 = vadd.f32 %v3978, %v4204
        %v4206 = vpop.f32.mrb[0].mxu0
        %4207 = vdwg.mxu0
        %v4208 = vmax.f32 %v4050, 0.0
        %v4209 = vmax.f32 %v4055, 0.0
        %v4210 = vmax.f32 %v4060, 0.0
        %v4211 = vmax.f32 %v4065, 0.0
        %v4212 = vmax.f32 %v4070, 0.0
        %v4213 = vmax.f32 %v4075, 0.0
        %v4214 = vmax.f32 %v4080, 0.0
        %v4215 = vmax.f32 %v4085, 0.0
        %v4216 = vmax.f32 %v4090, 0.0
        %v4217 = vmax.f32 %v4095, 0.0
        %v4218 = vmax.f32 %v4100, 0.0
        %v4219 = vmax.f32 %v4105, 0.0
        %v4220 = vmax.f32 %v4110, 0.0
        %v4221 = vmax.f32 %v4115, 0.0
        %v4222 = vmax.f32 %v4120, 0.0
        %v4223 = vmax.f32 %v4125, 0.0
        %v4224 = vmax.f32 %v4130, 0.0
        %v4225 = vmax.f32 %v4135, 0.0
        %v4226 = vmax.f32 %v4140, 0.0
        %v4227 = vmax.f32 %v4145, 0.0
        %v4228 = vmax.f32 %v4150, 0.0
        %v4229 = vmax.f32 %v4155, 0.0
        %v4230 = vmax.f32 %v4160, 0.0
        %v4231 = vmax.f32 %v4165, 0.0
        %v4232 = vmax.f32 %v4170, 0.0
        %v4233 = vmax.f32 %v4175, 0.0
        %v4234 = vmax.f32 %v4180, 0.0
        %v4235 = vmax.f32 %v4185, 0.0
        %v4236 = vmax.f32 %v4190, 0.0
        %v4237 = vmax.f32 %v4195, 0.0
        %v4238 = vmax.f32 %v4200, 0.0
        %v4239 = vmax.f32 %v4205, 0.0
        %v4272 = vrot.slane %v4208, 7
        %v4273 = vrot.slane %v4209, 7
        %v4274 = vsel %vm906, %v4272, %v4273
        %v4275 = vrot.slane %v4210, 7
        %v4276 = vrot.slane %v4211, 7
        %v4277 = vsel %vm906, %v4275, %v4276
        %v4278 = vrot.slane %v4212, 7
        %v4279 = vrot.slane %v4213, 7
        %v4280 = vsel %vm906, %v4278, %v4279
        %v4281 = vrot.slane %v4214, 7
        %v4282 = vrot.slane %v4215, 7
        %v4283 = vsel %vm906, %v4281, %v4282
        %v4284 = vrot.slane %v4216, 7
        %v4285 = vrot.slane %v4217, 7
        %v4286 = vsel %vm906, %v4284, %v4285
        %v4287 = vrot.slane %v4218, 7
        %v4288 = vrot.slane %v4219, 7
        %v4289 = vsel %vm906, %v4287, %v4288
        %v4290 = vrot.slane %v4220, 7
        %v4291 = vrot.slane %v4221, 7
        %v4292 = vsel %vm906, %v4290, %v4291
        %v4293 = vrot.slane %v4222, 7
        %v4294 = vrot.slane %v4223, 7
        %v4295 = vsel %vm906, %v4293, %v4294
        %v4296 = vrot.slane %v4224, 7
        %v4297 = vrot.slane %v4225, 7
        %v4298 = vsel %vm906, %v4296, %v4297
        %v4299 = vrot.slane %v4226, 7
        %v4300 = vrot.slane %v4227, 7
        %v4301 = vsel %vm906, %v4299, %v4300
        %v4302 = vrot.slane %v4228, 7
        %v4303 = vrot.slane %v4229, 7
        %v4304 = vsel %vm906, %v4302, %v4303
        %v4305 = vrot.slane %v4230, 7
        %v4306 = vrot.slane %v4231, 7
        %v4307 = vsel %vm906, %v4305, %v4306
        %v4308 = vrot.slane %v4232, 7
        %v4309 = vrot.slane %v4233, 7
        %v4310 = vsel %vm906, %v4308, %v4309
        %v4311 = vrot.slane %v4234, 7
        %v4312 = vrot.slane %v4235, 7
        %v4313 = vsel %vm906, %v4311, %v4312
        %v4314 = vrot.slane %v4236, 7
        %v4315 = vrot.slane %v4237, 7
        %v4316 = vsel %vm906, %v4314, %v4315
        %v4317 = vrot.slane %v4238, 7
        %v4318 = vrot.slane %v4239, 7
        %v4319 = vsel %vm906, %v4317, %v4318
        %v4367 = vsel %vm906, 0.0, %v4272
        %v4368 = vsel %vm906, 0.0, %v4275
        %v4369 = vsel %vm906, 0.0, %v4278
        %v4370 = vsel %vm906, 0.0, %v4281
        %v4371 = vsel %vm906, 0.0, %v4284
        %v4372 = vsel %vm906, 0.0, %v4287
        %v4373 = vsel %vm906, 0.0, %v4290
        %v4374 = vsel %vm906, 0.0, %v4293
        %v4375 = vsel %vm906, 0.0, %v4296
        %v4376 = vsel %vm906, 0.0, %v4299
        %v4377 = vsel %vm906, 0.0, %v4302
        %v4378 = vsel %vm906, 0.0, %v4305
        %v4379 = vsel %vm906, 0.0, %v4308
        %v4380 = vsel %vm906, 0.0, %v4311
        %v4381 = vsel %vm906, 0.0, %v4314
        %v4382 = vsel %vm906, 0.0, %v4317
        %v4383 = vsel %vm906, %v4273, 0.0
        %v4384 = vsel %vm906, %v4276, 0.0
        %v4385 = vsel %vm906, %v4279, 0.0
        %v4386 = vsel %vm906, %v4282, 0.0
        %v4387 = vsel %vm906, %v4285, 0.0
        %v4388 = vsel %vm906, %v4288, 0.0
        %v4389 = vsel %vm906, %v4291, 0.0
        %v4390 = vsel %vm906, %v4294, 0.0
        %v4391 = vsel %vm906, %v4297, 0.0
        %v4392 = vsel %vm906, %v4300, 0.0
        %v4393 = vsel %vm906, %v4303, 0.0
        %v4394 = vsel %vm906, %v4306, 0.0
        %v4395 = vsel %vm906, %v4309, 0.0
        %v4396 = vsel %vm906, %v4312, 0.0
        %v4397 = vsel %vm906, %v4315, 0.0
        %v4398 = vsel %vm906, %v4318, 0.0
        %v4429 = vrot.slane %v4367, 1
        %v4430 = vrot.slane %v4274, 1
        %v4431 = vsel %vm1066, %v4429, %v4430
        %v4432 = vrot.slane %v4383, 1
        %v4433 = vsel %vm1066, %v4430, %v4432
        %v4434 = vrot.slane %v4368, 1
        %v4435 = vrot.slane %v4277, 1
        %v4436 = vsel %vm1066, %v4434, %v4435
        %v4437 = vrot.slane %v4384, 1
        %v4438 = vsel %vm1066, %v4435, %v4437
        %v4439 = vrot.slane %v4369, 1
        %v4440 = vrot.slane %v4280, 1
        %v4441 = vsel %vm1066, %v4439, %v4440
        %v4442 = vrot.slane %v4385, 1
        %v4443 = vsel %vm1066, %v4440, %v4442
        %v4444 = vrot.slane %v4370, 1
        %v4445 = vrot.slane %v4283, 1
        %v4446 = vsel %vm1066, %v4444, %v4445
        %v4447 = vrot.slane %v4386, 1
        %v4448 = vsel %vm1066, %v4445, %v4447
        %v4449 = vrot.slane %v4371, 1
        %v4450 = vrot.slane %v4286, 1
        %v4451 = vsel %vm1066, %v4449, %v4450
        %v4452 = vrot.slane %v4387, 1
        %v4453 = vsel %vm1066, %v4450, %v4452
        %v4454 = vrot.slane %v4372, 1
        %v4455 = vrot.slane %v4289, 1
        %v4456 = vsel %vm1066, %v4454, %v4455
        %v4457 = vrot.slane %v4388, 1
        %v4458 = vsel %vm1066, %v4455, %v4457
        %v4459 = vrot.slane %v4373, 1
        %v4460 = vrot.slane %v4292, 1
        %v4461 = vsel %vm1066, %v4459, %v4460
        %v4462 = vrot.slane %v4389, 1
        %v4463 = vsel %vm1066, %v4460, %v4462
        %v4464 = vrot.slane %v4374, 1
        %v4465 = vrot.slane %v4295, 1
        %v4466 = vsel %vm1066, %v4464, %v4465
        %v4467 = vrot.slane %v4390, 1
        %v4468 = vsel %vm1066, %v4465, %v4467
        %v4469 = vrot.slane %v4375, 1
        %v4470 = vrot.slane %v4298, 1
        %v4471 = vsel %vm1066, %v4469, %v4470
        %v4472 = vrot.slane %v4391, 1
        %v4473 = vsel %vm1066, %v4470, %v4472
        %v4474 = vrot.slane %v4376, 1
        %v4475 = vrot.slane %v4301, 1
        %v4476 = vsel %vm1066, %v4474, %v4475
        %v4477 = vrot.slane %v4392, 1
        %v4478 = vsel %vm1066, %v4475, %v4477
        %v4479 = vrot.slane %v4377, 1
        %v4480 = vrot.slane %v4304, 1
        %v4481 = vsel %vm1066, %v4479, %v4480
        %v4482 = vrot.slane %v4393, 1
        %v4483 = vsel %vm1066, %v4480, %v4482
        %v4484 = vrot.slane %v4378, 1
        %v4485 = vrot.slane %v4307, 1
        %v4486 = vsel %vm1066, %v4484, %v4485
        %v4487 = vrot.slane %v4394, 1
        %v4488 = vsel %vm1066, %v4485, %v4487
        %v4489 = vrot.slane %v4379, 1
        %v4490 = vrot.slane %v4310, 1
        %v4491 = vsel %vm1066, %v4489, %v4490
        %v4492 = vrot.slane %v4395, 1
        %v4493 = vsel %vm1066, %v4490, %v4492
        %v4494 = vrot.slane %v4380, 1
        %v4495 = vrot.slane %v4313, 1
        %v4496 = vsel %vm1066, %v4494, %v4495
        %v4497 = vrot.slane %v4396, 1
        %v4498 = vsel %vm1066, %v4495, %v4497
        %v4499 = vrot.slane %v4381, 1
        %v4500 = vrot.slane %v4316, 1
        %v4501 = vsel %vm1066, %v4499, %v4500
        %v4502 = vrot.slane %v4397, 1
        %v4503 = vsel %vm1066, %v4500, %v4502
        %4504 = vrot.lane.b32.xlu0 %v4431, 24
        %v4505 = vpop.permute.xlu0 %4504
        %4506 = vrot.lane.b32.xlu0 %v4433, 24
        %v4507 = vpop.permute.xlu0 %4506
        %4508 = vrot.lane.b32.xlu0 %v4436, 24
        %v4509 = vpop.permute.xlu0 %4508
        %4510 = vrot.lane.b32.xlu0 %v4438, 24
        %v4511 = vpop.permute.xlu0 %4510
        %4512 = vrot.lane.b32.xlu0 %v4441, 24
        %v4513 = vpop.permute.xlu0 %4512
        %4514 = vrot.lane.b32.xlu0 %v4443, 24
        %v4515 = vpop.permute.xlu0 %4514
        %4516 = vrot.lane.b32.xlu0 %v4446, 24
        %v4517 = vpop.permute.xlu0 %4516
        %4518 = vrot.lane.b32.xlu0 %v4448, 24
        %v4519 = vpop.permute.xlu0 %4518
        %4520 = vrot.lane.b32.xlu0 %v4451, 24
        %v4521 = vpop.permute.xlu0 %4520
        %4522 = vrot.lane.b32.xlu0 %v4453, 24
        %v4523 = vpop.permute.xlu0 %4522
        %4524 = vrot.lane.b32.xlu0 %v4456, 24
        %v4525 = vpop.permute.xlu0 %4524
        %4526 = vrot.lane.b32.xlu0 %v4458, 24
        %v4527 = vpop.permute.xlu0 %4526
        %4528 = vrot.lane.b32.xlu0 %v4461, 24
        %v4529 = vpop.permute.xlu0 %4528
        %4530 = vrot.lane.b32.xlu0 %v4463, 24
        %v4531 = vpop.permute.xlu0 %4530
        %4532 = vrot.lane.b32.xlu0 %v4466, 24
        %v4533 = vpop.permute.xlu0 %4532
        %4534 = vrot.lane.b32.xlu0 %v4468, 24
        %v4535 = vpop.permute.xlu0 %4534
        %4536 = vrot.lane.b32.xlu0 %v4471, 24
        %v4537 = vpop.permute.xlu0 %4536
        %4538 = vrot.lane.b32.xlu0 %v4473, 24
        %v4539 = vpop.permute.xlu0 %4538
        %4540 = vrot.lane.b32.xlu0 %v4476, 24
        %v4541 = vpop.permute.xlu0 %4540
        %4542 = vrot.lane.b32.xlu0 %v4478, 24
        %v4543 = vpop.permute.xlu0 %4542
        %4544 = vrot.lane.b32.xlu0 %v4481, 24
        %v4545 = vpop.permute.xlu0 %4544
        %4546 = vrot.lane.b32.xlu0 %v4483, 24
        %v4547 = vpop.permute.xlu0 %4546
        %4548 = vrot.lane.b32.xlu0 %v4486, 24
        %v4549 = vpop.permute.xlu0 %4548
        %4550 = vrot.lane.b32.xlu0 %v4488, 24
        %v4551 = vpop.permute.xlu0 %4550
        %4552 = vrot.lane.b32.xlu0 %v4491, 24
        %v4553 = vpop.permute.xlu0 %4552
        %4554 = vrot.lane.b32.xlu0 %v4493, 24
        %v4555 = vpop.permute.xlu0 %4554
        %4556 = vrot.lane.b32.xlu0 %v4496, 24
        %v4557 = vpop.permute.xlu0 %4556
        %4558 = vrot.lane.b32.xlu0 %v4498, 24
        %v4559 = vpop.permute.xlu0 %4558
        %4560 = vrot.lane.b32.xlu0 %v4501, 24
        %v4561 = vpop.permute.xlu0 %4560
        %4562 = vrot.lane.b32.xlu0 %v4503, 24
        %v4563 = vpop.permute.xlu0 %4562
        %v4594 = vrot.slane %v4367, 2
        %v4595 = vrot.slane %v4274, 2
        %v4596 = vsel %vm1206, %v4594, %v4595
        %v4597 = vrot.slane %v4383, 2
        %v4598 = vsel %vm1206, %v4595, %v4597
        %v4599 = vrot.slane %v4368, 2
        %v4600 = vrot.slane %v4277, 2
        %v4601 = vsel %vm1206, %v4599, %v4600
        %v4602 = vrot.slane %v4384, 2
        %v4603 = vsel %vm1206, %v4600, %v4602
        %v4604 = vrot.slane %v4369, 2
        %v4605 = vrot.slane %v4280, 2
        %v4606 = vsel %vm1206, %v4604, %v4605
        %v4607 = vrot.slane %v4385, 2
        %v4608 = vsel %vm1206, %v4605, %v4607
        %v4609 = vrot.slane %v4370, 2
        %v4610 = vrot.slane %v4283, 2
        %v4611 = vsel %vm1206, %v4609, %v4610
        %v4612 = vrot.slane %v4386, 2
        %v4613 = vsel %vm1206, %v4610, %v4612
        %v4614 = vrot.slane %v4371, 2
        %v4615 = vrot.slane %v4286, 2
        %v4616 = vsel %vm1206, %v4614, %v4615
        %v4617 = vrot.slane %v4387, 2
        %v4618 = vsel %vm1206, %v4615, %v4617
        %v4619 = vrot.slane %v4372, 2
        %v4620 = vrot.slane %v4289, 2
        %v4621 = vsel %vm1206, %v4619, %v4620
        %v4622 = vrot.slane %v4388, 2
        %v4623 = vsel %vm1206, %v4620, %v4622
        %v4624 = vrot.slane %v4373, 2
        %v4625 = vrot.slane %v4292, 2
        %v4626 = vsel %vm1206, %v4624, %v4625
        %v4627 = vrot.slane %v4389, 2
        %v4628 = vsel %vm1206, %v4625, %v4627
        %v4629 = vrot.slane %v4374, 2
        %v4630 = vrot.slane %v4295, 2
        %v4631 = vsel %vm1206, %v4629, %v4630
        %v4632 = vrot.slane %v4390, 2
        %v4633 = vsel %vm1206, %v4630, %v4632
        %v4634 = vrot.slane %v4375, 2
        %v4635 = vrot.slane %v4298, 2
        %v4636 = vsel %vm1206, %v4634, %v4635
        %v4637 = vrot.slane %v4391, 2
        %v4638 = vsel %vm1206, %v4635, %v4637
        %v4639 = vrot.slane %v4376, 2
        %v4640 = vrot.slane %v4301, 2
        %v4641 = vsel %vm1206, %v4639, %v4640
        %v4642 = vrot.slane %v4392, 2
        %v4643 = vsel %vm1206, %v4640, %v4642
        %v4644 = vrot.slane %v4377, 2
        %v4645 = vrot.slane %v4304, 2
        %v4646 = vsel %vm1206, %v4644, %v4645
        %v4647 = vrot.slane %v4393, 2
        %v4648 = vsel %vm1206, %v4645, %v4647
        %v4649 = vrot.slane %v4378, 2
        %v4650 = vrot.slane %v4307, 2
        %v4651 = vsel %vm1206, %v4649, %v4650
        %v4652 = vrot.slane %v4394, 2
        %v4653 = vsel %vm1206, %v4650, %v4652
        %v4654 = vrot.slane %v4379, 2
        %v4655 = vrot.slane %v4310, 2
        %v4656 = vsel %vm1206, %v4654, %v4655
        %v4657 = vrot.slane %v4395, 2
        %v4658 = vsel %vm1206, %v4655, %v4657
        %v4659 = vrot.slane %v4380, 2
        %v4660 = vrot.slane %v4313, 2
        %v4661 = vsel %vm1206, %v4659, %v4660
        %v4662 = vrot.slane %v4396, 2
        %v4663 = vsel %vm1206, %v4660, %v4662
        %v4664 = vrot.slane %v4381, 2
        %v4665 = vrot.slane %v4316, 2
        %v4666 = vsel %vm1206, %v4664, %v4665
        %v4667 = vrot.slane %v4397, 2
        %v4668 = vsel %vm1206, %v4665, %v4667
        %4669 = vrot.lane.b32.xlu0 %v4596, 48
        %v4670 = vpop.permute.xlu0 %4669
        %4671 = vrot.lane.b32.xlu0 %v4598, 48
        %v4672 = vpop.permute.xlu0 %4671
        %4673 = vrot.lane.b32.xlu0 %v4601, 48
        %v4674 = vpop.permute.xlu0 %4673
        %4675 = vrot.lane.b32.xlu0 %v4603, 48
        %v4676 = vpop.permute.xlu0 %4675
        %4677 = vrot.lane.b32.xlu0 %v4606, 48
        %v4678 = vpop.permute.xlu0 %4677
        %4679 = vrot.lane.b32.xlu0 %v4608, 48
        %v4680 = vpop.permute.xlu0 %4679
        %4681 = vrot.lane.b32.xlu0 %v4611, 48
        %v4682 = vpop.permute.xlu0 %4681
        %4683 = vrot.lane.b32.xlu0 %v4613, 48
        %v4684 = vpop.permute.xlu0 %4683
        %4685 = vrot.lane.b32.xlu0 %v4616, 48
        %v4686 = vpop.permute.xlu0 %4685
        %4687 = vrot.lane.b32.xlu0 %v4618, 48
        %v4688 = vpop.permute.xlu0 %4687
        %4689 = vrot.lane.b32.xlu0 %v4621, 48
        %v4690 = vpop.permute.xlu0 %4689
        %4691 = vrot.lane.b32.xlu0 %v4623, 48
        %v4692 = vpop.permute.xlu0 %4691
        %4693 = vrot.lane.b32.xlu0 %v4626, 48
        %v4694 = vpop.permute.xlu0 %4693
        %4695 = vrot.lane.b32.xlu0 %v4628, 48
        %v4696 = vpop.permute.xlu0 %4695
        %4697 = vrot.lane.b32.xlu0 %v4631, 48
        %v4698 = vpop.permute.xlu0 %4697
        %4699 = vrot.lane.b32.xlu0 %v4633, 48
        %v4700 = vpop.permute.xlu0 %4699
        %4701 = vrot.lane.b32.xlu0 %v4636, 48
        %v4702 = vpop.permute.xlu0 %4701
        %4703 = vrot.lane.b32.xlu0 %v4638, 48
        %v4704 = vpop.permute.xlu0 %4703
        %4705 = vrot.lane.b32.xlu0 %v4641, 48
        %v4706 = vpop.permute.xlu0 %4705
        %4707 = vrot.lane.b32.xlu0 %v4643, 48
        %v4708 = vpop.permute.xlu0 %4707
        %4709 = vrot.lane.b32.xlu0 %v4646, 48
        %v4710 = vpop.permute.xlu0 %4709
        %4711 = vrot.lane.b32.xlu0 %v4648, 48
        %v4712 = vpop.permute.xlu0 %4711
        %4713 = vrot.lane.b32.xlu0 %v4651, 48
        %v4714 = vpop.permute.xlu0 %4713
        %4715 = vrot.lane.b32.xlu0 %v4653, 48
        %v4716 = vpop.permute.xlu0 %4715
        %4717 = vrot.lane.b32.xlu0 %v4656, 48
        %v4718 = vpop.permute.xlu0 %4717
        %4719 = vrot.lane.b32.xlu0 %v4658, 48
        %v4720 = vpop.permute.xlu0 %4719
        %4721 = vrot.lane.b32.xlu0 %v4661, 48
        %v4722 = vpop.permute.xlu0 %4721
        %4723 = vrot.lane.b32.xlu0 %v4663, 48
        %v4724 = vpop.permute.xlu0 %4723
        %4725 = vrot.lane.b32.xlu0 %v4666, 48
        %v4726 = vpop.permute.xlu0 %4725
        %4727 = vrot.lane.b32.xlu0 %v4668, 48
        %v4728 = vpop.permute.xlu0 %4727
        %4760 = vrot.lane.b32.xlu0 %v4367, 72
        %v4761 = vpop.permute.xlu0 %4760
        %4762 = vrot.lane.b32.xlu0 %v4274, 72
        %v4763 = vpop.permute.xlu0 %4762
        %4764 = vrot.lane.b32.xlu0 %v4368, 72
        %v4765 = vpop.permute.xlu0 %4764
        %4766 = vrot.lane.b32.xlu0 %v4277, 72
        %v4767 = vpop.permute.xlu0 %4766
        %4768 = vrot.lane.b32.xlu0 %v4369, 72
        %v4769 = vpop.permute.xlu0 %4768
        %4770 = vrot.lane.b32.xlu0 %v4280, 72
        %v4771 = vpop.permute.xlu0 %4770
        %4772 = vrot.lane.b32.xlu0 %v4370, 72
        %v4773 = vpop.permute.xlu0 %4772
        %4774 = vrot.lane.b32.xlu0 %v4283, 72
        %v4775 = vpop.permute.xlu0 %4774
        %4776 = vrot.lane.b32.xlu0 %v4371, 72
        %v4777 = vpop.permute.xlu0 %4776
        %4778 = vrot.lane.b32.xlu0 %v4286, 72
        %v4779 = vpop.permute.xlu0 %4778
        %4780 = vrot.lane.b32.xlu0 %v4372, 72
        %v4781 = vpop.permute.xlu0 %4780
        %4782 = vrot.lane.b32.xlu0 %v4289, 72
        %v4783 = vpop.permute.xlu0 %4782
        %4784 = vrot.lane.b32.xlu0 %v4373, 72
        %v4785 = vpop.permute.xlu0 %4784
        %4786 = vrot.lane.b32.xlu0 %v4292, 72
        %v4787 = vpop.permute.xlu0 %4786
        %4788 = vrot.lane.b32.xlu0 %v4374, 72
        %v4789 = vpop.permute.xlu0 %4788
        %4790 = vrot.lane.b32.xlu0 %v4295, 72
        %v4791 = vpop.permute.xlu0 %4790
        %4792 = vrot.lane.b32.xlu0 %v4375, 72
        %v4793 = vpop.permute.xlu0 %4792
        %4794 = vrot.lane.b32.xlu0 %v4298, 72
        %v4795 = vpop.permute.xlu0 %4794
        %4796 = vrot.lane.b32.xlu0 %v4376, 72
        %v4797 = vpop.permute.xlu0 %4796
        %4798 = vrot.lane.b32.xlu0 %v4301, 72
        %v4799 = vpop.permute.xlu0 %4798
        %4800 = vrot.lane.b32.xlu0 %v4377, 72
        %v4801 = vpop.permute.xlu0 %4800
        %4802 = vrot.lane.b32.xlu0 %v4304, 72
        %v4803 = vpop.permute.xlu0 %4802
        %4804 = vrot.lane.b32.xlu0 %v4378, 72
        %v4805 = vpop.permute.xlu0 %4804
        %4806 = vrot.lane.b32.xlu0 %v4307, 72
        %v4807 = vpop.permute.xlu0 %4806
        %4808 = vrot.lane.b32.xlu0 %v4379, 72
        %v4809 = vpop.permute.xlu0 %4808
        %4810 = vrot.lane.b32.xlu0 %v4310, 72
        %v4811 = vpop.permute.xlu0 %4810
        %4812 = vrot.lane.b32.xlu0 %v4380, 72
        %v4813 = vpop.permute.xlu0 %4812
        %4814 = vrot.lane.b32.xlu0 %v4313, 72
        %v4815 = vpop.permute.xlu0 %4814
        %4816 = vrot.lane.b32.xlu0 %v4381, 72
        %v4817 = vpop.permute.xlu0 %4816
        %4818 = vrot.lane.b32.xlu0 %v4316, 72
        %v4819 = vpop.permute.xlu0 %4818
        %4820 = vrot.lane.b32.xlu0 %v4382, 72
        %v4821 = vpop.permute.xlu0 %4820
        %4822 = vrot.lane.b32.xlu0 %v4319, 72
        %v4823 = vpop.permute.xlu0 %4822
        %v4857 = vrot.slane %v4382, 1
        %v4858 = vrot.slane %v4319, 1
        %v4859 = vsel %vm1066, %v4857, %v4858
        %v4860 = vrot.slane %v4398, 1
        %v4861 = vsel %vm1066, %v4858, %v4860
        %4862 = vrot.lane.b32.xlu0 %v4431, 96
        %v4863 = vpop.permute.xlu0 %4862
        %4864 = vrot.lane.b32.xlu0 %v4433, 96
        %v4865 = vpop.permute.xlu0 %4864
        %4866 = vrot.lane.b32.xlu0 %v4436, 96
        %v4867 = vpop.permute.xlu0 %4866
        %4868 = vrot.lane.b32.xlu0 %v4438, 96
        %v4869 = vpop.permute.xlu0 %4868
        %4870 = vrot.lane.b32.xlu0 %v4441, 96
        %v4871 = vpop.permute.xlu0 %4870
        %4872 = vrot.lane.b32.xlu0 %v4443, 96
        %v4873 = vpop.permute.xlu0 %4872
        %4874 = vrot.lane.b32.xlu0 %v4446, 96
        %v4875 = vpop.permute.xlu0 %4874
        %4876 = vrot.lane.b32.xlu0 %v4448, 96
        %v4877 = vpop.permute.xlu0 %4876
        %4878 = vrot.lane.b32.xlu0 %v4451, 96
        %v4879 = vpop.permute.xlu0 %4878
        %4880 = vrot.lane.b32.xlu0 %v4453, 96
        %v4881 = vpop.permute.xlu0 %4880
        %4882 = vrot.lane.b32.xlu0 %v4456, 96
        %v4883 = vpop.permute.xlu0 %4882
        %4884 = vrot.lane.b32.xlu0 %v4458, 96
        %v4885 = vpop.permute.xlu0 %4884
        %4886 = vrot.lane.b32.xlu0 %v4461, 96
        %v4887 = vpop.permute.xlu0 %4886
        %4888 = vrot.lane.b32.xlu0 %v4463, 96
        %v4889 = vpop.permute.xlu0 %4888
        %4890 = vrot.lane.b32.xlu0 %v4466, 96
        %v4891 = vpop.permute.xlu0 %4890
        %4892 = vrot.lane.b32.xlu0 %v4468, 96
        %v4893 = vpop.permute.xlu0 %4892
        %4894 = vrot.lane.b32.xlu0 %v4471, 96
        %v4895 = vpop.permute.xlu0 %4894
        %4896 = vrot.lane.b32.xlu0 %v4473, 96
        %v4897 = vpop.permute.xlu0 %4896
        %4898 = vrot.lane.b32.xlu0 %v4476, 96
        %v4899 = vpop.permute.xlu0 %4898
        %4900 = vrot.lane.b32.xlu0 %v4478, 96
        %v4901 = vpop.permute.xlu0 %4900
        %4902 = vrot.lane.b32.xlu0 %v4481, 96
        %v4903 = vpop.permute.xlu0 %4902
        %4904 = vrot.lane.b32.xlu0 %v4483, 96
        %v4905 = vpop.permute.xlu0 %4904
        %4906 = vrot.lane.b32.xlu0 %v4486, 96
        %v4907 = vpop.permute.xlu0 %4906
        %4908 = vrot.lane.b32.xlu0 %v4488, 96
        %v4909 = vpop.permute.xlu0 %4908
        %4910 = vrot.lane.b32.xlu0 %v4491, 96
        %v4911 = vpop.permute.xlu0 %4910
        %4912 = vrot.lane.b32.xlu0 %v4493, 96
        %v4913 = vpop.permute.xlu0 %4912
        %4914 = vrot.lane.b32.xlu0 %v4496, 96
        %v4915 = vpop.permute.xlu0 %4914
        %4916 = vrot.lane.b32.xlu0 %v4498, 96
        %v4917 = vpop.permute.xlu0 %4916
        %4918 = vrot.lane.b32.xlu0 %v4501, 96
        %v4919 = vpop.permute.xlu0 %4918
        %4920 = vrot.lane.b32.xlu0 %v4503, 96
        %v4921 = vpop.permute.xlu0 %4920
        %4922 = vrot.lane.b32.xlu0 %v4859, 96
        %v4923 = vpop.permute.xlu0 %4922
        %4924 = vrot.lane.b32.xlu0 %v4861, 96
        %v4925 = vpop.permute.xlu0 %4924
        %v4958 = vrot.slane %v4382, 2
        %v4959 = vrot.slane %v4319, 2
        %v4960 = vsel %vm1206, %v4958, %v4959
        %v4961 = vrot.slane %v4398, 2
        %v4962 = vsel %vm1206, %v4959, %v4961
        %4963 = vrot.lane.b32.xlu0 %v4596, 120
        %v4964 = vpop.permute.xlu0 %4963
        %4965 = vrot.lane.b32.xlu0 %v4598, 120
        %v4966 = vpop.permute.xlu0 %4965
        %4967 = vrot.lane.b32.xlu0 %v4601, 120
        %v4968 = vpop.permute.xlu0 %4967
        %4969 = vrot.lane.b32.xlu0 %v4603, 120
        %v4970 = vpop.permute.xlu0 %4969
        %4971 = vrot.lane.b32.xlu0 %v4606, 120
        %v4972 = vpop.permute.xlu0 %4971
        %4973 = vrot.lane.b32.xlu0 %v4608, 120
        %v4974 = vpop.permute.xlu0 %4973
        %4975 = vrot.lane.b32.xlu0 %v4611, 120
        %v4976 = vpop.permute.xlu0 %4975
        %4977 = vrot.lane.b32.xlu0 %v4613, 120
        %v4978 = vpop.permute.xlu0 %4977
        %4979 = vrot.lane.b32.xlu0 %v4616, 120
        %v4980 = vpop.permute.xlu0 %4979
        %4981 = vrot.lane.b32.xlu0 %v4618, 120
        %v4982 = vpop.permute.xlu0 %4981
        %4983 = vrot.lane.b32.xlu0 %v4621, 120
        %v4984 = vpop.permute.xlu0 %4983
        %4985 = vrot.lane.b32.xlu0 %v4623, 120
        %v4986 = vpop.permute.xlu0 %4985
        %4987 = vrot.lane.b32.xlu0 %v4626, 120
        %v4988 = vpop.permute.xlu0 %4987
        %4989 = vrot.lane.b32.xlu0 %v4628, 120
        %v4990 = vpop.permute.xlu0 %4989
        %4991 = vrot.lane.b32.xlu0 %v4631, 120
        %v4992 = vpop.permute.xlu0 %4991
        %4993 = vrot.lane.b32.xlu0 %v4633, 120
        %v4994 = vpop.permute.xlu0 %4993
        %4995 = vrot.lane.b32.xlu0 %v4636, 120
        %v4996 = vpop.permute.xlu0 %4995
        %4997 = vrot.lane.b32.xlu0 %v4638, 120
        %v4998 = vpop.permute.xlu0 %4997
        %4999 = vrot.lane.b32.xlu0 %v4641, 120
        %v5000 = vpop.permute.xlu0 %4999
        %5001 = vrot.lane.b32.xlu0 %v4643, 120
        %v5002 = vpop.permute.xlu0 %5001
        %5003 = vrot.lane.b32.xlu0 %v4646, 120
        %v5004 = vpop.permute.xlu0 %5003
        %5005 = vrot.lane.b32.xlu0 %v4648, 120
        %v5006 = vpop.permute.xlu0 %5005
        %5007 = vrot.lane.b32.xlu0 %v4651, 120
        %v5008 = vpop.permute.xlu0 %5007
        %5009 = vrot.lane.b32.xlu0 %v4653, 120
        %v5010 = vpop.permute.xlu0 %5009
        %5011 = vrot.lane.b32.xlu0 %v4656, 120
        %v5012 = vpop.permute.xlu0 %5011
        %5013 = vrot.lane.b32.xlu0 %v4658, 120
        %v5014 = vpop.permute.xlu0 %5013
        %5015 = vrot.lane.b32.xlu0 %v4661, 120
        %v5016 = vpop.permute.xlu0 %5015
        %5017 = vrot.lane.b32.xlu0 %v4663, 120
        %v5018 = vpop.permute.xlu0 %5017
        %5019 = vrot.lane.b32.xlu0 %v4666, 120
        %v5020 = vpop.permute.xlu0 %5019
        %5021 = vrot.lane.b32.xlu0 %v4668, 120
        %v5022 = vpop.permute.xlu0 %5021
        %5023 = vrot.lane.b32.xlu0 %v4960, 120
        %v5024 = vpop.permute.xlu0 %5023
        %5025 = vrot.lane.b32.xlu0 %v4962, 120
        %v5026 = vpop.permute.xlu0 %5025
        %5059 = vrot.lane.b32.xlu0 %v4368, 16
        %v5060 = vpop.permute.xlu0 %5059
        %5061 = vrot.lane.b32.xlu0 %v4277, 16
        %v5062 = vpop.permute.xlu0 %5061
        %5063 = vrot.lane.b32.xlu0 %v4369, 16
        %v5064 = vpop.permute.xlu0 %5063
        %5065 = vrot.lane.b32.xlu0 %v4280, 16
        %v5066 = vpop.permute.xlu0 %5065
        %5067 = vrot.lane.b32.xlu0 %v4370, 16
        %v5068 = vpop.permute.xlu0 %5067
        %5069 = vrot.lane.b32.xlu0 %v4283, 16
        %v5070 = vpop.permute.xlu0 %5069
        %5071 = vrot.lane.b32.xlu0 %v4371, 16
        %v5072 = vpop.permute.xlu0 %5071
        %5073 = vrot.lane.b32.xlu0 %v4286, 16
        %v5074 = vpop.permute.xlu0 %5073
        %5075 = vrot.lane.b32.xlu0 %v4372, 16
        %v5076 = vpop.permute.xlu0 %5075
        %5077 = vrot.lane.b32.xlu0 %v4289, 16
        %v5078 = vpop.permute.xlu0 %5077
        %5079 = vrot.lane.b32.xlu0 %v4373, 16
        %v5080 = vpop.permute.xlu0 %5079
        %5081 = vrot.lane.b32.xlu0 %v4292, 16
        %v5082 = vpop.permute.xlu0 %5081
        %5083 = vrot.lane.b32.xlu0 %v4374, 16
        %v5084 = vpop.permute.xlu0 %5083
        %5085 = vrot.lane.b32.xlu0 %v4295, 16
        %v5086 = vpop.permute.xlu0 %5085
        %5087 = vrot.lane.b32.xlu0 %v4375, 16
        %v5088 = vpop.permute.xlu0 %5087
        %5089 = vrot.lane.b32.xlu0 %v4298, 16
        %v5090 = vpop.permute.xlu0 %5089
        %5091 = vrot.lane.b32.xlu0 %v4376, 16
        %v5092 = vpop.permute.xlu0 %5091
        %5093 = vrot.lane.b32.xlu0 %v4301, 16
        %v5094 = vpop.permute.xlu0 %5093
        %5095 = vrot.lane.b32.xlu0 %v4377, 16
        %v5096 = vpop.permute.xlu0 %5095
        %5097 = vrot.lane.b32.xlu0 %v4304, 16
        %v5098 = vpop.permute.xlu0 %5097
        %5099 = vrot.lane.b32.xlu0 %v4378, 16
        %v5100 = vpop.permute.xlu0 %5099
        %5101 = vrot.lane.b32.xlu0 %v4307, 16
        %v5102 = vpop.permute.xlu0 %5101
        %5103 = vrot.lane.b32.xlu0 %v4379, 16
        %v5104 = vpop.permute.xlu0 %5103
        %5105 = vrot.lane.b32.xlu0 %v4310, 16
        %v5106 = vpop.permute.xlu0 %5105
        %5107 = vrot.lane.b32.xlu0 %v4380, 16
        %v5108 = vpop.permute.xlu0 %5107
        %5109 = vrot.lane.b32.xlu0 %v4313, 16
        %v5110 = vpop.permute.xlu0 %5109
        %5111 = vrot.lane.b32.xlu0 %v4381, 16
        %v5112 = vpop.permute.xlu0 %5111
        %5113 = vrot.lane.b32.xlu0 %v4316, 16
        %v5114 = vpop.permute.xlu0 %5113
        %5115 = vrot.lane.b32.xlu0 %v4382, 16
        %v5116 = vpop.permute.xlu0 %5115
        %5117 = vrot.lane.b32.xlu0 %v4319, 16
        %v5118 = vpop.permute.xlu0 %5117
        %5149 = vrot.lane.b32.xlu0 %v4436, 40
        %v5150 = vpop.permute.xlu0 %5149
        %5151 = vrot.lane.b32.xlu0 %v4438, 40
        %v5152 = vpop.permute.xlu0 %5151
        %5153 = vrot.lane.b32.xlu0 %v4441, 40
        %v5154 = vpop.permute.xlu0 %5153
        %5155 = vrot.lane.b32.xlu0 %v4443, 40
        %v5156 = vpop.permute.xlu0 %5155
        %5157 = vrot.lane.b32.xlu0 %v4446, 40
        %v5158 = vpop.permute.xlu0 %5157
        %5159 = vrot.lane.b32.xlu0 %v4448, 40
        %v5160 = vpop.permute.xlu0 %5159
        %5161 = vrot.lane.b32.xlu0 %v4451, 40
        %v5162 = vpop.permute.xlu0 %5161
        %5163 = vrot.lane.b32.xlu0 %v4453, 40
        %v5164 = vpop.permute.xlu0 %5163
        %5165 = vrot.lane.b32.xlu0 %v4456, 40
        %v5166 = vpop.permute.xlu0 %5165
        %5167 = vrot.lane.b32.xlu0 %v4458, 40
        %v5168 = vpop.permute.xlu0 %5167
        %5169 = vrot.lane.b32.xlu0 %v4461, 40
        %v5170 = vpop.permute.xlu0 %5169
        %5171 = vrot.lane.b32.xlu0 %v4463, 40
        %v5172 = vpop.permute.xlu0 %5171
        %5173 = vrot.lane.b32.xlu0 %v4466, 40
        %v5174 = vpop.permute.xlu0 %5173
        %5175 = vrot.lane.b32.xlu0 %v4468, 40
        %v5176 = vpop.permute.xlu0 %5175
        %5177 = vrot.lane.b32.xlu0 %v4471, 40
        %v5178 = vpop.permute.xlu0 %5177
        %5179 = vrot.lane.b32.xlu0 %v4473, 40
        %v5180 = vpop.permute.xlu0 %5179
        %5181 = vrot.lane.b32.xlu0 %v4476, 40
        %v5182 = vpop.permute.xlu0 %5181
        %5183 = vrot.lane.b32.xlu0 %v4478, 40
        %v5184 = vpop.permute.xlu0 %5183
        %5185 = vrot.lane.b32.xlu0 %v4481, 40
        %v5186 = vpop.permute.xlu0 %5185
        %5187 = vrot.lane.b32.xlu0 %v4483, 40
        %v5188 = vpop.permute.xlu0 %5187
        %5189 = vrot.lane.b32.xlu0 %v4486, 40
        %v5190 = vpop.permute.xlu0 %5189
        %5191 = vrot.lane.b32.xlu0 %v4488, 40
        %v5192 = vpop.permute.xlu0 %5191
        %5193 = vrot.lane.b32.xlu0 %v4491, 40
        %v5194 = vpop.permute.xlu0 %5193
        %5195 = vrot.lane.b32.xlu0 %v4493, 40
        %v5196 = vpop.permute.xlu0 %5195
        %5197 = vrot.lane.b32.xlu0 %v4496, 40
        %v5198 = vpop.permute.xlu0 %5197
        %5199 = vrot.lane.b32.xlu0 %v4498, 40
        %v5200 = vpop.permute.xlu0 %5199
        %5201 = vrot.lane.b32.xlu0 %v4501, 40
        %v5202 = vpop.permute.xlu0 %5201
        %5203 = vrot.lane.b32.xlu0 %v4503, 40
        %v5204 = vpop.permute.xlu0 %5203
        %5205 = vrot.lane.b32.xlu0 %v4859, 40
        %v5206 = vpop.permute.xlu0 %5205
        %5207 = vrot.lane.b32.xlu0 %v4861, 40
        %v5208 = vpop.permute.xlu0 %5207
        %5239 = vrot.lane.b32.xlu0 %v4601, 64
        %v5240 = vpop.permute.xlu0 %5239
        %5241 = vrot.lane.b32.xlu0 %v4603, 64
        %v5242 = vpop.permute.xlu0 %5241
        %5243 = vrot.lane.b32.xlu0 %v4606, 64
        %v5244 = vpop.permute.xlu0 %5243
        %5245 = vrot.lane.b32.xlu0 %v4608, 64
        %v5246 = vpop.permute.xlu0 %5245
        %5247 = vrot.lane.b32.xlu0 %v4611, 64
        %v5248 = vpop.permute.xlu0 %5247
        %5249 = vrot.lane.b32.xlu0 %v4613, 64
        %v5250 = vpop.permute.xlu0 %5249
        %5251 = vrot.lane.b32.xlu0 %v4616, 64
        %v5252 = vpop.permute.xlu0 %5251
        %5253 = vrot.lane.b32.xlu0 %v4618, 64
        %v5254 = vpop.permute.xlu0 %5253
        %5255 = vrot.lane.b32.xlu0 %v4621, 64
        %v5256 = vpop.permute.xlu0 %5255
        %5257 = vrot.lane.b32.xlu0 %v4623, 64
        %v5258 = vpop.permute.xlu0 %5257
        %5259 = vrot.lane.b32.xlu0 %v4626, 64
        %v5260 = vpop.permute.xlu0 %5259
        %5261 = vrot.lane.b32.xlu0 %v4628, 64
        %v5262 = vpop.permute.xlu0 %5261
        %5263 = vrot.lane.b32.xlu0 %v4631, 64
        %v5264 = vpop.permute.xlu0 %5263
        %5265 = vrot.lane.b32.xlu0 %v4633, 64
        %v5266 = vpop.permute.xlu0 %5265
        %5267 = vrot.lane.b32.xlu0 %v4636, 64
        %v5268 = vpop.permute.xlu0 %5267
        %5269 = vrot.lane.b32.xlu0 %v4638, 64
        %v5270 = vpop.permute.xlu0 %5269
        %5271 = vrot.lane.b32.xlu0 %v4641, 64
        %v5272 = vpop.permute.xlu0 %5271
        %5273 = vrot.lane.b32.xlu0 %v4643, 64
        %v5274 = vpop.permute.xlu0 %5273
        %5275 = vrot.lane.b32.xlu0 %v4646, 64
        %v5276 = vpop.permute.xlu0 %5275
        %5277 = vrot.lane.b32.xlu0 %v4648, 64
        %v5278 = vpop.permute.xlu0 %5277
        %5279 = vrot.lane.b32.xlu0 %v4651, 64
        %v5280 = vpop.permute.xlu0 %5279
        %5281 = vrot.lane.b32.xlu0 %v4653, 64
        %v5282 = vpop.permute.xlu0 %5281
        %5283 = vrot.lane.b32.xlu0 %v4656, 64
        %v5284 = vpop.permute.xlu0 %5283
        %5285 = vrot.lane.b32.xlu0 %v4658, 64
        %v5286 = vpop.permute.xlu0 %5285
        %5287 = vrot.lane.b32.xlu0 %v4661, 64
        %v5288 = vpop.permute.xlu0 %5287
        %5289 = vrot.lane.b32.xlu0 %v4663, 64
        %v5290 = vpop.permute.xlu0 %5289
        %5291 = vrot.lane.b32.xlu0 %v4666, 64
        %v5292 = vpop.permute.xlu0 %5291
        %5293 = vrot.lane.b32.xlu0 %v4668, 64
        %v5294 = vpop.permute.xlu0 %5293
        %5295 = vrot.lane.b32.xlu0 %v4960, 64
        %v5296 = vpop.permute.xlu0 %5295
        %5297 = vrot.lane.b32.xlu0 %v4962, 64
        %v5298 = vpop.permute.xlu0 %5297
        %v5329 = vsel %vm3322, %v4367, %v4505
        %v5330 = vsel %vm3322, %v4274, %v4507
        %v5331 = vsel %vm3322, %v4368, %v4509
        %v5332 = vsel %vm3322, %v4277, %v4511
        %v5333 = vsel %vm3322, %v4369, %v4513
        %v5334 = vsel %vm3322, %v4280, %v4515
        %v5335 = vsel %vm3322, %v4370, %v4517
        %v5336 = vsel %vm3322, %v4283, %v4519
        %v5337 = vsel %vm3322, %v4371, %v4521
        %v5338 = vsel %vm3322, %v4286, %v4523
        %v5339 = vsel %vm3322, %v4372, %v4525
        %v5340 = vsel %vm3322, %v4289, %v4527
        %v5341 = vsel %vm3322, %v4373, %v4529
        %v5342 = vsel %vm3322, %v4292, %v4531
        %v5343 = vsel %vm3322, %v4374, %v4533
        %v5344 = vsel %vm3322, %v4295, %v4535
        %v5345 = vsel %vm3322, %v4375, %v4537
        %v5346 = vsel %vm3322, %v4298, %v4539
        %v5347 = vsel %vm3322, %v4376, %v4541
        %v5348 = vsel %vm3322, %v4301, %v4543
        %v5349 = vsel %vm3322, %v4377, %v4545
        %v5350 = vsel %vm3322, %v4304, %v4547
        %v5351 = vsel %vm3322, %v4378, %v4549
        %v5352 = vsel %vm3322, %v4307, %v4551
        %v5353 = vsel %vm3322, %v4379, %v4553
        %v5354 = vsel %vm3322, %v4310, %v4555
        %v5355 = vsel %vm3322, %v4380, %v4557
        %v5356 = vsel %vm3322, %v4313, %v4559
        %v5357 = vsel %vm3322, %v4381, %v4561
        %v5358 = vsel %vm3322, %v4316, %v4563
        %v5359 = vsel %vm3354, %v5329, %v4670
        %v5360 = vsel %vm3354, %v5330, %v4672
        %v5361 = vsel %vm3354, %v5331, %v4674
        %v5362 = vsel %vm3354, %v5332, %v4676
        %v5363 = vsel %vm3354, %v5333, %v4678
        %v5364 = vsel %vm3354, %v5334, %v4680
        %v5365 = vsel %vm3354, %v5335, %v4682
        %v5366 = vsel %vm3354, %v5336, %v4684
        %v5367 = vsel %vm3354, %v5337, %v4686
        %v5368 = vsel %vm3354, %v5338, %v4688
        %v5369 = vsel %vm3354, %v5339, %v4690
        %v5370 = vsel %vm3354, %v5340, %v4692
        %v5371 = vsel %vm3354, %v5341, %v4694
        %v5372 = vsel %vm3354, %v5342, %v4696
        %v5373 = vsel %vm3354, %v5343, %v4698
        %v5374 = vsel %vm3354, %v5344, %v4700
        %v5375 = vsel %vm3354, %v5345, %v4702
        %v5376 = vsel %vm3354, %v5346, %v4704
        %v5377 = vsel %vm3354, %v5347, %v4706
        %v5378 = vsel %vm3354, %v5348, %v4708
        %v5379 = vsel %vm3354, %v5349, %v4710
        %v5380 = vsel %vm3354, %v5350, %v4712
        %v5381 = vsel %vm3354, %v5351, %v4714
        %v5382 = vsel %vm3354, %v5352, %v4716
        %v5383 = vsel %vm3354, %v5353, %v4718
        %v5384 = vsel %vm3354, %v5354, %v4720
        %v5385 = vsel %vm3354, %v5355, %v4722
        %v5386 = vsel %vm3354, %v5356, %v4724
        %v5387 = vsel %vm3354, %v5357, %v4726
        %v5388 = vsel %vm3354, %v5358, %v4728
        %v5389 = vsel %vm3386, %v3355, %v4761
        %v5390 = vsel %vm3386, %v3355, %v4763
        %v5391 = vsel %vm3386, %v5359, %v4765
        %v5392 = vsel %vm3386, %v5360, %v4767
        %v5393 = vsel %vm3386, %v5361, %v4769
        %v5394 = vsel %vm3386, %v5362, %v4771
        %v5395 = vsel %vm3386, %v5363, %v4773
        %v5396 = vsel %vm3386, %v5364, %v4775
        %v5397 = vsel %vm3386, %v5365, %v4777
        %v5398 = vsel %vm3386, %v5366, %v4779
        %v5399 = vsel %vm3386, %v5367, %v4781
        %v5400 = vsel %vm3386, %v5368, %v4783
        %v5401 = vsel %vm3386, %v5369, %v4785
        %v5402 = vsel %vm3386, %v5370, %v4787
        %v5403 = vsel %vm3386, %v5371, %v4789
        %v5404 = vsel %vm3386, %v5372, %v4791
        %v5405 = vsel %vm3386, %v5373, %v4793
        %v5406 = vsel %vm3386, %v5374, %v4795
        %v5407 = vsel %vm3386, %v5375, %v4797
        %v5408 = vsel %vm3386, %v5376, %v4799
        %v5409 = vsel %vm3386, %v5377, %v4801
        %v5410 = vsel %vm3386, %v5378, %v4803
        %v5411 = vsel %vm3386, %v5379, %v4805
        %v5412 = vsel %vm3386, %v5380, %v4807
        %v5413 = vsel %vm3386, %v5381, %v4809
        %v5414 = vsel %vm3386, %v5382, %v4811
        %v5415 = vsel %vm3386, %v5383, %v4813
        %v5416 = vsel %vm3386, %v5384, %v4815
        %v5417 = vsel %vm3386, %v5385, %v4817
        %v5418 = vsel %vm3386, %v5386, %v4819
        %v5419 = vsel %vm3386, %v5387, %v4821
        %v5420 = vsel %vm3386, %v5388, %v4823
        %v5421 = vsel %vm3419, %v5389, %v4863
        %v5422 = vsel %vm3419, %v5390, %v4865
        %v5423 = vsel %vm3419, %v5391, %v4867
        %v5424 = vsel %vm3419, %v5392, %v4869
        %v5425 = vsel %vm3419, %v5393, %v4871
        %v5426 = vsel %vm3419, %v5394, %v4873
        %v5427 = vsel %vm3419, %v5395, %v4875
        %v5428 = vsel %vm3419, %v5396, %v4877
        %v5429 = vsel %vm3419, %v5397, %v4879
        %v5430 = vsel %vm3419, %v5398, %v4881
        %v5431 = vsel %vm3419, %v5399, %v4883
        %v5432 = vsel %vm3419, %v5400, %v4885
        %v5433 = vsel %vm3419, %v5401, %v4887
        %v5434 = vsel %vm3419, %v5402, %v4889
        %v5435 = vsel %vm3419, %v5403, %v4891
        %v5436 = vsel %vm3419, %v5404, %v4893
        %v5437 = vsel %vm3419, %v5405, %v4895
        %v5438 = vsel %vm3419, %v5406, %v4897
        %v5439 = vsel %vm3419, %v5407, %v4899
        %v5440 = vsel %vm3419, %v5408, %v4901
        %v5441 = vsel %vm3419, %v5409, %v4903
        %v5442 = vsel %vm3419, %v5410, %v4905
        %v5443 = vsel %vm3419, %v5411, %v4907
        %v5444 = vsel %vm3419, %v5412, %v4909
        %v5445 = vsel %vm3419, %v5413, %v4911
        %v5446 = vsel %vm3419, %v5414, %v4913
        %v5447 = vsel %vm3419, %v5415, %v4915
        %v5448 = vsel %vm3419, %v5416, %v4917
        %v5449 = vsel %vm3419, %v5417, %v4919
        %v5450 = vsel %vm3419, %v5418, %v4921
        %v5451 = vsel %vm3419, %v5419, %v4923
        %v5452 = vsel %vm3419, %v5420, %v4925
        %v5453 = vsel %vm3452, %v5421, %v4964
        %v5454 = vsel %vm3452, %v5422, %v4966
        %v5455 = vsel %vm3452, %v5423, %v4968
        %v5456 = vsel %vm3452, %v5424, %v4970
        %v5457 = vsel %vm3452, %v5425, %v4972
        %v5458 = vsel %vm3452, %v5426, %v4974
        %v5459 = vsel %vm3452, %v5427, %v4976
        %v5460 = vsel %vm3452, %v5428, %v4978
        %v5461 = vsel %vm3452, %v5429, %v4980
        %v5462 = vsel %vm3452, %v5430, %v4982
        %v5463 = vsel %vm3452, %v5431, %v4984
        %v5464 = vsel %vm3452, %v5432, %v4986
        %v5465 = vsel %vm3452, %v5433, %v4988
        %v5466 = vsel %vm3452, %v5434, %v4990
        %v5467 = vsel %vm3452, %v5435, %v4992
        %v5468 = vsel %vm3452, %v5436, %v4994
        %v5469 = vsel %vm3452, %v5437, %v4996
        %v5470 = vsel %vm3452, %v5438, %v4998
        %v5471 = vsel %vm3452, %v5439, %v5000
        %v5472 = vsel %vm3452, %v5440, %v5002
        %v5473 = vsel %vm3452, %v5441, %v5004
        %v5474 = vsel %vm3452, %v5442, %v5006
        %v5475 = vsel %vm3452, %v5443, %v5008
        %v5476 = vsel %vm3452, %v5444, %v5010
        %v5477 = vsel %vm3452, %v5445, %v5012
        %v5478 = vsel %vm3452, %v5446, %v5014
        %v5479 = vsel %vm3452, %v5447, %v5016
        %v5480 = vsel %vm3452, %v5448, %v5018
        %v5481 = vsel %vm3452, %v5449, %v5020
        %v5482 = vsel %vm3452, %v5450, %v5022
        %v5483 = vsel %vm3452, %v5451, %v5024
        %v5484 = vsel %vm3452, %v5452, %v5026
        %v5485 = vsel %vm3485, %v4964, %v5060
        %v5486 = vsel %vm3485, %v4966, %v5062
        %v5487 = vsel %vm3485, %v4968, %v5064
        %v5488 = vsel %vm3485, %v4970, %v5066
        %v5489 = vsel %vm3485, %v4972, %v5068
        %v5490 = vsel %vm3485, %v4974, %v5070
        %v5491 = vsel %vm3485, %v4976, %v5072
        %v5492 = vsel %vm3485, %v4978, %v5074
        %v5493 = vsel %vm3485, %v4980, %v5076
        %v5494 = vsel %vm3485, %v4982, %v5078
        %v5495 = vsel %vm3485, %v4984, %v5080
        %v5496 = vsel %vm3485, %v4986, %v5082
        %v5497 = vsel %vm3485, %v4988, %v5084
        %v5498 = vsel %vm3485, %v4990, %v5086
        %v5499 = vsel %vm3485, %v4992, %v5088
        %v5500 = vsel %vm3485, %v4994, %v5090
        %v5501 = vsel %vm3485, %v4996, %v5092
        %v5502 = vsel %vm3485, %v4998, %v5094
        %v5503 = vsel %vm3485, %v5000, %v5096
        %v5504 = vsel %vm3485, %v5002, %v5098
        %v5505 = vsel %vm3485, %v5004, %v5100
        %v5506 = vsel %vm3485, %v5006, %v5102
        %v5507 = vsel %vm3485, %v5008, %v5104
        %v5508 = vsel %vm3485, %v5010, %v5106
        %v5509 = vsel %vm3485, %v5012, %v5108
        %v5510 = vsel %vm3485, %v5014, %v5110
        %v5511 = vsel %vm3485, %v5016, %v5112
        %v5512 = vsel %vm3485, %v5018, %v5114
        %v5513 = vsel %vm3485, %v5020, %v5116
        %v5514 = vsel %vm3485, %v5022, %v5118
        %v5515 = vsel %vm3485, %v5024, %v3104
        %v5516 = vsel %vm3485, %v5026, %v3104
        %v5517 = vsel %vm3518, %v5485, %v5150
        %v5518 = vsel %vm3518, %v5486, %v5152
        %v5519 = vsel %vm3518, %v5487, %v5154
        %v5520 = vsel %vm3518, %v5488, %v5156
        %v5521 = vsel %vm3518, %v5489, %v5158
        %v5522 = vsel %vm3518, %v5490, %v5160
        %v5523 = vsel %vm3518, %v5491, %v5162
        %v5524 = vsel %vm3518, %v5492, %v5164
        %v5525 = vsel %vm3518, %v5493, %v5166
        %v5526 = vsel %vm3518, %v5494, %v5168
        %v5527 = vsel %vm3518, %v5495, %v5170
        %v5528 = vsel %vm3518, %v5496, %v5172
        %v5529 = vsel %vm3518, %v5497, %v5174
        %v5530 = vsel %vm3518, %v5498, %v5176
        %v5531 = vsel %vm3518, %v5499, %v5178
        %v5532 = vsel %vm3518, %v5500, %v5180
        %v5533 = vsel %vm3518, %v5501, %v5182
        %v5534 = vsel %vm3518, %v5502, %v5184
        %v5535 = vsel %vm3518, %v5503, %v5186
        %v5536 = vsel %vm3518, %v5504, %v5188
        %v5537 = vsel %vm3518, %v5505, %v5190
        %v5538 = vsel %vm3518, %v5506, %v5192
        %v5539 = vsel %vm3518, %v5507, %v5194
        %v5540 = vsel %vm3518, %v5508, %v5196
        %v5541 = vsel %vm3518, %v5509, %v5198
        %v5542 = vsel %vm3518, %v5510, %v5200
        %v5543 = vsel %vm3518, %v5511, %v5202
        %v5544 = vsel %vm3518, %v5512, %v5204
        %v5545 = vsel %vm3518, %v5513, %v5206
        %v5546 = vsel %vm3518, %v5514, %v5208
        %v5547 = vsel %vm3518, %v5515, %v3197
        %v5548 = vsel %vm3518, %v5516, %v3197
        %v5549 = vsel %vm3551, %v5517, %v5240
        %v5550 = vsel %vm3551, %v5518, %v5242
        %v5551 = vsel %vm3551, %v5519, %v5244
        %v5552 = vsel %vm3551, %v5520, %v5246
        %v5553 = vsel %vm3551, %v5521, %v5248
        %v5554 = vsel %vm3551, %v5522, %v5250
        %v5555 = vsel %vm3551, %v5523, %v5252
        %v5556 = vsel %vm3551, %v5524, %v5254
        %v5557 = vsel %vm3551, %v5525, %v5256
        %v5558 = vsel %vm3551, %v5526, %v5258
        %v5559 = vsel %vm3551, %v5527, %v5260
        %v5560 = vsel %vm3551, %v5528, %v5262
        %v5561 = vsel %vm3551, %v5529, %v5264
        %v5562 = vsel %vm3551, %v5530, %v5266
        %v5563 = vsel %vm3551, %v5531, %v5268
        %v5564 = vsel %vm3551, %v5532, %v5270
        %v5565 = vsel %vm3551, %v5533, %v5272
        %v5566 = vsel %vm3551, %v5534, %v5274
        %v5567 = vsel %vm3551, %v5535, %v5276
        %v5568 = vsel %vm3551, %v5536, %v5278
        %v5569 = vsel %vm3551, %v5537, %v5280
        %v5570 = vsel %vm3551, %v5538, %v5282
        %v5571 = vsel %vm3551, %v5539, %v5284
        %v5572 = vsel %vm3551, %v5540, %v5286
        %v5573 = vsel %vm3551, %v5541, %v5288
        %v5574 = vsel %vm3551, %v5542, %v5290
        %v5575 = vsel %vm3551, %v5543, %v5292
        %v5576 = vsel %vm3551, %v5544, %v5294
        %v5577 = vsel %vm3551, %v5545, %v5296
        %v5578 = vsel %vm3551, %v5546, %v5298
        %v5579 = vsel %vm3551, %v5547, %v3290
        %v5580 = vsel %vm3551, %v5548, %v3290
        %v5581 = vld [vmem:[#allocation2] sm:$0xff]
        %v5582 = vld [vmem:[#allocation2 + $0x8] sm:$0xff]
        %v5583 = vld [vmem:[#allocation2 + $0x10] sm:$0xff]
        %v5584 = vld [vmem:[#allocation2 + $0x18] sm:$0xff]
        %v5585 = vld [vmem:[#allocation2 + $0x20] sm:$0xff]
        %v5586 = vld [vmem:[#allocation2 + $0x28] sm:$0xff]
        %v5587 = vld [vmem:[#allocation2 + $0x30] sm:$0xff]
        %v5588 = vld [vmem:[#allocation2 + $0x38] sm:$0xff]
        %v5589 = vld [vmem:[#allocation2 + $0x40] sm:$0xff]
        %v5590 = vld [vmem:[#allocation2 + $0x48] sm:$0xff]
        %v5591 = vld [vmem:[#allocation2 + $0x50] sm:$0xff]
        %v5592 = vld [vmem:[#allocation2 + $0x58] sm:$0xff]
        %v5593 = vld [vmem:[#allocation2 + $0x60] sm:$0xff]
        %v5594 = vld [vmem:[#allocation2 + $0x68] sm:$0xff]
        %v5595 = vld [vmem:[#allocation2 + $0x70] sm:$0xff]
        %v5596 = vld [vmem:[#allocation2 + $0x78] sm:$0xff]
        %v5597 = vld [vmem:[#allocation2 + $0x80] sm:$0xff]
        %v5598 = vld [vmem:[#allocation2 + $0x88] sm:$0xff]
        %v5599 = vld [vmem:[#allocation2 + $0x90] sm:$0xff]
        %v5600 = vld [vmem:[#allocation2 + $0x98] sm:$0xff]
        %v5601 = vld [vmem:[#allocation2 + $0xa0] sm:$0xff]
        %v5602 = vld [vmem:[#allocation2 + $0xa8] sm:$0xff]
        %v5603 = vld [vmem:[#allocation2 + $0xb0] sm:$0xff]
        %v5604 = vld [vmem:[#allocation2 + $0xb8] sm:$0xff]
        %v5605 = vld [vmem:[#allocation2 + $0xc0] sm:$0xff]
        %v5606 = vld [vmem:[#allocation2 + $0xc8] sm:$0xff]
        %v5607 = vld [vmem:[#allocation2 + $0xd0] sm:$0xff]
        %v5608 = vld [vmem:[%s12] sm:$0x1]
        %v5610 = vlaneseq
        %v5611 = vshrl.u32 %v5610, 7
        %v5612 = vsub.s32 0, %v5611
        %v5613 = vrot.slane %v5608, %v5612
        %v5616 = vsel %vm3618, %v5549, 0
        %v5619 = vsel %vm3618, %v5550, 0
        %v5622 = vsel %vm3618, %v5551, 0
        %v5625 = vsel %vm3618, %v5552, 0
        %v5628 = vsel %vm3618, %v5553, 0
        %v5631 = vsel %vm3618, %v5554, 0
        %v5634 = vsel %vm3618, %v5555, 0
        %v5637 = vsel %vm3618, %v5556, 0
        %v5640 = vsel %vm3618, %v5557, 0
        %v5643 = vsel %vm3618, %v5558, 0
        %v5646 = vsel %vm3618, %v5559, 0
        %v5649 = vsel %vm3618, %v5560, 0
        %v5652 = vsel %vm3618, %v5561, 0
        %v5655 = vsel %vm3618, %v5562, 0
        %v5658 = vsel %vm3618, %v5563, 0
        %v5661 = vsel %vm3618, %v5564, 0
        %v5664 = vsel %vm3618, %v5565, 0
        %v5667 = vsel %vm3618, %v5566, 0
        %v5670 = vsel %vm3618, %v5567, 0
        %v5673 = vsel %vm3618, %v5568, 0
        %v5676 = vsel %vm3618, %v5569, 0
        %v5679 = vsel %vm3618, %v5570, 0
        %v5682 = vsel %vm3618, %v5571, 0
        %v5685 = vsel %vm3618, %v5572, 0
        %v5688 = vsel %vm3618, %v5573, 0
        %v5691 = vsel %vm3618, %v5574, 0
        %v5694 = vsel %vm3618, %v5575, 0
        %v5697 = vsel %vm3618, %v5576, 0
        %v5700 = vsel %vm3618, %v5577, 0
        %v5703 = vsel %vm3618, %v5578, 0
        %v5706 = vsel %vm3618, %v5579, 0
        %v5709 = vsel %vm3618, %v5580, 0
        %5711 = vmatprep.subr.mxu0 0.0
        %5712 = vmatpush1.msra.mxu0 %v5581
        %5713 = vmatprep.subr.mxu0 0.0
        %5714 = vmatpush1.msra.mxu0 %v5582
        %5715 = vmatprep.subr.mxu0 0.0
        %5716 = vmatpush1.msra.mxu0 %v5583
        %5717 = vmatprep.subr.mxu0 0.0
        %5718 = vmatpush1.msra.mxu0 %v5584
        %5719 = vmatprep.subr.mxu0 0.0
        %5720 = vmatpush1.msra.mxu0 %v5585
        %5721 = vmatprep.subr.mxu0 0.0
        %5722 = vmatpush1.msra.mxu0 %v5586
        %5723 = vmatprep.subr.mxu0 0.0
        %5724 = vmatpush1.msra.mxu0 %v5587
        %5725 = vmatprep.subr.mxu0 0.0
        %5726 = vmatpush1.msra.mxu0 %v5588
        %5727 = vmatprep.subr.mxu0 0.0
        %5728 = vmatpush1.msra.mxu0 %v5589
        %5729 = vmatprep.subr.mxu0 0.0
        %5730 = vmatpush1.msra.mxu0 %v5590
        %5731 = vmatprep.subr.mxu0 0.0
        %5732 = vmatpush1.msra.mxu0 %v5591
        %5733 = vmatprep.subr.mxu0 0.0
        %5734 = vmatpush1.msra.mxu0 %v5592
        %5735 = vmatprep.subr.mxu0 0.0
        %5736 = vmatpush1.msra.mxu0 %v5593
        %5737 = vmatprep.subr.mxu0 0.0
        %5738 = vmatpush1.msra.mxu0 %v5594
        %5739 = vmatprep.subr.mxu0 0.0
        %5740 = vmatpush1.msra.mxu0 %v5595
        %5741 = vmatprep.subr.mxu0 0.0
        %5742 = vmatpush1.msra.mxu0 %v5596
        %5743 = vmatprep.subr.mxu0 0.0
        %5744 = vmatpush1.msra.mxu0 %v5597
        %5745 = vmatprep.subr.mxu0 0.0
        %5746 = vmatpush1.msra.mxu0 %v5598
        %5747 = vmatprep.subr.mxu0 0.0
        %5748 = vmatpush1.msra.mxu0 %v5599
        %5749 = vmatprep.subr.mxu0 0.0
        %5750 = vmatpush1.msra.mxu0 %v5600
        %5751 = vmatprep.subr.mxu0 0.0
        %5752 = vmatpush1.msra.mxu0 %v5601
        %5753 = vmatprep.subr.mxu0 0.0
        %5754 = vmatpush1.msra.mxu0 %v5602
        %5755 = vmatprep.subr.mxu0 0.0
        %5756 = vmatpush1.msra.mxu0 %v5603
        %5757 = vmatprep.subr.mxu0 0.0
        %5758 = vmatpush1.msra.mxu0 %v5604
        %5759 = vmatprep.subr.mxu0 0.0
        %5760 = vmatpush1.msra.mxu0 %v5605
        %5761 = vmatprep.subr.mxu0 0.0
        %5762 = vmatpush1.msra.mxu0 %v5606
        %5763 = vmatprep.subr.mxu0 0.0
        %5764 = vmatpush1.msra.mxu0 %v5607
        %5765 = vmatprep.subr.mxu0 0.0
        %5766 = vmatpush1.msra.mxu0 0.0
        %5767 = vmatprep.subr.mxu0 0.0
        %5768 = vmatpush1.msra.mxu0 0.0
        %5769 = vmatprep.subr.mxu0 0.0
        %5770 = vmatpush1.msra.mxu0 0.0
        %5771 = vmatprep.subr.mxu0 0.0
        %5772 = vmatpush1.msra.mxu0 0.0
        %5773 = vmatprep.subr.mxu0 0.0
        %5774 = vmatpush1.msra.mxu0 0.0
        %5775 = vmatprep.mubr.f32.mxu0 %v5616
        %5776 = vmatmul.mubr.f32.gmra.mrb[0].mxu0 %v5453
        %v5777 = vpop.f32.mrb[0].mxu0
        %v5778 = vadd.f32 %v5613, %v5777
        %v5779 = vpop.f32.mrb[0].mxu0
        %5780 = vmatprep.mubr.f32.mxu0 %v5619
        %5781 = vmatmul.mubr.f32.gmra.mrb[0].mxu0 %v5454
        %v5782 = vpop.f32.mrb[0].mxu0
        %v5783 = vadd.f32 %v5613, %v5782
        %v5784 = vpop.f32.mrb[0].mxu0
        %5785 = vmatprep.mubr.f32.mxu0 %v5622
        %5786 = vmatmul.mubr.f32.gmra.mrb[0].mxu0 %v5455
        %v5787 = vpop.f32.mrb[0].mxu0
        %v5788 = vadd.f32 %v5613, %v5787
        %v5789 = vpop.f32.mrb[0].mxu0
        %5790 = vmatprep.mubr.f32.mxu0 %v5625
        %5791 = vmatmul.mubr.f32.gmra.mrb[0].mxu0 %v5456
        %v5792 = vpop.f32.mrb[0].mxu0
        %v5793 = vadd.f32 %v5613, %v5792
        %v5794 = vpop.f32.mrb[0].mxu0
        %5795 = vmatprep.mubr.f32.mxu0 %v5628
        %5796 = vmatmul.mubr.f32.gmra.mrb[0].mxu0 %v5457
        %v5797 = vpop.f32.mrb[0].mxu0
        %v5798 = vadd.f32 %v5613, %v5797
        %v5799 = vpop.f32.mrb[0].mxu0
        %5800 = vmatprep.mubr.f32.mxu0 %v5631
        %5801 = vmatmul.mubr.f32.gmra.mrb[0].mxu0 %v5458
        %v5802 = vpop.f32.mrb[0].mxu0
        %v5803 = vadd.f32 %v5613, %v5802
        %v5804 = vpop.f32.mrb[0].mxu0
        %5805 = vmatprep.mubr.f32.mxu0 %v5634
        %5806 = vmatmul.mubr.f32.gmra.mrb[0].mxu0 %v5459
        %v5807 = vpop.f32.mrb[0].mxu0
        %v5808 = vadd.f32 %v5613, %v5807
        %v5809 = vpop.f32.mrb[0].mxu0
        %5810 = vmatprep.mubr.f32.mxu0 %v5637
        %5811 = vmatmul.mubr.f32.gmra.mrb[0].mxu0 %v5460
        %v5812 = vpop.f32.mrb[0].mxu0
        %v5813 = vadd.f32 %v5613, %v5812
        %v5814 = vpop.f32.mrb[0].mxu0
        %5815 = vmatprep.mubr.f32.mxu0 %v5640
        %5816 = vmatmul.mubr.f32.gmra.mrb[0].mxu0 %v5461
        %v5817 = vpop.f32.mrb[0].mxu0
        %v5818 = vadd.f32 %v5613, %v5817
        %v5819 = vpop.f32.mrb[0].mxu0
        %5820 = vmatprep.mubr.f32.mxu0 %v5643
        %5821 = vmatmul.mubr.f32.gmra.mrb[0].mxu0 %v5462
        %v5822 = vpop.f32.mrb[0].mxu0
        %v5823 = vadd.f32 %v5613, %v5822
        %v5824 = vpop.f32.mrb[0].mxu0
        %5825 = vmatprep.mubr.f32.mxu0 %v5646
        %5826 = vmatmul.mubr.f32.gmra.mrb[0].mxu0 %v5463
        %v5827 = vpop.f32.mrb[0].mxu0
        %v5828 = vadd.f32 %v5613, %v5827
        %v5829 = vpop.f32.mrb[0].mxu0
        %5830 = vmatprep.mubr.f32.mxu0 %v5649
        %5831 = vmatmul.mubr.f32.gmra.mrb[0].mxu0 %v5464
        %v5832 = vpop.f32.mrb[0].mxu0
        %v5833 = vadd.f32 %v5613, %v5832
        %v5834 = vpop.f32.mrb[0].mxu0
        %5835 = vmatprep.mubr.f32.mxu0 %v5652
        %5836 = vmatmul.mubr.f32.gmra.mrb[0].mxu0 %v5465
        %v5837 = vpop.f32.mrb[0].mxu0
        %v5838 = vadd.f32 %v5613, %v5837
        %v5839 = vpop.f32.mrb[0].mxu0
        %5840 = vmatprep.mubr.f32.mxu0 %v5655
        %5841 = vmatmul.mubr.f32.gmra.mrb[0].mxu0 %v5466
        %v5842 = vpop.f32.mrb[0].mxu0
        %v5843 = vadd.f32 %v5613, %v5842
        %v5844 = vpop.f32.mrb[0].mxu0
        %5845 = vmatprep.mubr.f32.mxu0 %v5658
        %5846 = vmatmul.mubr.f32.gmra.mrb[0].mxu0 %v5467
        %v5847 = vpop.f32.mrb[0].mxu0
        %v5848 = vadd.f32 %v5613, %v5847
        %v5849 = vpop.f32.mrb[0].mxu0
        %5850 = vmatprep.mubr.f32.mxu0 %v5661
        %5851 = vmatmul.mubr.f32.gmra.mrb[0].mxu0 %v5468
        %v5852 = vpop.f32.mrb[0].mxu0
        %v5853 = vadd.f32 %v5613, %v5852
        %v5854 = vpop.f32.mrb[0].mxu0
        %5855 = vmatprep.mubr.f32.mxu0 %v5664
        %5856 = vmatmul.mubr.f32.gmra.mrb[0].mxu0 %v5469
        %v5857 = vpop.f32.mrb[0].mxu0
        %v5858 = vadd.f32 %v5613, %v5857
        %v5859 = vpop.f32.mrb[0].mxu0
        %5860 = vmatprep.mubr.f32.mxu0 %v5667
        %5861 = vmatmul.mubr.f32.gmra.mrb[0].mxu0 %v5470
        %v5862 = vpop.f32.mrb[0].mxu0
        %v5863 = vadd.f32 %v5613, %v5862
        %v5864 = vpop.f32.mrb[0].mxu0
        %5865 = vmatprep.mubr.f32.mxu0 %v5670
        %5866 = vmatmul.mubr.f32.gmra.mrb[0].mxu0 %v5471
        %v5867 = vpop.f32.mrb[0].mxu0
        %v5868 = vadd.f32 %v5613, %v5867
        %v5869 = vpop.f32.mrb[0].mxu0
        %5870 = vmatprep.mubr.f32.mxu0 %v5673
        %5871 = vmatmul.mubr.f32.gmra.mrb[0].mxu0 %v5472
        %v5872 = vpop.f32.mrb[0].mxu0
        %v5873 = vadd.f32 %v5613, %v5872
        %v5874 = vpop.f32.mrb[0].mxu0
        %5875 = vmatprep.mubr.f32.mxu0 %v5676
        %5876 = vmatmul.mubr.f32.gmra.mrb[0].mxu0 %v5473
        %v5877 = vpop.f32.mrb[0].mxu0
        %v5878 = vadd.f32 %v5613, %v5877
        %v5879 = vpop.f32.mrb[0].mxu0
        %5880 = vmatprep.mubr.f32.mxu0 %v5679
        %5881 = vmatmul.mubr.f32.gmra.mrb[0].mxu0 %v5474
        %v5882 = vpop.f32.mrb[0].mxu0
        %v5883 = vadd.f32 %v5613, %v5882
        %v5884 = vpop.f32.mrb[0].mxu0
        %5885 = vmatprep.mubr.f32.mxu0 %v5682
        %5886 = vmatmul.mubr.f32.gmra.mrb[0].mxu0 %v5475
        %v5887 = vpop.f32.mrb[0].mxu0
        %v5888 = vadd.f32 %v5613, %v5887
        %v5889 = vpop.f32.mrb[0].mxu0
        %5890 = vmatprep.mubr.f32.mxu0 %v5685
        %5891 = vmatmul.mubr.f32.gmra.mrb[0].mxu0 %v5476
        %v5892 = vpop.f32.mrb[0].mxu0
        %v5893 = vadd.f32 %v5613, %v5892
        %v5894 = vpop.f32.mrb[0].mxu0
        %5895 = vmatprep.mubr.f32.mxu0 %v5688
        %5896 = vmatmul.mubr.f32.gmra.mrb[0].mxu0 %v5477
        %v5897 = vpop.f32.mrb[0].mxu0
        %v5898 = vadd.f32 %v5613, %v5897
        %v5899 = vpop.f32.mrb[0].mxu0
        %5900 = vmatprep.mubr.f32.mxu0 %v5691
        %5901 = vmatmul.mubr.f32.gmra.mrb[0].mxu0 %v5478
        %v5902 = vpop.f32.mrb[0].mxu0
        %v5903 = vadd.f32 %v5613, %v5902
        %v5904 = vpop.f32.mrb[0].mxu0
        %5905 = vmatprep.mubr.f32.mxu0 %v5694
        %5906 = vmatmul.mubr.f32.gmra.mrb[0].mxu0 %v5479
        %v5907 = vpop.f32.mrb[0].mxu0
        %v5908 = vadd.f32 %v5613, %v5907
        %v5909 = vpop.f32.mrb[0].mxu0
        %5910 = vmatprep.mubr.f32.mxu0 %v5697
        %5911 = vmatmul.mubr.f32.gmra.mrb[0].mxu0 %v5480
        %v5912 = vpop.f32.mrb[0].mxu0
        %v5913 = vadd.f32 %v5613, %v5912
        %v5914 = vpop.f32.mrb[0].mxu0
        %5915 = vmatprep.mubr.f32.mxu0 %v5700
        %5916 = vmatmul.mubr.f32.gmra.mrb[0].mxu0 %v5481
        %v5917 = vpop.f32.mrb[0].mxu0
        %v5918 = vadd.f32 %v5613, %v5917
        %v5919 = vpop.f32.mrb[0].mxu0
        %5920 = vmatprep.mubr.f32.mxu0 %v5703
        %5921 = vmatmul.mubr.f32.gmra.mrb[0].mxu0 %v5482
        %v5922 = vpop.f32.mrb[0].mxu0
        %v5923 = vadd.f32 %v5613, %v5922
        %v5924 = vpop.f32.mrb[0].mxu0
        %5925 = vmatprep.mubr.f32.mxu0 %v5706
        %5926 = vmatmul.mubr.f32.gmra.mrb[0].mxu0 %v5483
        %v5927 = vpop.f32.mrb[0].mxu0
        %v5928 = vadd.f32 %v5613, %v5927
        %v5929 = vpop.f32.mrb[0].mxu0
        %5930 = vmatprep.mubr.f32.mxu0 %v5709
        %5931 = vmatmul.mubr.f32.gmra.mrb[0].mxu0 %v5484
        %v5932 = vpop.f32.mrb[0].mxu0
        %v5933 = vadd.f32 %v5613, %v5932
        %v5934 = vpop.f32.mrb[0].mxu0
        %5935 = vdwg.mxu0
        %v5936 = vmax.f32 %v5778, 0.0
        %v5937 = vmax.f32 %v5783, 0.0
        %v5938 = vmax.f32 %v5788, 0.0
        %v5939 = vmax.f32 %v5793, 0.0
        %v5940 = vmax.f32 %v5798, 0.0
        %v5941 = vmax.f32 %v5803, 0.0
        %v5942 = vmax.f32 %v5808, 0.0
        %v5943 = vmax.f32 %v5813, 0.0
        %v5944 = vmax.f32 %v5818, 0.0
        %v5945 = vmax.f32 %v5823, 0.0
        %v5946 = vmax.f32 %v5828, 0.0
        %v5947 = vmax.f32 %v5833, 0.0
        %v5948 = vmax.f32 %v5838, 0.0
        %v5949 = vmax.f32 %v5843, 0.0
        %v5950 = vmax.f32 %v5848, 0.0
        %v5951 = vmax.f32 %v5853, 0.0
        %v5952 = vmax.f32 %v5858, 0.0
        %v5953 = vmax.f32 %v5863, 0.0
        %v5954 = vmax.f32 %v5868, 0.0
        %v5955 = vmax.f32 %v5873, 0.0
        %v5956 = vmax.f32 %v5878, 0.0
        %v5957 = vmax.f32 %v5883, 0.0
        %v5958 = vmax.f32 %v5888, 0.0
        %v5959 = vmax.f32 %v5893, 0.0
        %v5960 = vmax.f32 %v5898, 0.0
        %v5961 = vmax.f32 %v5903, 0.0
        %v5962 = vmax.f32 %v5908, 0.0
        %v5963 = vmax.f32 %v5913, 0.0
        %v5964 = vmax.f32 %v5918, 0.0
        %v5965 = vmax.f32 %v5923, 0.0
        %v5966 = vmax.f32 %v5928, 0.0
        %v5967 = vmax.f32 %v5933, 0.0
        %v6000 = vrot.slane %v5936, 7
        %v6001 = vrot.slane %v5937, 7
        %v6002 = vsel %vm906, %v6000, %v6001
        %v6003 = vrot.slane %v5938, 7
        %v6004 = vrot.slane %v5939, 7
        %v6005 = vsel %vm906, %v6003, %v6004
        %v6006 = vrot.slane %v5940, 7
        %v6007 = vrot.slane %v5941, 7
        %v6008 = vsel %vm906, %v6006, %v6007
        %v6009 = vrot.slane %v5942, 7
        %v6010 = vrot.slane %v5943, 7
        %v6011 = vsel %vm906, %v6009, %v6010
        %v6012 = vrot.slane %v5944, 7
        %v6013 = vrot.slane %v5945, 7
        %v6014 = vsel %vm906, %v6012, %v6013
        %v6015 = vrot.slane %v5946, 7
        %v6016 = vrot.slane %v5947, 7
        %v6017 = vsel %vm906, %v6015, %v6016
        %v6018 = vrot.slane %v5948, 7
        %v6019 = vrot.slane %v5949, 7
        %v6020 = vsel %vm906, %v6018, %v6019
        %v6021 = vrot.slane %v5950, 7
        %v6022 = vrot.slane %v5951, 7
        %v6023 = vsel %vm906, %v6021, %v6022
        %v6024 = vrot.slane %v5952, 7
        %v6025 = vrot.slane %v5953, 7
        %v6026 = vsel %vm906, %v6024, %v6025
        %v6027 = vrot.slane %v5954, 7
        %v6028 = vrot.slane %v5955, 7
        %v6029 = vsel %vm906, %v6027, %v6028
        %v6030 = vrot.slane %v5956, 7
        %v6031 = vrot.slane %v5957, 7
        %v6032 = vsel %vm906, %v6030, %v6031
        %v6033 = vrot.slane %v5958, 7
        %v6034 = vrot.slane %v5959, 7
        %v6035 = vsel %vm906, %v6033, %v6034
        %v6036 = vrot.slane %v5960, 7
        %v6037 = vrot.slane %v5961, 7
        %v6038 = vsel %vm906, %v6036, %v6037
        %v6039 = vrot.slane %v5962, 7
        %v6040 = vrot.slane %v5963, 7
        %v6041 = vsel %vm906, %v6039, %v6040
        %v6042 = vrot.slane %v5964, 7
        %v6043 = vrot.slane %v5965, 7
        %v6044 = vsel %vm906, %v6042, %v6043
        %v6045 = vrot.slane %v5966, 7
        %v6046 = vrot.slane %v5967, 7
        %v6047 = vsel %vm906, %v6045, %v6046
        %v6095 = vsel %vm906, 0.0, %v6000
        %v6096 = vsel %vm906, 0.0, %v6003
        %v6097 = vsel %vm906, 0.0, %v6006
        %v6098 = vsel %vm906, 0.0, %v6009
        %v6099 = vsel %vm906, 0.0, %v6012
        %v6100 = vsel %vm906, 0.0, %v6015
        %v6101 = vsel %vm906, 0.0, %v6018
        %v6102 = vsel %vm906, 0.0, %v6021
        %v6103 = vsel %vm906, 0.0, %v6024
        %v6104 = vsel %vm906, 0.0, %v6027
        %v6105 = vsel %vm906, 0.0, %v6030
        %v6106 = vsel %vm906, 0.0, %v6033
        %v6107 = vsel %vm906, 0.0, %v6036
        %v6108 = vsel %vm906, 0.0, %v6039
        %v6109 = vsel %vm906, 0.0, %v6042
        %v6110 = vsel %vm906, 0.0, %v6045
        %v6111 = vsel %vm906, %v6001, 0.0
        %v6112 = vsel %vm906, %v6004, 0.0
        %v6113 = vsel %vm906, %v6007, 0.0
        %v6114 = vsel %vm906, %v6010, 0.0
        %v6115 = vsel %vm906, %v6013, 0.0
        %v6116 = vsel %vm906, %v6016, 0.0
        %v6117 = vsel %vm906, %v6019, 0.0
        %v6118 = vsel %vm906, %v6022, 0.0
        %v6119 = vsel %vm906, %v6025, 0.0
        %v6120 = vsel %vm906, %v6028, 0.0
        %v6121 = vsel %vm906, %v6031, 0.0
        %v6122 = vsel %vm906, %v6034, 0.0
        %v6123 = vsel %vm906, %v6037, 0.0
        %v6124 = vsel %vm906, %v6040, 0.0
        %v6125 = vsel %vm906, %v6043, 0.0
        %v6126 = vsel %vm906, %v6046, 0.0
        %v6157 = vrot.slane %v6095, 1
        %v6158 = vrot.slane %v6002, 1
        %v6159 = vsel %vm1066, %v6157, %v6158
        %v6160 = vrot.slane %v6111, 1
        %v6161 = vsel %vm1066, %v6158, %v6160
        %v6162 = vrot.slane %v6096, 1
        %v6163 = vrot.slane %v6005, 1
        %v6164 = vsel %vm1066, %v6162, %v6163
        %v6165 = vrot.slane %v6112, 1
        %v6166 = vsel %vm1066, %v6163, %v6165
        %v6167 = vrot.slane %v6097, 1
        %v6168 = vrot.slane %v6008, 1
        %v6169 = vsel %vm1066, %v6167, %v6168
        %v6170 = vrot.slane %v6113, 1
        %v6171 = vsel %vm1066, %v6168, %v6170
        %v6172 = vrot.slane %v6098, 1
        %v6173 = vrot.slane %v6011, 1
        %v6174 = vsel %vm1066, %v6172, %v6173
        %v6175 = vrot.slane %v6114, 1
        %v6176 = vsel %vm1066, %v6173, %v6175
        %v6177 = vrot.slane %v6099, 1
        %v6178 = vrot.slane %v6014, 1
        %v6179 = vsel %vm1066, %v6177, %v6178
        %v6180 = vrot.slane %v6115, 1
        %v6181 = vsel %vm1066, %v6178, %v6180
        %v6182 = vrot.slane %v6100, 1
        %v6183 = vrot.slane %v6017, 1
        %v6184 = vsel %vm1066, %v6182, %v6183
        %v6185 = vrot.slane %v6116, 1
        %v6186 = vsel %vm1066, %v6183, %v6185
        %v6187 = vrot.slane %v6101, 1
        %v6188 = vrot.slane %v6020, 1
        %v6189 = vsel %vm1066, %v6187, %v6188
        %v6190 = vrot.slane %v6117, 1
        %v6191 = vsel %vm1066, %v6188, %v6190
        %v6192 = vrot.slane %v6102, 1
        %v6193 = vrot.slane %v6023, 1
        %v6194 = vsel %vm1066, %v6192, %v6193
        %v6195 = vrot.slane %v6118, 1
        %v6196 = vsel %vm1066, %v6193, %v6195
        %v6197 = vrot.slane %v6103, 1
        %v6198 = vrot.slane %v6026, 1
        %v6199 = vsel %vm1066, %v6197, %v6198
        %v6200 = vrot.slane %v6119, 1
        %v6201 = vsel %vm1066, %v6198, %v6200
        %v6202 = vrot.slane %v6104, 1
        %v6203 = vrot.slane %v6029, 1
        %v6204 = vsel %vm1066, %v6202, %v6203
        %v6205 = vrot.slane %v6120, 1
        %v6206 = vsel %vm1066, %v6203, %v6205
        %v6207 = vrot.slane %v6105, 1
        %v6208 = vrot.slane %v6032, 1
        %v6209 = vsel %vm1066, %v6207, %v6208
        %v6210 = vrot.slane %v6121, 1
        %v6211 = vsel %vm1066, %v6208, %v6210
        %v6212 = vrot.slane %v6106, 1
        %v6213 = vrot.slane %v6035, 1
        %v6214 = vsel %vm1066, %v6212, %v6213
        %v6215 = vrot.slane %v6122, 1
        %v6216 = vsel %vm1066, %v6213, %v6215
        %v6217 = vrot.slane %v6107, 1
        %v6218 = vrot.slane %v6038, 1
        %v6219 = vsel %vm1066, %v6217, %v6218
        %v6220 = vrot.slane %v6123, 1
        %v6221 = vsel %vm1066, %v6218, %v6220
        %v6222 = vrot.slane %v6108, 1
        %v6223 = vrot.slane %v6041, 1
        %v6224 = vsel %vm1066, %v6222, %v6223
        %v6225 = vrot.slane %v6124, 1
        %v6226 = vsel %vm1066, %v6223, %v6225
        %v6227 = vrot.slane %v6109, 1
        %v6228 = vrot.slane %v6044, 1
        %v6229 = vsel %vm1066, %v6227, %v6228
        %v6230 = vrot.slane %v6125, 1
        %v6231 = vsel %vm1066, %v6228, %v6230
        %6232 = vrot.lane.b32.xlu0 %v1068, 32
        %v6233 = vpop.permute.xlu0 %6232
        %6234 = vrot.lane.b32.xlu0 %v6159, 32
        %v6235 = vpop.permute.xlu0 %6234
        %6236 = vrot.lane.b32.xlu0 %v6161, 32
        %v6237 = vpop.permute.xlu0 %6236
        %6238 = vrot.lane.b32.xlu0 %v6164, 32
        %v6239 = vpop.permute.xlu0 %6238
        %6240 = vrot.lane.b32.xlu0 %v6166, 32
        %v6241 = vpop.permute.xlu0 %6240
        %6242 = vrot.lane.b32.xlu0 %v6169, 32
        %v6243 = vpop.permute.xlu0 %6242
        %6244 = vrot.lane.b32.xlu0 %v6171, 32
        %v6245 = vpop.permute.xlu0 %6244
        %6246 = vrot.lane.b32.xlu0 %v6174, 32
        %v6247 = vpop.permute.xlu0 %6246
        %6248 = vrot.lane.b32.xlu0 %v6176, 32
        %v6249 = vpop.permute.xlu0 %6248
        %6250 = vrot.lane.b32.xlu0 %v6179, 32
        %v6251 = vpop.permute.xlu0 %6250
        %6252 = vrot.lane.b32.xlu0 %v6181, 32
        %v6253 = vpop.permute.xlu0 %6252
        %6254 = vrot.lane.b32.xlu0 %v6184, 32
        %v6255 = vpop.permute.xlu0 %6254
        %6256 = vrot.lane.b32.xlu0 %v6186, 32
        %v6257 = vpop.permute.xlu0 %6256
        %6258 = vrot.lane.b32.xlu0 %v6189, 32
        %v6259 = vpop.permute.xlu0 %6258
        %6260 = vrot.lane.b32.xlu0 %v6191, 32
        %v6261 = vpop.permute.xlu0 %6260
        %6262 = vrot.lane.b32.xlu0 %v6194, 32
        %v6263 = vpop.permute.xlu0 %6262
        %6264 = vrot.lane.b32.xlu0 %v6196, 32
        %v6265 = vpop.permute.xlu0 %6264
        %6266 = vrot.lane.b32.xlu0 %v6199, 32
        %v6267 = vpop.permute.xlu0 %6266
        %6268 = vrot.lane.b32.xlu0 %v6201, 32
        %v6269 = vpop.permute.xlu0 %6268
        %6270 = vrot.lane.b32.xlu0 %v6204, 32
        %v6271 = vpop.permute.xlu0 %6270
        %6272 = vrot.lane.b32.xlu0 %v6206, 32
        %v6273 = vpop.permute.xlu0 %6272
        %6274 = vrot.lane.b32.xlu0 %v6209, 32
        %v6275 = vpop.permute.xlu0 %6274
        %6276 = vrot.lane.b32.xlu0 %v6211, 32
        %v6277 = vpop.permute.xlu0 %6276
        %6278 = vrot.lane.b32.xlu0 %v6214, 32
        %v6279 = vpop.permute.xlu0 %6278
        %6280 = vrot.lane.b32.xlu0 %v6216, 32
        %v6281 = vpop.permute.xlu0 %6280
        %6282 = vrot.lane.b32.xlu0 %v6219, 32
        %v6283 = vpop.permute.xlu0 %6282
        %6284 = vrot.lane.b32.xlu0 %v6221, 32
        %v6285 = vpop.permute.xlu0 %6284
        %6286 = vrot.lane.b32.xlu0 %v6224, 32
        %v6287 = vpop.permute.xlu0 %6286
        %6288 = vrot.lane.b32.xlu0 %v6226, 32
        %v6289 = vpop.permute.xlu0 %6288
        %6290 = vrot.lane.b32.xlu0 %v6229, 32
        %v6291 = vpop.permute.xlu0 %6290
        %6292 = vrot.lane.b32.xlu0 %v6231, 32
        %v6293 = vpop.permute.xlu0 %6292
        %v6325 = vrot.slane %v6095, 2
        %v6326 = vrot.slane %v6002, 2
        %v6327 = vsel %vm1206, %v6325, %v6326
        %v6328 = vrot.slane %v6111, 2
        %v6329 = vsel %vm1206, %v6326, %v6328
        %v6330 = vrot.slane %v6096, 2
        %v6331 = vrot.slane %v6005, 2
        %v6332 = vsel %vm1206, %v6330, %v6331
        %v6333 = vrot.slane %v6112, 2
        %v6334 = vsel %vm1206, %v6331, %v6333
        %v6335 = vrot.slane %v6097, 2
        %v6336 = vrot.slane %v6008, 2
        %v6337 = vsel %vm1206, %v6335, %v6336
        %v6338 = vrot.slane %v6113, 2
        %v6339 = vsel %vm1206, %v6336, %v6338
        %v6340 = vrot.slane %v6098, 2
        %v6341 = vrot.slane %v6011, 2
        %v6342 = vsel %vm1206, %v6340, %v6341
        %v6343 = vrot.slane %v6114, 2
        %v6344 = vsel %vm1206, %v6341, %v6343
        %v6345 = vrot.slane %v6099, 2
        %v6346 = vrot.slane %v6014, 2
        %v6347 = vsel %vm1206, %v6345, %v6346
        %v6348 = vrot.slane %v6115, 2
        %v6349 = vsel %vm1206, %v6346, %v6348
        %v6350 = vrot.slane %v6100, 2
        %v6351 = vrot.slane %v6017, 2
        %v6352 = vsel %vm1206, %v6350, %v6351
        %v6353 = vrot.slane %v6116, 2
        %v6354 = vsel %vm1206, %v6351, %v6353
        %v6355 = vrot.slane %v6101, 2
        %v6356 = vrot.slane %v6020, 2
        %v6357 = vsel %vm1206, %v6355, %v6356
        %v6358 = vrot.slane %v6117, 2
        %v6359 = vsel %vm1206, %v6356, %v6358
        %v6360 = vrot.slane %v6102, 2
        %v6361 = vrot.slane %v6023, 2
        %v6362 = vsel %vm1206, %v6360, %v6361
        %v6363 = vrot.slane %v6118, 2
        %v6364 = vsel %vm1206, %v6361, %v6363
        %v6365 = vrot.slane %v6103, 2
        %v6366 = vrot.slane %v6026, 2
        %v6367 = vsel %vm1206, %v6365, %v6366
        %v6368 = vrot.slane %v6119, 2
        %v6369 = vsel %vm1206, %v6366, %v6368
        %v6370 = vrot.slane %v6104, 2
        %v6371 = vrot.slane %v6029, 2
        %v6372 = vsel %vm1206, %v6370, %v6371
        %v6373 = vrot.slane %v6120, 2
        %v6374 = vsel %vm1206, %v6371, %v6373
        %v6375 = vrot.slane %v6105, 2
        %v6376 = vrot.slane %v6032, 2
        %v6377 = vsel %vm1206, %v6375, %v6376
        %v6378 = vrot.slane %v6121, 2
        %v6379 = vsel %vm1206, %v6376, %v6378
        %v6380 = vrot.slane %v6106, 2
        %v6381 = vrot.slane %v6035, 2
        %v6382 = vsel %vm1206, %v6380, %v6381
        %v6383 = vrot.slane %v6122, 2
        %v6384 = vsel %vm1206, %v6381, %v6383
        %v6385 = vrot.slane %v6107, 2
        %v6386 = vrot.slane %v6038, 2
        %v6387 = vsel %vm1206, %v6385, %v6386
        %v6388 = vrot.slane %v6123, 2
        %v6389 = vsel %vm1206, %v6386, %v6388
        %v6390 = vrot.slane %v6108, 2
        %v6391 = vrot.slane %v6041, 2
        %v6392 = vsel %vm1206, %v6390, %v6391
        %v6393 = vrot.slane %v6124, 2
        %v6394 = vsel %vm1206, %v6391, %v6393
        %v6395 = vrot.slane %v6109, 2
        %v6396 = vrot.slane %v6044, 2
        %v6397 = vsel %vm1206, %v6395, %v6396
        %v6398 = vrot.slane %v6125, 2
        %v6399 = vsel %vm1206, %v6396, %v6398
        %6400 = vrot.lane.b32.xlu0 %v6327, 64
        %v6401 = vpop.permute.xlu0 %6400
        %6402 = vrot.lane.b32.xlu0 %v6329, 64
        %v6403 = vpop.permute.xlu0 %6402
        %6404 = vrot.lane.b32.xlu0 %v6332, 64
        %v6405 = vpop.permute.xlu0 %6404
        %6406 = vrot.lane.b32.xlu0 %v6334, 64
        %v6407 = vpop.permute.xlu0 %6406
        %6408 = vrot.lane.b32.xlu0 %v6337, 64
        %v6409 = vpop.permute.xlu0 %6408
        %6410 = vrot.lane.b32.xlu0 %v6339, 64
        %v6411 = vpop.permute.xlu0 %6410
        %6412 = vrot.lane.b32.xlu0 %v6342, 64
        %v6413 = vpop.permute.xlu0 %6412
        %6414 = vrot.lane.b32.xlu0 %v6344, 64
        %v6415 = vpop.permute.xlu0 %6414
        %6416 = vrot.lane.b32.xlu0 %v6347, 64
        %v6417 = vpop.permute.xlu0 %6416
        %6418 = vrot.lane.b32.xlu0 %v6349, 64
        %v6419 = vpop.permute.xlu0 %6418
        %6420 = vrot.lane.b32.xlu0 %v6352, 64
        %v6421 = vpop.permute.xlu0 %6420
        %6422 = vrot.lane.b32.xlu0 %v6354, 64
        %v6423 = vpop.permute.xlu0 %6422
        %6424 = vrot.lane.b32.xlu0 %v6357, 64
        %v6425 = vpop.permute.xlu0 %6424
        %6426 = vrot.lane.b32.xlu0 %v6359, 64
        %v6427 = vpop.permute.xlu0 %6426
        %6428 = vrot.lane.b32.xlu0 %v6362, 64
        %v6429 = vpop.permute.xlu0 %6428
        %6430 = vrot.lane.b32.xlu0 %v6364, 64
        %v6431 = vpop.permute.xlu0 %6430
        %6432 = vrot.lane.b32.xlu0 %v6367, 64
        %v6433 = vpop.permute.xlu0 %6432
        %6434 = vrot.lane.b32.xlu0 %v6369, 64
        %v6435 = vpop.permute.xlu0 %6434
        %6436 = vrot.lane.b32.xlu0 %v6372, 64
        %v6437 = vpop.permute.xlu0 %6436
        %6438 = vrot.lane.b32.xlu0 %v6374, 64
        %v6439 = vpop.permute.xlu0 %6438
        %6440 = vrot.lane.b32.xlu0 %v6377, 64
        %v6441 = vpop.permute.xlu0 %6440
        %6442 = vrot.lane.b32.xlu0 %v6379, 64
        %v6443 = vpop.permute.xlu0 %6442
        %6444 = vrot.lane.b32.xlu0 %v6382, 64
        %v6445 = vpop.permute.xlu0 %6444
        %6446 = vrot.lane.b32.xlu0 %v6384, 64
        %v6447 = vpop.permute.xlu0 %6446
        %6448 = vrot.lane.b32.xlu0 %v6387, 64
        %v6449 = vpop.permute.xlu0 %6448
        %6450 = vrot.lane.b32.xlu0 %v6389, 64
        %v6451 = vpop.permute.xlu0 %6450
        %6452 = vrot.lane.b32.xlu0 %v6392, 64
        %v6453 = vpop.permute.xlu0 %6452
        %6454 = vrot.lane.b32.xlu0 %v6394, 64
        %v6455 = vpop.permute.xlu0 %6454
        %6456 = vrot.lane.b32.xlu0 %v6397, 64
        %v6457 = vpop.permute.xlu0 %6456
        %6458 = vrot.lane.b32.xlu0 %v6399, 64
        %v6459 = vpop.permute.xlu0 %6458
        %6491 = vrot.lane.b32.xlu0 %v6095, 96
        %v6492 = vpop.permute.xlu0 %6491
        %6493 = vrot.lane.b32.xlu0 %v6002, 96
        %v6494 = vpop.permute.xlu0 %6493
        %6495 = vrot.lane.b32.xlu0 %v6096, 96
        %v6496 = vpop.permute.xlu0 %6495
        %6497 = vrot.lane.b32.xlu0 %v6005, 96
        %v6498 = vpop.permute.xlu0 %6497
        %6499 = vrot.lane.b32.xlu0 %v6097, 96
        %v6500 = vpop.permute.xlu0 %6499
        %6501 = vrot.lane.b32.xlu0 %v6008, 96
        %v6502 = vpop.permute.xlu0 %6501
        %6503 = vrot.lane.b32.xlu0 %v6098, 96
        %v6504 = vpop.permute.xlu0 %6503
        %6505 = vrot.lane.b32.xlu0 %v6011, 96
        %v6506 = vpop.permute.xlu0 %6505
        %6507 = vrot.lane.b32.xlu0 %v6099, 96
        %v6508 = vpop.permute.xlu0 %6507
        %6509 = vrot.lane.b32.xlu0 %v6014, 96
        %v6510 = vpop.permute.xlu0 %6509
        %6511 = vrot.lane.b32.xlu0 %v6100, 96
        %v6512 = vpop.permute.xlu0 %6511
        %6513 = vrot.lane.b32.xlu0 %v6017, 96
        %v6514 = vpop.permute.xlu0 %6513
        %6515 = vrot.lane.b32.xlu0 %v6101, 96
        %v6516 = vpop.permute.xlu0 %6515
        %6517 = vrot.lane.b32.xlu0 %v6020, 96
        %v6518 = vpop.permute.xlu0 %6517
        %6519 = vrot.lane.b32.xlu0 %v6102, 96
        %v6520 = vpop.permute.xlu0 %6519
        %6521 = vrot.lane.b32.xlu0 %v6023, 96
        %v6522 = vpop.permute.xlu0 %6521
        %6523 = vrot.lane.b32.xlu0 %v6103, 96
        %v6524 = vpop.permute.xlu0 %6523
        %6525 = vrot.lane.b32.xlu0 %v6026, 96
        %v6526 = vpop.permute.xlu0 %6525
        %6527 = vrot.lane.b32.xlu0 %v6104, 96
        %v6528 = vpop.permute.xlu0 %6527
        %6529 = vrot.lane.b32.xlu0 %v6029, 96
        %v6530 = vpop.permute.xlu0 %6529
        %6531 = vrot.lane.b32.xlu0 %v6105, 96
        %v6532 = vpop.permute.xlu0 %6531
        %6533 = vrot.lane.b32.xlu0 %v6032, 96
        %v6534 = vpop.permute.xlu0 %6533
        %6535 = vrot.lane.b32.xlu0 %v6106, 96
        %v6536 = vpop.permute.xlu0 %6535
        %6537 = vrot.lane.b32.xlu0 %v6035, 96
        %v6538 = vpop.permute.xlu0 %6537
        %6539 = vrot.lane.b32.xlu0 %v6107, 96
        %v6540 = vpop.permute.xlu0 %6539
        %6541 = vrot.lane.b32.xlu0 %v6038, 96
        %v6542 = vpop.permute.xlu0 %6541
        %6543 = vrot.lane.b32.xlu0 %v6108, 96
        %v6544 = vpop.permute.xlu0 %6543
        %6545 = vrot.lane.b32.xlu0 %v6041, 96
        %v6546 = vpop.permute.xlu0 %6545
        %6547 = vrot.lane.b32.xlu0 %v6109, 96
        %v6548 = vpop.permute.xlu0 %6547
        %6549 = vrot.lane.b32.xlu0 %v6044, 96
        %v6550 = vpop.permute.xlu0 %6549
        %6551 = vrot.lane.b32.xlu0 %v6110, 96
        %v6552 = vpop.permute.xlu0 %6551
        %6553 = vrot.lane.b32.xlu0 %v6047, 96
        %v6554 = vpop.permute.xlu0 %6553
        %v6588 = vrot.slane %v6110, 1
        %v6589 = vrot.slane %v6047, 1
        %v6590 = vsel %vm1066, %v6588, %v6589
        %v6591 = vrot.slane %v6126, 1
        %v6592 = vsel %vm1066, %v6589, %v6591
        %v6625 = vrot.slane %v6110, 2
        %v6626 = vrot.slane %v6047, 2
        %v6627 = vsel %vm1206, %v6625, %v6626
        %v6628 = vrot.slane %v6126, 2
        %v6629 = vsel %vm1206, %v6626, %v6628
        %6630 = vrot.lane.b32.xlu0 %v6327, 32
        %v6631 = vpop.permute.xlu0 %6630
        %6632 = vrot.lane.b32.xlu0 %v6329, 32
        %v6633 = vpop.permute.xlu0 %6632
        %6634 = vrot.lane.b32.xlu0 %v6332, 32
        %v6635 = vpop.permute.xlu0 %6634
        %6636 = vrot.lane.b32.xlu0 %v6334, 32
        %v6637 = vpop.permute.xlu0 %6636
        %6638 = vrot.lane.b32.xlu0 %v6337, 32
        %v6639 = vpop.permute.xlu0 %6638
        %6640 = vrot.lane.b32.xlu0 %v6339, 32
        %v6641 = vpop.permute.xlu0 %6640
        %6642 = vrot.lane.b32.xlu0 %v6342, 32
        %v6643 = vpop.permute.xlu0 %6642
        %6644 = vrot.lane.b32.xlu0 %v6344, 32
        %v6645 = vpop.permute.xlu0 %6644
        %6646 = vrot.lane.b32.xlu0 %v6347, 32
        %v6647 = vpop.permute.xlu0 %6646
        %6648 = vrot.lane.b32.xlu0 %v6349, 32
        %v6649 = vpop.permute.xlu0 %6648
        %6650 = vrot.lane.b32.xlu0 %v6352, 32
        %v6651 = vpop.permute.xlu0 %6650
        %6652 = vrot.lane.b32.xlu0 %v6354, 32
        %v6653 = vpop.permute.xlu0 %6652
        %6654 = vrot.lane.b32.xlu0 %v6357, 32
        %v6655 = vpop.permute.xlu0 %6654
        %6656 = vrot.lane.b32.xlu0 %v6359, 32
        %v6657 = vpop.permute.xlu0 %6656
        %6658 = vrot.lane.b32.xlu0 %v6362, 32
        %v6659 = vpop.permute.xlu0 %6658
        %6660 = vrot.lane.b32.xlu0 %v6364, 32
        %v6661 = vpop.permute.xlu0 %6660
        %6662 = vrot.lane.b32.xlu0 %v6367, 32
        %v6663 = vpop.permute.xlu0 %6662
        %6664 = vrot.lane.b32.xlu0 %v6369, 32
        %v6665 = vpop.permute.xlu0 %6664
        %6666 = vrot.lane.b32.xlu0 %v6372, 32
        %v6667 = vpop.permute.xlu0 %6666
        %6668 = vrot.lane.b32.xlu0 %v6374, 32
        %v6669 = vpop.permute.xlu0 %6668
        %6670 = vrot.lane.b32.xlu0 %v6377, 32
        %v6671 = vpop.permute.xlu0 %6670
        %6672 = vrot.lane.b32.xlu0 %v6379, 32
        %v6673 = vpop.permute.xlu0 %6672
        %6674 = vrot.lane.b32.xlu0 %v6382, 32
        %v6675 = vpop.permute.xlu0 %6674
        %6676 = vrot.lane.b32.xlu0 %v6384, 32
        %v6677 = vpop.permute.xlu0 %6676
        %6678 = vrot.lane.b32.xlu0 %v6387, 32
        %v6679 = vpop.permute.xlu0 %6678
        %6680 = vrot.lane.b32.xlu0 %v6389, 32
        %v6681 = vpop.permute.xlu0 %6680
        %6682 = vrot.lane.b32.xlu0 %v6392, 32
        %v6683 = vpop.permute.xlu0 %6682
        %6684 = vrot.lane.b32.xlu0 %v6394, 32
        %v6685 = vpop.permute.xlu0 %6684
        %6686 = vrot.lane.b32.xlu0 %v6397, 32
        %v6687 = vpop.permute.xlu0 %6686
        %6688 = vrot.lane.b32.xlu0 %v6399, 32
        %v6689 = vpop.permute.xlu0 %6688
        %6690 = vrot.lane.b32.xlu0 %v6627, 32
        %v6691 = vpop.permute.xlu0 %6690
        %6692 = vrot.lane.b32.xlu0 %v6629, 32
        %v6693 = vpop.permute.xlu0 %6692
        %6726 = vrot.lane.b32.xlu0 %v6096, 64
        %v6727 = vpop.permute.xlu0 %6726
        %6728 = vrot.lane.b32.xlu0 %v6005, 64
        %v6729 = vpop.permute.xlu0 %6728
        %6730 = vrot.lane.b32.xlu0 %v6097, 64
        %v6731 = vpop.permute.xlu0 %6730
        %6732 = vrot.lane.b32.xlu0 %v6008, 64
        %v6733 = vpop.permute.xlu0 %6732
        %6734 = vrot.lane.b32.xlu0 %v6098, 64
        %v6735 = vpop.permute.xlu0 %6734
        %6736 = vrot.lane.b32.xlu0 %v6011, 64
        %v6737 = vpop.permute.xlu0 %6736
        %6738 = vrot.lane.b32.xlu0 %v6099, 64
        %v6739 = vpop.permute.xlu0 %6738
        %6740 = vrot.lane.b32.xlu0 %v6014, 64
        %v6741 = vpop.permute.xlu0 %6740
        %6742 = vrot.lane.b32.xlu0 %v6100, 64
        %v6743 = vpop.permute.xlu0 %6742
        %6744 = vrot.lane.b32.xlu0 %v6017, 64
        %v6745 = vpop.permute.xlu0 %6744
        %6746 = vrot.lane.b32.xlu0 %v6101, 64
        %v6747 = vpop.permute.xlu0 %6746
        %6748 = vrot.lane.b32.xlu0 %v6020, 64
        %v6749 = vpop.permute.xlu0 %6748
        %6750 = vrot.lane.b32.xlu0 %v6102, 64
        %v6751 = vpop.permute.xlu0 %6750
        %6752 = vrot.lane.b32.xlu0 %v6023, 64
        %v6753 = vpop.permute.xlu0 %6752
        %6754 = vrot.lane.b32.xlu0 %v6103, 64
        %v6755 = vpop.permute.xlu0 %6754
        %6756 = vrot.lane.b32.xlu0 %v6026, 64
        %v6757 = vpop.permute.xlu0 %6756
        %6758 = vrot.lane.b32.xlu0 %v6104, 64
        %v6759 = vpop.permute.xlu0 %6758
        %6760 = vrot.lane.b32.xlu0 %v6029, 64
        %v6761 = vpop.permute.xlu0 %6760
        %6762 = vrot.lane.b32.xlu0 %v6105, 64
        %v6763 = vpop.permute.xlu0 %6762
        %6764 = vrot.lane.b32.xlu0 %v6032, 64
        %v6765 = vpop.permute.xlu0 %6764
        %6766 = vrot.lane.b32.xlu0 %v6106, 64
        %v6767 = vpop.permute.xlu0 %6766
        %6768 = vrot.lane.b32.xlu0 %v6035, 64
        %v6769 = vpop.permute.xlu0 %6768
        %6770 = vrot.lane.b32.xlu0 %v6107, 64
        %v6771 = vpop.permute.xlu0 %6770
        %6772 = vrot.lane.b32.xlu0 %v6038, 64
        %v6773 = vpop.permute.xlu0 %6772
        %6774 = vrot.lane.b32.xlu0 %v6108, 64
        %v6775 = vpop.permute.xlu0 %6774
        %6776 = vrot.lane.b32.xlu0 %v6041, 64
        %v6777 = vpop.permute.xlu0 %6776
        %6778 = vrot.lane.b32.xlu0 %v6109, 64
        %v6779 = vpop.permute.xlu0 %6778
        %6780 = vrot.lane.b32.xlu0 %v6044, 64
        %v6781 = vpop.permute.xlu0 %6780
        %6782 = vrot.lane.b32.xlu0 %v6110, 64
        %v6783 = vpop.permute.xlu0 %6782
        %6784 = vrot.lane.b32.xlu0 %v6047, 64
        %v6785 = vpop.permute.xlu0 %6784
        %6786 = vrot.lane.b32.xlu0 0.0, 64
        %v6787 = vpop.permute.xlu0 %6786
        %6819 = vrot.lane.b32.xlu0 %v6164, 96
        %v6820 = vpop.permute.xlu0 %6819
        %6821 = vrot.lane.b32.xlu0 %v6166, 96
        %v6822 = vpop.permute.xlu0 %6821
        %6823 = vrot.lane.b32.xlu0 %v6169, 96
        %v6824 = vpop.permute.xlu0 %6823
        %6825 = vrot.lane.b32.xlu0 %v6171, 96
        %v6826 = vpop.permute.xlu0 %6825
        %6827 = vrot.lane.b32.xlu0 %v6174, 96
        %v6828 = vpop.permute.xlu0 %6827
        %6829 = vrot.lane.b32.xlu0 %v6176, 96
        %v6830 = vpop.permute.xlu0 %6829
        %6831 = vrot.lane.b32.xlu0 %v6179, 96
        %v6832 = vpop.permute.xlu0 %6831
        %6833 = vrot.lane.b32.xlu0 %v6181, 96
        %v6834 = vpop.permute.xlu0 %6833
        %6835 = vrot.lane.b32.xlu0 %v6184, 96
        %v6836 = vpop.permute.xlu0 %6835
        %6837 = vrot.lane.b32.xlu0 %v6186, 96
        %v6838 = vpop.permute.xlu0 %6837
        %6839 = vrot.lane.b32.xlu0 %v6189, 96
        %v6840 = vpop.permute.xlu0 %6839
        %6841 = vrot.lane.b32.xlu0 %v6191, 96
        %v6842 = vpop.permute.xlu0 %6841
        %6843 = vrot.lane.b32.xlu0 %v6194, 96
        %v6844 = vpop.permute.xlu0 %6843
        %6845 = vrot.lane.b32.xlu0 %v6196, 96
        %v6846 = vpop.permute.xlu0 %6845
        %6847 = vrot.lane.b32.xlu0 %v6199, 96
        %v6848 = vpop.permute.xlu0 %6847
        %6849 = vrot.lane.b32.xlu0 %v6201, 96
        %v6850 = vpop.permute.xlu0 %6849
        %6851 = vrot.lane.b32.xlu0 %v6204, 96
        %v6852 = vpop.permute.xlu0 %6851
        %6853 = vrot.lane.b32.xlu0 %v6206, 96
        %v6854 = vpop.permute.xlu0 %6853
        %6855 = vrot.lane.b32.xlu0 %v6209, 96
        %v6856 = vpop.permute.xlu0 %6855
        %6857 = vrot.lane.b32.xlu0 %v6211, 96
        %v6858 = vpop.permute.xlu0 %6857
        %6859 = vrot.lane.b32.xlu0 %v6214, 96
        %v6860 = vpop.permute.xlu0 %6859
        %6861 = vrot.lane.b32.xlu0 %v6216, 96
        %v6862 = vpop.permute.xlu0 %6861
        %6863 = vrot.lane.b32.xlu0 %v6219, 96
        %v6864 = vpop.permute.xlu0 %6863
        %6865 = vrot.lane.b32.xlu0 %v6221, 96
        %v6866 = vpop.permute.xlu0 %6865
        %6867 = vrot.lane.b32.xlu0 %v6224, 96
        %v6868 = vpop.permute.xlu0 %6867
        %6869 = vrot.lane.b32.xlu0 %v6226, 96
        %v6870 = vpop.permute.xlu0 %6869
        %6871 = vrot.lane.b32.xlu0 %v6229, 96
        %v6872 = vpop.permute.xlu0 %6871
        %6873 = vrot.lane.b32.xlu0 %v6231, 96
        %v6874 = vpop.permute.xlu0 %6873
        %6875 = vrot.lane.b32.xlu0 %v6590, 96
        %v6876 = vpop.permute.xlu0 %6875
        %6877 = vrot.lane.b32.xlu0 %v6592, 96
        %v6878 = vpop.permute.xlu0 %6877
        %6879 = vrot.lane.b32.xlu0 %v1068, 96
        %v6880 = vpop.permute.xlu0 %6879
        %vm6912 = vcmask 261120
        %v6913 = vsel %vm6912, 0.0, %v6233
        %v6914 = vsel %vm6912, %v6095, %v6235
        %v6915 = vsel %vm6912, %v6002, %v6237
        %v6916 = vsel %vm6912, %v6096, %v6239
        %v6917 = vsel %vm6912, %v6005, %v6241
        %v6918 = vsel %vm6912, %v6097, %v6243
        %v6919 = vsel %vm6912, %v6008, %v6245
        %v6920 = vsel %vm6912, %v6098, %v6247
        %v6921 = vsel %vm6912, %v6011, %v6249
        %v6922 = vsel %vm6912, %v6099, %v6251
        %v6923 = vsel %vm6912, %v6014, %v6253
        %v6924 = vsel %vm6912, %v6100, %v6255
        %v6925 = vsel %vm6912, %v6017, %v6257
        %v6926 = vsel %vm6912, %v6101, %v6259
        %v6927 = vsel %vm6912, %v6020, %v6261
        %v6928 = vsel %vm6912, %v6102, %v6263
        %v6929 = vsel %vm6912, %v6023, %v6265
        %v6930 = vsel %vm6912, %v6103, %v6267
        %v6931 = vsel %vm6912, %v6026, %v6269
        %v6932 = vsel %vm6912, %v6104, %v6271
        %v6933 = vsel %vm6912, %v6029, %v6273
        %v6934 = vsel %vm6912, %v6105, %v6275
        %v6935 = vsel %vm6912, %v6032, %v6277
        %v6936 = vsel %vm6912, %v6106, %v6279
        %v6937 = vsel %vm6912, %v6035, %v6281
        %v6938 = vsel %vm6912, %v6107, %v6283
        %v6939 = vsel %vm6912, %v6038, %v6285
        %v6940 = vsel %vm6912, %v6108, %v6287
        %v6941 = vsel %vm6912, %v6041, %v6289
        %v6942 = vsel %vm6912, %v6109, %v6291
        %v6943 = vsel %vm6912, %v6044, %v6293
        %v6944 = vsel %vm3551, %v6913, %v3290
        %v6945 = vsel %vm3551, %v6914, %v6401
        %v6946 = vsel %vm3551, %v6915, %v6403
        %v6947 = vsel %vm3551, %v6916, %v6405
        %v6948 = vsel %vm3551, %v6917, %v6407
        %v6949 = vsel %vm3551, %v6918, %v6409
        %v6950 = vsel %vm3551, %v6919, %v6411
        %v6951 = vsel %vm3551, %v6920, %v6413
        %v6952 = vsel %vm3551, %v6921, %v6415
        %v6953 = vsel %vm3551, %v6922, %v6417
        %v6954 = vsel %vm3551, %v6923, %v6419
        %v6955 = vsel %vm3551, %v6924, %v6421
        %v6956 = vsel %vm3551, %v6925, %v6423
        %v6957 = vsel %vm3551, %v6926, %v6425
        %v6958 = vsel %vm3551, %v6927, %v6427
        %v6959 = vsel %vm3551, %v6928, %v6429
        %v6960 = vsel %vm3551, %v6929, %v6431
        %v6961 = vsel %vm3551, %v6930, %v6433
        %v6962 = vsel %vm3551, %v6931, %v6435
        %v6963 = vsel %vm3551, %v6932, %v6437
        %v6964 = vsel %vm3551, %v6933, %v6439
        %v6965 = vsel %vm3551, %v6934, %v6441
        %v6966 = vsel %vm3551, %v6935, %v6443
        %v6967 = vsel %vm3551, %v6936, %v6445
        %v6968 = vsel %vm3551, %v6937, %v6447
        %v6969 = vsel %vm3551, %v6938, %v6449
        %v6970 = vsel %vm3551, %v6939, %v6451
        %v6971 = vsel %vm3551, %v6940, %v6453
        %v6972 = vsel %vm3551, %v6941, %v6455
        %v6973 = vsel %vm3551, %v6942, %v6457
        %v6974 = vsel %vm3551, %v6943, %v6459
        %v6975 = vsel %vm3419, %v6944, %v6492
        %v6976 = vsel %vm3419, %v6944, %v6494
        %v6977 = vsel %vm3419, %v6945, %v6496
        %v6978 = vsel %vm3419, %v6946, %v6498
        %v6979 = vsel %vm3419, %v6947, %v6500
        %v6980 = vsel %vm3419, %v6948, %v6502
        %v6981 = vsel %vm3419, %v6949, %v6504
        %v6982 = vsel %vm3419, %v6950, %v6506
        %v6983 = vsel %vm3419, %v6951, %v6508
        %v6984 = vsel %vm3419, %v6952, %v6510
        %v6985 = vsel %vm3419, %v6953, %v6512
        %v6986 = vsel %vm3419, %v6954, %v6514
        %v6987 = vsel %vm3419, %v6955, %v6516
        %v6988 = vsel %vm3419, %v6956, %v6518
        %v6989 = vsel %vm3419, %v6957, %v6520
        %v6990 = vsel %vm3419, %v6958, %v6522
        %v6991 = vsel %vm3419, %v6959, %v6524
        %v6992 = vsel %vm3419, %v6960, %v6526
        %v6993 = vsel %vm3419, %v6961, %v6528
        %v6994 = vsel %vm3419, %v6962, %v6530
        %v6995 = vsel %vm3419, %v6963, %v6532
        %v6996 = vsel %vm3419, %v6964, %v6534
        %v6997 = vsel %vm3419, %v6965, %v6536
        %v6998 = vsel %vm3419, %v6966, %v6538
        %v6999 = vsel %vm3419, %v6967, %v6540
        %v7000 = vsel %vm3419, %v6968, %v6542
        %v7001 = vsel %vm3419, %v6969, %v6544
        %v7002 = vsel %vm3419, %v6970, %v6546
        %v7003 = vsel %vm3419, %v6971, %v6548
        %v7004 = vsel %vm3419, %v6972, %v6550
        %v7005 = vsel %vm3419, %v6973, %v6552
        %v7006 = vsel %vm3419, %v6974, %v6554
        %v7007 = vsel %vm6912, %v6159, %v6631
        %v7008 = vsel %vm6912, %v6161, %v6633
        %v7009 = vsel %vm6912, %v6164, %v6635
        %v7010 = vsel %vm6912, %v6166, %v6637
        %v7011 = vsel %vm6912, %v6169, %v6639
        %v7012 = vsel %vm6912, %v6171, %v6641
        %v7013 = vsel %vm6912, %v6174, %v6643
        %v7014 = vsel %vm6912, %v6176, %v6645
        %v7015 = vsel %vm6912, %v6179, %v6647
        %v7016 = vsel %vm6912, %v6181, %v6649
        %v7017 = vsel %vm6912, %v6184, %v6651
        %v7018 = vsel %vm6912, %v6186, %v6653
        %v7019 = vsel %vm6912, %v6189, %v6655
        %v7020 = vsel %vm6912, %v6191, %v6657
        %v7021 = vsel %vm6912, %v6194, %v6659
        %v7022 = vsel %vm6912, %v6196, %v6661
        %v7023 = vsel %vm6912, %v6199, %v6663
        %v7024 = vsel %vm6912, %v6201, %v6665
        %v7025 = vsel %vm6912, %v6204, %v6667
        %v7026 = vsel %vm6912, %v6206, %v6669
        %v7027 = vsel %vm6912, %v6209, %v6671
        %v7028 = vsel %vm6912, %v6211, %v6673
        %v7029 = vsel %vm6912, %v6214, %v6675
        %v7030 = vsel %vm6912, %v6216, %v6677
        %v7031 = vsel %vm6912, %v6219, %v6679
        %v7032 = vsel %vm6912, %v6221, %v6681
        %v7033 = vsel %vm6912, %v6224, %v6683
        %v7034 = vsel %vm6912, %v6226, %v6685
        %v7035 = vsel %vm6912, %v6229, %v6687
        %v7036 = vsel %vm6912, %v6231, %v6689
        %v7037 = vsel %vm6912, %v6590, %v6691
        %v7038 = vsel %vm6912, %v6592, %v6693
        %v7039 = vsel %vm3551, %v7007, %v6727
        %v7040 = vsel %vm3551, %v7008, %v6729
        %v7041 = vsel %vm3551, %v7009, %v6731
        %v7042 = vsel %vm3551, %v7010, %v6733
        %v7043 = vsel %vm3551, %v7011, %v6735
        %v7044 = vsel %vm3551, %v7012, %v6737
        %v7045 = vsel %vm3551, %v7013, %v6739
        %v7046 = vsel %vm3551, %v7014, %v6741
        %v7047 = vsel %vm3551, %v7015, %v6743
        %v7048 = vsel %vm3551, %v7016, %v6745
        %v7049 = vsel %vm3551, %v7017, %v6747
        %v7050 = vsel %vm3551, %v7018, %v6749
        %v7051 = vsel %vm3551, %v7019, %v6751
        %v7052 = vsel %vm3551, %v7020, %v6753
        %v7053 = vsel %vm3551, %v7021, %v6755
        %v7054 = vsel %vm3551, %v7022, %v6757
        %v7055 = vsel %vm3551, %v7023, %v6759
        %v7056 = vsel %vm3551, %v7024, %v6761
        %v7057 = vsel %vm3551, %v7025, %v6763
        %v7058 = vsel %vm3551, %v7026, %v6765
        %v7059 = vsel %vm3551, %v7027, %v6767
        %v7060 = vsel %vm3551, %v7028, %v6769
        %v7061 = vsel %vm3551, %v7029, %v6771
        %v7062 = vsel %vm3551, %v7030, %v6773
        %v7063 = vsel %vm3551, %v7031, %v6775
        %v7064 = vsel %vm3551, %v7032, %v6777
        %v7065 = vsel %vm3551, %v7033, %v6779
        %v7066 = vsel %vm3551, %v7034, %v6781
        %v7067 = vsel %vm3551, %v7035, %v6783
        %v7068 = vsel %vm3551, %v7036, %v6785
        %v7069 = vsel %vm3551, %v7037, %v6787
        %v7070 = vsel %vm3551, %v7038, %v6787
        %v7071 = vsel %vm3419, %v7039, %v6820
        %v7072 = vsel %vm3419, %v7040, %v6822
        %v7073 = vsel %vm3419, %v7041, %v6824
        %v7074 = vsel %vm3419, %v7042, %v6826
        %v7075 = vsel %vm3419, %v7043, %v6828
        %v7076 = vsel %vm3419, %v7044, %v6830
        %v7077 = vsel %vm3419, %v7045, %v6832
        %v7078 = vsel %vm3419, %v7046, %v6834
        %v7079 = vsel %vm3419, %v7047, %v6836
        %v7080 = vsel %vm3419, %v7048, %v6838
        %v7081 = vsel %vm3419, %v7049, %v6840
        %v7082 = vsel %vm3419, %v7050, %v6842
        %v7083 = vsel %vm3419, %v7051, %v6844
        %v7084 = vsel %vm3419, %v7052, %v6846
        %v7085 = vsel %vm3419, %v7053, %v6848
        %v7086 = vsel %vm3419, %v7054, %v6850
        %v7087 = vsel %vm3419, %v7055, %v6852
        %v7088 = vsel %vm3419, %v7056, %v6854
        %v7089 = vsel %vm3419, %v7057, %v6856
        %v7090 = vsel %vm3419, %v7058, %v6858
        %v7091 = vsel %vm3419, %v7059, %v6860
        %v7092 = vsel %vm3419, %v7060, %v6862
        %v7093 = vsel %vm3419, %v7061, %v6864
        %v7094 = vsel %vm3419, %v7062, %v6866
        %v7095 = vsel %vm3419, %v7063, %v6868
        %v7096 = vsel %vm3419, %v7064, %v6870
        %v7097 = vsel %vm3419, %v7065, %v6872
        %v7098 = vsel %vm3419, %v7066, %v6874
        %v7099 = vsel %vm3419, %v7067, %v6876
        %v7100 = vsel %vm3419, %v7068, %v6878
        %v7101 = vsel %vm3419, %v7069, %v6880
        %v7102 = vsel %vm3419, %v7070, %v6880
        %v7103 = vld [vmem:[%s13] sm:$0xff]
        %v7104 = vld [vmem:[%s13 + $0x8] sm:$0xff]
        %v7105 = vld [vmem:[%s13 + $0x10] sm:$0xff]
        %v7106 = vld [vmem:[%s13 + $0x18] sm:$0xff]
        %v7107 = vld [vmem:[%s13 + $0x20] sm:$0xff]
        %v7108 = vld [vmem:[%s13 + $0x28] sm:$0xff]
        %v7109 = vld [vmem:[%s13 + $0x30] sm:$0xff]
        %v7110 = vld [vmem:[%s13 + $0x38] sm:$0xff]
        %v7111 = vld [vmem:[%s13 + $0x40] sm:$0xff]
        %v7112 = vld [vmem:[%s13 + $0x48] sm:$0xff]
        %v7113 = vld [vmem:[%s13 + $0x50] sm:$0xff]
        %v7114 = vld [vmem:[%s13 + $0x58] sm:$0xff]
        %v7115 = vld [vmem:[%s13 + $0x60] sm:$0xff]
        %v7116 = vld [vmem:[%s13 + $0x68] sm:$0xff]
        %v7117 = vld [vmem:[%s13 + $0x70] sm:$0xff]
        %v7118 = vld [vmem:[%s13 + $0x78] sm:$0xff]
        %v7119 = vld [vmem:[%s13 + $0x80] sm:$0xff]
        %v7120 = vld [vmem:[%s13 + $0x88] sm:$0xff]
        %v7121 = vld [vmem:[%s13 + $0x90] sm:$0xff]
        %v7122 = vld [vmem:[%s13 + $0x98] sm:$0xff]
        %v7123 = vld [vmem:[%s13 + $0xa0] sm:$0xff]
        %v7124 = vld [vmem:[%s13 + $0xa8] sm:$0xff]
        %v7125 = vld [vmem:[%s13 + $0xb0] sm:$0xff]
        %v7126 = vld [vmem:[%s13 + $0xb8] sm:$0xff]
        %v7127 = vld [vmem:[%s13 + $0xc0] sm:$0xff]
        %v7128 = vld [vmem:[%s13 + $0xc8] sm:$0xff]
        %v7129 = vld [vmem:[%s13 + $0xd0] sm:$0xff]
        %v7130 = vld [vmem:[%s13 + $0xd8] sm:$0xff]
        %v7131 = vld [vmem:[%s13 + $0xe0] sm:$0xff]
        %v7132 = vld [vmem:[%s13 + $0xe8] sm:$0xff]
        %v7133 = vld [vmem:[%s13 + $0xf0] sm:$0xff]
        %v7134 = vld [vmem:[%s13 + $0xf8] sm:$0xff]
        %v7135 = vld [vmem:[%s13 + $0x100] sm:$0xff]
        %v7136 = vld [vmem:[%s13 + $0x108] sm:$0xff]
        %v7137 = vld [vmem:[%s13 + $0x110] sm:$0xff]
        %v7138 = vld [vmem:[%s13 + $0x118] sm:$0xff]
        %v7139 = vld [vmem:[%s14] sm:$0x1]
        %v7141 = vlaneseq
        %v7142 = vshrl.u32 %v7141, 7
        %v7143 = vsub.s32 0, %v7142
        %v7144 = vrot.slane %v7139, %v7143
        %v7146 = vsel %vm6912, %v6332, 0
        %v7148 = vsel %vm6912, %v6334, 0
        %v7150 = vsel %vm6912, %v6337, 0
        %v7152 = vsel %vm6912, %v6339, 0
        %v7154 = vsel %vm6912, %v6342, 0
        %v7156 = vsel %vm6912, %v6344, 0
        %v7158 = vsel %vm6912, %v6347, 0
        %v7160 = vsel %vm6912, %v6349, 0
        %v7162 = vsel %vm6912, %v6352, 0
        %v7164 = vsel %vm6912, %v6354, 0
        %v7166 = vsel %vm6912, %v6357, 0
        %v7168 = vsel %vm6912, %v6359, 0
        %v7170 = vsel %vm6912, %v6362, 0
        %v7172 = vsel %vm6912, %v6364, 0
        %v7174 = vsel %vm6912, %v6367, 0
        %v7176 = vsel %vm6912, %v6369, 0
        %v7178 = vsel %vm6912, %v6372, 0
        %v7180 = vsel %vm6912, %v6374, 0
        %v7182 = vsel %vm6912, %v6377, 0
        %v7184 = vsel %vm6912, %v6379, 0
        %v7186 = vsel %vm6912, %v6382, 0
        %v7188 = vsel %vm6912, %v6384, 0
        %v7190 = vsel %vm6912, %v6387, 0
        %v7192 = vsel %vm6912, %v6389, 0
        %v7194 = vsel %vm6912, %v6392, 0
        %v7196 = vsel %vm6912, %v6394, 0
        %v7198 = vsel %vm6912, %v6397, 0
        %v7200 = vsel %vm6912, %v6399, 0
        %v7202 = vsel %vm6912, %v6627, 0
        %v7204 = vsel %vm6912, %v6629, 0
        %v7206 = vsel %vm6912, %v1208, 0
        %7208 = vmatprep.subr.mxu0 0.0
        %7209 = vmatpush1.msra.mxu0 %v7103
        %7210 = vmatprep.subr.mxu0 0.0
        %7211 = vmatpush1.msra.mxu0 %v7104
        %7212 = vmatprep.subr.mxu0 0.0
        %7213 = vmatpush1.msra.mxu0 %v7105
        %7214 = vmatprep.subr.mxu0 0.0
        %7215 = vmatpush1.msra.mxu0 %v7106
        %7216 = vmatprep.subr.mxu0 0.0
        %7217 = vmatpush1.msra.mxu0 %v7107
        %7218 = vmatprep.subr.mxu0 0.0
        %7219 = vmatpush1.msra.mxu0 %v7108
        %7220 = vmatprep.subr.mxu0 0.0
        %7221 = vmatpush1.msra.mxu0 %v7109
        %7222 = vmatprep.subr.mxu0 0.0
        %7223 = vmatpush1.msra.mxu0 %v7110
        %7224 = vmatprep.subr.mxu0 0.0
        %7225 = vmatpush1.msra.mxu0 %v7111
        %7226 = vmatprep.subr.mxu0 0.0
        %7227 = vmatpush1.msra.mxu0 %v7112
        %7228 = vmatprep.subr.mxu0 0.0
        %7229 = vmatpush1.msra.mxu0 %v7113
        %7230 = vmatprep.subr.mxu0 0.0
        %7231 = vmatpush1.msra.mxu0 %v7114
        %7232 = vmatprep.subr.mxu0 0.0
        %7233 = vmatpush1.msra.mxu0 %v7115
        %7234 = vmatprep.subr.mxu0 0.0
        %7235 = vmatpush1.msra.mxu0 %v7116
        %7236 = vmatprep.subr.mxu0 0.0
        %7237 = vmatpush1.msra.mxu0 %v7117
        %7238 = vmatprep.subr.mxu0 0.0
        %7239 = vmatpush1.msra.mxu0 %v7118
        %7240 = vmatprep.subr.mxu0 0.0
        %7241 = vmatpush1.msra.mxu0 %v7119
        %7242 = vmatprep.subr.mxu0 0.0
        %7243 = vmatpush1.msra.mxu0 %v7120
        %7244 = vmatprep.subr.mxu0 0.0
        %7245 = vmatpush1.msra.mxu0 %v7121
        %7246 = vmatprep.subr.mxu0 0.0
        %7247 = vmatpush1.msra.mxu0 %v7122
        %7248 = vmatprep.subr.mxu0 0.0
        %7249 = vmatpush1.msra.mxu0 %v7123
        %7250 = vmatprep.subr.mxu0 0.0
        %7251 = vmatpush1.msra.mxu0 %v7124
        %7252 = vmatprep.subr.mxu0 0.0
        %7253 = vmatpush1.msra.mxu0 %v7125
        %7254 = vmatprep.subr.mxu0 0.0
        %7255 = vmatpush1.msra.mxu0 %v7126
        %7256 = vmatprep.subr.mxu0 0.0
        %7257 = vmatpush1.msra.mxu0 %v7127
        %7258 = vmatprep.subr.mxu0 0.0
        %7259 = vmatpush1.msra.mxu0 %v7128
        %7260 = vmatprep.subr.mxu0 0.0
        %7261 = vmatpush1.msra.mxu0 %v7129
        %7262 = vmatprep.subr.mxu0 0.0
        %7263 = vmatpush1.msra.mxu0 %v7130
        %7264 = vmatprep.subr.mxu0 0.0
        %7265 = vmatpush1.msra.mxu0 %v7131
        %7266 = vmatprep.subr.mxu0 0.0
        %7267 = vmatpush1.msra.mxu0 %v7132
        %7268 = vmatprep.subr.mxu0 0.0
        %7269 = vmatpush1.msra.mxu0 %v7133
        %7270 = vmatprep.subr.mxu0 0.0
        %7271 = vmatpush1.msra.mxu0 %v7134
        %7272 = vmatprep.mubr.f32.mxu0 %v7071
        %7273 = vmatmul.mubr.f32.gmra.mrb[0].mxu0 %v6975
        %v7274 = vpop.f32.mrb[0].mxu0
        %v7275 = vadd.f32 %v7144, %v7274
        %v7276 = vpop.f32.mrb[0].mxu0
        %7277 = vmatprep.mubr.f32.mxu0 %v7072
        %7278 = vmatmul.mubr.f32.gmra.mrb[0].mxu0 %v6976
        %v7279 = vpop.f32.mrb[0].mxu0
        %v7280 = vadd.f32 %v7144, %v7279
        %v7281 = vpop.f32.mrb[0].mxu0
        %7282 = vmatprep.mubr.f32.mxu0 %v7073
        %7283 = vmatmul.mubr.f32.gmra.mrb[0].mxu0 %v6977
        %v7284 = vpop.f32.mrb[0].mxu0
        %v7285 = vadd.f32 %v7144, %v7284
        %v7286 = vpop.f32.mrb[0].mxu0
        %7287 = vmatprep.mubr.f32.mxu0 %v7074
        %7288 = vmatmul.mubr.f32.gmra.mrb[0].mxu0 %v6978
        %v7289 = vpop.f32.mrb[0].mxu0
        %v7290 = vadd.f32 %v7144, %v7289
        %v7291 = vpop.f32.mrb[0].mxu0
        %7292 = vmatprep.mubr.f32.mxu0 %v7075
        %7293 = vmatmul.mubr.f32.gmra.mrb[0].mxu0 %v6979
        %v7294 = vpop.f32.mrb[0].mxu0
        %v7295 = vadd.f32 %v7144, %v7294
        %v7296 = vpop.f32.mrb[0].mxu0
        %7297 = vmatprep.mubr.f32.mxu0 %v7076
        %7298 = vmatmul.mubr.f32.gmra.mrb[0].mxu0 %v6980
        %v7299 = vpop.f32.mrb[0].mxu0
        %v7300 = vadd.f32 %v7144, %v7299
        %v7301 = vpop.f32.mrb[0].mxu0
        %7302 = vmatprep.mubr.f32.mxu0 %v7077
        %7303 = vmatmul.mubr.f32.gmra.mrb[0].mxu0 %v6981
        %v7304 = vpop.f32.mrb[0].mxu0
        %v7305 = vadd.f32 %v7144, %v7304
        %v7306 = vpop.f32.mrb[0].mxu0
        %7307 = vmatprep.mubr.f32.mxu0 %v7078
        %7308 = vmatmul.mubr.f32.gmra.mrb[0].mxu0 %v6982
        %v7309 = vpop.f32.mrb[0].mxu0
        %v7310 = vadd.f32 %v7144, %v7309
        %v7311 = vpop.f32.mrb[0].mxu0
        %7312 = vmatprep.mubr.f32.mxu0 %v7079
        %7313 = vmatmul.mubr.f32.gmra.mrb[0].mxu0 %v6983
        %v7314 = vpop.f32.mrb[0].mxu0
        %v7315 = vadd.f32 %v7144, %v7314
        %v7316 = vpop.f32.mrb[0].mxu0
        %7317 = vmatprep.mubr.f32.mxu0 %v7080
        %7318 = vmatmul.mubr.f32.gmra.mrb[0].mxu0 %v6984
        %v7319 = vpop.f32.mrb[0].mxu0
        %v7320 = vadd.f32 %v7144, %v7319
        %v7321 = vpop.f32.mrb[0].mxu0
        %7322 = vmatprep.mubr.f32.mxu0 %v7081
        %7323 = vmatmul.mubr.f32.gmra.mrb[0].mxu0 %v6985
        %v7324 = vpop.f32.mrb[0].mxu0
        %v7325 = vadd.f32 %v7144, %v7324
        %v7326 = vpop.f32.mrb[0].mxu0
        %7327 = vmatprep.mubr.f32.mxu0 %v7082
        %7328 = vmatmul.mubr.f32.gmra.mrb[0].mxu0 %v6986
        %v7329 = vpop.f32.mrb[0].mxu0
        %v7330 = vadd.f32 %v7144, %v7329
        %v7331 = vpop.f32.mrb[0].mxu0
        %7332 = vmatprep.mubr.f32.mxu0 %v7083
        %7333 = vmatmul.mubr.f32.gmra.mrb[0].mxu0 %v6987
        %v7334 = vpop.f32.mrb[0].mxu0
        %v7335 = vadd.f32 %v7144, %v7334
        %v7336 = vpop.f32.mrb[0].mxu0
        %7337 = vmatprep.mubr.f32.mxu0 %v7084
        %7338 = vmatmul.mubr.f32.gmra.mrb[0].mxu0 %v6988
        %v7339 = vpop.f32.mrb[0].mxu0
        %v7340 = vadd.f32 %v7144, %v7339
        %v7341 = vpop.f32.mrb[0].mxu0
        %7342 = vmatprep.mubr.f32.mxu0 %v7085
        %7343 = vmatmul.mubr.f32.gmra.mrb[0].mxu0 %v6989
        %v7344 = vpop.f32.mrb[0].mxu0
        %v7345 = vadd.f32 %v7144, %v7344
        %v7346 = vpop.f32.mrb[0].mxu0
        %7347 = vmatprep.mubr.f32.mxu0 %v7086
        %7348 = vmatmul.mubr.f32.gmra.mrb[0].mxu0 %v6990
        %v7349 = vpop.f32.mrb[0].mxu0
        %v7350 = vadd.f32 %v7144, %v7349
        %v7351 = vpop.f32.mrb[0].mxu0
        %7352 = vmatprep.mubr.f32.mxu0 %v7087
        %7353 = vmatmul.mubr.f32.gmra.mrb[0].mxu0 %v6991
        %v7354 = vpop.f32.mrb[0].mxu0
        %v7355 = vadd.f32 %v7144, %v7354
        %v7356 = vpop.f32.mrb[0].mxu0
        %7357 = vmatprep.mubr.f32.mxu0 %v7088
        %7358 = vmatmul.mubr.f32.gmra.mrb[0].mxu0 %v6992
        %v7359 = vpop.f32.mrb[0].mxu0
        %v7360 = vadd.f32 %v7144, %v7359
        %v7361 = vpop.f32.mrb[0].mxu0
        %7362 = vmatprep.mubr.f32.mxu0 %v7089
        %7363 = vmatmul.mubr.f32.gmra.mrb[0].mxu0 %v6993
        %v7364 = vpop.f32.mrb[0].mxu0
        %v7365 = vadd.f32 %v7144, %v7364
        %v7366 = vpop.f32.mrb[0].mxu0
        %7367 = vmatprep.mubr.f32.mxu0 %v7090
        %7368 = vmatmul.mubr.f32.gmra.mrb[0].mxu0 %v6994
        %v7369 = vpop.f32.mrb[0].mxu0
        %v7370 = vadd.f32 %v7144, %v7369
        %v7371 = vpop.f32.mrb[0].mxu0
        %7372 = vmatprep.mubr.f32.mxu0 %v7091
        %7373 = vmatmul.mubr.f32.gmra.mrb[0].mxu0 %v6995
        %v7374 = vpop.f32.mrb[0].mxu0
        %v7375 = vadd.f32 %v7144, %v7374
        %v7376 = vpop.f32.mrb[0].mxu0
        %7377 = vmatprep.mubr.f32.mxu0 %v7092
        %7378 = vmatmul.mubr.f32.gmra.mrb[0].mxu0 %v6996
        %v7379 = vpop.f32.mrb[0].mxu0
        %v7380 = vadd.f32 %v7144, %v7379
        %v7381 = vpop.f32.mrb[0].mxu0
        %7382 = vmatprep.mubr.f32.mxu0 %v7093
        %7383 = vmatmul.mubr.f32.gmra.mrb[0].mxu0 %v6997
        %v7384 = vpop.f32.mrb[0].mxu0
        %v7385 = vadd.f32 %v7144, %v7384
        %v7386 = vpop.f32.mrb[0].mxu0
        %7387 = vmatprep.mubr.f32.mxu0 %v7094
        %7388 = vmatmul.mubr.f32.gmra.mrb[0].mxu0 %v6998
        %v7389 = vpop.f32.mrb[0].mxu0
        %v7390 = vadd.f32 %v7144, %v7389
        %v7391 = vpop.f32.mrb[0].mxu0
        %7392 = vmatprep.mubr.f32.mxu0 %v7095
        %7393 = vmatmul.mubr.f32.gmra.mrb[0].mxu0 %v6999
        %v7394 = vpop.f32.mrb[0].mxu0
        %v7395 = vadd.f32 %v7144, %v7394
        %v7396 = vpop.f32.mrb[0].mxu0
        %7397 = vmatprep.mubr.f32.mxu0 %v7096
        %7398 = vmatmul.mubr.f32.gmra.mrb[0].mxu0 %v7000
        %v7399 = vpop.f32.mrb[0].mxu0
        %v7400 = vadd.f32 %v7144, %v7399
        %v7401 = vpop.f32.mrb[0].mxu0
        %7402 = vmatprep.mubr.f32.mxu0 %v7097
        %7403 = vmatmul.mubr.f32.gmra.mrb[0].mxu0 %v7001
        %v7404 = vpop.f32.mrb[0].mxu0
        %v7405 = vadd.f32 %v7144, %v7404
        %v7406 = vpop.f32.mrb[0].mxu0
        %7407 = vmatprep.mubr.f32.mxu0 %v7098
        %7408 = vmatmul.mubr.f32.gmra.mrb[0].mxu0 %v7002
        %v7409 = vpop.f32.mrb[0].mxu0
        %v7410 = vadd.f32 %v7144, %v7409
        %v7411 = vpop.f32.mrb[0].mxu0
        %7412 = vmatprep.mubr.f32.mxu0 %v7099
        %7413 = vmatmul.mubr.f32.gmra.mrb[0].mxu0 %v7003
        %v7414 = vpop.f32.mrb[0].mxu0
        %v7415 = vadd.f32 %v7144, %v7414
        %v7416 = vpop.f32.mrb[0].mxu0
        %7417 = vmatprep.mubr.f32.mxu0 %v7100
        %7418 = vmatmul.mubr.f32.gmra.mrb[0].mxu0 %v7004
        %v7419 = vpop.f32.mrb[0].mxu0
        %v7420 = vadd.f32 %v7144, %v7419
        %v7421 = vpop.f32.mrb[0].mxu0
        %7422 = vmatprep.mubr.f32.mxu0 %v7101
        %7423 = vmatmul.mubr.f32.gmra.mrb[0].mxu0 %v7005
        %v7424 = vpop.f32.mrb[0].mxu0
        %v7425 = vadd.f32 %v7144, %v7424
        %v7426 = vpop.f32.mrb[0].mxu0
        %7427 = vmatprep.mubr.f32.mxu0 %v7102
        %7428 = vmatmul.mubr.f32.gmra.mrb[0].mxu0 %v7006
        %v7429 = vpop.f32.mrb[0].mxu0
        %v7430 = vadd.f32 %v7144, %v7429
        %v7431 = vpop.f32.mrb[0].mxu0
        %7432 = vdwg.mxu0
        %7433 = vmatprep.subr.mxu0 0.0
        %7434 = vmatpush1.msra.mxu0 %v7135
        %7435 = vmatprep.subr.mxu0 0.0
        %7436 = vmatpush1.msra.mxu0 %v7136
        %7437 = vmatprep.subr.mxu0 0.0
        %7438 = vmatpush1.msra.mxu0 %v7137
        %7439 = vmatprep.subr.mxu0 0.0
        %7440 = vmatpush1.msra.mxu0 %v7138
        %7441 = vmatprep.subr.mxu0 0.0
        %7442 = vmatpush1.msra.mxu0 0.0
        %7443 = vmatprep.subr.mxu0 0.0
        %7444 = vmatpush1.msra.mxu0 0.0
        %7445 = vmatprep.subr.mxu0 0.0
        %7446 = vmatpush1.msra.mxu0 0.0
        %7447 = vmatprep.subr.mxu0 0.0
        %7448 = vmatpush1.msra.mxu0 0.0
        %7449 = vmatprep.subr.mxu0 0.0
        %7450 = vmatpush1.msra.mxu0 0.0
        %7451 = vmatprep.subr.mxu0 0.0
        %7452 = vmatpush1.msra.mxu0 0.0
        %7453 = vmatprep.subr.mxu0 0.0
        %7454 = vmatpush1.msra.mxu0 0.0
        %7455 = vmatprep.subr.mxu0 0.0
        %7456 = vmatpush1.msra.mxu0 0.0
        %7457 = vmatprep.subr.mxu0 0.0
        %7458 = vmatpush1.msra.mxu0 0.0
        %7459 = vmatprep.subr.mxu0 0.0
        %7460 = vmatpush1.msra.mxu0 0.0
        %7461 = vmatprep.subr.mxu0 0.0
        %7462 = vmatpush1.msra.mxu0 0.0
        %7463 = vmatprep.subr.mxu0 0.0
        %7464 = vmatpush1.msra.mxu0 0.0
        %7465 = vmatprep.subr.mxu0 0.0
        %7466 = vmatpush1.msra.mxu0 0.0
        %7467 = vmatprep.subr.mxu0 0.0
        %7468 = vmatpush1.msra.mxu0 0.0
        %7469 = vmatprep.subr.mxu0 0.0
        %7470 = vmatpush1.msra.mxu0 0.0
        %7471 = vmatprep.subr.mxu0 0.0
        %7472 = vmatpush1.msra.mxu0 0.0
        %7473 = vmatprep.subr.mxu0 0.0
        %7474 = vmatpush1.msra.mxu0 0.0
        %7475 = vmatprep.subr.mxu0 0.0
        %7476 = vmatpush1.msra.mxu0 0.0
        %7477 = vmatprep.subr.mxu0 0.0
        %7478 = vmatpush1.msra.mxu0 0.0
        %7479 = vmatprep.subr.mxu0 0.0
        %7480 = vmatpush1.msra.mxu0 0.0
        %7481 = vmatprep.subr.mxu0 0.0
        %7482 = vmatpush1.msra.mxu0 0.0
        %7483 = vmatprep.subr.mxu0 0.0
        %7484 = vmatpush1.msra.mxu0 0.0
        %7485 = vmatprep.subr.mxu0 0.0
        %7486 = vmatpush1.msra.mxu0 0.0
        %7487 = vmatprep.subr.mxu0 0.0
        %7488 = vmatpush1.msra.mxu0 0.0
        %7489 = vmatprep.subr.mxu0 0.0
        %7490 = vmatpush1.msra.mxu0 0.0
        %7491 = vmatprep.subr.mxu0 0.0
        %7492 = vmatpush1.msra.mxu0 0.0
        %7493 = vmatprep.subr.mxu0 0.0
        %7494 = vmatpush1.msra.mxu0 0.0
        %7495 = vmatprep.subr.mxu0 0.0
        %7496 = vmatpush1.msra.mxu0 0.0
        %7497 = vmatprep.mubr.f32.mxu0 0.0
        %7498 = vmatmul.mubr.f32.gmra.mrb[0].mxu0 %v7146
        %v7499 = vpop.f32.mrb[0].mxu0
        %v7500 = vadd.f32 %v7275, %v7499
        %v7501 = vpop.f32.mrb[0].mxu0
        %7502 = vmatprep.mubr.f32.mxu0 0.0
        %7503 = vmatmul.mubr.f32.gmra.mrb[0].mxu0 %v7148
        %v7504 = vpop.f32.mrb[0].mxu0
        %v7505 = vadd.f32 %v7280, %v7504
        %v7506 = vpop.f32.mrb[0].mxu0
        %7507 = vmatprep.mubr.f32.mxu0 0.0
        %7508 = vmatmul.mubr.f32.gmra.mrb[0].mxu0 %v7150
        %v7509 = vpop.f32.mrb[0].mxu0
        %v7510 = vadd.f32 %v7285, %v7509
        %v7511 = vpop.f32.mrb[0].mxu0
        %7512 = vmatprep.mubr.f32.mxu0 0.0
        %7513 = vmatmul.mubr.f32.gmra.mrb[0].mxu0 %v7152
        %v7514 = vpop.f32.mrb[0].mxu0
        %v7515 = vadd.f32 %v7290, %v7514
        %v7516 = vpop.f32.mrb[0].mxu0
        %7517 = vmatprep.mubr.f32.mxu0 0.0
        %7518 = vmatmul.mubr.f32.gmra.mrb[0].mxu0 %v7154
        %v7519 = vpop.f32.mrb[0].mxu0
        %v7520 = vadd.f32 %v7295, %v7519
        %v7521 = vpop.f32.mrb[0].mxu0
        %7522 = vmatprep.mubr.f32.mxu0 0.0
        %7523 = vmatmul.mubr.f32.gmra.mrb[0].mxu0 %v7156
        %v7524 = vpop.f32.mrb[0].mxu0
        %v7525 = vadd.f32 %v7300, %v7524
        %v7526 = vpop.f32.mrb[0].mxu0
        %7527 = vmatprep.mubr.f32.mxu0 0.0
        %7528 = vmatmul.mubr.f32.gmra.mrb[0].mxu0 %v7158
        %v7529 = vpop.f32.mrb[0].mxu0
        %v7530 = vadd.f32 %v7305, %v7529
        %v7531 = vpop.f32.mrb[0].mxu0
        %7532 = vmatprep.mubr.f32.mxu0 0.0
        %7533 = vmatmul.mubr.f32.gmra.mrb[0].mxu0 %v7160
        %v7534 = vpop.f32.mrb[0].mxu0
        %v7535 = vadd.f32 %v7310, %v7534
        %v7536 = vpop.f32.mrb[0].mxu0
        %7537 = vmatprep.mubr.f32.mxu0 0.0
        %7538 = vmatmul.mubr.f32.gmra.mrb[0].mxu0 %v7162
        %v7539 = vpop.f32.mrb[0].mxu0
        %v7540 = vadd.f32 %v7315, %v7539
        %v7541 = vpop.f32.mrb[0].mxu0
        %7542 = vmatprep.mubr.f32.mxu0 0.0
        %7543 = vmatmul.mubr.f32.gmra.mrb[0].mxu0 %v7164
        %v7544 = vpop.f32.mrb[0].mxu0
        %v7545 = vadd.f32 %v7320, %v7544
        %v7546 = vpop.f32.mrb[0].mxu0
        %7547 = vmatprep.mubr.f32.mxu0 0.0
        %7548 = vmatmul.mubr.f32.gmra.mrb[0].mxu0 %v7166
        %v7549 = vpop.f32.mrb[0].mxu0
        %v7550 = vadd.f32 %v7325, %v7549
        %v7551 = vpop.f32.mrb[0].mxu0
        %7552 = vmatprep.mubr.f32.mxu0 0.0
        %7553 = vmatmul.mubr.f32.gmra.mrb[0].mxu0 %v7168
        %v7554 = vpop.f32.mrb[0].mxu0
        %v7555 = vadd.f32 %v7330, %v7554
        %v7556 = vpop.f32.mrb[0].mxu0
        %7557 = vmatprep.mubr.f32.mxu0 0.0
        %7558 = vmatmul.mubr.f32.gmra.mrb[0].mxu0 %v7170
        %v7559 = vpop.f32.mrb[0].mxu0
        %v7560 = vadd.f32 %v7335, %v7559
        %v7561 = vpop.f32.mrb[0].mxu0
        %7562 = vmatprep.mubr.f32.mxu0 0.0
        %7563 = vmatmul.mubr.f32.gmra.mrb[0].mxu0 %v7172
        %v7564 = vpop.f32.mrb[0].mxu0
        %v7565 = vadd.f32 %v7340, %v7564
        %v7566 = vpop.f32.mrb[0].mxu0
        %7567 = vmatprep.mubr.f32.mxu0 0.0
        %7568 = vmatmul.mubr.f32.gmra.mrb[0].mxu0 %v7174
        %v7569 = vpop.f32.mrb[0].mxu0
        %v7570 = vadd.f32 %v7345, %v7569
        %v7571 = vpop.f32.mrb[0].mxu0
        %7572 = vmatprep.mubr.f32.mxu0 0.0
        %7573 = vmatmul.mubr.f32.gmra.mrb[0].mxu0 %v7176
        %v7574 = vpop.f32.mrb[0].mxu0
        %v7575 = vadd.f32 %v7350, %v7574
        %v7576 = vpop.f32.mrb[0].mxu0
        %7577 = vmatprep.mubr.f32.mxu0 0.0
        %7578 = vmatmul.mubr.f32.gmra.mrb[0].mxu0 %v7178
        %v7579 = vpop.f32.mrb[0].mxu0
        %v7580 = vadd.f32 %v7355, %v7579
        %v7581 = vpop.f32.mrb[0].mxu0
        %7582 = vmatprep.mubr.f32.mxu0 0.0
        %7583 = vmatmul.mubr.f32.gmra.mrb[0].mxu0 %v7180
        %v7584 = vpop.f32.mrb[0].mxu0
        %v7585 = vadd.f32 %v7360, %v7584
        %v7586 = vpop.f32.mrb[0].mxu0
        %7587 = vmatprep.mubr.f32.mxu0 0.0
        %7588 = vmatmul.mubr.f32.gmra.mrb[0].mxu0 %v7182
        %v7589 = vpop.f32.mrb[0].mxu0
        %v7590 = vadd.f32 %v7365, %v7589
        %v7591 = vpop.f32.mrb[0].mxu0
        %7592 = vmatprep.mubr.f32.mxu0 0.0
        %7593 = vmatmul.mubr.f32.gmra.mrb[0].mxu0 %v7184
        %v7594 = vpop.f32.mrb[0].mxu0
        %v7595 = vadd.f32 %v7370, %v7594
        %v7596 = vpop.f32.mrb[0].mxu0
        %7597 = vmatprep.mubr.f32.mxu0 0.0
        %7598 = vmatmul.mubr.f32.gmra.mrb[0].mxu0 %v7186
        %v7599 = vpop.f32.mrb[0].mxu0
        %v7600 = vadd.f32 %v7375, %v7599
        %v7601 = vpop.f32.mrb[0].mxu0
        %7602 = vmatprep.mubr.f32.mxu0 0.0
        %7603 = vmatmul.mubr.f32.gmra.mrb[0].mxu0 %v7188
        %v7604 = vpop.f32.mrb[0].mxu0
        %v7605 = vadd.f32 %v7380, %v7604
        %v7606 = vpop.f32.mrb[0].mxu0
        %7607 = vmatprep.mubr.f32.mxu0 0.0
        %7608 = vmatmul.mubr.f32.gmra.mrb[0].mxu0 %v7190
        %v7609 = vpop.f32.mrb[0].mxu0
        %v7610 = vadd.f32 %v7385, %v7609
        %v7611 = vpop.f32.mrb[0].mxu0
        %7612 = vmatprep.mubr.f32.mxu0 0.0
        %7613 = vmatmul.mubr.f32.gmra.mrb[0].mxu0 %v7192
        %v7614 = vpop.f32.mrb[0].mxu0
        %v7615 = vadd.f32 %v7390, %v7614
        %v7616 = vpop.f32.mrb[0].mxu0
        %7617 = vmatprep.mubr.f32.mxu0 0.0
        %7618 = vmatmul.mubr.f32.gmra.mrb[0].mxu0 %v7194
        %v7619 = vpop.f32.mrb[0].mxu0
        %v7620 = vadd.f32 %v7395, %v7619
        %v7621 = vpop.f32.mrb[0].mxu0
        %7622 = vmatprep.mubr.f32.mxu0 0.0
        %7623 = vmatmul.mubr.f32.gmra.mrb[0].mxu0 %v7196
        %v7624 = vpop.f32.mrb[0].mxu0
        %v7625 = vadd.f32 %v7400, %v7624
        %v7626 = vpop.f32.mrb[0].mxu0
        %7627 = vmatprep.mubr.f32.mxu0 0.0
        %7628 = vmatmul.mubr.f32.gmra.mrb[0].mxu0 %v7198
        %v7629 = vpop.f32.mrb[0].mxu0
        %v7630 = vadd.f32 %v7405, %v7629
        %v7631 = vpop.f32.mrb[0].mxu0
        %7632 = vmatprep.mubr.f32.mxu0 0.0
        %7633 = vmatmul.mubr.f32.gmra.mrb[0].mxu0 %v7200
        %v7634 = vpop.f32.mrb[0].mxu0
        %v7635 = vadd.f32 %v7410, %v7634
        %v7636 = vpop.f32.mrb[0].mxu0
        %7637 = vmatprep.mubr.f32.mxu0 0.0
        %7638 = vmatmul.mubr.f32.gmra.mrb[0].mxu0 %v7202
        %v7639 = vpop.f32.mrb[0].mxu0
        %v7640 = vadd.f32 %v7415, %v7639
        %v7641 = vpop.f32.mrb[0].mxu0
        %7642 = vmatprep.mubr.f32.mxu0 0.0
        %7643 = vmatmul.mubr.f32.gmra.mrb[0].mxu0 %v7204
        %v7644 = vpop.f32.mrb[0].mxu0
        %v7645 = vadd.f32 %v7420, %v7644
        %v7646 = vpop.f32.mrb[0].mxu0
        %7647 = vmatprep.mubr.f32.mxu0 0.0
        %7648 = vmatmul.mubr.f32.gmra.mrb[0].mxu0 %v7206
        %v7649 = vpop.f32.mrb[0].mxu0
        %v7650 = vadd.f32 %v7425, %v7649
        %v7651 = vpop.f32.mrb[0].mxu0
        %7652 = vmatprep.mubr.f32.mxu0 0.0
        %7653 = vmatmul.mubr.f32.gmra.mrb[0].mxu0 %v7206
        %v7654 = vpop.f32.mrb[0].mxu0
        %v7655 = vadd.f32 %v7430, %v7654
        %v7656 = vpop.f32.mrb[0].mxu0
        %7657 = vdwg.mxu0
        %v7658 = vmax.f32 %v7500, 0.0
        %v7659 = vmax.f32 %v7505, 0.0
        %v7660 = vmax.f32 %v7510, 0.0
        %v7661 = vmax.f32 %v7515, 0.0
        %v7662 = vmax.f32 %v7520, 0.0
        %v7663 = vmax.f32 %v7525, 0.0
        %v7664 = vmax.f32 %v7530, 0.0
        %v7665 = vmax.f32 %v7535, 0.0
        %v7666 = vmax.f32 %v7540, 0.0
        %v7667 = vmax.f32 %v7545, 0.0
        %v7668 = vmax.f32 %v7550, 0.0
        %v7669 = vmax.f32 %v7555, 0.0
        %v7670 = vmax.f32 %v7560, 0.0
        %v7671 = vmax.f32 %v7565, 0.0
        %v7672 = vmax.f32 %v7570, 0.0
        %v7673 = vmax.f32 %v7575, 0.0
        %v7674 = vmax.f32 %v7580, 0.0
        %v7675 = vmax.f32 %v7585, 0.0
        %v7676 = vmax.f32 %v7590, 0.0
        %v7677 = vmax.f32 %v7595, 0.0
        %v7678 = vmax.f32 %v7600, 0.0
        %v7679 = vmax.f32 %v7605, 0.0
        %v7680 = vmax.f32 %v7610, 0.0
        %v7681 = vmax.f32 %v7615, 0.0
        %v7682 = vmax.f32 %v7620, 0.0
        %v7683 = vmax.f32 %v7625, 0.0
        %v7684 = vmax.f32 %v7630, 0.0
        %v7685 = vmax.f32 %v7635, 0.0
        %v7686 = vmax.f32 %v7640, 0.0
        %v7687 = vmax.f32 %v7645, 0.0
        %v7688 = vmax.f32 %v7650, 0.0
        %v7689 = vmax.f32 %v7655, 0.0
        %7722 = vrot.lane.b32.xlu0 %v1918, 32
        %v7723 = vpop.permute.xlu0 %7722
        %7724 = vrot.lane.b32.xlu0 %v1919, 32
        %v7725 = vpop.permute.xlu0 %7724
        %7726 = vrot.lane.b32.xlu0 %v1920, 32
        %v7727 = vpop.permute.xlu0 %7726
        %7728 = vrot.lane.b32.xlu0 %v1921, 32
        %v7729 = vpop.permute.xlu0 %7728
        %7730 = vrot.lane.b32.xlu0 %v1922, 32
        %v7731 = vpop.permute.xlu0 %7730
        %7732 = vrot.lane.b32.xlu0 %v1923, 32
        %v7733 = vpop.permute.xlu0 %7732
        %7734 = vrot.lane.b32.xlu0 %v1924, 32
        %v7735 = vpop.permute.xlu0 %7734
        %7736 = vrot.lane.b32.xlu0 %v1925, 32
        %v7737 = vpop.permute.xlu0 %7736
        %7738 = vrot.lane.b32.xlu0 %v1926, 32
        %v7739 = vpop.permute.xlu0 %7738
        %7740 = vrot.lane.b32.xlu0 %v1927, 32
        %v7741 = vpop.permute.xlu0 %7740
        %7742 = vrot.lane.b32.xlu0 %v1928, 32
        %v7743 = vpop.permute.xlu0 %7742
        %7744 = vrot.lane.b32.xlu0 %v1929, 32
        %v7745 = vpop.permute.xlu0 %7744
        %7746 = vrot.lane.b32.xlu0 %v1930, 32
        %v7747 = vpop.permute.xlu0 %7746
        %7748 = vrot.lane.b32.xlu0 %v1931, 32
        %v7749 = vpop.permute.xlu0 %7748
        %7750 = vrot.lane.b32.xlu0 %v1932, 32
        %v7751 = vpop.permute.xlu0 %7750
        %7752 = vrot.lane.b32.xlu0 %v1933, 32
        %v7753 = vpop.permute.xlu0 %7752
        %7754 = vrot.lane.b32.xlu0 %v1934, 32
        %v7755 = vpop.permute.xlu0 %7754
        %7756 = vrot.lane.b32.xlu0 %v1935, 32
        %v7757 = vpop.permute.xlu0 %7756
        %7758 = vrot.lane.b32.xlu0 %v1936, 32
        %v7759 = vpop.permute.xlu0 %7758
        %7760 = vrot.lane.b32.xlu0 %v1937, 32
        %v7761 = vpop.permute.xlu0 %7760
        %7762 = vrot.lane.b32.xlu0 %v1938, 32
        %v7763 = vpop.permute.xlu0 %7762
        %7764 = vrot.lane.b32.xlu0 %v1939, 32
        %v7765 = vpop.permute.xlu0 %7764
        %7766 = vrot.lane.b32.xlu0 %v1940, 32
        %v7767 = vpop.permute.xlu0 %7766
        %7768 = vrot.lane.b32.xlu0 %v1941, 32
        %v7769 = vpop.permute.xlu0 %7768
        %7770 = vrot.lane.b32.xlu0 %v1942, 32
        %v7771 = vpop.permute.xlu0 %7770
        %7772 = vrot.lane.b32.xlu0 %v1943, 32
        %v7773 = vpop.permute.xlu0 %7772
        %7774 = vrot.lane.b32.xlu0 %v1944, 32
        %v7775 = vpop.permute.xlu0 %7774
        %7776 = vrot.lane.b32.xlu0 %v1945, 32
        %v7777 = vpop.permute.xlu0 %7776
        %7778 = vrot.lane.b32.xlu0 %v1946, 32
        %v7779 = vpop.permute.xlu0 %7778
        %7780 = vrot.lane.b32.xlu0 %v1947, 32
        %v7781 = vpop.permute.xlu0 %7780
        %7782 = vrot.lane.b32.xlu0 %v1948, 32
        %v7783 = vpop.permute.xlu0 %7782
        %7784 = vrot.lane.b32.xlu0 %v1949, 32
        %v7785 = vpop.permute.xlu0 %7784
        %7850 = vrot.lane.b32.xlu0 %v3940, 64
        %v7851 = vpop.permute.xlu0 %7850
        %7852 = vrot.lane.b32.xlu0 %v3941, 64
        %v7853 = vpop.permute.xlu0 %7852
        %7854 = vrot.lane.b32.xlu0 %v3942, 64
        %v7855 = vpop.permute.xlu0 %7854
        %7856 = vrot.lane.b32.xlu0 %v3943, 64
        %v7857 = vpop.permute.xlu0 %7856
        %7858 = vrot.lane.b32.xlu0 %v3944, 64
        %v7859 = vpop.permute.xlu0 %7858
        %7860 = vrot.lane.b32.xlu0 %v3945, 64
        %v7861 = vpop.permute.xlu0 %7860
        %7862 = vrot.lane.b32.xlu0 %v3946, 64
        %v7863 = vpop.permute.xlu0 %7862
        %7864 = vrot.lane.b32.xlu0 %v3947, 64
        %v7865 = vpop.permute.xlu0 %7864
        %7866 = vrot.lane.b32.xlu0 %v3948, 64
        %v7867 = vpop.permute.xlu0 %7866
        %7868 = vrot.lane.b32.xlu0 %v3949, 64
        %v7869 = vpop.permute.xlu0 %7868
        %7870 = vrot.lane.b32.xlu0 %v3950, 64
        %v7871 = vpop.permute.xlu0 %7870
        %7872 = vrot.lane.b32.xlu0 %v3951, 64
        %v7873 = vpop.permute.xlu0 %7872
        %7874 = vrot.lane.b32.xlu0 %v3952, 64
        %v7875 = vpop.permute.xlu0 %7874
        %7876 = vrot.lane.b32.xlu0 %v3953, 64
        %v7877 = vpop.permute.xlu0 %7876
        %7878 = vrot.lane.b32.xlu0 %v3954, 64
        %v7879 = vpop.permute.xlu0 %7878
        %7880 = vrot.lane.b32.xlu0 %v3955, 64
        %v7881 = vpop.permute.xlu0 %7880
        %7882 = vrot.lane.b32.xlu0 %v3956, 64
        %v7883 = vpop.permute.xlu0 %7882
        %7884 = vrot.lane.b32.xlu0 %v3957, 64
        %v7885 = vpop.permute.xlu0 %7884
        %7886 = vrot.lane.b32.xlu0 %v3958, 64
        %v7887 = vpop.permute.xlu0 %7886
        %7888 = vrot.lane.b32.xlu0 %v3959, 64
        %v7889 = vpop.permute.xlu0 %7888
        %7890 = vrot.lane.b32.xlu0 %v3960, 64
        %v7891 = vpop.permute.xlu0 %7890
        %7892 = vrot.lane.b32.xlu0 %v3961, 64
        %v7893 = vpop.permute.xlu0 %7892
        %7894 = vrot.lane.b32.xlu0 %v3962, 64
        %v7895 = vpop.permute.xlu0 %7894
        %7896 = vrot.lane.b32.xlu0 %v3963, 64
        %v7897 = vpop.permute.xlu0 %7896
        %7898 = vrot.lane.b32.xlu0 %v3964, 64
        %v7899 = vpop.permute.xlu0 %7898
        %7900 = vrot.lane.b32.xlu0 %v3965, 64
        %v7901 = vpop.permute.xlu0 %7900
        %7902 = vrot.lane.b32.xlu0 %v3966, 64
        %v7903 = vpop.permute.xlu0 %7902
        %7904 = vrot.lane.b32.xlu0 %v3967, 64
        %v7905 = vpop.permute.xlu0 %7904
        %7906 = vrot.lane.b32.xlu0 %v3968, 64
        %v7907 = vpop.permute.xlu0 %7906
        %7908 = vrot.lane.b32.xlu0 %v3969, 64
        %v7909 = vpop.permute.xlu0 %7908
        %7910 = vrot.lane.b32.xlu0 %v3970, 64
        %v7911 = vpop.permute.xlu0 %7910
        %7912 = vrot.lane.b32.xlu0 %v3971, 64
        %v7913 = vpop.permute.xlu0 %7912
        %7978 = vrot.lane.b32.xlu0 %v7658, 96
        %v7979 = vpop.permute.xlu0 %7978
        %7980 = vrot.lane.b32.xlu0 %v7659, 96
        %v7981 = vpop.permute.xlu0 %7980
        %7982 = vrot.lane.b32.xlu0 %v7660, 96
        %v7983 = vpop.permute.xlu0 %7982
        %7984 = vrot.lane.b32.xlu0 %v7661, 96
        %v7985 = vpop.permute.xlu0 %7984
        %7986 = vrot.lane.b32.xlu0 %v7662, 96
        %v7987 = vpop.permute.xlu0 %7986
        %7988 = vrot.lane.b32.xlu0 %v7663, 96
        %v7989 = vpop.permute.xlu0 %7988
        %7990 = vrot.lane.b32.xlu0 %v7664, 96
        %v7991 = vpop.permute.xlu0 %7990
        %7992 = vrot.lane.b32.xlu0 %v7665, 96
        %v7993 = vpop.permute.xlu0 %7992
        %7994 = vrot.lane.b32.xlu0 %v7666, 96
        %v7995 = vpop.permute.xlu0 %7994
        %7996 = vrot.lane.b32.xlu0 %v7667, 96
        %v7997 = vpop.permute.xlu0 %7996
        %7998 = vrot.lane.b32.xlu0 %v7668, 96
        %v7999 = vpop.permute.xlu0 %7998
        %8000 = vrot.lane.b32.xlu0 %v7669, 96
        %v8001 = vpop.permute.xlu0 %8000
        %8002 = vrot.lane.b32.xlu0 %v7670, 96
        %v8003 = vpop.permute.xlu0 %8002
        %8004 = vrot.lane.b32.xlu0 %v7671, 96
        %v8005 = vpop.permute.xlu0 %8004
        %8006 = vrot.lane.b32.xlu0 %v7672, 96
        %v8007 = vpop.permute.xlu0 %8006
        %8008 = vrot.lane.b32.xlu0 %v7673, 96
        %v8009 = vpop.permute.xlu0 %8008
        %8010 = vrot.lane.b32.xlu0 %v7674, 96
        %v8011 = vpop.permute.xlu0 %8010
        %8012 = vrot.lane.b32.xlu0 %v7675, 96
        %v8013 = vpop.permute.xlu0 %8012
        %8014 = vrot.lane.b32.xlu0 %v7676, 96
        %v8015 = vpop.permute.xlu0 %8014
        %8016 = vrot.lane.b32.xlu0 %v7677, 96
        %v8017 = vpop.permute.xlu0 %8016
        %8018 = vrot.lane.b32.xlu0 %v7678, 96
        %v8019 = vpop.permute.xlu0 %8018
        %8020 = vrot.lane.b32.xlu0 %v7679, 96
        %v8021 = vpop.permute.xlu0 %8020
        %8022 = vrot.lane.b32.xlu0 %v7680, 96
        %v8023 = vpop.permute.xlu0 %8022
        %8024 = vrot.lane.b32.xlu0 %v7681, 96
        %v8025 = vpop.permute.xlu0 %8024
        %8026 = vrot.lane.b32.xlu0 %v7682, 96
        %v8027 = vpop.permute.xlu0 %8026
        %8028 = vrot.lane.b32.xlu0 %v7683, 96
        %v8029 = vpop.permute.xlu0 %8028
        %8030 = vrot.lane.b32.xlu0 %v7684, 96
        %v8031 = vpop.permute.xlu0 %8030
        %8032 = vrot.lane.b32.xlu0 %v7685, 96
        %v8033 = vpop.permute.xlu0 %8032
        %8034 = vrot.lane.b32.xlu0 %v7686, 96
        %v8035 = vpop.permute.xlu0 %8034
        %8036 = vrot.lane.b32.xlu0 %v7687, 96
        %v8037 = vpop.permute.xlu0 %8036
        %8038 = vrot.lane.b32.xlu0 %v7688, 96
        %v8039 = vpop.permute.xlu0 %8038
        %8040 = vrot.lane.b32.xlu0 %v7689, 96
        %v8041 = vpop.permute.xlu0 %8040
        %v8074 = vsel %vm6912, %v874, %v7723
        %v8075 = vsel %vm6912, %v875, %v7725
        %v8076 = vsel %vm6912, %v876, %v7727
        %v8077 = vsel %vm6912, %v877, %v7729
        %v8078 = vsel %vm6912, %v878, %v7731
        %v8079 = vsel %vm6912, %v879, %v7733
        %v8080 = vsel %vm6912, %v880, %v7735
        %v8081 = vsel %vm6912, %v881, %v7737
        %v8082 = vsel %vm6912, %v882, %v7739
        %v8083 = vsel %vm6912, %v883, %v7741
        %v8084 = vsel %vm6912, %v884, %v7743
        %v8085 = vsel %vm6912, %v885, %v7745
        %v8086 = vsel %vm6912, %v886, %v7747
        %v8087 = vsel %vm6912, %v887, %v7749
        %v8088 = vsel %vm6912, %v888, %v7751
        %v8089 = vsel %vm6912, %v889, %v7753
        %v8090 = vsel %vm6912, %v890, %v7755
        %v8091 = vsel %vm6912, %v891, %v7757
        %v8092 = vsel %vm6912, %v892, %v7759
        %v8093 = vsel %vm6912, %v893, %v7761
        %v8094 = vsel %vm6912, %v894, %v7763
        %v8095 = vsel %vm6912, %v895, %v7765
        %v8096 = vsel %vm6912, %v896, %v7767
        %v8097 = vsel %vm6912, %v897, %v7769
        %v8098 = vsel %vm6912, %v898, %v7771
        %v8099 = vsel %vm6912, %v899, %v7773
        %v8100 = vsel %vm6912, %v900, %v7775
        %v8101 = vsel %vm6912, %v901, %v7777
        %v8102 = vsel %vm6912, %v902, %v7779
        %v8103 = vsel %vm6912, %v903, %v7781
        %v8104 = vsel %vm6912, %v904, %v7783
        %v8105 = vsel %vm6912, %v905, %v7785
        %v8106 = vsel %vm3551, %v8074, %v7851
        %v8107 = vsel %vm3551, %v8075, %v7853
        %v8108 = vsel %vm3551, %v8076, %v7855
        %v8109 = vsel %vm3551, %v8077, %v7857
        %v8110 = vsel %vm3551, %v8078, %v7859
        %v8111 = vsel %vm3551, %v8079, %v7861
        %v8112 = vsel %vm3551, %v8080, %v7863
        %v8113 = vsel %vm3551, %v8081, %v7865
        %v8114 = vsel %vm3551, %v8082, %v7867
        %v8115 = vsel %vm3551, %v8083, %v7869
        %v8116 = vsel %vm3551, %v8084, %v7871
        %v8117 = vsel %vm3551, %v8085, %v7873
        %v8118 = vsel %vm3551, %v8086, %v7875
        %v8119 = vsel %vm3551, %v8087, %v7877
        %v8120 = vsel %vm3551, %v8088, %v7879
        %v8121 = vsel %vm3551, %v8089, %v7881
        %v8122 = vsel %vm3551, %v8090, %v7883
        %v8123 = vsel %vm3551, %v8091, %v7885
        %v8124 = vsel %vm3551, %v8092, %v7887
        %v8125 = vsel %vm3551, %v8093, %v7889
        %v8126 = vsel %vm3551, %v8094, %v7891
        %v8127 = vsel %vm3551, %v8095, %v7893
        %v8128 = vsel %vm3551, %v8096, %v7895
        %v8129 = vsel %vm3551, %v8097, %v7897
        %v8130 = vsel %vm3551, %v8098, %v7899
        %v8131 = vsel %vm3551, %v8099, %v7901
        %v8132 = vsel %vm3551, %v8100, %v7903
        %v8133 = vsel %vm3551, %v8101, %v7905
        %v8134 = vsel %vm3551, %v8102, %v7907
        %v8135 = vsel %vm3551, %v8103, %v7909
        %v8136 = vsel %vm3551, %v8104, %v7911
        %v8137 = vsel %vm3551, %v8105, %v7913
        %v8138 = vsel %vm3419, %v8106, %v7979
        %v8139 = vsel %vm3419, %v8107, %v7981
        %v8140 = vsel %vm3419, %v8108, %v7983
        %v8141 = vsel %vm3419, %v8109, %v7985
        %v8142 = vsel %vm3419, %v8110, %v7987
        %v8143 = vsel %vm3419, %v8111, %v7989
        %v8144 = vsel %vm3419, %v8112, %v7991
        %v8145 = vsel %vm3419, %v8113, %v7993
        %v8146 = vsel %vm3419, %v8114, %v7995
        %v8147 = vsel %vm3419, %v8115, %v7997
        %v8148 = vsel %vm3419, %v8116, %v7999
        %v8149 = vsel %vm3419, %v8117, %v8001
        %v8150 = vsel %vm3419, %v8118, %v8003
        %v8151 = vsel %vm3419, %v8119, %v8005
        %v8152 = vsel %vm3419, %v8120, %v8007
        %v8153 = vsel %vm3419, %v8121, %v8009
        %v8154 = vsel %vm3419, %v8122, %v8011
        %v8155 = vsel %vm3419, %v8123, %v8013
        %v8156 = vsel %vm3419, %v8124, %v8015
        %v8157 = vsel %vm3419, %v8125, %v8017
        %v8158 = vsel %vm3419, %v8126, %v8019
        %v8159 = vsel %vm3419, %v8127, %v8021
        %v8160 = vsel %vm3419, %v8128, %v8023
        %v8161 = vsel %vm3419, %v8129, %v8025
        %v8162 = vsel %vm3419, %v8130, %v8027
        %v8163 = vsel %vm3419, %v8131, %v8029
        %v8164 = vsel %vm3419, %v8132, %v8031
        %v8165 = vsel %vm3419, %v8133, %v8033
        %v8166 = vsel %vm3419, %v8134, %v8035
        %v8167 = vsel %vm3419, %v8135, %v8037
        %v8168 = vsel %vm3419, %v8136, %v8039
        %v8169 = vsel %vm3419, %v8137, %v8041
        %8170 = vst [vmem:[%s502] sm:$0xff] %v8138
        %8171 = vst [vmem:[%s502 + $0x8] sm:$0xff] %v8139
        %8172 = vst [vmem:[%s502 + $0x10] sm:$0xff] %v8140
        %8173 = vst [vmem:[%s502 + $0x18] sm:$0xff] %v8141
        %8174 = vst [vmem:[%s502 + $0x20] sm:$0xff] %v8142
        %8175 = vst [vmem:[%s502 + $0x28] sm:$0xff] %v8143
        %8176 = vst [vmem:[%s502 + $0x30] sm:$0xff] %v8144
        %8177 = vst [vmem:[%s502 + $0x38] sm:$0xff] %v8145
        %8178 = vst [vmem:[%s502 + $0x40] sm:$0xff] %v8146
        %8179 = vst [vmem:[%s502 + $0x48] sm:$0xff] %v8147
        %8180 = vst [vmem:[%s502 + $0x50] sm:$0xff] %v8148
        %8181 = vst [vmem:[%s502 + $0x58] sm:$0xff] %v8149
        %8182 = vst [vmem:[%s502 + $0x60] sm:$0xff] %v8150
        %8183 = vst [vmem:[%s502 + $0x68] sm:$0xff] %v8151
        %8184 = vst [vmem:[%s502 + $0x70] sm:$0xff] %v8152
        %8185 = vst [vmem:[%s502 + $0x78] sm:$0xff] %v8153
        %8186 = vst [vmem:[%s502 + $0x80] sm:$0xff] %v8154
        %8187 = vst [vmem:[%s502 + $0x88] sm:$0xff] %v8155
        %8188 = vst [vmem:[%s502 + $0x90] sm:$0xff] %v8156
        %8189 = vst [vmem:[%s502 + $0x98] sm:$0xff] %v8157
        %8190 = vst [vmem:[%s502 + $0xa0] sm:$0xff] %v8158
        %8191 = vst [vmem:[%s502 + $0xa8] sm:$0xff] %v8159
        %8192 = vst [vmem:[%s502 + $0xb0] sm:$0xff] %v8160
        %8193 = vst [vmem:[%s502 + $0xb8] sm:$0xff] %v8161
        %8194 = vst [vmem:[%s502 + $0xc0] sm:$0xff] %v8162
        %8195 = vst [vmem:[%s502 + $0xc8] sm:$0xff] %v8163
        %8196 = vst [vmem:[%s502 + $0xd0] sm:$0xff] %v8164
        %8197 = vst [vmem:[%s502 + $0xd8] sm:$0xff] %v8165
        %8198 = vst [vmem:[%s502 + $0xe0] sm:$0xff] %v8166
        %8199 = vst [vmem:[%s502 + $0xe8] sm:$0xff] %v8167
        %8200 = vst [vmem:[%s502 + $0xf0] sm:$0xff] %v8168
        %8201 = vst [vmem:[%s502 + $0xf8] sm:$0xff] %v8169
        %s8202 = sand.u32 %s358, 1
        %s8203 = scalar_lea.sflag [#allocation4], %s8202
        %s8204 = sand.u32 %s358, 1
        %s8205 = smul.addr %s8204, 256
        %s8206 = scalar_lea.vmem [#allocation5], %s8205
        // Predicated region
        $region85: #{inception_forward.1} parent=79 // pred_check
          %p8207 = pneg %p368
        $region86: #{inception_forward.1} parent=79 // pred_check_branch
          %8209 = sbr.rel (%p8207) target = $region88
        $region87: #{inception_forward.1} parent=79 // pred_region
          %s8211 = ssub.s32 4096, 4096
          %8212 = vsyncadd %s8203, %s8211
          %s8213 = smul.addr %s30, 32
          %s8214 = smul.addr %s8213, 128
          %s8215 = scalar_lea.hbm %s15, %s8214
          %s8216 = sshll.u32 %s8206, 4
          %s8217 = int_to_ptr.vmem [resolvable:$true] %s8216
          %8222 = dma.vmem_to_hbm [thread:$0]  %s8217, 4096, %s8215, %s8203, 128, 128, 8
        $region88: #{inception_forward.1} parent=79 // pred_fallthru
          _
      $region80: #{inception_forward.1} parent=5 // pred_fallthru
        _
      %p8223 = scmp.le.s32.totalorder 2, %s25
      // Predicated region
      $region89: #{inception_forward.1} parent=5 // pred_check
        %p8224 = pneg %p8223
      $region90: #{inception_forward.1} parent=5 // pred_check_branch
        %8226 = sbr.rel (%p8224) target = $region92
      $region91: #{inception_forward.1} parent=5 // pred_region
        %s8227 = ssub.s32 %s25, 2
        // Predicated region
        $region93: #{inception_forward.1} parent=91 // pred_check
          %p8228 = pneg %p374
        $region94: #{inception_forward.1} parent=91 // pred_check_branch
          %8230 = sbr.rel (%p8228) target = $region96
        $region95: #{inception_forward.1} parent=91 // pred_region
          %s8231 = sand.u32 %s359, 1
          %s8232 = scalar_lea.sflag [#allocation4], %s8231
          %s8233 = sand.u32 %s359, 1
          %s8234 = smul.addr %s8233, 256
          %s8235 = scalar_lea.vmem [#allocation5], %s8234
          %8236 = dma.done %s8232, 4096
        $region96: #{inception_forward.1} parent=91 // pred_fallthru
          _
      $region92: #{inception_forward.1} parent=5 // pred_fallthru
        _
    $region6: #{inception_forward.1} parent=1 // loop_footer
      %s29 = sadd.s32 1, %s25
    $region7: #{inception_forward.1} parent=1 // loop_footer_branch
      %24 = sbr.rel target = $region3
    $region8: #{inception_forward.1} parent=1 // loop_exit
      _
    %8237 = vsyncpa [#allocation3], 1
    %s8238 = scalar_lea.sflag [#allocation3], 1
    %8239 = vsyncpa %s8238, 1
    %8240 = vsyncpa [#allocation4], 1
    %s8241 = scalar_lea.sflag [#allocation4], 1
    %8242 = vsyncpa %s8241, 1

</llo_original>
